<compile_context>
chip_gen: v7x
topology: tpu7x:2x2x1
jax: 0.10.0
libtpu: 0.0.40
codegen_flags: <defaults>
</compile_context>

<pallas_src>
import functools
import math

import jax
import jax.numpy as jnp
from jax import lax
from jax.experimental import pallas as pl
from jax.experimental.pallas import tpu as pltpu

N_CAND = 50                                   # 1 positive + 49 sampled negatives
DROP_P = 0.4
KEEP_SCALE = 1.0 / (1.0 - DROP_P)
_DROP_BITS = 23                               # int32-safe compare range
_DROP_MASK = (1 << _DROP_BITS) - 1
_DROP_THRESHOLD = int(round(DROP_P * (1 << _DROP_BITS)))   # drop iff bits < thr


def _i32(v):
    """Python int -> int32 constant with uint32 wrap-around semantics."""
    v &= 0xFFFFFFFF
    if v >= 1 << 31:
        v -= 1 << 32
    return jnp.int32(v)


def _default_compute_dtype():
    """bf16 elementwise math on v6e/v7x, f32 on v5e / older / non-TPU."""
    try:
        kind = jax.devices()[0].device_kind.lower()
    except Exception:
        return jnp.float32
    if "v6" in kind or "v7" in kind:
        return jnp.bfloat16
    return jnp.float32


# ----------------------------- Pallas kernel ------------------------------ #
def hyte_score_kernel(seed_ref, fixed_ref, t_ref, cand_ref, out_ref, *,
                      sign, training, compute_dtype):
    cdt = compute_dtype
    fixed = fixed_ref[...].astype(cdt)        # (R, 1, TB)  per-batch-row h+r / r-o
    t = t_ref[...].astype(cdt)                # (R, 1, TB)  time-plane normal
    cand = cand_ref[...].astype(cdt)          # (R, C, TB)  bf16 stream, lanes = batch

    # e = h + r - o ; the fixed part broadcasts over the candidate (sublane) axis.
    e = fixed + cand if sign > 0 else fixed - cand

    # HyTE time-plane projection.  It is linear, so the three per-embedding
    # projections fuse exactly into one projection of (h + r - o).  R is the
    # OUTER block axis, so this reduction is a chain of VPU adds of (C, TB)
    # tiles (no cross-lane XLU work), accumulated in f32.
    d = jnp.sum(e * t, axis=0, keepdims=True, dtype=jnp.float32)   # (1, C, TB)
    proj = e - d.astype(cdt) * t                                   # (R, C, TB)
    sc = jnp.abs(proj)

    if training:
        # In-kernel inverted dropout from a counter-based int32 hash (pure jnp:
        # runs on Mosaic and in interpret mode, no HBM mask stream).
        R, C, TB = sc.shape
        r_i = lax.broadcasted_iota(jnp.int32, sc.shape, 0)
        c_i = lax.broadcasted_iota(jnp.int32, sc.shape, 1)
        b_i = lax.broadcasted_iota(jnp.int32, sc.shape, 2)
        gb = b_i + pl.program_id(0) * TB                   # global batch row
        lin = (gb * C + c_i) * R + r_i                     # unique id (mod 2^32)
        x = lin ^ seed_ref[0]
        x = x * _i32(0x9E3779B1)
        x = x ^ ((x & jnp.int32(0x7FFFFFFF)) >> 16)
        x = x * _i32(0x85EBCA6B)
        x = x ^ ((x & jnp.int32(0x7FFFFFFF)) >> 13)
        x = x * _i32(0xC2B2AE35)
        x = x ^ ((x & jnp.int32(0x7FFFFFFF)) >> 16)
        keep = (x & jnp.int32(_DROP_MASK)) >= jnp.int32(_DROP_THRESHOLD)
        sc = jnp.where(keep, sc, 0.0)

    # Final sum over the rank axis: again VPU adds of (C, TB) tiles, f32 acc.
    s = jnp.sum(sc, axis=0, dtype=jnp.float32)             # (C, TB)
    if training:
        s = s * jnp.float32(KEEP_SCALE)                    # hoisted dropout scale
    out_ref[...] = s                                       # lane-dense store


def hyte_scores(fixed_rcb, t_rcb, cand_rcb, seed, *, sign, training,
                block_batch, compute_dtype,
                vmem_limit_bytes=64 * 1024 * 1024):
    """fixed_rcb, t_rcb: (R, 1, Bp) f32; cand_rcb: (R, C, Bp) bf16.
    Returns scores transposed as (C, Bp) f32 (lane-dense output)."""
    R, C, Bp = cand_rcb.shape
    TB = block_batch
    assert Bp % TB == 0, "caller pads the (cheap) index/vector arrays"
    grid = (Bp // TB,)   # keep >= 2 blocks at real batch sizes so v7x's 2 TCs split it

    kernel = functools.partial(hyte_score_kernel, sign=sign, training=training,
                               compute_dtype=compute_dtype)
    bytes_accessed = (cand_rcb.size * cand_rcb.dtype.itemsize
                      + fixed_rcb.size * fixed_rcb.dtype.itemsize
                      + t_rcb.size * t_rcb.dtype.itemsize
                      + C * Bp * 4)
    cost = pl.CostEstimate(flops=9 * Bp * C * R, transcendentals=0,
                           bytes_accessed=bytes_accessed)

    return pl.pallas_call(
        kernel,
        out_shape=jax.ShapeDtypeStruct((C, Bp), jnp.float32),
        grid_spec=pltpu.PrefetchScalarGridSpec(
            num_scalar_prefetch=1,          # dropout seed lives in SMEM
            grid=grid,
            in_specs=[
                pl.BlockSpec((R, 1, TB), lambda b, seed_ref: (0, 0, b)),
                pl.BlockSpec((R, 1, TB), lambda b, seed_ref: (0, 0, b)),
                pl.BlockSpec((R, C, TB), lambda b, seed_ref: (0, 0, b)),
            ],
            out_specs=pl.BlockSpec((C, TB), lambda b, seed_ref: (0, b)),
        ),
        compiler_params=pltpu.CompilerParams(
            dimension_semantics=("parallel",),
            vmem_limit_bytes=vmem_limit_bytes),
        cost_estimate=cost,
    )(seed, fixed_rcb, t_rcb, cand_rcb)


# --------------------------- Module equivalent ----------------------------- #
class HyTEPallas:
    def __init__(self, sizes, rank, key, init_size=0.01, training=True,
                 block_batch=256, compute_dtype=None):
        self.sizes = sizes
        self.rank = rank
        self.training = training
        self.block_batch = block_batch       # batch rows per grid step (mult of 8)
        self.compute_dtype = (_default_compute_dtype()
                              if compute_dtype is None else compute_dtype)
        k1, k2, k3 = jax.random.split(key, 3)

        def xavier(k, n, d):
            a = math.sqrt(6.0 / (n + d))
            return jax.random.uniform(k, (n, d), jnp.float32, -a, a)

        self.ent_embs = xavier(k1, sizes[0], rank)     # (n_ent, R)
        self.rel_embs = xavier(k2, sizes[1], rank)     # (n_rel, R)
        self.time_embs = xavier(k3, sizes[3], rank)    # (n_time, R)
        # Pre-transposed bf16 entity table: the candidate gather emits the
        # (R, C, B) slab the kernel wants directly (bf16 stream, no extra
        # cast / transpose pass over the big slab).
        self.ent_embs_t_bf16 = jnp.asarray(self.ent_embs.T, dtype=jnp.bfloat16)

    def _block(self, B):
        if B <= self.block_batch:
            return B, B                      # single block == full (valid) dims
        TB = self.block_batch                # multiple of 8 -> legal sublane tile
        Bp = -(-B // TB) * TB
        return TB, Bp

    def forward(self, x, weight, type_, key):
        """x: int32 (B, 4) of [head, rel, tail, time] indices."""
        del weight  # unused, mirrors torch signature
        B = x.shape[0]
        R = self.rank
        k_neg, k_drop = jax.random.split(key)
        neg = jax.random.randint(k_neg, (B, N_CAND - 1), 0, self.sizes[0],
                                 dtype=jnp.int32)

        if type_ == 'o':
            cand_idx = jnp.concatenate([x[:, 2:3], neg], axis=-1)     # tails vary
            fixed = self.ent_embs[x[:, 0]] + self.rel_embs[x[:, 1]]   # h + r
            sign = -1.0                                               # e = fixed - o
        elif type_ == 's':
            cand_idx = jnp.concatenate([x[:, 0:1], neg], axis=-1)     # heads vary
            fixed = self.rel_embs[x[:, 1]] - self.ent_embs[x[:, 2]]   # r - o
            sign = +1.0                                               # e = fixed + h
        else:
            raise ValueError("type_ must be 'o' or 's'")

        t_emb = self.time_embs[x[:, 3]]                               # (B, R)

        # Pad only the cheap per-batch-row arrays so Bp % TB == 0.
        TB, Bp = self._block(B)
        if Bp != B:
            pad = Bp - B
            cand_idx = jnp.pad(cand_idx, ((0, pad), (0, 0)))
            fixed = jnp.pad(fixed, ((0, pad), (0, 0)))
            t_emb_p = jnp.pad(t_emb, ((0, pad), (0, 0)))
        else:
            t_emb_p = t_emb

        # Candidate slab gathered directly into the kernel's (R, C, Bp) layout
        # (batch on the minor/lane axis) from the transposed bf16 table.
        flat_idx = cand_idx.T.reshape(-1)                             # (C*Bp,), b minor
        cand_rcb = jnp.take(self.ent_embs_t_bf16, flat_idx, axis=1)
        cand_rcb = cand_rcb.reshape(R, N_CAND, Bp)

        fixed_rcb = fixed.T.reshape(R, 1, Bp).astype(jnp.float32)
        t_rcb = t_emb_p.T.reshape(R, 1, Bp).astype(jnp.float32)

        seed = jax.random.randint(k_drop, (1,), 0, 2**31 - 1, dtype=jnp.int32)

        scores_cb = hyte_scores(fixed_rcb, t_rcb, cand_rcb, seed,
                                sign=sign, training=self.training,
                                block_batch=TB,
                                compute_dtype=self.compute_dtype)     # (C, Bp)
        scores = scores_cb.T[:B]                                      # (B, 50)

        reg = (self.ent_embs[x[:, 0]],
               self.rel_embs[x[:, 1]],
               self.ent_embs[x[:, 2]])
        return scores, reg, self.time_embs[x[:, 3]]


# --------------------------------- main ------------------------------------ #
if __name__ == "__main__":
    key = jax.random.PRNGKey(0)
    k_params, k_data, k_fwd1, k_fwd2 = jax.random.split(key, 4)

    # sizes = (n_entities, n_relations, n_entities, n_timestamps), small demo
    sizes = (40, 6, 40, 10)
    rank = 32
    batch = 2

    model = HyTEPallas(sizes, rank, k_params, training=True)

    # x: (B, 4) = [head, rel, tail, time]
    kh, kr, kt, ktm = jax.random.split(k_data, 4)
    x = jnp.stack([
        jax.random.randint(kh, (batch,), 0, sizes[0]),
        jax.random.randint(kr, (batch,), 0, sizes[1]),
        jax.random.randint(kt, (batch,), 0, sizes[0]),
        jax.random.randint(ktm, (batch,), 0, sizes[3]),
    ], axis=-1).astype(jnp.int32)

    scores_o, reg_o, time_o = model.forward(x, None, 'o', k_fwd1)
    scores_s, reg_s, time_s = model.forward(x, None, 's', k_fwd2)
    jax.block_until_ready(scores_o)
    jax.block_until_ready(scores_s)
    jax.block_until_ready(reg_o)
    jax.block_until_ready(time_o)

    assert scores_o.shape == (batch, N_CAND)
    assert scores_s.shape == (batch, N_CAND)
    assert reg_o[0].shape == (batch, rank)
    assert time_o.shape == (batch, rank)
    assert bool(jnp.all(jnp.isfinite(scores_o)))
    assert bool(jnp.all(jnp.isfinite(scores_s)))
    print("KERNEL_OK")
</pallas_src>

<mosaic_0001>
module attributes {stable_mosaic.version = 11 : i64} {
  func.func @hyte_score_kernel(%arg0: i32, %arg1: memref<1xi32, #tpu.memory_space<smem>>, %arg2: memref<32x1x2xf32, #tpu.memory_space<vmem>>, %arg3: memref<32x1x2xf32, #tpu.memory_space<vmem>>, %arg4: memref<32x50x2xbf16, #tpu.memory_space<vmem>>, %arg5: memref<50x2xf32, #tpu.memory_space<vmem>>) attributes {dimension_semantics = [#tpu.dimension_semantics<parallel>], iteration_bounds = array<i64: 1>, scalar_prefetch = 1 : i64, scratch_operands = 0 : i64, tpu.core_type = #tpu.core_type<tc>, window_params = [{transform_indices = @transform_0, window_bounds = array<i64: 32, 1, 2>}, {transform_indices = @transform_1, window_bounds = array<i64: 32, 1, 2>}, {transform_indices = @transform_2, window_bounds = array<i64: 32, 50, 2>}, {transform_indices = @transform_3, window_bounds = array<i64: 50, 2>}]} {
    %c0 = arith.constant 0 : index
    %c0_0 = arith.constant 0 : index
    %c0_1 = arith.constant 0 : index
    %0 = vector.load %arg2[%c0, %c0_0, %c0_1] : memref<32x1x2xf32, #tpu.memory_space<vmem>>, vector<32x1x2xf32>
    %c0_2 = arith.constant 0 : index
    %c0_3 = arith.constant 0 : index
    %c0_4 = arith.constant 0 : index
    %1 = vector.load %arg3[%c0_2, %c0_3, %c0_4] : memref<32x1x2xf32, #tpu.memory_space<vmem>>, vector<32x1x2xf32>
    %c0_5 = arith.constant 0 : index
    %c0_6 = arith.constant 0 : index
    %c0_7 = arith.constant 0 : index
    %2 = vector.load %arg4[%c0_5, %c0_6, %c0_7] : memref<32x50x2xbf16, #tpu.memory_space<vmem>>, vector<32x50x2xbf16>
    %3 = arith.extf %2 : vector<32x50x2xbf16> to vector<32x50x2xf32>
    %4 = vector.broadcast %0 : vector<32x1x2xf32> to vector<32x50x2xf32>
    %5 = arith.subf %4, %3 : vector<32x50x2xf32>
    %6 = vector.broadcast %1 : vector<32x1x2xf32> to vector<32x50x2xf32>
    %7 = arith.mulf %5, %6 : vector<32x50x2xf32>
    %cst = arith.constant dense<0.000000e+00> : vector<50x2xf32>
    %8 = vector.multi_reduction <add>, %7, %cst [0] : vector<32x50x2xf32> to vector<50x2xf32>
    %9 = vector.shape_cast %8 : vector<50x2xf32> to vector<1x50x2xf32>
    %10 = vector.broadcast %9 : vector<1x50x2xf32> to vector<32x50x2xf32>
    %11 = vector.broadcast %1 : vector<32x1x2xf32> to vector<32x50x2xf32>
    %12 = arith.mulf %10, %11 : vector<32x50x2xf32>
    %13 = arith.subf %5, %12 : vector<32x50x2xf32>
    %14 = math.absf %13 : vector<32x50x2xf32>
    %15 = tpu.iota {dimensions = array<i32: 0>} : vector<32x50x2xi32>
    %16 = tpu.iota {dimensions = array<i32: 1>} : vector<32x50x2xi32>
    %17 = tpu.iota {dimensions = array<i32: 2>} : vector<32x50x2xi32>
    %c2_i32 = arith.constant 2 : i32
    %18 = arith.muli %arg0, %c2_i32 : i32
    %19 = vector.broadcast %18 : i32 to vector<32x50x2xi32>
    %20 = arith.addi %17, %19 : vector<32x50x2xi32>
    %c50_i32 = arith.constant 50 : i32
    %21 = vector.broadcast %c50_i32 : i32 to vector<32x50x2xi32>
    %22 = arith.muli %20, %21 : vector<32x50x2xi32>
    %23 = arith.addi %22, %16 : vector<32x50x2xi32>
    %c32_i32 = arith.constant 32 : i32
    %24 = vector.broadcast %c32_i32 : i32 to vector<32x50x2xi32>
    %25 = arith.muli %23, %24 : vector<32x50x2xi32>
    %26 = arith.addi %25, %15 : vector<32x50x2xi32>
    %c0_8 = arith.constant 0 : index
    %27 = memref.load %arg1[%c0_8] : memref<1xi32, #tpu.memory_space<smem>>
    %28 = vector.broadcast %27 : i32 to vector<32x50x2xi32>
    %29 = arith.xori %26, %28 : vector<32x50x2xi32>
    %c-1640531535_i32 = arith.constant -1640531535 : i32
    %30 = vector.broadcast %c-1640531535_i32 : i32 to vector<32x50x2xi32>
    %31 = arith.muli %29, %30 : vector<32x50x2xi32>
    %c2147483647_i32 = arith.constant 2147483647 : i32
    %32 = vector.broadcast %c2147483647_i32 : i32 to vector<32x50x2xi32>
    %33 = arith.andi %31, %32 : vector<32x50x2xi32>
    %c16_i32 = arith.constant 16 : i32
    %34 = vector.broadcast %c16_i32 : i32 to vector<32x50x2xi32>
    %35 = arith.shrsi %33, %34 : vector<32x50x2xi32>
    %36 = arith.xori %31, %35 : vector<32x50x2xi32>
    %c-2048144789_i32 = arith.constant -2048144789 : i32
    %37 = vector.broadcast %c-2048144789_i32 : i32 to vector<32x50x2xi32>
    %38 = arith.muli %36, %37 : vector<32x50x2xi32>
    %c2147483647_i32_9 = arith.constant 2147483647 : i32
    %39 = vector.broadcast %c2147483647_i32_9 : i32 to vector<32x50x2xi32>
    %40 = arith.andi %38, %39 : vector<32x50x2xi32>
    %c13_i32 = arith.constant 13 : i32
    %41 = vector.broadcast %c13_i32 : i32 to vector<32x50x2xi32>
    %42 = arith.shrsi %40, %41 : vector<32x50x2xi32>
    %43 = arith.xori %38, %42 : vector<32x50x2xi32>
    %c-1028477387_i32 = arith.constant -1028477387 : i32
    %44 = vector.broadcast %c-1028477387_i32 : i32 to vector<32x50x2xi32>
    %45 = arith.muli %43, %44 : vector<32x50x2xi32>
    %c2147483647_i32_10 = arith.constant 2147483647 : i32
    %46 = vector.broadcast %c2147483647_i32_10 : i32 to vector<32x50x2xi32>
    %47 = arith.andi %45, %46 : vector<32x50x2xi32>
    %c16_i32_11 = arith.constant 16 : i32
    %48 = vector.broadcast %c16_i32_11 : i32 to vector<32x50x2xi32>
    %49 = arith.shrsi %47, %48 : vector<32x50x2xi32>
    %50 = arith.xori %45, %49 : vector<32x50x2xi32>
    %c8388607_i32 = arith.constant 8388607 : i32
    %51 = vector.broadcast %c8388607_i32 : i32 to vector<32x50x2xi32>
    %52 = arith.andi %50, %51 : vector<32x50x2xi32>
    %c3355443_i32 = arith.constant 3355443 : i32
    %53 = vector.broadcast %c3355443_i32 : i32 to vector<32x50x2xi32>
    %54 = arith.cmpi sge, %52, %53 : vector<32x50x2xi32>
    %cst_12 = arith.constant 0.000000e+00 : f32
    %55 = vector.broadcast %cst_12 : f32 to vector<32x50x2xf32>
    %56 = arith.select %54, %14, %55 : vector<32x50x2xi1>, vector<32x50x2xf32>
    %cst_13 = arith.constant dense<0.000000e+00> : vector<50x2xf32>
    %57 = vector.multi_reduction <add>, %56, %cst_13 [0] : vector<32x50x2xf32> to vector<50x2xf32>
    %cst_14 = arith.constant 1.66666663 : f32
    %58 = vector.broadcast %cst_14 : f32 to vector<50x2xf32>
    %59 = arith.mulf %57, %58 : vector<50x2xf32>
    %c0_15 = arith.constant 0 : index
    %c0_16 = arith.constant 0 : index
    %60 = vector.load %arg5[%c0_15, %c0_16] : memref<50x2xf32, #tpu.memory_space<vmem>>, vector<50x2xf32>
    tpu.vector_store %arg5[%c0_15, %c0_16], %59 {strides = array<i32>} : memref<50x2xf32, #tpu.memory_space<vmem>>, vector<50x2xf32>,
    return
  }
  func.func @transform_0(%arg0: i32, %arg1: memref<1xi32, #tpu.memory_space<smem>>) -> (i32, i32, i32) {
    %c0_i32 = arith.constant 0 : i32
    %c0_i32_0 = arith.constant 0 : i32
    %c0_i32_1 = arith.constant 0 : i32
    return %c0_i32, %c0_i32_0, %arg0 : i32, i32, i32
  }
  func.func @transform_1(%arg0: i32, %arg1: memref<1xi32, #tpu.memory_space<smem>>) -> (i32, i32, i32) {
    %c0_i32 = arith.constant 0 : i32
    %c0_i32_0 = arith.constant 0 : i32
    %c0_i32_1 = arith.constant 0 : i32
    return %c0_i32, %c0_i32_0, %arg0 : i32, i32, i32
  }
  func.func @transform_2(%arg0: i32, %arg1: memref<1xi32, #tpu.memory_space<smem>>) -> (i32, i32, i32) {
    %c0_i32 = arith.constant 0 : i32
    %c0_i32_0 = arith.constant 0 : i32
    %c0_i32_1 = arith.constant 0 : i32
    return %c0_i32, %c0_i32_0, %arg0 : i32, i32, i32
  }
  func.func @transform_3(%arg0: i32, %arg1: memref<1xi32, #tpu.memory_space<smem>>) -> (i32, i32) {
    %c0_i32 = arith.constant 0 : i32
    %c0_i32_0 = arith.constant 0 : i32
    return %c0_i32, %arg0 : i32, i32
  }
}

</mosaic_0001>

<llo_original>
// kernel: tpu_custom_call.1
$region0: #{tpu_custom_call.1}
  #allocation0 [shape = 'u32[]', space=smem, size = 0x4, offset = 0x4, fixed_abs, tag = 'smem constant byte address 0x4 - core index']
  #allocation1 [shape = 'u32[144,128]{1,0:T(1,128)}', space=vmem, size = 0x12000, scoped, tag = 'internal scratch']
  #allocation2 [shape = 's32[1]{0}', space=sflag, size = 0x4, scoped, tag = 'scoped memory for tpu_custom_call.1']
  #allocation3 [shape = 's32[1]{0:T(128)S(6)}', space=smem, size = 0x200, scoped, tag = 'prefetched SMEM operand 0']
  %s0 = inlined_call_operand.<no memory space> [shape: s32[1], index: 0, kind: input, shape index: {}]
  %s1 = inlined_call_operand.hbm [shape: f32[32,1,2], index: 1, kind: input, shape index: {}]
  %s2 = inlined_call_operand.hbm [shape: f32[32,1,2], index: 2, kind: input, shape index: {}]
  %s3 = inlined_call_operand.hbm [shape: bf16[32,50,2], index: 3, kind: input, shape index: {}]
  %s4 = inlined_call_operand.hbm [shape: f32[50,2], index: 4, kind: output, shape index: {}]
  %s5 = sld [smem:[#allocation0]]
  $region34: #{tpu_custom_call.1} parent=0
    _
  %s7 = ssub.s32 1, %s5
  %s8 = scalar_select 0, %s7, %s5
  %9 = sst [smem:[#allocation3]] %s0
  $region1: #{tpu_custom_call.1} parent=0
    #allocation4 [shape = 'u8[16384]{0}', space=vmem, size = 0x4000, scoped, tag = 'input window, operand 1, single buffered']
    #allocation5 [shape = 's32[1]{0}', space=sflag, size = 0x4, scoped, tag = 'scoped memory for tpu_custom_call.1']
    #allocation6 [shape = 's32[1]{0}', space=sflag, size = 0x4, scoped, tag = 'scoped memory for tpu_custom_call.1']
    #allocation7 [shape = 'u8[16384]{0}', space=vmem, size = 0x4000, scoped, tag = 'input window, operand 2, single buffered']
    #allocation8 [shape = 's32[1]{0}', space=sflag, size = 0x4, scoped, tag = 'scoped memory for tpu_custom_call.1']
    #allocation9 [shape = 'u8[458752]{0}', space=vmem, size = 0x70000, scoped, tag = 'input window, operand 3, single buffered']
    #allocation10 [shape = 'u8[28672]{0}', space=vmem, size = 0x7000, scoped, tag = 'output window, operand 0, single buffered']
    %10 = vsyncpa [#allocation5], 0
    %11 = vsyncpa [#allocation8], 0
    %12 = vsyncpa [#allocation6], 0
    // Predicated region
    $region2: #{tpu_custom_call.1} parent=1 // pred_check
      _
    $region3: #{tpu_custom_call.1} parent=1 // pred_check_branch
      %14 = sbr.rel (0) target = $region5
    $region4: #{tpu_custom_call.1} parent=1 // pred_region
      %s16 = ssub.s32 512, 512
      %17 = vsyncadd [#allocation5], %s16
      %s18 = sshll.u32 [#allocation4], 4
      %s19 = int_to_ptr.vmem [resolvable:$true] %s18
      %24 = dma.hbm_to_vmem [thread:$0]  %s1, 512, %s19, [#allocation5], 16, 16, 1
    $region5: #{tpu_custom_call.1} parent=1 // pred_fallthru
      _
    // Predicated region
    $region6: #{tpu_custom_call.1} parent=1 // pred_check
      _
    $region7: #{tpu_custom_call.1} parent=1 // pred_check_branch
      %26 = sbr.rel (0) target = $region9
    $region8: #{tpu_custom_call.1} parent=1 // pred_region
      %s28 = ssub.s32 512, 512
      %29 = vsyncadd [#allocation8], %s28
      %s30 = sshll.u32 [#allocation7], 4
      %s31 = int_to_ptr.vmem [resolvable:$true] %s30
      %36 = dma.hbm_to_vmem [thread:$0]  %s2, 512, %s31, [#allocation8], 16, 16, 1
    $region9: #{tpu_custom_call.1} parent=1 // pred_fallthru
      _
    // Predicated region
    $region10: #{tpu_custom_call.1} parent=1 // pred_check
      _
    $region11: #{tpu_custom_call.1} parent=1 // pred_check_branch
      %38 = sbr.rel (0) target = $region13
    $region12: #{tpu_custom_call.1} parent=1 // pred_region
      %s40 = ssub.s32 14336, 14336
      %41 = vsyncadd [#allocation8], %s40
      %s42 = sshll.u32 [#allocation9], 4
      %s43 = int_to_ptr.vmem [resolvable:$true] %s42
      %48 = dma.hbm_to_vmem [thread:$0]  %s3, 14336, %s43, [#allocation8], 64, 64, 4
    $region13: #{tpu_custom_call.1} parent=1 // pred_fallthru
      _
    // Predicated region
    $region14: #{tpu_custom_call.1} parent=1 // pred_check
      _
    $region15: #{tpu_custom_call.1} parent=1 // pred_check_branch
      %50 = sbr.rel (0) target = $region17
    $region16: #{tpu_custom_call.1} parent=1 // pred_region
      %51 = dma.done [#allocation5], 512
    $region17: #{tpu_custom_call.1} parent=1 // pred_fallthru
      _
    // Predicated region
    $region18: #{tpu_custom_call.1} parent=1 // pred_check
      _
    $region19: #{tpu_custom_call.1} parent=1 // pred_check_branch
      %53 = sbr.rel (0) target = $region21
    $region20: #{tpu_custom_call.1} parent=1 // pred_region
      %54 = dma.done [#allocation8], 512
    $region21: #{tpu_custom_call.1} parent=1 // pred_fallthru
      _
    // Predicated region
    $region22: #{tpu_custom_call.1} parent=1 // pred_check
      _
    $region23: #{tpu_custom_call.1} parent=1 // pred_check_branch
      %56 = sbr.rel (0) target = $region25
    $region24: #{tpu_custom_call.1} parent=1 // pred_region
      %57 = dma.done [#allocation8], 14336
    $region25: #{tpu_custom_call.1} parent=1 // pred_fallthru
      _
    %v58 = vld [vmem:[#allocation4] sm:$0x1]
    %v59 = vld [vmem:[#allocation4 + $0x1] sm:$0x1]
    %v60 = vld [vmem:[#allocation4 + $0x2] sm:$0x1]
    %v61 = vld [vmem:[#allocation4 + $0x3] sm:$0x1]
    %v62 = vld [vmem:[#allocation4 + $0x4] sm:$0x1]
    %v63 = vld [vmem:[#allocation4 + $0x5] sm:$0x1]
    %v64 = vld [vmem:[#allocation4 + $0x6] sm:$0x1]
    %v65 = vld [vmem:[#allocation4 + $0x7] sm:$0x1]
    %v66 = vld [vmem:[#allocation4 + $0x8] sm:$0x1]
    %v67 = vld [vmem:[#allocation4 + $0x9] sm:$0x1]
    %v68 = vld [vmem:[#allocation4 + $0xa] sm:$0x1]
    %v69 = vld [vmem:[#allocation4 + $0xb] sm:$0x1]
    %v70 = vld [vmem:[#allocation4 + $0xc] sm:$0x1]
    %v71 = vld [vmem:[#allocation4 + $0xd] sm:$0x1]
    %v72 = vld [vmem:[#allocation4 + $0xe] sm:$0x1]
    %v73 = vld [vmem:[#allocation4 + $0xf] sm:$0x1]
    %v74 = vld [vmem:[#allocation4 + $0x10] sm:$0x1]
    %v75 = vld [vmem:[#allocation4 + $0x11] sm:$0x1]
    %v76 = vld [vmem:[#allocation4 + $0x12] sm:$0x1]
    %v77 = vld [vmem:[#allocation4 + $0x13] sm:$0x1]
    %v78 = vld [vmem:[#allocation4 + $0x14] sm:$0x1]
    %v79 = vld [vmem:[#allocation4 + $0x15] sm:$0x1]
    %v80 = vld [vmem:[#allocation4 + $0x16] sm:$0x1]
    %v81 = vld [vmem:[#allocation4 + $0x17] sm:$0x1]
    %v82 = vld [vmem:[#allocation4 + $0x18] sm:$0x1]
    %v83 = vld [vmem:[#allocation4 + $0x19] sm:$0x1]
    %v84 = vld [vmem:[#allocation4 + $0x1a] sm:$0x1]
    %v85 = vld [vmem:[#allocation4 + $0x1b] sm:$0x1]
    %v86 = vld [vmem:[#allocation4 + $0x1c] sm:$0x1]
    %v87 = vld [vmem:[#allocation4 + $0x1d] sm:$0x1]
    %v88 = vld [vmem:[#allocation4 + $0x1e] sm:$0x1]
    %v89 = vld [vmem:[#allocation4 + $0x1f] sm:$0x1]
    %v90 = vld [vmem:[#allocation7] sm:$0x1]
    %v91 = vld [vmem:[#allocation7 + $0x1] sm:$0x1]
    %v92 = vld [vmem:[#allocation7 + $0x2] sm:$0x1]
    %v93 = vld [vmem:[#allocation7 + $0x3] sm:$0x1]
    %v94 = vld [vmem:[#allocation7 + $0x4] sm:$0x1]
    %v95 = vld [vmem:[#allocation7 + $0x5] sm:$0x1]
    %v96 = vld [vmem:[#allocation7 + $0x6] sm:$0x1]
    %v97 = vld [vmem:[#allocation7 + $0x7] sm:$0x1]
    %v98 = vld [vmem:[#allocation7 + $0x8] sm:$0x1]
    %v99 = vld [vmem:[#allocation7 + $0x9] sm:$0x1]
    %v100 = vld [vmem:[#allocation7 + $0xa] sm:$0x1]
    %v101 = vld [vmem:[#allocation7 + $0xb] sm:$0x1]
    %v102 = vld [vmem:[#allocation7 + $0xc] sm:$0x1]
    %v103 = vld [vmem:[#allocation7 + $0xd] sm:$0x1]
    %v104 = vld [vmem:[#allocation7 + $0xe] sm:$0x1]
    %v105 = vld [vmem:[#allocation7 + $0xf] sm:$0x1]
    %v106 = vld [vmem:[#allocation7 + $0x10] sm:$0x1]
    %v107 = vld [vmem:[#allocation7 + $0x11] sm:$0x1]
    %v108 = vld [vmem:[#allocation7 + $0x12] sm:$0x1]
    %v109 = vld [vmem:[#allocation7 + $0x13] sm:$0x1]
    %v110 = vld [vmem:[#allocation7 + $0x14] sm:$0x1]
    %v111 = vld [vmem:[#allocation7 + $0x15] sm:$0x1]
    %v112 = vld [vmem:[#allocation7 + $0x16] sm:$0x1]
    %v113 = vld [vmem:[#allocation7 + $0x17] sm:$0x1]
    %v114 = vld [vmem:[#allocation7 + $0x18] sm:$0x1]
    %v115 = vld [vmem:[#allocation7 + $0x19] sm:$0x1]
    %v116 = vld [vmem:[#allocation7 + $0x1a] sm:$0x1]
    %v117 = vld [vmem:[#allocation7 + $0x1b] sm:$0x1]
    %v118 = vld [vmem:[#allocation7 + $0x1c] sm:$0x1]
    %v119 = vld [vmem:[#allocation7 + $0x1d] sm:$0x1]
    %v120 = vld [vmem:[#allocation7 + $0x1e] sm:$0x1]
    %v121 = vld [vmem:[#allocation7 + $0x1f] sm:$0x1]
    %v122 = vld [vmem:[#allocation9] sm:$0xf]
    %v123 = vld [vmem:[#allocation9 + $0x4] sm:$0xf]
    %v124 = vld [vmem:[#allocation9 + $0x8] sm:$0xf]
    %v125 = vld [vmem:[#allocation9 + $0xc] sm:$0xf]
    %v126 = vld [vmem:[#allocation9 + $0x10] sm:$0xf]
    %v127 = vld [vmem:[#allocation9 + $0x14] sm:$0xf]
    %v128 = vld [vmem:[#allocation9 + $0x18] sm:$0x1]
    %v129 = vld [vmem:[#allocation9 + $0x1c] sm:$0xf]
    %v130 = vld [vmem:[#allocation9 + $0x20] sm:$0xf]
    %v131 = vld [vmem:[#allocation9 + $0x24] sm:$0xf]
    %v132 = vld [vmem:[#allocation9 + $0x28] sm:$0xf]
    %v133 = vld [vmem:[#allocation9 + $0x2c] sm:$0xf]
    %v134 = vld [vmem:[#allocation9 + $0x30] sm:$0xf]
    %v135 = vld [vmem:[#allocation9 + $0x34] sm:$0x1]
    %v136 = vld [vmem:[#allocation9 + $0x38] sm:$0xf]
    %v137 = vld [vmem:[#allocation9 + $0x3c] sm:$0xf]
    %v138 = vld [vmem:[#allocation9 + $0x40] sm:$0xf]
    %v139 = vld [vmem:[#allocation9 + $0x44] sm:$0xf]
    %v140 = vld [vmem:[#allocation9 + $0x48] sm:$0xf]
    %v141 = vld [vmem:[#allocation9 + $0x4c] sm:$0xf]
    %v142 = vld [vmem:[#allocation9 + $0x50] sm:$0x1]
    %v143 = vld [vmem:[#allocation9 + $0x54] sm:$0xf]
    %v144 = vld [vmem:[#allocation9 + $0x58] sm:$0xf]
    %v145 = vld [vmem:[#allocation9 + $0x5c] sm:$0xf]
    %v146 = vld [vmem:[#allocation9 + $0x60] sm:$0xf]
    %v147 = vld [vmem:[#allocation9 + $0x64] sm:$0xf]
    %v148 = vld [vmem:[#allocation9 + $0x68] sm:$0xf]
    %v149 = vld [vmem:[#allocation9 + $0x6c] sm:$0x1]
    %v150 = vld [vmem:[#allocation9 + $0x70] sm:$0xf]
    %v151 = vld [vmem:[#allocation9 + $0x74] sm:$0xf]
    %v152 = vld [vmem:[#allocation9 + $0x78] sm:$0xf]
    %v153 = vld [vmem:[#allocation9 + $0x7c] sm:$0xf]
    %v154 = vld [vmem:[#allocation9 + $0x80] sm:$0xf]
    %v155 = vld [vmem:[#allocation9 + $0x84] sm:$0xf]
    %v156 = vld [vmem:[#allocation9 + $0x88] sm:$0x1]
    %v157 = vld [vmem:[#allocation9 + $0x8c] sm:$0xf]
    %v158 = vld [vmem:[#allocation9 + $0x90] sm:$0xf]
    %v159 = vld [vmem:[#allocation9 + $0x94] sm:$0xf]
    %v160 = vld [vmem:[#allocation9 + $0x98] sm:$0xf]
    %v161 = vld [vmem:[#allocation9 + $0x9c] sm:$0xf]
    %v162 = vld [vmem:[#allocation9 + $0xa0] sm:$0xf]
    %v163 = vld [vmem:[#allocation9 + $0xa4] sm:$0x1]
    %v164 = vld [vmem:[#allocation9 + $0xa8] sm:$0xf]
    %v165 = vld [vmem:[#allocation9 + $0xac] sm:$0xf]
    %v166 = vld [vmem:[#allocation9 + $0xb0] sm:$0xf]
    %v167 = vld [vmem:[#allocation9 + $0xb4] sm:$0xf]
    %v168 = vld [vmem:[#allocation9 + $0xb8] sm:$0xf]
    %v169 = vld [vmem:[#allocation9 + $0xbc] sm:$0xf]
    %v170 = vld [vmem:[#allocation9 + $0xc0] sm:$0x1]
    %v171 = vld [vmem:[#allocation9 + $0xc4] sm:$0xf]
    %v172 = vld [vmem:[#allocation9 + $0xc8] sm:$0xf]
    %v173 = vld [vmem:[#allocation9 + $0xcc] sm:$0xf]
    %v174 = vld [vmem:[#allocation9 + $0xd0] sm:$0xf]
    %v175 = vld [vmem:[#allocation9 + $0xd4] sm:$0xf]
    %v176 = vld [vmem:[#allocation9 + $0xd8] sm:$0xf]
    %v177 = vld [vmem:[#allocation9 + $0xdc] sm:$0x1]
    %v178 = vld [vmem:[#allocation9 + $0xe0] sm:$0xf]
    %v179 = vld [vmem:[#allocation9 + $0xe4] sm:$0xf]
    %v180 = vld [vmem:[#allocation9 + $0xe8] sm:$0xf]
    %v181 = vld [vmem:[#allocation9 + $0xec] sm:$0xf]
    %v182 = vld [vmem:[#allocation9 + $0xf0] sm:$0xf]
    %v183 = vld [vmem:[#allocation9 + $0xf4] sm:$0xf]
    %v184 = vld [vmem:[#allocation9 + $0xf8] sm:$0x1]
    %v185 = vld [vmem:[#allocation9 + $0xfc] sm:$0xf]
    %v186 = vld [vmem:[#allocation9 + $0x100] sm:$0xf]
    %v187 = vld [vmem:[#allocation9 + $0x104] sm:$0xf]
    %v188 = vld [vmem:[#allocation9 + $0x108] sm:$0xf]
    %v189 = vld [vmem:[#allocation9 + $0x10c] sm:$0xf]
    %v190 = vld [vmem:[#allocation9 + $0x110] sm:$0xf]
    %v191 = vld [vmem:[#allocation9 + $0x114] sm:$0x1]
    %v192 = vld [vmem:[#allocation9 + $0x118] sm:$0xf]
    %v193 = vld [vmem:[#allocation9 + $0x11c] sm:$0xf]
    %v194 = vld [vmem:[#allocation9 + $0x120] sm:$0xf]
    %v195 = vld [vmem:[#allocation9 + $0x124] sm:$0xf]
    %v196 = vld [vmem:[#allocation9 + $0x128] sm:$0xf]
    %v197 = vld [vmem:[#allocation9 + $0x12c] sm:$0xf]
    %v198 = vld [vmem:[#allocation9 + $0x130] sm:$0x1]
    %v199 = vld [vmem:[#allocation9 + $0x134] sm:$0xf]
    %v200 = vld [vmem:[#allocation9 + $0x138] sm:$0xf]
    %v201 = vld [vmem:[#allocation9 + $0x13c] sm:$0xf]
    %v202 = vld [vmem:[#allocation9 + $0x140] sm:$0xf]
    %v203 = vld [vmem:[#allocation9 + $0x144] sm:$0xf]
    %v204 = vld [vmem:[#allocation9 + $0x148] sm:$0xf]
    %v205 = vld [vmem:[#allocation9 + $0x14c] sm:$0x1]
    %v206 = vld [vmem:[#allocation9 + $0x150] sm:$0xf]
    %v207 = vld [vmem:[#allocation9 + $0x154] sm:$0xf]
    %v208 = vld [vmem:[#allocation9 + $0x158] sm:$0xf]
    %v209 = vld [vmem:[#allocation9 + $0x15c] sm:$0xf]
    %v210 = vld [vmem:[#allocation9 + $0x160] sm:$0xf]
    %v211 = vld [vmem:[#allocation9 + $0x164] sm:$0xf]
    %v212 = vld [vmem:[#allocation9 + $0x168] sm:$0x1]
    %v213 = vld [vmem:[#allocation9 + $0x16c] sm:$0xf]
    %v214 = vld [vmem:[#allocation9 + $0x170] sm:$0xf]
    %v215 = vld [vmem:[#allocation9 + $0x174] sm:$0xf]
    %v216 = vld [vmem:[#allocation9 + $0x178] sm:$0xf]
    %v217 = vld [vmem:[#allocation9 + $0x17c] sm:$0xf]
    %v218 = vld [vmem:[#allocation9 + $0x180] sm:$0xf]
    %v219 = vld [vmem:[#allocation9 + $0x184] sm:$0x1]
    %v220 = vld [vmem:[#allocation9 + $0x188] sm:$0xf]
    %v221 = vld [vmem:[#allocation9 + $0x18c] sm:$0xf]
    %v222 = vld [vmem:[#allocation9 + $0x190] sm:$0xf]
    %v223 = vld [vmem:[#allocation9 + $0x194] sm:$0xf]
    %v224 = vld [vmem:[#allocation9 + $0x198] sm:$0xf]
    %v225 = vld [vmem:[#allocation9 + $0x19c] sm:$0xf]
    %v226 = vld [vmem:[#allocation9 + $0x1a0] sm:$0x1]
    %v227 = vld [vmem:[#allocation9 + $0x1a4] sm:$0xf]
    %v228 = vld [vmem:[#allocation9 + $0x1a8] sm:$0xf]
    %v229 = vld [vmem:[#allocation9 + $0x1ac] sm:$0xf]
    %v230 = vld [vmem:[#allocation9 + $0x1b0] sm:$0xf]
    %v231 = vld [vmem:[#allocation9 + $0x1b4] sm:$0xf]
    %v232 = vld [vmem:[#allocation9 + $0x1b8] sm:$0xf]
    %v233 = vld [vmem:[#allocation9 + $0x1bc] sm:$0x1]
    %v234 = vld [vmem:[#allocation9 + $0x1c0] sm:$0xf]
    %v235 = vld [vmem:[#allocation9 + $0x1c4] sm:$0xf]
    %v236 = vld [vmem:[#allocation9 + $0x1c8] sm:$0xf]
    %v237 = vld [vmem:[#allocation9 + $0x1cc] sm:$0xf]
    %v238 = vld [vmem:[#allocation9 + $0x1d0] sm:$0xf]
    %v239 = vld [vmem:[#allocation9 + $0x1d4] sm:$0xf]
    %v240 = vld [vmem:[#allocation9 + $0x1d8] sm:$0x1]
    %v241 = vld [vmem:[#allocation9 + $0x1dc] sm:$0xf]
    %v242 = vld [vmem:[#allocation9 + $0x1e0] sm:$0xf]
    %v243 = vld [vmem:[#allocation9 + $0x1e4] sm:$0xf]
    %v244 = vld [vmem:[#allocation9 + $0x1e8] sm:$0xf]
    %v245 = vld [vmem:[#allocation9 + $0x1ec] sm:$0xf]
    %v246 = vld [vmem:[#allocation9 + $0x1f0] sm:$0xf]
    %v247 = vld [vmem:[#allocation9 + $0x1f4] sm:$0x1]
    %v248 = vld [vmem:[#allocation9 + $0x1f8] sm:$0xf]
    %v249 = vld [vmem:[#allocation9 + $0x1fc] sm:$0xf]
    %v250 = vld [vmem:[#allocation9 + $0x200] sm:$0xf]
    %v251 = vld [vmem:[#allocation9 + $0x204] sm:$0xf]
    %v252 = vld [vmem:[#allocation9 + $0x208] sm:$0xf]
    %v253 = vld [vmem:[#allocation9 + $0x20c] sm:$0xf]
    %v254 = vld [vmem:[#allocation9 + $0x210] sm:$0x1]
    %v255 = vld [vmem:[#allocation9 + $0x214] sm:$0xf]
    %v256 = vld [vmem:[#allocation9 + $0x218] sm:$0xf]
    %v257 = vld [vmem:[#allocation9 + $0x21c] sm:$0xf]
    %v258 = vld [vmem:[#allocation9 + $0x220] sm:$0xf]
    %v259 = vld [vmem:[#allocation9 + $0x224] sm:$0xf]
    %v260 = vld [vmem:[#allocation9 + $0x228] sm:$0xf]
    %v261 = vld [vmem:[#allocation9 + $0x22c] sm:$0x1]
    %v262 = vld [vmem:[#allocation9 + $0x230] sm:$0xf]
    %v263 = vld [vmem:[#allocation9 + $0x234] sm:$0xf]
    %v264 = vld [vmem:[#allocation9 + $0x238] sm:$0xf]
    %v265 = vld [vmem:[#allocation9 + $0x23c] sm:$0xf]
    %v266 = vld [vmem:[#allocation9 + $0x240] sm:$0xf]
    %v267 = vld [vmem:[#allocation9 + $0x244] sm:$0xf]
    %v268 = vld [vmem:[#allocation9 + $0x248] sm:$0x1]
    %v269 = vld [vmem:[#allocation9 + $0x24c] sm:$0xf]
    %v270 = vld [vmem:[#allocation9 + $0x250] sm:$0xf]
    %v271 = vld [vmem:[#allocation9 + $0x254] sm:$0xf]
    %v272 = vld [vmem:[#allocation9 + $0x258] sm:$0xf]
    %v273 = vld [vmem:[#allocation9 + $0x25c] sm:$0xf]
    %v274 = vld [vmem:[#allocation9 + $0x260] sm:$0xf]
    %v275 = vld [vmem:[#allocation9 + $0x264] sm:$0x1]
    %v276 = vld [vmem:[#allocation9 + $0x268] sm:$0xf]
    %v277 = vld [vmem:[#allocation9 + $0x26c] sm:$0xf]
    %v278 = vld [vmem:[#allocation9 + $0x270] sm:$0xf]
    %v279 = vld [vmem:[#allocation9 + $0x274] sm:$0xf]
    %v280 = vld [vmem:[#allocation9 + $0x278] sm:$0xf]
    %v281 = vld [vmem:[#allocation9 + $0x27c] sm:$0xf]
    %v282 = vld [vmem:[#allocation9 + $0x280] sm:$0x1]
    %v283 = vld [vmem:[#allocation9 + $0x284] sm:$0xf]
    %v284 = vld [vmem:[#allocation9 + $0x288] sm:$0xf]
    %v285 = vld [vmem:[#allocation9 + $0x28c] sm:$0xf]
    %v286 = vld [vmem:[#allocation9 + $0x290] sm:$0xf]
    %v287 = vld [vmem:[#allocation9 + $0x294] sm:$0xf]
    %v288 = vld [vmem:[#allocation9 + $0x298] sm:$0xf]
    %v289 = vld [vmem:[#allocation9 + $0x29c] sm:$0x1]
    %v290 = vld [vmem:[#allocation9 + $0x2a0] sm:$0xf]
    %v291 = vld [vmem:[#allocation9 + $0x2a4] sm:$0xf]
    %v292 = vld [vmem:[#allocation9 + $0x2a8] sm:$0xf]
    %v293 = vld [vmem:[#allocation9 + $0x2ac] sm:$0xf]
    %v294 = vld [vmem:[#allocation9 + $0x2b0] sm:$0xf]
    %v295 = vld [vmem:[#allocation9 + $0x2b4] sm:$0xf]
    %v296 = vld [vmem:[#allocation9 + $0x2b8] sm:$0x1]
    %v297 = vld [vmem:[#allocation9 + $0x2bc] sm:$0xf]
    %v298 = vld [vmem:[#allocation9 + $0x2c0] sm:$0xf]
    %v299 = vld [vmem:[#allocation9 + $0x2c4] sm:$0xf]
    %v300 = vld [vmem:[#allocation9 + $0x2c8] sm:$0xf]
    %v301 = vld [vmem:[#allocation9 + $0x2cc] sm:$0xf]
    %v302 = vld [vmem:[#allocation9 + $0x2d0] sm:$0xf]
    %v303 = vld [vmem:[#allocation9 + $0x2d4] sm:$0x1]
    %v304 = vld [vmem:[#allocation9 + $0x2d8] sm:$0xf]
    %v305 = vld [vmem:[#allocation9 + $0x2dc] sm:$0xf]
    %v306 = vld [vmem:[#allocation9 + $0x2e0] sm:$0xf]
    %v307 = vld [vmem:[#allocation9 + $0x2e4] sm:$0xf]
    %v308 = vld [vmem:[#allocation9 + $0x2e8] sm:$0xf]
    %v309 = vld [vmem:[#allocation9 + $0x2ec] sm:$0xf]
    %v310 = vld [vmem:[#allocation9 + $0x2f0] sm:$0x1]
    %v311 = vld [vmem:[#allocation9 + $0x2f4] sm:$0xf]
    %v312 = vld [vmem:[#allocation9 + $0x2f8] sm:$0xf]
    %v313 = vld [vmem:[#allocation9 + $0x2fc] sm:$0xf]
    %v314 = vld [vmem:[#allocation9 + $0x300] sm:$0xf]
    %v315 = vld [vmem:[#allocation9 + $0x304] sm:$0xf]
    %v316 = vld [vmem:[#allocation9 + $0x308] sm:$0xf]
    %v317 = vld [vmem:[#allocation9 + $0x30c] sm:$0x1]
    %v318 = vld [vmem:[#allocation9 + $0x310] sm:$0xf]
    %v319 = vld [vmem:[#allocation9 + $0x314] sm:$0xf]
    %v320 = vld [vmem:[#allocation9 + $0x318] sm:$0xf]
    %v321 = vld [vmem:[#allocation9 + $0x31c] sm:$0xf]
    %v322 = vld [vmem:[#allocation9 + $0x320] sm:$0xf]
    %v323 = vld [vmem:[#allocation9 + $0x324] sm:$0xf]
    %v324 = vld [vmem:[#allocation9 + $0x328] sm:$0x1]
    %v325 = vld [vmem:[#allocation9 + $0x32c] sm:$0xf]
    %v326 = vld [vmem:[#allocation9 + $0x330] sm:$0xf]
    %v327 = vld [vmem:[#allocation9 + $0x334] sm:$0xf]
    %v328 = vld [vmem:[#allocation9 + $0x338] sm:$0xf]
    %v329 = vld [vmem:[#allocation9 + $0x33c] sm:$0xf]
    %v330 = vld [vmem:[#allocation9 + $0x340] sm:$0xf]
    %v331 = vld [vmem:[#allocation9 + $0x344] sm:$0x1]
    %v332 = vld [vmem:[#allocation9 + $0x348] sm:$0xf]
    %v333 = vld [vmem:[#allocation9 + $0x34c] sm:$0xf]
    %v334 = vld [vmem:[#allocation9 + $0x350] sm:$0xf]
    %v335 = vld [vmem:[#allocation9 + $0x354] sm:$0xf]
    %v336 = vld [vmem:[#allocation9 + $0x358] sm:$0xf]
    %v337 = vld [vmem:[#allocation9 + $0x35c] sm:$0xf]
    %v338 = vld [vmem:[#allocation9 + $0x360] sm:$0x1]
    %v339 = vld [vmem:[#allocation9 + $0x364] sm:$0xf]
    %v340 = vld [vmem:[#allocation9 + $0x368] sm:$0xf]
    %v341 = vld [vmem:[#allocation9 + $0x36c] sm:$0xf]
    %v342 = vld [vmem:[#allocation9 + $0x370] sm:$0xf]
    %v343 = vld [vmem:[#allocation9 + $0x374] sm:$0xf]
    %v344 = vld [vmem:[#allocation9 + $0x378] sm:$0xf]
    %v345 = vld [vmem:[#allocation9 + $0x37c] sm:$0x1]
    %v346 = vunpack.c.l.bf16 %v122
    %v347 = vunpack.c.l.bf16 %v123
    %v348 = vunpack.c.l.bf16 %v124
    %v349 = vunpack.c.l.bf16 %v125
    %v350 = vunpack.c.l.bf16 %v126
    %v351 = vunpack.c.l.bf16 %v127
    %v352 = vunpack.c.l.bf16 %v128
    %v353 = vunpack.c.l.bf16 %v129
    %v354 = vunpack.c.l.bf16 %v130
    %v355 = vunpack.c.l.bf16 %v131
    %v356 = vunpack.c.l.bf16 %v132
    %v357 = vunpack.c.l.bf16 %v133
    %v358 = vunpack.c.l.bf16 %v134
    %v359 = vunpack.c.l.bf16 %v135
    %v360 = vunpack.c.l.bf16 %v136
    %v361 = vunpack.c.l.bf16 %v137
    %v362 = vunpack.c.l.bf16 %v138
    %v363 = vunpack.c.l.bf16 %v139
    %v364 = vunpack.c.l.bf16 %v140
    %v365 = vunpack.c.l.bf16 %v141
    %v366 = vunpack.c.l.bf16 %v142
    %v367 = vunpack.c.l.bf16 %v143
    %v368 = vunpack.c.l.bf16 %v144
    %v369 = vunpack.c.l.bf16 %v145
    %v370 = vunpack.c.l.bf16 %v146
    %v371 = vunpack.c.l.bf16 %v147
    %v372 = vunpack.c.l.bf16 %v148
    %v373 = vunpack.c.l.bf16 %v149
    %v374 = vunpack.c.l.bf16 %v150
    %v375 = vunpack.c.l.bf16 %v151
    %v376 = vunpack.c.l.bf16 %v152
    %v377 = vunpack.c.l.bf16 %v153
    %v378 = vunpack.c.l.bf16 %v154
    %v379 = vunpack.c.l.bf16 %v155
    %v380 = vunpack.c.l.bf16 %v156
    %v381 = vunpack.c.l.bf16 %v157
    %v382 = vunpack.c.l.bf16 %v158
    %v383 = vunpack.c.l.bf16 %v159
    %v384 = vunpack.c.l.bf16 %v160
    %v385 = vunpack.c.l.bf16 %v161
    %v386 = vunpack.c.l.bf16 %v162
    %v387 = vunpack.c.l.bf16 %v163
    %v388 = vunpack.c.l.bf16 %v164
    %v389 = vunpack.c.l.bf16 %v165
    %v390 = vunpack.c.l.bf16 %v166
    %v391 = vunpack.c.l.bf16 %v167
    %v392 = vunpack.c.l.bf16 %v168
    %v393 = vunpack.c.l.bf16 %v169
    %v394 = vunpack.c.l.bf16 %v170
    %v395 = vunpack.c.l.bf16 %v171
    %v396 = vunpack.c.l.bf16 %v172
    %v397 = vunpack.c.l.bf16 %v173
    %v398 = vunpack.c.l.bf16 %v174
    %v399 = vunpack.c.l.bf16 %v175
    %v400 = vunpack.c.l.bf16 %v176
    %v401 = vunpack.c.l.bf16 %v177
    %v402 = vunpack.c.l.bf16 %v178
    %v403 = vunpack.c.l.bf16 %v179
    %v404 = vunpack.c.l.bf16 %v180
    %v405 = vunpack.c.l.bf16 %v181
    %v406 = vunpack.c.l.bf16 %v182
    %v407 = vunpack.c.l.bf16 %v183
    %v408 = vunpack.c.l.bf16 %v184
    %v409 = vunpack.c.l.bf16 %v185
    %v410 = vunpack.c.l.bf16 %v186
    %v411 = vunpack.c.l.bf16 %v187
    %v412 = vunpack.c.l.bf16 %v188
    %v413 = vunpack.c.l.bf16 %v189
    %v414 = vunpack.c.l.bf16 %v190
    %v415 = vunpack.c.l.bf16 %v191
    %v416 = vunpack.c.l.bf16 %v192
    %v417 = vunpack.c.l.bf16 %v193
    %v418 = vunpack.c.l.bf16 %v194
    %v419 = vunpack.c.l.bf16 %v195
    %v420 = vunpack.c.l.bf16 %v196
    %v421 = vunpack.c.l.bf16 %v197
    %v422 = vunpack.c.l.bf16 %v198
    %v423 = vunpack.c.l.bf16 %v199
    %v424 = vunpack.c.l.bf16 %v200
    %v425 = vunpack.c.l.bf16 %v201
    %v426 = vunpack.c.l.bf16 %v202
    %v427 = vunpack.c.l.bf16 %v203
    %v428 = vunpack.c.l.bf16 %v204
    %v429 = vunpack.c.l.bf16 %v205
    %v430 = vunpack.c.l.bf16 %v206
    %v431 = vunpack.c.l.bf16 %v207
    %v432 = vunpack.c.l.bf16 %v208
    %v433 = vunpack.c.l.bf16 %v209
    %v434 = vunpack.c.l.bf16 %v210
    %v435 = vunpack.c.l.bf16 %v211
    %v436 = vunpack.c.l.bf16 %v212
    %v437 = vunpack.c.l.bf16 %v213
    %v438 = vunpack.c.l.bf16 %v214
    %v439 = vunpack.c.l.bf16 %v215
    %v440 = vunpack.c.l.bf16 %v216
    %v441 = vunpack.c.l.bf16 %v217
    %v442 = vunpack.c.l.bf16 %v218
    %v443 = vunpack.c.l.bf16 %v219
    %v444 = vunpack.c.l.bf16 %v220
    %v445 = vunpack.c.l.bf16 %v221
    %v446 = vunpack.c.l.bf16 %v222
    %v447 = vunpack.c.l.bf16 %v223
    %v448 = vunpack.c.l.bf16 %v224
    %v449 = vunpack.c.l.bf16 %v225
    %v450 = vunpack.c.l.bf16 %v226
    %v451 = vunpack.c.l.bf16 %v227
    %v452 = vunpack.c.l.bf16 %v228
    %v453 = vunpack.c.l.bf16 %v229
    %v454 = vunpack.c.l.bf16 %v230
    %v455 = vunpack.c.l.bf16 %v231
    %v456 = vunpack.c.l.bf16 %v232
    %v457 = vunpack.c.l.bf16 %v233
    %v458 = vunpack.c.l.bf16 %v234
    %v459 = vunpack.c.l.bf16 %v235
    %v460 = vunpack.c.l.bf16 %v236
    %v461 = vunpack.c.l.bf16 %v237
    %v462 = vunpack.c.l.bf16 %v238
    %v463 = vunpack.c.l.bf16 %v239
    %v464 = vunpack.c.l.bf16 %v240
    %v465 = vunpack.c.l.bf16 %v241
    %v466 = vunpack.c.l.bf16 %v242
    %v467 = vunpack.c.l.bf16 %v243
    %v468 = vunpack.c.l.bf16 %v244
    %v469 = vunpack.c.l.bf16 %v245
    %v470 = vunpack.c.l.bf16 %v246
    %v471 = vunpack.c.l.bf16 %v247
    %v472 = vunpack.c.l.bf16 %v248
    %v473 = vunpack.c.l.bf16 %v249
    %v474 = vunpack.c.l.bf16 %v250
    %v475 = vunpack.c.l.bf16 %v251
    %v476 = vunpack.c.l.bf16 %v252
    %v477 = vunpack.c.l.bf16 %v253
    %v478 = vunpack.c.l.bf16 %v254
    %v479 = vunpack.c.l.bf16 %v255
    %v480 = vunpack.c.l.bf16 %v256
    %v481 = vunpack.c.l.bf16 %v257
    %v482 = vunpack.c.l.bf16 %v258
    %v483 = vunpack.c.l.bf16 %v259
    %v484 = vunpack.c.l.bf16 %v260
    %v485 = vunpack.c.l.bf16 %v261
    %v486 = vunpack.c.l.bf16 %v262
    %v487 = vunpack.c.l.bf16 %v263
    %v488 = vunpack.c.l.bf16 %v264
    %v489 = vunpack.c.l.bf16 %v265
    %v490 = vunpack.c.l.bf16 %v266
    %v491 = vunpack.c.l.bf16 %v267
    %v492 = vunpack.c.l.bf16 %v268
    %v493 = vunpack.c.l.bf16 %v269
    %v494 = vunpack.c.l.bf16 %v270
    %v495 = vunpack.c.l.bf16 %v271
    %v496 = vunpack.c.l.bf16 %v272
    %v497 = vunpack.c.l.bf16 %v273
    %v498 = vunpack.c.l.bf16 %v274
    %v499 = vunpack.c.l.bf16 %v275
    %v500 = vunpack.c.l.bf16 %v276
    %v501 = vunpack.c.l.bf16 %v277
    %v502 = vunpack.c.l.bf16 %v278
    %v503 = vunpack.c.l.bf16 %v279
    %v504 = vunpack.c.l.bf16 %v280
    %v505 = vunpack.c.l.bf16 %v281
    %v506 = vunpack.c.l.bf16 %v282
    %v507 = vunpack.c.l.bf16 %v283
    %v508 = vunpack.c.l.bf16 %v284
    %v509 = vunpack.c.l.bf16 %v285
    %v510 = vunpack.c.l.bf16 %v286
    %v511 = vunpack.c.l.bf16 %v287
    %v512 = vunpack.c.l.bf16 %v288
    %v513 = vunpack.c.l.bf16 %v289
    %v514 = vunpack.c.l.bf16 %v290
    %v515 = vunpack.c.l.bf16 %v291
    %v516 = vunpack.c.l.bf16 %v292
    %v517 = vunpack.c.l.bf16 %v293
    %v518 = vunpack.c.l.bf16 %v294
    %v519 = vunpack.c.l.bf16 %v295
    %v520 = vunpack.c.l.bf16 %v296
    %v521 = vunpack.c.l.bf16 %v297
    %v522 = vunpack.c.l.bf16 %v298
    %v523 = vunpack.c.l.bf16 %v299
    %v524 = vunpack.c.l.bf16 %v300
    %v525 = vunpack.c.l.bf16 %v301
    %v526 = vunpack.c.l.bf16 %v302
    %v527 = vunpack.c.l.bf16 %v303
    %v528 = vunpack.c.l.bf16 %v304
    %v529 = vunpack.c.l.bf16 %v305
    %v530 = vunpack.c.l.bf16 %v306
    %v531 = vunpack.c.l.bf16 %v307
    %v532 = vunpack.c.l.bf16 %v308
    %v533 = vunpack.c.l.bf16 %v309
    %v534 = vunpack.c.l.bf16 %v310
    %v535 = vunpack.c.l.bf16 %v311
    %v536 = vunpack.c.l.bf16 %v312
    %v537 = vunpack.c.l.bf16 %v313
    %v538 = vunpack.c.l.bf16 %v314
    %v539 = vunpack.c.l.bf16 %v315
    %v540 = vunpack.c.l.bf16 %v316
    %v541 = vunpack.c.l.bf16 %v317
    %v542 = vunpack.c.l.bf16 %v318
    %v543 = vunpack.c.l.bf16 %v319
    %v544 = vunpack.c.l.bf16 %v320
    %v545 = vunpack.c.l.bf16 %v321
    %v546 = vunpack.c.l.bf16 %v322
    %v547 = vunpack.c.l.bf16 %v323
    %v548 = vunpack.c.l.bf16 %v324
    %v549 = vunpack.c.l.bf16 %v325
    %v550 = vunpack.c.l.bf16 %v326
    %v551 = vunpack.c.l.bf16 %v327
    %v552 = vunpack.c.l.bf16 %v328
    %v553 = vunpack.c.l.bf16 %v329
    %v554 = vunpack.c.l.bf16 %v330
    %v555 = vunpack.c.l.bf16 %v331
    %v556 = vunpack.c.l.bf16 %v332
    %v557 = vunpack.c.l.bf16 %v333
    %v558 = vunpack.c.l.bf16 %v334
    %v559 = vunpack.c.l.bf16 %v335
    %v560 = vunpack.c.l.bf16 %v336
    %v561 = vunpack.c.l.bf16 %v337
    %v562 = vunpack.c.l.bf16 %v338
    %v563 = vunpack.c.l.bf16 %v339
    %v564 = vunpack.c.l.bf16 %v340
    %v565 = vunpack.c.l.bf16 %v341
    %v566 = vunpack.c.l.bf16 %v342
    %v567 = vunpack.c.l.bf16 %v343
    %v568 = vunpack.c.l.bf16 %v344
    %v569 = vunpack.c.l.bf16 %v345
    %v602 = vlaneseq
    %v603 = vshrl.u32 %v602, 7
    %v604 = vsub.s32 0, %v603
    %v605 = vrot.slane %v58, %v604
    %v606 = vlaneseq
    %v607 = vshrl.u32 %v606, 7
    %v608 = vsub.s32 0, %v607
    %v609 = vrot.slane %v59, %v608
    %v610 = vlaneseq
    %v611 = vshrl.u32 %v610, 7
    %v612 = vsub.s32 0, %v611
    %v613 = vrot.slane %v60, %v612
    %v614 = vlaneseq
    %v615 = vshrl.u32 %v614, 7
    %v616 = vsub.s32 0, %v615
    %v617 = vrot.slane %v61, %v616
    %v618 = vlaneseq
    %v619 = vshrl.u32 %v618, 7
    %v620 = vsub.s32 0, %v619
    %v621 = vrot.slane %v62, %v620
    %v622 = vlaneseq
    %v623 = vshrl.u32 %v622, 7
    %v624 = vsub.s32 0, %v623
    %v625 = vrot.slane %v63, %v624
    %v626 = vlaneseq
    %v627 = vshrl.u32 %v626, 7
    %v628 = vsub.s32 0, %v627
    %v629 = vrot.slane %v64, %v628
    %v630 = vlaneseq
    %v631 = vshrl.u32 %v630, 7
    %v632 = vsub.s32 0, %v631
    %v633 = vrot.slane %v65, %v632
    %v634 = vlaneseq
    %v635 = vshrl.u32 %v634, 7
    %v636 = vsub.s32 0, %v635
    %v637 = vrot.slane %v66, %v636
    %v638 = vlaneseq
    %v639 = vshrl.u32 %v638, 7
    %v640 = vsub.s32 0, %v639
    %v641 = vrot.slane %v67, %v640
    %v642 = vlaneseq
    %v643 = vshrl.u32 %v642, 7
    %v644 = vsub.s32 0, %v643
    %v645 = vrot.slane %v68, %v644
    %v646 = vlaneseq
    %v647 = vshrl.u32 %v646, 7
    %v648 = vsub.s32 0, %v647
    %v649 = vrot.slane %v69, %v648
    %v650 = vlaneseq
    %v651 = vshrl.u32 %v650, 7
    %v652 = vsub.s32 0, %v651
    %v653 = vrot.slane %v70, %v652
    %v654 = vlaneseq
    %v655 = vshrl.u32 %v654, 7
    %v656 = vsub.s32 0, %v655
    %v657 = vrot.slane %v71, %v656
    %v658 = vlaneseq
    %v659 = vshrl.u32 %v658, 7
    %v660 = vsub.s32 0, %v659
    %v661 = vrot.slane %v72, %v660
    %v662 = vlaneseq
    %v663 = vshrl.u32 %v662, 7
    %v664 = vsub.s32 0, %v663
    %v665 = vrot.slane %v73, %v664
    %v666 = vlaneseq
    %v667 = vshrl.u32 %v666, 7
    %v668 = vsub.s32 0, %v667
    %v669 = vrot.slane %v74, %v668
    %v670 = vlaneseq
    %v671 = vshrl.u32 %v670, 7
    %v672 = vsub.s32 0, %v671
    %v673 = vrot.slane %v75, %v672
    %v674 = vlaneseq
    %v675 = vshrl.u32 %v674, 7
    %v676 = vsub.s32 0, %v675
    %v677 = vrot.slane %v76, %v676
    %v678 = vlaneseq
    %v679 = vshrl.u32 %v678, 7
    %v680 = vsub.s32 0, %v679
    %v681 = vrot.slane %v77, %v680
    %v682 = vlaneseq
    %v683 = vshrl.u32 %v682, 7
    %v684 = vsub.s32 0, %v683
    %v685 = vrot.slane %v78, %v684
    %v686 = vlaneseq
    %v687 = vshrl.u32 %v686, 7
    %v688 = vsub.s32 0, %v687
    %v689 = vrot.slane %v79, %v688
    %v690 = vlaneseq
    %v691 = vshrl.u32 %v690, 7
    %v692 = vsub.s32 0, %v691
    %v693 = vrot.slane %v80, %v692
    %v694 = vlaneseq
    %v695 = vshrl.u32 %v694, 7
    %v696 = vsub.s32 0, %v695
    %v697 = vrot.slane %v81, %v696
    %v698 = vlaneseq
    %v699 = vshrl.u32 %v698, 7
    %v700 = vsub.s32 0, %v699
    %v701 = vrot.slane %v82, %v700
    %v702 = vlaneseq
    %v703 = vshrl.u32 %v702, 7
    %v704 = vsub.s32 0, %v703
    %v705 = vrot.slane %v83, %v704
    %v706 = vlaneseq
    %v707 = vshrl.u32 %v706, 7
    %v708 = vsub.s32 0, %v707
    %v709 = vrot.slane %v84, %v708
    %v710 = vlaneseq
    %v711 = vshrl.u32 %v710, 7
    %v712 = vsub.s32 0, %v711
    %v713 = vrot.slane %v85, %v712
    %v714 = vlaneseq
    %v715 = vshrl.u32 %v714, 7
    %v716 = vsub.s32 0, %v715
    %v717 = vrot.slane %v86, %v716
    %v718 = vlaneseq
    %v719 = vshrl.u32 %v718, 7
    %v720 = vsub.s32 0, %v719
    %v721 = vrot.slane %v87, %v720
    %v722 = vlaneseq
    %v723 = vshrl.u32 %v722, 7
    %v724 = vsub.s32 0, %v723
    %v725 = vrot.slane %v88, %v724
    %v726 = vlaneseq
    %v727 = vshrl.u32 %v726, 7
    %v728 = vsub.s32 0, %v727
    %v729 = vrot.slane %v89, %v728
    %v762 = vsub.f32 %v605, %v346
    %v763 = vsub.f32 %v605, %v347
    %v764 = vsub.f32 %v605, %v348
    %v765 = vsub.f32 %v605, %v349
    %v766 = vsub.f32 %v605, %v350
    %v767 = vsub.f32 %v605, %v351
    %v768 = vsub.f32 %v605, %v352
    %v769 = vsub.f32 %v609, %v353
    %v770 = vsub.f32 %v609, %v354
    %v771 = vsub.f32 %v609, %v355
    %v772 = vsub.f32 %v609, %v356
    %v773 = vsub.f32 %v609, %v357
    %v774 = vsub.f32 %v609, %v358
    %v775 = vsub.f32 %v609, %v359
    %v776 = vsub.f32 %v613, %v360
    %v777 = vsub.f32 %v613, %v361
    %v778 = vsub.f32 %v613, %v362
    %v779 = vsub.f32 %v613, %v363
    %v780 = vsub.f32 %v613, %v364
    %v781 = vsub.f32 %v613, %v365
    %v782 = vsub.f32 %v613, %v366
    %v783 = vsub.f32 %v617, %v367
    %v784 = vsub.f32 %v617, %v368
    %v785 = vsub.f32 %v617, %v369
    %v786 = vsub.f32 %v617, %v370
    %v787 = vsub.f32 %v617, %v371
    %v788 = vsub.f32 %v617, %v372
    %v789 = vsub.f32 %v617, %v373
    %v790 = vsub.f32 %v621, %v374
    %v791 = vsub.f32 %v621, %v375
    %v792 = vsub.f32 %v621, %v376
    %v793 = vsub.f32 %v621, %v377
    %v794 = vsub.f32 %v621, %v378
    %v795 = vsub.f32 %v621, %v379
    %v796 = vsub.f32 %v621, %v380
    %v797 = vsub.f32 %v625, %v381
    %v798 = vsub.f32 %v625, %v382
    %v799 = vsub.f32 %v625, %v383
    %v800 = vsub.f32 %v625, %v384
    %v801 = vsub.f32 %v625, %v385
    %v802 = vsub.f32 %v625, %v386
    %v803 = vsub.f32 %v625, %v387
    %v804 = vsub.f32 %v629, %v388
    %v805 = vsub.f32 %v629, %v389
    %v806 = vsub.f32 %v629, %v390
    %v807 = vsub.f32 %v629, %v391
    %v808 = vsub.f32 %v629, %v392
    %v809 = vsub.f32 %v629, %v393
    %v810 = vsub.f32 %v629, %v394
    %v811 = vsub.f32 %v633, %v395
    %v812 = vsub.f32 %v633, %v396
    %v813 = vsub.f32 %v633, %v397
    %v814 = vsub.f32 %v633, %v398
    %v815 = vsub.f32 %v633, %v399
    %v816 = vsub.f32 %v633, %v400
    %v817 = vsub.f32 %v633, %v401
    %v818 = vsub.f32 %v637, %v402
    %v819 = vsub.f32 %v637, %v403
    %v820 = vsub.f32 %v637, %v404
    %v821 = vsub.f32 %v637, %v405
    %v822 = vsub.f32 %v637, %v406
    %v823 = vsub.f32 %v637, %v407
    %v824 = vsub.f32 %v637, %v408
    %v825 = vsub.f32 %v641, %v409
    %v826 = vsub.f32 %v641, %v410
    %v827 = vsub.f32 %v641, %v411
    %v828 = vsub.f32 %v641, %v412
    %v829 = vsub.f32 %v641, %v413
    %v830 = vsub.f32 %v641, %v414
    %v831 = vsub.f32 %v641, %v415
    %v832 = vsub.f32 %v645, %v416
    %v833 = vsub.f32 %v645, %v417
    %v834 = vsub.f32 %v645, %v418
    %v835 = vsub.f32 %v645, %v419
    %v836 = vsub.f32 %v645, %v420
    %v837 = vsub.f32 %v645, %v421
    %v838 = vsub.f32 %v645, %v422
    %v839 = vsub.f32 %v649, %v423
    %v840 = vsub.f32 %v649, %v424
    %v841 = vsub.f32 %v649, %v425
    %v842 = vsub.f32 %v649, %v426
    %v843 = vsub.f32 %v649, %v427
    %v844 = vsub.f32 %v649, %v428
    %v845 = vsub.f32 %v649, %v429
    %v846 = vsub.f32 %v653, %v430
    %v847 = vsub.f32 %v653, %v431
    %v848 = vsub.f32 %v653, %v432
    %v849 = vsub.f32 %v653, %v433
    %v850 = vsub.f32 %v653, %v434
    %v851 = vsub.f32 %v653, %v435
    %v852 = vsub.f32 %v653, %v436
    %v853 = vsub.f32 %v657, %v437
    %v854 = vsub.f32 %v657, %v438
    %v855 = vsub.f32 %v657, %v439
    %v856 = vsub.f32 %v657, %v440
    %v857 = vsub.f32 %v657, %v441
    %v858 = vsub.f32 %v657, %v442
    %v859 = vsub.f32 %v657, %v443
    %v860 = vsub.f32 %v661, %v444
    %v861 = vsub.f32 %v661, %v445
    %v862 = vsub.f32 %v661, %v446
    %v863 = vsub.f32 %v661, %v447
    %v864 = vsub.f32 %v661, %v448
    %v865 = vsub.f32 %v661, %v449
    %v866 = vsub.f32 %v661, %v450
    %v867 = vsub.f32 %v665, %v451
    %v868 = vsub.f32 %v665, %v452
    %v869 = vsub.f32 %v665, %v453
    %v870 = vsub.f32 %v665, %v454
    %v871 = vsub.f32 %v665, %v455
    %v872 = vsub.f32 %v665, %v456
    %v873 = vsub.f32 %v665, %v457
    %v874 = vsub.f32 %v669, %v458
    %v875 = vsub.f32 %v669, %v459
    %v876 = vsub.f32 %v669, %v460
    %v877 = vsub.f32 %v669, %v461
    %v878 = vsub.f32 %v669, %v462
    %v879 = vsub.f32 %v669, %v463
    %v880 = vsub.f32 %v669, %v464
    %v881 = vsub.f32 %v673, %v465
    %v882 = vsub.f32 %v673, %v466
    %v883 = vsub.f32 %v673, %v467
    %v884 = vsub.f32 %v673, %v468
    %v885 = vsub.f32 %v673, %v469
    %v886 = vsub.f32 %v673, %v470
    %v887 = vsub.f32 %v673, %v471
    %v888 = vsub.f32 %v677, %v472
    %v889 = vsub.f32 %v677, %v473
    %v890 = vsub.f32 %v677, %v474
    %v891 = vsub.f32 %v677, %v475
    %v892 = vsub.f32 %v677, %v476
    %v893 = vsub.f32 %v677, %v477
    %v894 = vsub.f32 %v677, %v478
    %v895 = vsub.f32 %v681, %v479
    %v896 = vsub.f32 %v681, %v480
    %v897 = vsub.f32 %v681, %v481
    %v898 = vsub.f32 %v681, %v482
    %v899 = vsub.f32 %v681, %v483
    %v900 = vsub.f32 %v681, %v484
    %v901 = vsub.f32 %v681, %v485
    %v902 = vsub.f32 %v685, %v486
    %v903 = vsub.f32 %v685, %v487
    %v904 = vsub.f32 %v685, %v488
    %v905 = vsub.f32 %v685, %v489
    %v906 = vsub.f32 %v685, %v490
    %v907 = vsub.f32 %v685, %v491
    %v908 = vsub.f32 %v685, %v492
    %v909 = vsub.f32 %v689, %v493
    %v910 = vsub.f32 %v689, %v494
    %v911 = vsub.f32 %v689, %v495
    %v912 = vsub.f32 %v689, %v496
    %v913 = vsub.f32 %v689, %v497
    %v914 = vsub.f32 %v689, %v498
    %v915 = vsub.f32 %v689, %v499
    %v916 = vsub.f32 %v693, %v500
    %v917 = vsub.f32 %v693, %v501
    %v918 = vsub.f32 %v693, %v502
    %v919 = vsub.f32 %v693, %v503
    %v920 = vsub.f32 %v693, %v504
    %v921 = vsub.f32 %v693, %v505
    %v922 = vsub.f32 %v693, %v506
    %v923 = vsub.f32 %v697, %v507
    %v924 = vsub.f32 %v697, %v508
    %v925 = vsub.f32 %v697, %v509
    %v926 = vsub.f32 %v697, %v510
    %v927 = vsub.f32 %v697, %v511
    %v928 = vsub.f32 %v697, %v512
    %v929 = vsub.f32 %v697, %v513
    %v930 = vsub.f32 %v701, %v514
    %v931 = vsub.f32 %v701, %v515
    %v932 = vsub.f32 %v701, %v516
    %v933 = vsub.f32 %v701, %v517
    %v934 = vsub.f32 %v701, %v518
    %v935 = vsub.f32 %v701, %v519
    %v936 = vsub.f32 %v701, %v520
    %v937 = vsub.f32 %v705, %v521
    %v938 = vsub.f32 %v705, %v522
    %v939 = vsub.f32 %v705, %v523
    %v940 = vsub.f32 %v705, %v524
    %v941 = vsub.f32 %v705, %v525
    %v942 = vsub.f32 %v705, %v526
    %v943 = vsub.f32 %v705, %v527
    %v944 = vsub.f32 %v709, %v528
    %v945 = vsub.f32 %v709, %v529
    %v946 = vsub.f32 %v709, %v530
    %v947 = vsub.f32 %v709, %v531
    %v948 = vsub.f32 %v709, %v532
    %v949 = vsub.f32 %v709, %v533
    %v950 = vsub.f32 %v709, %v534
    %v951 = vsub.f32 %v713, %v535
    %v952 = vsub.f32 %v713, %v536
    %v953 = vsub.f32 %v713, %v537
    %v954 = vsub.f32 %v713, %v538
    %v955 = vsub.f32 %v713, %v539
    %v956 = vsub.f32 %v713, %v540
    %v957 = vsub.f32 %v713, %v541
    %v958 = vsub.f32 %v717, %v542
    %v959 = vsub.f32 %v717, %v543
    %v960 = vsub.f32 %v717, %v544
    %v961 = vsub.f32 %v717, %v545
    %v962 = vsub.f32 %v717, %v546
    %v963 = vsub.f32 %v717, %v547
    %v964 = vsub.f32 %v717, %v548
    %v965 = vsub.f32 %v721, %v549
    %v966 = vsub.f32 %v721, %v550
    %v967 = vsub.f32 %v721, %v551
    %v968 = vsub.f32 %v721, %v552
    %v969 = vsub.f32 %v721, %v553
    %v970 = vsub.f32 %v721, %v554
    %v971 = vsub.f32 %v721, %v555
    %v972 = vsub.f32 %v725, %v556
    %v973 = vsub.f32 %v725, %v557
    %v974 = vsub.f32 %v725, %v558
    %v975 = vsub.f32 %v725, %v559
    %v976 = vsub.f32 %v725, %v560
    %v977 = vsub.f32 %v725, %v561
    %v978 = vsub.f32 %v725, %v562
    %v979 = vsub.f32 %v729, %v563
    %v980 = vsub.f32 %v729, %v564
    %v981 = vsub.f32 %v729, %v565
    %v982 = vsub.f32 %v729, %v566
    %v983 = vsub.f32 %v729, %v567
    %v984 = vsub.f32 %v729, %v568
    %v985 = vsub.f32 %v729, %v569
    %v1018 = vlaneseq
    %v1019 = vshrl.u32 %v1018, 7
    %v1020 = vsub.s32 0, %v1019
    %v1021 = vrot.slane %v90, %v1020
    %v1022 = vlaneseq
    %v1023 = vshrl.u32 %v1022, 7
    %v1024 = vsub.s32 0, %v1023
    %v1025 = vrot.slane %v91, %v1024
    %v1026 = vlaneseq
    %v1027 = vshrl.u32 %v1026, 7
    %v1028 = vsub.s32 0, %v1027
    %v1029 = vrot.slane %v92, %v1028
    %v1030 = vlaneseq
    %v1031 = vshrl.u32 %v1030, 7
    %v1032 = vsub.s32 0, %v1031
    %v1033 = vrot.slane %v93, %v1032
    %v1034 = vlaneseq
    %v1035 = vshrl.u32 %v1034, 7
    %v1036 = vsub.s32 0, %v1035
    %v1037 = vrot.slane %v94, %v1036
    %v1038 = vlaneseq
    %v1039 = vshrl.u32 %v1038, 7
    %v1040 = vsub.s32 0, %v1039
    %v1041 = vrot.slane %v95, %v1040
    %v1042 = vlaneseq
    %v1043 = vshrl.u32 %v1042, 7
    %v1044 = vsub.s32 0, %v1043
    %v1045 = vrot.slane %v96, %v1044
    %v1046 = vlaneseq
    %v1047 = vshrl.u32 %v1046, 7
    %v1048 = vsub.s32 0, %v1047
    %v1049 = vrot.slane %v97, %v1048
    %v1050 = vlaneseq
    %v1051 = vshrl.u32 %v1050, 7
    %v1052 = vsub.s32 0, %v1051
    %v1053 = vrot.slane %v98, %v1052
    %v1054 = vlaneseq
    %v1055 = vshrl.u32 %v1054, 7
    %v1056 = vsub.s32 0, %v1055
    %v1057 = vrot.slane %v99, %v1056
    %v1058 = vlaneseq
    %v1059 = vshrl.u32 %v1058, 7
    %v1060 = vsub.s32 0, %v1059
    %v1061 = vrot.slane %v100, %v1060
    %v1062 = vlaneseq
    %v1063 = vshrl.u32 %v1062, 7
    %v1064 = vsub.s32 0, %v1063
    %v1065 = vrot.slane %v101, %v1064
    %v1066 = vlaneseq
    %v1067 = vshrl.u32 %v1066, 7
    %v1068 = vsub.s32 0, %v1067
    %v1069 = vrot.slane %v102, %v1068
    %v1070 = vlaneseq
    %v1071 = vshrl.u32 %v1070, 7
    %v1072 = vsub.s32 0, %v1071
    %v1073 = vrot.slane %v103, %v1072
    %v1074 = vlaneseq
    %v1075 = vshrl.u32 %v1074, 7
    %v1076 = vsub.s32 0, %v1075
    %v1077 = vrot.slane %v104, %v1076
    %v1078 = vlaneseq
    %v1079 = vshrl.u32 %v1078, 7
    %v1080 = vsub.s32 0, %v1079
    %v1081 = vrot.slane %v105, %v1080
    %v1082 = vlaneseq
    %v1083 = vshrl.u32 %v1082, 7
    %v1084 = vsub.s32 0, %v1083
    %v1085 = vrot.slane %v106, %v1084
    %v1086 = vlaneseq
    %v1087 = vshrl.u32 %v1086, 7
    %v1088 = vsub.s32 0, %v1087
    %v1089 = vrot.slane %v107, %v1088
    %v1090 = vlaneseq
    %v1091 = vshrl.u32 %v1090, 7
    %v1092 = vsub.s32 0, %v1091
    %v1093 = vrot.slane %v108, %v1092
    %v1094 = vlaneseq
    %v1095 = vshrl.u32 %v1094, 7
    %v1096 = vsub.s32 0, %v1095
    %v1097 = vrot.slane %v109, %v1096
    %v1098 = vlaneseq
    %v1099 = vshrl.u32 %v1098, 7
    %v1100 = vsub.s32 0, %v1099
    %v1101 = vrot.slane %v110, %v1100
    %v1102 = vlaneseq
    %v1103 = vshrl.u32 %v1102, 7
    %v1104 = vsub.s32 0, %v1103
    %v1105 = vrot.slane %v111, %v1104
    %v1106 = vlaneseq
    %v1107 = vshrl.u32 %v1106, 7
    %v1108 = vsub.s32 0, %v1107
    %v1109 = vrot.slane %v112, %v1108
    %v1110 = vlaneseq
    %v1111 = vshrl.u32 %v1110, 7
    %v1112 = vsub.s32 0, %v1111
    %v1113 = vrot.slane %v113, %v1112
    %v1114 = vlaneseq
    %v1115 = vshrl.u32 %v1114, 7
    %v1116 = vsub.s32 0, %v1115
    %v1117 = vrot.slane %v114, %v1116
    %v1118 = vlaneseq
    %v1119 = vshrl.u32 %v1118, 7
    %v1120 = vsub.s32 0, %v1119
    %v1121 = vrot.slane %v115, %v1120
    %v1122 = vlaneseq
    %v1123 = vshrl.u32 %v1122, 7
    %v1124 = vsub.s32 0, %v1123
    %v1125 = vrot.slane %v116, %v1124
    %v1126 = vlaneseq
    %v1127 = vshrl.u32 %v1126, 7
    %v1128 = vsub.s32 0, %v1127
    %v1129 = vrot.slane %v117, %v1128
    %v1130 = vlaneseq
    %v1131 = vshrl.u32 %v1130, 7
    %v1132 = vsub.s32 0, %v1131
    %v1133 = vrot.slane %v118, %v1132
    %v1134 = vlaneseq
    %v1135 = vshrl.u32 %v1134, 7
    %v1136 = vsub.s32 0, %v1135
    %v1137 = vrot.slane %v119, %v1136
    %v1138 = vlaneseq
    %v1139 = vshrl.u32 %v1138, 7
    %v1140 = vsub.s32 0, %v1139
    %v1141 = vrot.slane %v120, %v1140
    %v1142 = vlaneseq
    %v1143 = vshrl.u32 %v1142, 7
    %v1144 = vsub.s32 0, %v1143
    %v1145 = vrot.slane %v121, %v1144
    %v1178 = vmul.f32 %v762, %v1021
    %v1179 = vmul.f32 %v763, %v1021
    %v1180 = vmul.f32 %v764, %v1021
    %v1181 = vmul.f32 %v765, %v1021
    %v1182 = vmul.f32 %v766, %v1021
    %v1183 = vmul.f32 %v767, %v1021
    %v1184 = vmul.f32 %v768, %v1021
    %v1185 = vmul.f32 %v769, %v1025
    %v1186 = vmul.f32 %v770, %v1025
    %v1187 = vmul.f32 %v771, %v1025
    %v1188 = vmul.f32 %v772, %v1025
    %v1189 = vmul.f32 %v773, %v1025
    %v1190 = vmul.f32 %v774, %v1025
    %v1191 = vmul.f32 %v775, %v1025
    %v1192 = vmul.f32 %v776, %v1029
    %v1193 = vmul.f32 %v777, %v1029
    %v1194 = vmul.f32 %v778, %v1029
    %v1195 = vmul.f32 %v779, %v1029
    %v1196 = vmul.f32 %v780, %v1029
    %v1197 = vmul.f32 %v781, %v1029
    %v1198 = vmul.f32 %v782, %v1029
    %v1199 = vmul.f32 %v783, %v1033
    %v1200 = vmul.f32 %v784, %v1033
    %v1201 = vmul.f32 %v785, %v1033
    %v1202 = vmul.f32 %v786, %v1033
    %v1203 = vmul.f32 %v787, %v1033
    %v1204 = vmul.f32 %v788, %v1033
    %v1205 = vmul.f32 %v789, %v1033
    %v1206 = vmul.f32 %v790, %v1037
    %v1207 = vmul.f32 %v791, %v1037
    %v1208 = vmul.f32 %v792, %v1037
    %v1209 = vmul.f32 %v793, %v1037
    %v1210 = vmul.f32 %v794, %v1037
    %v1211 = vmul.f32 %v795, %v1037
    %v1212 = vmul.f32 %v796, %v1037
    %v1213 = vmul.f32 %v797, %v1041
    %v1214 = vmul.f32 %v798, %v1041
    %v1215 = vmul.f32 %v799, %v1041
    %v1216 = vmul.f32 %v800, %v1041
    %v1217 = vmul.f32 %v801, %v1041
    %v1218 = vmul.f32 %v802, %v1041
    %v1219 = vmul.f32 %v803, %v1041
    %v1220 = vmul.f32 %v804, %v1045
    %v1221 = vmul.f32 %v805, %v1045
    %v1222 = vmul.f32 %v806, %v1045
    %v1223 = vmul.f32 %v807, %v1045
    %v1224 = vmul.f32 %v808, %v1045
    %v1225 = vmul.f32 %v809, %v1045
    %v1226 = vmul.f32 %v810, %v1045
    %v1227 = vmul.f32 %v811, %v1049
    %v1228 = vmul.f32 %v812, %v1049
    %v1229 = vmul.f32 %v813, %v1049
    %v1230 = vmul.f32 %v814, %v1049
    %v1231 = vmul.f32 %v815, %v1049
    %v1232 = vmul.f32 %v816, %v1049
    %v1233 = vmul.f32 %v817, %v1049
    %v1234 = vmul.f32 %v818, %v1053
    %v1235 = vmul.f32 %v819, %v1053
    %v1236 = vmul.f32 %v820, %v1053
    %v1237 = vmul.f32 %v821, %v1053
    %v1238 = vmul.f32 %v822, %v1053
    %v1239 = vmul.f32 %v823, %v1053
    %v1240 = vmul.f32 %v824, %v1053
    %v1241 = vmul.f32 %v825, %v1057
    %v1242 = vmul.f32 %v826, %v1057
    %v1243 = vmul.f32 %v827, %v1057
    %v1244 = vmul.f32 %v828, %v1057
    %v1245 = vmul.f32 %v829, %v1057
    %v1246 = vmul.f32 %v830, %v1057
    %v1247 = vmul.f32 %v831, %v1057
    %v1248 = vmul.f32 %v832, %v1061
    %v1249 = vmul.f32 %v833, %v1061
    %v1250 = vmul.f32 %v834, %v1061
    %v1251 = vmul.f32 %v835, %v1061
    %v1252 = vmul.f32 %v836, %v1061
    %v1253 = vmul.f32 %v837, %v1061
    %v1254 = vmul.f32 %v838, %v1061
    %v1255 = vmul.f32 %v839, %v1065
    %v1256 = vmul.f32 %v840, %v1065
    %v1257 = vmul.f32 %v841, %v1065
    %v1258 = vmul.f32 %v842, %v1065
    %v1259 = vmul.f32 %v843, %v1065
    %v1260 = vmul.f32 %v844, %v1065
    %v1261 = vmul.f32 %v845, %v1065
    %v1262 = vmul.f32 %v846, %v1069
    %v1263 = vmul.f32 %v847, %v1069
    %v1264 = vmul.f32 %v848, %v1069
    %v1265 = vmul.f32 %v849, %v1069
    %v1266 = vmul.f32 %v850, %v1069
    %v1267 = vmul.f32 %v851, %v1069
    %v1268 = vmul.f32 %v852, %v1069
    %v1269 = vmul.f32 %v853, %v1073
    %v1270 = vmul.f32 %v854, %v1073
    %v1271 = vmul.f32 %v855, %v1073
    %v1272 = vmul.f32 %v856, %v1073
    %v1273 = vmul.f32 %v857, %v1073
    %v1274 = vmul.f32 %v858, %v1073
    %v1275 = vmul.f32 %v859, %v1073
    %v1276 = vmul.f32 %v860, %v1077
    %v1277 = vmul.f32 %v861, %v1077
    %v1278 = vmul.f32 %v862, %v1077
    %v1279 = vmul.f32 %v863, %v1077
    %v1280 = vmul.f32 %v864, %v1077
    %v1281 = vmul.f32 %v865, %v1077
    %v1282 = vmul.f32 %v866, %v1077
    %v1283 = vmul.f32 %v867, %v1081
    %v1284 = vmul.f32 %v868, %v1081
    %v1285 = vmul.f32 %v869, %v1081
    %v1286 = vmul.f32 %v870, %v1081
    %v1287 = vmul.f32 %v871, %v1081
    %v1288 = vmul.f32 %v872, %v1081
    %v1289 = vmul.f32 %v873, %v1081
    %v1290 = vmul.f32 %v874, %v1085
    %v1291 = vmul.f32 %v875, %v1085
    %v1292 = vmul.f32 %v876, %v1085
    %v1293 = vmul.f32 %v877, %v1085
    %v1294 = vmul.f32 %v878, %v1085
    %v1295 = vmul.f32 %v879, %v1085
    %v1296 = vmul.f32 %v880, %v1085
    %v1297 = vmul.f32 %v881, %v1089
    %v1298 = vmul.f32 %v882, %v1089
    %v1299 = vmul.f32 %v883, %v1089
    %v1300 = vmul.f32 %v884, %v1089
    %v1301 = vmul.f32 %v885, %v1089
    %v1302 = vmul.f32 %v886, %v1089
    %v1303 = vmul.f32 %v887, %v1089
    %v1304 = vmul.f32 %v888, %v1093
    %v1305 = vmul.f32 %v889, %v1093
    %v1306 = vmul.f32 %v890, %v1093
    %v1307 = vmul.f32 %v891, %v1093
    %v1308 = vmul.f32 %v892, %v1093
    %v1309 = vmul.f32 %v893, %v1093
    %v1310 = vmul.f32 %v894, %v1093
    %v1311 = vmul.f32 %v895, %v1097
    %v1312 = vmul.f32 %v896, %v1097
    %v1313 = vmul.f32 %v897, %v1097
    %v1314 = vmul.f32 %v898, %v1097
    %v1315 = vmul.f32 %v899, %v1097
    %v1316 = vmul.f32 %v900, %v1097
    %v1317 = vmul.f32 %v901, %v1097
    %v1318 = vmul.f32 %v902, %v1101
    %v1319 = vmul.f32 %v903, %v1101
    %v1320 = vmul.f32 %v904, %v1101
    %v1321 = vmul.f32 %v905, %v1101
    %v1322 = vmul.f32 %v906, %v1101
    %v1323 = vmul.f32 %v907, %v1101
    %v1324 = vmul.f32 %v908, %v1101
    %v1325 = vmul.f32 %v909, %v1105
    %v1326 = vmul.f32 %v910, %v1105
    %v1327 = vmul.f32 %v911, %v1105
    %v1328 = vmul.f32 %v912, %v1105
    %v1329 = vmul.f32 %v913, %v1105
    %v1330 = vmul.f32 %v914, %v1105
    %v1331 = vmul.f32 %v915, %v1105
    %v1332 = vmul.f32 %v916, %v1109
    %v1333 = vmul.f32 %v917, %v1109
    %v1334 = vmul.f32 %v918, %v1109
    %v1335 = vmul.f32 %v919, %v1109
    %v1336 = vmul.f32 %v920, %v1109
    %v1337 = vmul.f32 %v921, %v1109
    %v1338 = vmul.f32 %v922, %v1109
    %v1339 = vmul.f32 %v923, %v1113
    %v1340 = vmul.f32 %v924, %v1113
    %v1341 = vmul.f32 %v925, %v1113
    %v1342 = vmul.f32 %v926, %v1113
    %v1343 = vmul.f32 %v927, %v1113
    %v1344 = vmul.f32 %v928, %v1113
    %v1345 = vmul.f32 %v929, %v1113
    %v1346 = vmul.f32 %v930, %v1117
    %v1347 = vmul.f32 %v931, %v1117
    %v1348 = vmul.f32 %v932, %v1117
    %v1349 = vmul.f32 %v933, %v1117
    %v1350 = vmul.f32 %v934, %v1117
    %v1351 = vmul.f32 %v935, %v1117
    %v1352 = vmul.f32 %v936, %v1117
    %v1353 = vmul.f32 %v937, %v1121
    %v1354 = vmul.f32 %v938, %v1121
    %v1355 = vmul.f32 %v939, %v1121
    %v1356 = vmul.f32 %v940, %v1121
    %v1357 = vmul.f32 %v941, %v1121
    %v1358 = vmul.f32 %v942, %v1121
    %v1359 = vmul.f32 %v943, %v1121
    %v1360 = vmul.f32 %v944, %v1125
    %v1361 = vmul.f32 %v945, %v1125
    %v1362 = vmul.f32 %v946, %v1125
    %v1363 = vmul.f32 %v947, %v1125
    %v1364 = vmul.f32 %v948, %v1125
    %v1365 = vmul.f32 %v949, %v1125
    %v1366 = vmul.f32 %v950, %v1125
    %v1367 = vmul.f32 %v951, %v1129
    %v1368 = vmul.f32 %v952, %v1129
    %v1369 = vmul.f32 %v953, %v1129
    %v1370 = vmul.f32 %v954, %v1129
    %v1371 = vmul.f32 %v955, %v1129
    %v1372 = vmul.f32 %v956, %v1129
    %v1373 = vmul.f32 %v957, %v1129
    %v1374 = vmul.f32 %v958, %v1133
    %v1375 = vmul.f32 %v959, %v1133
    %v1376 = vmul.f32 %v960, %v1133
    %v1377 = vmul.f32 %v961, %v1133
    %v1378 = vmul.f32 %v962, %v1133
    %v1379 = vmul.f32 %v963, %v1133
    %v1380 = vmul.f32 %v964, %v1133
    %v1381 = vmul.f32 %v965, %v1137
    %v1382 = vmul.f32 %v966, %v1137
    %v1383 = vmul.f32 %v967, %v1137
    %v1384 = vmul.f32 %v968, %v1137
    %v1385 = vmul.f32 %v969, %v1137
    %v1386 = vmul.f32 %v970, %v1137
    %v1387 = vmul.f32 %v971, %v1137
    %v1388 = vmul.f32 %v972, %v1141
    %v1389 = vmul.f32 %v973, %v1141
    %v1390 = vmul.f32 %v974, %v1141
    %v1391 = vmul.f32 %v975, %v1141
    %v1392 = vmul.f32 %v976, %v1141
    %v1393 = vmul.f32 %v977, %v1141
    %v1394 = vmul.f32 %v978, %v1141
    %v1395 = vmul.f32 %v979, %v1145
    %v1396 = vmul.f32 %v980, %v1145
    %v1397 = vmul.f32 %v981, %v1145
    %v1398 = vmul.f32 %v982, %v1145
    %v1399 = vmul.f32 %v983, %v1145
    %v1400 = vmul.f32 %v984, %v1145
    %v1401 = vmul.f32 %v985, %v1145
    %vm1402 = vcmask 15360
    %v1403 = vsel %vm1402, %v1178, 0.0
    %v1404 = vsel %vm1402, %v1185, 0.0
    %v1405 = vadd.f32 %v1403, %v1404
    %v1406 = vsel %vm1402, %v1192, 0.0
    %v1407 = vadd.f32 %v1405, %v1406
    %v1408 = vsel %vm1402, %v1199, 0.0
    %v1409 = vadd.f32 %v1407, %v1408
    %v1410 = vsel %vm1402, %v1206, 0.0
    %v1411 = vadd.f32 %v1409, %v1410
    %v1412 = vsel %vm1402, %v1213, 0.0
    %v1413 = vadd.f32 %v1411, %v1412
    %v1414 = vsel %vm1402, %v1220, 0.0
    %v1415 = vadd.f32 %v1413, %v1414
    %v1416 = vsel %vm1402, %v1227, 0.0
    %v1417 = vadd.f32 %v1415, %v1416
    %v1418 = vsel %vm1402, %v1234, 0.0
    %v1419 = vadd.f32 %v1417, %v1418
    %v1420 = vsel %vm1402, %v1241, 0.0
    %v1421 = vadd.f32 %v1419, %v1420
    %v1422 = vsel %vm1402, %v1248, 0.0
    %v1423 = vadd.f32 %v1421, %v1422
    %v1424 = vsel %vm1402, %v1255, 0.0
    %v1425 = vadd.f32 %v1423, %v1424
    %v1426 = vsel %vm1402, %v1262, 0.0
    %v1427 = vadd.f32 %v1425, %v1426
    %v1428 = vsel %vm1402, %v1269, 0.0
    %v1429 = vadd.f32 %v1427, %v1428
    %v1430 = vsel %vm1402, %v1276, 0.0
    %v1431 = vadd.f32 %v1429, %v1430
    %v1432 = vsel %vm1402, %v1283, 0.0
    %v1433 = vadd.f32 %v1431, %v1432
    %v1434 = vsel %vm1402, %v1290, 0.0
    %v1435 = vadd.f32 %v1433, %v1434
    %v1436 = vsel %vm1402, %v1297, 0.0
    %v1437 = vadd.f32 %v1435, %v1436
    %v1438 = vsel %vm1402, %v1304, 0.0
    %v1439 = vadd.f32 %v1437, %v1438
    %v1440 = vsel %vm1402, %v1311, 0.0
    %v1441 = vadd.f32 %v1439, %v1440
    %v1442 = vsel %vm1402, %v1318, 0.0
    %v1443 = vadd.f32 %v1441, %v1442
    %v1444 = vsel %vm1402, %v1325, 0.0
    %v1445 = vadd.f32 %v1443, %v1444
    %v1446 = vsel %vm1402, %v1332, 0.0
    %v1447 = vadd.f32 %v1445, %v1446
    %v1448 = vsel %vm1402, %v1339, 0.0
    %v1449 = vadd.f32 %v1447, %v1448
    %v1450 = vsel %vm1402, %v1346, 0.0
    %v1451 = vadd.f32 %v1449, %v1450
    %v1452 = vsel %vm1402, %v1353, 0.0
    %v1453 = vadd.f32 %v1451, %v1452
    %v1454 = vsel %vm1402, %v1360, 0.0
    %v1455 = vadd.f32 %v1453, %v1454
    %v1456 = vsel %vm1402, %v1367, 0.0
    %v1457 = vadd.f32 %v1455, %v1456
    %v1458 = vsel %vm1402, %v1374, 0.0
    %v1459 = vadd.f32 %v1457, %v1458
    %v1460 = vsel %vm1402, %v1381, 0.0
    %v1461 = vadd.f32 %v1459, %v1460
    %v1462 = vsel %vm1402, %v1388, 0.0
    %v1463 = vadd.f32 %v1461, %v1462
    %v1464 = vsel %vm1402, %v1395, 0.0
    %v1465 = vadd.f32 %v1463, %v1464
    %v1466 = vsel %vm1402, %v1179, 0.0
    %v1467 = vsel %vm1402, %v1186, 0.0
    %v1468 = vadd.f32 %v1466, %v1467
    %v1469 = vsel %vm1402, %v1193, 0.0
    %v1470 = vadd.f32 %v1468, %v1469
    %v1471 = vsel %vm1402, %v1200, 0.0
    %v1472 = vadd.f32 %v1470, %v1471
    %v1473 = vsel %vm1402, %v1207, 0.0
    %v1474 = vadd.f32 %v1472, %v1473
    %v1475 = vsel %vm1402, %v1214, 0.0
    %v1476 = vadd.f32 %v1474, %v1475
    %v1477 = vsel %vm1402, %v1221, 0.0
    %v1478 = vadd.f32 %v1476, %v1477
    %v1479 = vsel %vm1402, %v1228, 0.0
    %v1480 = vadd.f32 %v1478, %v1479
    %v1481 = vsel %vm1402, %v1235, 0.0
    %v1482 = vadd.f32 %v1480, %v1481
    %v1483 = vsel %vm1402, %v1242, 0.0
    %v1484 = vadd.f32 %v1482, %v1483
    %v1485 = vsel %vm1402, %v1249, 0.0
    %v1486 = vadd.f32 %v1484, %v1485
    %v1487 = vsel %vm1402, %v1256, 0.0
    %v1488 = vadd.f32 %v1486, %v1487
    %v1489 = vsel %vm1402, %v1263, 0.0
    %v1490 = vadd.f32 %v1488, %v1489
    %v1491 = vsel %vm1402, %v1270, 0.0
    %v1492 = vadd.f32 %v1490, %v1491
    %v1493 = vsel %vm1402, %v1277, 0.0
    %v1494 = vadd.f32 %v1492, %v1493
    %v1495 = vsel %vm1402, %v1284, 0.0
    %v1496 = vadd.f32 %v1494, %v1495
    %v1497 = vsel %vm1402, %v1291, 0.0
    %v1498 = vadd.f32 %v1496, %v1497
    %v1499 = vsel %vm1402, %v1298, 0.0
    %v1500 = vadd.f32 %v1498, %v1499
    %v1501 = vsel %vm1402, %v1305, 0.0
    %v1502 = vadd.f32 %v1500, %v1501
    %v1503 = vsel %vm1402, %v1312, 0.0
    %v1504 = vadd.f32 %v1502, %v1503
    %v1505 = vsel %vm1402, %v1319, 0.0
    %v1506 = vadd.f32 %v1504, %v1505
    %v1507 = vsel %vm1402, %v1326, 0.0
    %v1508 = vadd.f32 %v1506, %v1507
    %v1509 = vsel %vm1402, %v1333, 0.0
    %v1510 = vadd.f32 %v1508, %v1509
    %v1511 = vsel %vm1402, %v1340, 0.0
    %v1512 = vadd.f32 %v1510, %v1511
    %v1513 = vsel %vm1402, %v1347, 0.0
    %v1514 = vadd.f32 %v1512, %v1513
    %v1515 = vsel %vm1402, %v1354, 0.0
    %v1516 = vadd.f32 %v1514, %v1515
    %v1517 = vsel %vm1402, %v1361, 0.0
    %v1518 = vadd.f32 %v1516, %v1517
    %v1519 = vsel %vm1402, %v1368, 0.0
    %v1520 = vadd.f32 %v1518, %v1519
    %v1521 = vsel %vm1402, %v1375, 0.0
    %v1522 = vadd.f32 %v1520, %v1521
    %v1523 = vsel %vm1402, %v1382, 0.0
    %v1524 = vadd.f32 %v1522, %v1523
    %v1525 = vsel %vm1402, %v1389, 0.0
    %v1526 = vadd.f32 %v1524, %v1525
    %v1527 = vsel %vm1402, %v1396, 0.0
    %v1528 = vadd.f32 %v1526, %v1527
    %v1529 = vsel %vm1402, %v1180, 0.0
    %v1530 = vsel %vm1402, %v1187, 0.0
    %v1531 = vadd.f32 %v1529, %v1530
    %v1532 = vsel %vm1402, %v1194, 0.0
    %v1533 = vadd.f32 %v1531, %v1532
    %v1534 = vsel %vm1402, %v1201, 0.0
    %v1535 = vadd.f32 %v1533, %v1534
    %v1536 = vsel %vm1402, %v1208, 0.0
    %v1537 = vadd.f32 %v1535, %v1536
    %v1538 = vsel %vm1402, %v1215, 0.0
    %v1539 = vadd.f32 %v1537, %v1538
    %v1540 = vsel %vm1402, %v1222, 0.0
    %v1541 = vadd.f32 %v1539, %v1540
    %v1542 = vsel %vm1402, %v1229, 0.0
    %v1543 = vadd.f32 %v1541, %v1542
    %v1544 = vsel %vm1402, %v1236, 0.0
    %v1545 = vadd.f32 %v1543, %v1544
    %v1546 = vsel %vm1402, %v1243, 0.0
    %v1547 = vadd.f32 %v1545, %v1546
    %v1548 = vsel %vm1402, %v1250, 0.0
    %v1549 = vadd.f32 %v1547, %v1548
    %v1550 = vsel %vm1402, %v1257, 0.0
    %v1551 = vadd.f32 %v1549, %v1550
    %v1552 = vsel %vm1402, %v1264, 0.0
    %v1553 = vadd.f32 %v1551, %v1552
    %v1554 = vsel %vm1402, %v1271, 0.0
    %v1555 = vadd.f32 %v1553, %v1554
    %v1556 = vsel %vm1402, %v1278, 0.0
    %v1557 = vadd.f32 %v1555, %v1556
    %v1558 = vsel %vm1402, %v1285, 0.0
    %v1559 = vadd.f32 %v1557, %v1558
    %v1560 = vsel %vm1402, %v1292, 0.0
    %v1561 = vadd.f32 %v1559, %v1560
    %v1562 = vsel %vm1402, %v1299, 0.0
    %v1563 = vadd.f32 %v1561, %v1562
    %v1564 = vsel %vm1402, %v1306, 0.0
    %v1565 = vadd.f32 %v1563, %v1564
    %v1566 = vsel %vm1402, %v1313, 0.0
    %v1567 = vadd.f32 %v1565, %v1566
    %v1568 = vsel %vm1402, %v1320, 0.0
    %v1569 = vadd.f32 %v1567, %v1568
    %v1570 = vsel %vm1402, %v1327, 0.0
    %v1571 = vadd.f32 %v1569, %v1570
    %v1572 = vsel %vm1402, %v1334, 0.0
    %v1573 = vadd.f32 %v1571, %v1572
    %v1574 = vsel %vm1402, %v1341, 0.0
    %v1575 = vadd.f32 %v1573, %v1574
    %v1576 = vsel %vm1402, %v1348, 0.0
    %v1577 = vadd.f32 %v1575, %v1576
    %v1578 = vsel %vm1402, %v1355, 0.0
    %v1579 = vadd.f32 %v1577, %v1578
    %v1580 = vsel %vm1402, %v1362, 0.0
    %v1581 = vadd.f32 %v1579, %v1580
    %v1582 = vsel %vm1402, %v1369, 0.0
    %v1583 = vadd.f32 %v1581, %v1582
    %v1584 = vsel %vm1402, %v1376, 0.0
    %v1585 = vadd.f32 %v1583, %v1584
    %v1586 = vsel %vm1402, %v1383, 0.0
    %v1587 = vadd.f32 %v1585, %v1586
    %v1588 = vsel %vm1402, %v1390, 0.0
    %v1589 = vadd.f32 %v1587, %v1588
    %v1590 = vsel %vm1402, %v1397, 0.0
    %v1591 = vadd.f32 %v1589, %v1590
    %v1592 = vsel %vm1402, %v1181, 0.0
    %v1593 = vsel %vm1402, %v1188, 0.0
    %v1594 = vadd.f32 %v1592, %v1593
    %v1595 = vsel %vm1402, %v1195, 0.0
    %v1596 = vadd.f32 %v1594, %v1595
    %v1597 = vsel %vm1402, %v1202, 0.0
    %v1598 = vadd.f32 %v1596, %v1597
    %v1599 = vsel %vm1402, %v1209, 0.0
    %v1600 = vadd.f32 %v1598, %v1599
    %v1601 = vsel %vm1402, %v1216, 0.0
    %v1602 = vadd.f32 %v1600, %v1601
    %v1603 = vsel %vm1402, %v1223, 0.0
    %v1604 = vadd.f32 %v1602, %v1603
    %v1605 = vsel %vm1402, %v1230, 0.0
    %v1606 = vadd.f32 %v1604, %v1605
    %v1607 = vsel %vm1402, %v1237, 0.0
    %v1608 = vadd.f32 %v1606, %v1607
    %v1609 = vsel %vm1402, %v1244, 0.0
    %v1610 = vadd.f32 %v1608, %v1609
    %v1611 = vsel %vm1402, %v1251, 0.0
    %v1612 = vadd.f32 %v1610, %v1611
    %v1613 = vsel %vm1402, %v1258, 0.0
    %v1614 = vadd.f32 %v1612, %v1613
    %v1615 = vsel %vm1402, %v1265, 0.0
    %v1616 = vadd.f32 %v1614, %v1615
    %v1617 = vsel %vm1402, %v1272, 0.0
    %v1618 = vadd.f32 %v1616, %v1617
    %v1619 = vsel %vm1402, %v1279, 0.0
    %v1620 = vadd.f32 %v1618, %v1619
    %v1621 = vsel %vm1402, %v1286, 0.0
    %v1622 = vadd.f32 %v1620, %v1621
    %v1623 = vsel %vm1402, %v1293, 0.0
    %v1624 = vadd.f32 %v1622, %v1623
    %v1625 = vsel %vm1402, %v1300, 0.0
    %v1626 = vadd.f32 %v1624, %v1625
    %v1627 = vsel %vm1402, %v1307, 0.0
    %v1628 = vadd.f32 %v1626, %v1627
    %v1629 = vsel %vm1402, %v1314, 0.0
    %v1630 = vadd.f32 %v1628, %v1629
    %v1631 = vsel %vm1402, %v1321, 0.0
    %v1632 = vadd.f32 %v1630, %v1631
    %v1633 = vsel %vm1402, %v1328, 0.0
    %v1634 = vadd.f32 %v1632, %v1633
    %v1635 = vsel %vm1402, %v1335, 0.0
    %v1636 = vadd.f32 %v1634, %v1635
    %v1637 = vsel %vm1402, %v1342, 0.0
    %v1638 = vadd.f32 %v1636, %v1637
    %v1639 = vsel %vm1402, %v1349, 0.0
    %v1640 = vadd.f32 %v1638, %v1639
    %v1641 = vsel %vm1402, %v1356, 0.0
    %v1642 = vadd.f32 %v1640, %v1641
    %v1643 = vsel %vm1402, %v1363, 0.0
    %v1644 = vadd.f32 %v1642, %v1643
    %v1645 = vsel %vm1402, %v1370, 0.0
    %v1646 = vadd.f32 %v1644, %v1645
    %v1647 = vsel %vm1402, %v1377, 0.0
    %v1648 = vadd.f32 %v1646, %v1647
    %v1649 = vsel %vm1402, %v1384, 0.0
    %v1650 = vadd.f32 %v1648, %v1649
    %v1651 = vsel %vm1402, %v1391, 0.0
    %v1652 = vadd.f32 %v1650, %v1651
    %v1653 = vsel %vm1402, %v1398, 0.0
    %v1654 = vadd.f32 %v1652, %v1653
    %v1655 = vsel %vm1402, %v1182, 0.0
    %v1656 = vsel %vm1402, %v1189, 0.0
    %v1657 = vadd.f32 %v1655, %v1656
    %v1658 = vsel %vm1402, %v1196, 0.0
    %v1659 = vadd.f32 %v1657, %v1658
    %v1660 = vsel %vm1402, %v1203, 0.0
    %v1661 = vadd.f32 %v1659, %v1660
    %v1662 = vsel %vm1402, %v1210, 0.0
    %v1663 = vadd.f32 %v1661, %v1662
    %v1664 = vsel %vm1402, %v1217, 0.0
    %v1665 = vadd.f32 %v1663, %v1664
    %v1666 = vsel %vm1402, %v1224, 0.0
    %v1667 = vadd.f32 %v1665, %v1666
    %v1668 = vsel %vm1402, %v1231, 0.0
    %v1669 = vadd.f32 %v1667, %v1668
    %v1670 = vsel %vm1402, %v1238, 0.0
    %v1671 = vadd.f32 %v1669, %v1670
    %v1672 = vsel %vm1402, %v1245, 0.0
    %v1673 = vadd.f32 %v1671, %v1672
    %v1674 = vsel %vm1402, %v1252, 0.0
    %v1675 = vadd.f32 %v1673, %v1674
    %v1676 = vsel %vm1402, %v1259, 0.0
    %v1677 = vadd.f32 %v1675, %v1676
    %v1678 = vsel %vm1402, %v1266, 0.0
    %v1679 = vadd.f32 %v1677, %v1678
    %v1680 = vsel %vm1402, %v1273, 0.0
    %v1681 = vadd.f32 %v1679, %v1680
    %v1682 = vsel %vm1402, %v1280, 0.0
    %v1683 = vadd.f32 %v1681, %v1682
    %v1684 = vsel %vm1402, %v1287, 0.0
    %v1685 = vadd.f32 %v1683, %v1684
    %v1686 = vsel %vm1402, %v1294, 0.0
    %v1687 = vadd.f32 %v1685, %v1686
    %v1688 = vsel %vm1402, %v1301, 0.0
    %v1689 = vadd.f32 %v1687, %v1688
    %v1690 = vsel %vm1402, %v1308, 0.0
    %v1691 = vadd.f32 %v1689, %v1690
    %v1692 = vsel %vm1402, %v1315, 0.0
    %v1693 = vadd.f32 %v1691, %v1692
    %v1694 = vsel %vm1402, %v1322, 0.0
    %v1695 = vadd.f32 %v1693, %v1694
    %v1696 = vsel %vm1402, %v1329, 0.0
    %v1697 = vadd.f32 %v1695, %v1696
    %v1698 = vsel %vm1402, %v1336, 0.0
    %v1699 = vadd.f32 %v1697, %v1698
    %v1700 = vsel %vm1402, %v1343, 0.0
    %v1701 = vadd.f32 %v1699, %v1700
    %v1702 = vsel %vm1402, %v1350, 0.0
    %v1703 = vadd.f32 %v1701, %v1702
    %v1704 = vsel %vm1402, %v1357, 0.0
    %v1705 = vadd.f32 %v1703, %v1704
    %v1706 = vsel %vm1402, %v1364, 0.0
    %v1707 = vadd.f32 %v1705, %v1706
    %v1708 = vsel %vm1402, %v1371, 0.0
    %v1709 = vadd.f32 %v1707, %v1708
    %v1710 = vsel %vm1402, %v1378, 0.0
    %v1711 = vadd.f32 %v1709, %v1710
    %v1712 = vsel %vm1402, %v1385, 0.0
    %v1713 = vadd.f32 %v1711, %v1712
    %v1714 = vsel %vm1402, %v1392, 0.0
    %v1715 = vadd.f32 %v1713, %v1714
    %v1716 = vsel %vm1402, %v1399, 0.0
    %v1717 = vadd.f32 %v1715, %v1716
    %v1718 = vsel %vm1402, %v1183, 0.0
    %v1719 = vsel %vm1402, %v1190, 0.0
    %v1720 = vadd.f32 %v1718, %v1719
    %v1721 = vsel %vm1402, %v1197, 0.0
    %v1722 = vadd.f32 %v1720, %v1721
    %v1723 = vsel %vm1402, %v1204, 0.0
    %v1724 = vadd.f32 %v1722, %v1723
    %v1725 = vsel %vm1402, %v1211, 0.0
    %v1726 = vadd.f32 %v1724, %v1725
    %v1727 = vsel %vm1402, %v1218, 0.0
    %v1728 = vadd.f32 %v1726, %v1727
    %v1729 = vsel %vm1402, %v1225, 0.0
    %v1730 = vadd.f32 %v1728, %v1729
    %v1731 = vsel %vm1402, %v1232, 0.0
    %v1732 = vadd.f32 %v1730, %v1731
    %v1733 = vsel %vm1402, %v1239, 0.0
    %v1734 = vadd.f32 %v1732, %v1733
    %v1735 = vsel %vm1402, %v1246, 0.0
    %v1736 = vadd.f32 %v1734, %v1735
    %v1737 = vsel %vm1402, %v1253, 0.0
    %v1738 = vadd.f32 %v1736, %v1737
    %v1739 = vsel %vm1402, %v1260, 0.0
    %v1740 = vadd.f32 %v1738, %v1739
    %v1741 = vsel %vm1402, %v1267, 0.0
    %v1742 = vadd.f32 %v1740, %v1741
    %v1743 = vsel %vm1402, %v1274, 0.0
    %v1744 = vadd.f32 %v1742, %v1743
    %v1745 = vsel %vm1402, %v1281, 0.0
    %v1746 = vadd.f32 %v1744, %v1745
    %v1747 = vsel %vm1402, %v1288, 0.0
    %v1748 = vadd.f32 %v1746, %v1747
    %v1749 = vsel %vm1402, %v1295, 0.0
    %v1750 = vadd.f32 %v1748, %v1749
    %v1751 = vsel %vm1402, %v1302, 0.0
    %v1752 = vadd.f32 %v1750, %v1751
    %v1753 = vsel %vm1402, %v1309, 0.0
    %v1754 = vadd.f32 %v1752, %v1753
    %v1755 = vsel %vm1402, %v1316, 0.0
    %v1756 = vadd.f32 %v1754, %v1755
    %v1757 = vsel %vm1402, %v1323, 0.0
    %v1758 = vadd.f32 %v1756, %v1757
    %v1759 = vsel %vm1402, %v1330, 0.0
    %v1760 = vadd.f32 %v1758, %v1759
    %v1761 = vsel %vm1402, %v1337, 0.0
    %v1762 = vadd.f32 %v1760, %v1761
    %v1763 = vsel %vm1402, %v1344, 0.0
    %v1764 = vadd.f32 %v1762, %v1763
    %v1765 = vsel %vm1402, %v1351, 0.0
    %v1766 = vadd.f32 %v1764, %v1765
    %v1767 = vsel %vm1402, %v1358, 0.0
    %v1768 = vadd.f32 %v1766, %v1767
    %v1769 = vsel %vm1402, %v1365, 0.0
    %v1770 = vadd.f32 %v1768, %v1769
    %v1771 = vsel %vm1402, %v1372, 0.0
    %v1772 = vadd.f32 %v1770, %v1771
    %v1773 = vsel %vm1402, %v1379, 0.0
    %v1774 = vadd.f32 %v1772, %v1773
    %v1775 = vsel %vm1402, %v1386, 0.0
    %v1776 = vadd.f32 %v1774, %v1775
    %v1777 = vsel %vm1402, %v1393, 0.0
    %v1778 = vadd.f32 %v1776, %v1777
    %v1779 = vsel %vm1402, %v1400, 0.0
    %v1780 = vadd.f32 %v1778, %v1779
    %vm1781 = vcmask 9216
    %v1782 = vsel %vm1781, %v1184, 0.0
    %v1783 = vsel %vm1781, %v1191, 0.0
    %v1784 = vadd.f32 %v1782, %v1783
    %v1785 = vsel %vm1781, %v1198, 0.0
    %v1786 = vadd.f32 %v1784, %v1785
    %v1787 = vsel %vm1781, %v1205, 0.0
    %v1788 = vadd.f32 %v1786, %v1787
    %v1789 = vsel %vm1781, %v1212, 0.0
    %v1790 = vadd.f32 %v1788, %v1789
    %v1791 = vsel %vm1781, %v1219, 0.0
    %v1792 = vadd.f32 %v1790, %v1791
    %v1793 = vsel %vm1781, %v1226, 0.0
    %v1794 = vadd.f32 %v1792, %v1793
    %v1795 = vsel %vm1781, %v1233, 0.0
    %v1796 = vadd.f32 %v1794, %v1795
    %v1797 = vsel %vm1781, %v1240, 0.0
    %v1798 = vadd.f32 %v1796, %v1797
    %v1799 = vsel %vm1781, %v1247, 0.0
    %v1800 = vadd.f32 %v1798, %v1799
    %v1801 = vsel %vm1781, %v1254, 0.0
    %v1802 = vadd.f32 %v1800, %v1801
    %v1803 = vsel %vm1781, %v1261, 0.0
    %v1804 = vadd.f32 %v1802, %v1803
    %v1805 = vsel %vm1781, %v1268, 0.0
    %v1806 = vadd.f32 %v1804, %v1805
    %v1807 = vsel %vm1781, %v1275, 0.0
    %v1808 = vadd.f32 %v1806, %v1807
    %v1809 = vsel %vm1781, %v1282, 0.0
    %v1810 = vadd.f32 %v1808, %v1809
    %v1811 = vsel %vm1781, %v1289, 0.0
    %v1812 = vadd.f32 %v1810, %v1811
    %v1813 = vsel %vm1781, %v1296, 0.0
    %v1814 = vadd.f32 %v1812, %v1813
    %v1815 = vsel %vm1781, %v1303, 0.0
    %v1816 = vadd.f32 %v1814, %v1815
    %v1817 = vsel %vm1781, %v1310, 0.0
    %v1818 = vadd.f32 %v1816, %v1817
    %v1819 = vsel %vm1781, %v1317, 0.0
    %v1820 = vadd.f32 %v1818, %v1819
    %v1821 = vsel %vm1781, %v1324, 0.0
    %v1822 = vadd.f32 %v1820, %v1821
    %v1823 = vsel %vm1781, %v1331, 0.0
    %v1824 = vadd.f32 %v1822, %v1823
    %v1825 = vsel %vm1781, %v1338, 0.0
    %v1826 = vadd.f32 %v1824, %v1825
    %v1827 = vsel %vm1781, %v1345, 0.0
    %v1828 = vadd.f32 %v1826, %v1827
    %v1829 = vsel %vm1781, %v1352, 0.0
    %v1830 = vadd.f32 %v1828, %v1829
    %v1831 = vsel %vm1781, %v1359, 0.0
    %v1832 = vadd.f32 %v1830, %v1831
    %v1833 = vsel %vm1781, %v1366, 0.0
    %v1834 = vadd.f32 %v1832, %v1833
    %v1835 = vsel %vm1781, %v1373, 0.0
    %v1836 = vadd.f32 %v1834, %v1835
    %v1837 = vsel %vm1781, %v1380, 0.0
    %v1838 = vadd.f32 %v1836, %v1837
    %v1839 = vsel %vm1781, %v1387, 0.0
    %v1840 = vadd.f32 %v1838, %v1839
    %v1841 = vsel %vm1781, %v1394, 0.0
    %v1842 = vadd.f32 %v1840, %v1841
    %v1843 = vsel %vm1781, %v1401, 0.0
    %v1844 = vadd.f32 %v1842, %v1843
    %v1845 = vmul.f32 %v1465, %v1021
    %v1846 = vmul.f32 %v1528, %v1021
    %v1847 = vmul.f32 %v1591, %v1021
    %v1848 = vmul.f32 %v1654, %v1021
    %v1849 = vmul.f32 %v1717, %v1021
    %v1850 = vmul.f32 %v1780, %v1021
    %v1851 = vmul.f32 %v1844, %v1021
    %v1852 = vmul.f32 %v1465, %v1025
    %v1853 = vmul.f32 %v1528, %v1025
    %v1854 = vmul.f32 %v1591, %v1025
    %v1855 = vmul.f32 %v1654, %v1025
    %v1856 = vmul.f32 %v1717, %v1025
    %v1857 = vmul.f32 %v1780, %v1025
    %v1858 = vmul.f32 %v1844, %v1025
    %v1859 = vmul.f32 %v1465, %v1029
    %v1860 = vmul.f32 %v1528, %v1029
    %v1861 = vmul.f32 %v1591, %v1029
    %v1862 = vmul.f32 %v1654, %v1029
    %v1863 = vmul.f32 %v1717, %v1029
    %v1864 = vmul.f32 %v1780, %v1029
    %v1865 = vmul.f32 %v1844, %v1029
    %v1866 = vmul.f32 %v1465, %v1033
    %v1867 = vmul.f32 %v1528, %v1033
    %v1868 = vmul.f32 %v1591, %v1033
    %v1869 = vmul.f32 %v1654, %v1033
    %v1870 = vmul.f32 %v1717, %v1033
    %v1871 = vmul.f32 %v1780, %v1033
    %v1872 = vmul.f32 %v1844, %v1033
    %v1873 = vmul.f32 %v1465, %v1037
    %v1874 = vmul.f32 %v1528, %v1037
    %v1875 = vmul.f32 %v1591, %v1037
    %v1876 = vmul.f32 %v1654, %v1037
    %v1877 = vmul.f32 %v1717, %v1037
    %v1878 = vmul.f32 %v1780, %v1037
    %v1879 = vmul.f32 %v1844, %v1037
    %v1880 = vmul.f32 %v1465, %v1041
    %v1881 = vmul.f32 %v1528, %v1041
    %v1882 = vmul.f32 %v1591, %v1041
    %v1883 = vmul.f32 %v1654, %v1041
    %v1884 = vmul.f32 %v1717, %v1041
    %v1885 = vmul.f32 %v1780, %v1041
    %v1886 = vmul.f32 %v1844, %v1041
    %v1887 = vmul.f32 %v1465, %v1045
    %v1888 = vmul.f32 %v1528, %v1045
    %v1889 = vmul.f32 %v1591, %v1045
    %v1890 = vmul.f32 %v1654, %v1045
    %v1891 = vmul.f32 %v1717, %v1045
    %v1892 = vmul.f32 %v1780, %v1045
    %v1893 = vmul.f32 %v1844, %v1045
    %v1894 = vmul.f32 %v1465, %v1049
    %v1895 = vmul.f32 %v1528, %v1049
    %v1896 = vmul.f32 %v1591, %v1049
    %v1897 = vmul.f32 %v1654, %v1049
    %v1898 = vmul.f32 %v1717, %v1049
    %v1899 = vmul.f32 %v1780, %v1049
    %v1900 = vmul.f32 %v1844, %v1049
    %v1901 = vmul.f32 %v1465, %v1053
    %v1902 = vmul.f32 %v1528, %v1053
    %v1903 = vmul.f32 %v1591, %v1053
    %v1904 = vmul.f32 %v1654, %v1053
    %v1905 = vmul.f32 %v1717, %v1053
    %v1906 = vmul.f32 %v1780, %v1053
    %v1907 = vmul.f32 %v1844, %v1053
    %v1908 = vmul.f32 %v1465, %v1057
    %v1909 = vmul.f32 %v1528, %v1057
    %v1910 = vmul.f32 %v1591, %v1057
    %v1911 = vmul.f32 %v1654, %v1057
    %v1912 = vmul.f32 %v1717, %v1057
    %v1913 = vmul.f32 %v1780, %v1057
    %v1914 = vmul.f32 %v1844, %v1057
    %v1915 = vmul.f32 %v1465, %v1061
    %v1916 = vmul.f32 %v1528, %v1061
    %v1917 = vmul.f32 %v1591, %v1061
    %v1918 = vmul.f32 %v1654, %v1061
    %v1919 = vmul.f32 %v1717, %v1061
    %v1920 = vmul.f32 %v1780, %v1061
    %v1921 = vmul.f32 %v1844, %v1061
    %v1922 = vmul.f32 %v1465, %v1065
    %v1923 = vmul.f32 %v1528, %v1065
    %v1924 = vmul.f32 %v1591, %v1065
    %v1925 = vmul.f32 %v1654, %v1065
    %v1926 = vmul.f32 %v1717, %v1065
    %v1927 = vmul.f32 %v1780, %v1065
    %v1928 = vmul.f32 %v1844, %v1065
    %v1929 = vmul.f32 %v1465, %v1069
    %v1930 = vmul.f32 %v1528, %v1069
    %v1931 = vmul.f32 %v1591, %v1069
    %v1932 = vmul.f32 %v1654, %v1069
    %v1933 = vmul.f32 %v1717, %v1069
    %v1934 = vmul.f32 %v1780, %v1069
    %v1935 = vmul.f32 %v1844, %v1069
    %v1936 = vmul.f32 %v1465, %v1073
    %v1937 = vmul.f32 %v1528, %v1073
    %v1938 = vmul.f32 %v1591, %v1073
    %v1939 = vmul.f32 %v1654, %v1073
    %v1940 = vmul.f32 %v1717, %v1073
    %v1941 = vmul.f32 %v1780, %v1073
    %v1942 = vmul.f32 %v1844, %v1073
    %v1943 = vmul.f32 %v1465, %v1077
    %v1944 = vmul.f32 %v1528, %v1077
    %v1945 = vmul.f32 %v1591, %v1077
    %v1946 = vmul.f32 %v1654, %v1077
    %v1947 = vmul.f32 %v1717, %v1077
    %v1948 = vmul.f32 %v1780, %v1077
    %v1949 = vmul.f32 %v1844, %v1077
    %v1950 = vmul.f32 %v1465, %v1081
    %v1951 = vmul.f32 %v1528, %v1081
    %v1952 = vmul.f32 %v1591, %v1081
    %v1953 = vmul.f32 %v1654, %v1081
    %v1954 = vmul.f32 %v1717, %v1081
    %v1955 = vmul.f32 %v1780, %v1081
    %v1956 = vmul.f32 %v1844, %v1081
    %v1957 = vmul.f32 %v1465, %v1085
    %v1958 = vmul.f32 %v1528, %v1085
    %v1959 = vmul.f32 %v1591, %v1085
    %v1960 = vmul.f32 %v1654, %v1085
    %v1961 = vmul.f32 %v1717, %v1085
    %v1962 = vmul.f32 %v1780, %v1085
    %v1963 = vmul.f32 %v1844, %v1085
    %v1964 = vmul.f32 %v1465, %v1089
    %v1965 = vmul.f32 %v1528, %v1089
    %v1966 = vmul.f32 %v1591, %v1089
    %v1967 = vmul.f32 %v1654, %v1089
    %v1968 = vmul.f32 %v1717, %v1089
    %v1969 = vmul.f32 %v1780, %v1089
    %v1970 = vmul.f32 %v1844, %v1089
    %v1971 = vmul.f32 %v1465, %v1093
    %v1972 = vmul.f32 %v1528, %v1093
    %v1973 = vmul.f32 %v1591, %v1093
    %v1974 = vmul.f32 %v1654, %v1093
    %v1975 = vmul.f32 %v1717, %v1093
    %v1976 = vmul.f32 %v1780, %v1093
    %v1977 = vmul.f32 %v1844, %v1093
    %v1978 = vmul.f32 %v1465, %v1097
    %v1979 = vmul.f32 %v1528, %v1097
    %v1980 = vmul.f32 %v1591, %v1097
    %v1981 = vmul.f32 %v1654, %v1097
    %v1982 = vmul.f32 %v1717, %v1097
    %v1983 = vmul.f32 %v1780, %v1097
    %v1984 = vmul.f32 %v1844, %v1097
    %v1985 = vmul.f32 %v1465, %v1101
    %v1986 = vmul.f32 %v1528, %v1101
    %v1987 = vmul.f32 %v1591, %v1101
    %v1988 = vmul.f32 %v1654, %v1101
    %v1989 = vmul.f32 %v1717, %v1101
    %v1990 = vmul.f32 %v1780, %v1101
    %v1991 = vmul.f32 %v1844, %v1101
    %v1992 = vmul.f32 %v1465, %v1105
    %v1993 = vmul.f32 %v1528, %v1105
    %v1994 = vmul.f32 %v1591, %v1105
    %v1995 = vmul.f32 %v1654, %v1105
    %v1996 = vmul.f32 %v1717, %v1105
    %v1997 = vmul.f32 %v1780, %v1105
    %v1998 = vmul.f32 %v1844, %v1105
    %v1999 = vmul.f32 %v1465, %v1109
    %v2000 = vmul.f32 %v1528, %v1109
    %v2001 = vmul.f32 %v1591, %v1109
    %v2002 = vmul.f32 %v1654, %v1109
    %v2003 = vmul.f32 %v1717, %v1109
    %v2004 = vmul.f32 %v1780, %v1109
    %v2005 = vmul.f32 %v1844, %v1109
    %v2006 = vmul.f32 %v1465, %v1113
    %v2007 = vmul.f32 %v1528, %v1113
    %v2008 = vmul.f32 %v1591, %v1113
    %v2009 = vmul.f32 %v1654, %v1113
    %v2010 = vmul.f32 %v1717, %v1113
    %v2011 = vmul.f32 %v1780, %v1113
    %v2012 = vmul.f32 %v1844, %v1113
    %v2013 = vmul.f32 %v1465, %v1117
    %v2014 = vmul.f32 %v1528, %v1117
    %v2015 = vmul.f32 %v1591, %v1117
    %v2016 = vmul.f32 %v1654, %v1117
    %v2017 = vmul.f32 %v1717, %v1117
    %v2018 = vmul.f32 %v1780, %v1117
    %v2019 = vmul.f32 %v1844, %v1117
    %v2020 = vmul.f32 %v1465, %v1121
    %v2021 = vmul.f32 %v1528, %v1121
    %v2022 = vmul.f32 %v1591, %v1121
    %v2023 = vmul.f32 %v1654, %v1121
    %v2024 = vmul.f32 %v1717, %v1121
    %v2025 = vmul.f32 %v1780, %v1121
    %v2026 = vmul.f32 %v1844, %v1121
    %v2027 = vmul.f32 %v1465, %v1125
    %v2028 = vmul.f32 %v1528, %v1125
    %v2029 = vmul.f32 %v1591, %v1125
    %v2030 = vmul.f32 %v1654, %v1125
    %v2031 = vmul.f32 %v1717, %v1125
    %v2032 = vmul.f32 %v1780, %v1125
    %v2033 = vmul.f32 %v1844, %v1125
    %v2034 = vmul.f32 %v1465, %v1129
    %v2035 = vmul.f32 %v1528, %v1129
    %v2036 = vmul.f32 %v1591, %v1129
    %v2037 = vmul.f32 %v1654, %v1129
    %v2038 = vmul.f32 %v1717, %v1129
    %v2039 = vmul.f32 %v1780, %v1129
    %v2040 = vmul.f32 %v1844, %v1129
    %v2041 = vmul.f32 %v1465, %v1133
    %v2042 = vmul.f32 %v1528, %v1133
    %v2043 = vmul.f32 %v1591, %v1133
    %v2044 = vmul.f32 %v1654, %v1133
    %v2045 = vmul.f32 %v1717, %v1133
    %v2046 = vmul.f32 %v1780, %v1133
    %v2047 = vmul.f32 %v1844, %v1133
    %v2048 = vmul.f32 %v1465, %v1137
    %v2049 = vmul.f32 %v1528, %v1137
    %v2050 = vmul.f32 %v1591, %v1137
    %v2051 = vmul.f32 %v1654, %v1137
    %v2052 = vmul.f32 %v1717, %v1137
    %v2053 = vmul.f32 %v1780, %v1137
    %v2054 = vmul.f32 %v1844, %v1137
    %v2055 = vmul.f32 %v1465, %v1141
    %v2056 = vmul.f32 %v1528, %v1141
    %v2057 = vmul.f32 %v1591, %v1141
    %v2058 = vmul.f32 %v1654, %v1141
    %v2059 = vmul.f32 %v1717, %v1141
    %v2060 = vmul.f32 %v1780, %v1141
    %v2061 = vmul.f32 %v1844, %v1141
    %v2062 = vmul.f32 %v1465, %v1145
    %v2063 = vmul.f32 %v1528, %v1145
    %v2064 = vmul.f32 %v1591, %v1145
    %v2065 = vmul.f32 %v1654, %v1145
    %v2066 = vmul.f32 %v1717, %v1145
    %v2067 = vmul.f32 %v1780, %v1145
    %v2068 = vmul.f32 %v1844, %v1145
    %v2069 = vsub.f32 %v762, %v1845
    %v2070 = vsub.f32 %v763, %v1846
    %v2071 = vsub.f32 %v764, %v1847
    %v2072 = vsub.f32 %v765, %v1848
    %v2073 = vsub.f32 %v766, %v1849
    %v2074 = vsub.f32 %v767, %v1850
    %v2075 = vsub.f32 %v768, %v1851
    %v2076 = vsub.f32 %v769, %v1852
    %v2077 = vsub.f32 %v770, %v1853
    %v2078 = vsub.f32 %v771, %v1854
    %v2079 = vsub.f32 %v772, %v1855
    %v2080 = vsub.f32 %v773, %v1856
    %v2081 = vsub.f32 %v774, %v1857
    %v2082 = vsub.f32 %v775, %v1858
    %v2083 = vsub.f32 %v776, %v1859
    %v2084 = vsub.f32 %v777, %v1860
    %v2085 = vsub.f32 %v778, %v1861
    %v2086 = vsub.f32 %v779, %v1862
    %v2087 = vsub.f32 %v780, %v1863
    %v2088 = vsub.f32 %v781, %v1864
    %v2089 = vsub.f32 %v782, %v1865
    %v2090 = vsub.f32 %v783, %v1866
    %v2091 = vsub.f32 %v784, %v1867
    %v2092 = vsub.f32 %v785, %v1868
    %v2093 = vsub.f32 %v786, %v1869
    %v2094 = vsub.f32 %v787, %v1870
    %v2095 = vsub.f32 %v788, %v1871
    %v2096 = vsub.f32 %v789, %v1872
    %v2097 = vsub.f32 %v790, %v1873
    %v2098 = vsub.f32 %v791, %v1874
    %v2099 = vsub.f32 %v792, %v1875
    %v2100 = vsub.f32 %v793, %v1876
    %v2101 = vsub.f32 %v794, %v1877
    %v2102 = vsub.f32 %v795, %v1878
    %v2103 = vsub.f32 %v796, %v1879
    %v2104 = vsub.f32 %v797, %v1880
    %v2105 = vsub.f32 %v798, %v1881
    %v2106 = vsub.f32 %v799, %v1882
    %v2107 = vsub.f32 %v800, %v1883
    %v2108 = vsub.f32 %v801, %v1884
    %v2109 = vsub.f32 %v802, %v1885
    %v2110 = vsub.f32 %v803, %v1886
    %v2111 = vsub.f32 %v804, %v1887
    %v2112 = vsub.f32 %v805, %v1888
    %v2113 = vsub.f32 %v806, %v1889
    %v2114 = vsub.f32 %v807, %v1890
    %v2115 = vsub.f32 %v808, %v1891
    %v2116 = vsub.f32 %v809, %v1892
    %v2117 = vsub.f32 %v810, %v1893
    %v2118 = vsub.f32 %v811, %v1894
    %v2119 = vsub.f32 %v812, %v1895
    %v2120 = vsub.f32 %v813, %v1896
    %v2121 = vsub.f32 %v814, %v1897
    %v2122 = vsub.f32 %v815, %v1898
    %v2123 = vsub.f32 %v816, %v1899
    %v2124 = vsub.f32 %v817, %v1900
    %v2125 = vsub.f32 %v818, %v1901
    %v2126 = vsub.f32 %v819, %v1902
    %v2127 = vsub.f32 %v820, %v1903
    %v2128 = vsub.f32 %v821, %v1904
    %v2129 = vsub.f32 %v822, %v1905
    %v2130 = vsub.f32 %v823, %v1906
    %v2131 = vsub.f32 %v824, %v1907
    %v2132 = vsub.f32 %v825, %v1908
    %v2133 = vsub.f32 %v826, %v1909
    %v2134 = vsub.f32 %v827, %v1910
    %v2135 = vsub.f32 %v828, %v1911
    %v2136 = vsub.f32 %v829, %v1912
    %v2137 = vsub.f32 %v830, %v1913
    %v2138 = vsub.f32 %v831, %v1914
    %v2139 = vsub.f32 %v832, %v1915
    %v2140 = vsub.f32 %v833, %v1916
    %v2141 = vsub.f32 %v834, %v1917
    %v2142 = vsub.f32 %v835, %v1918
    %v2143 = vsub.f32 %v836, %v1919
    %v2144 = vsub.f32 %v837, %v1920
    %v2145 = vsub.f32 %v838, %v1921
    %v2146 = vsub.f32 %v839, %v1922
    %v2147 = vsub.f32 %v840, %v1923
    %v2148 = vsub.f32 %v841, %v1924
    %v2149 = vsub.f32 %v842, %v1925
    %v2150 = vsub.f32 %v843, %v1926
    %v2151 = vsub.f32 %v844, %v1927
    %v2152 = vsub.f32 %v845, %v1928
    %v2153 = vsub.f32 %v846, %v1929
    %v2154 = vsub.f32 %v847, %v1930
    %v2155 = vsub.f32 %v848, %v1931
    %v2156 = vsub.f32 %v849, %v1932
    %v2157 = vsub.f32 %v850, %v1933
    %v2158 = vsub.f32 %v851, %v1934
    %v2159 = vsub.f32 %v852, %v1935
    %v2160 = vsub.f32 %v853, %v1936
    %v2161 = vsub.f32 %v854, %v1937
    %v2162 = vsub.f32 %v855, %v1938
    %v2163 = vsub.f32 %v856, %v1939
    %v2164 = vsub.f32 %v857, %v1940
    %v2165 = vsub.f32 %v858, %v1941
    %v2166 = vsub.f32 %v859, %v1942
    %v2167 = vsub.f32 %v860, %v1943
    %v2168 = vsub.f32 %v861, %v1944
    %v2169 = vsub.f32 %v862, %v1945
    %v2170 = vsub.f32 %v863, %v1946
    %v2171 = vsub.f32 %v864, %v1947
    %v2172 = vsub.f32 %v865, %v1948
    %v2173 = vsub.f32 %v866, %v1949
    %v2174 = vsub.f32 %v867, %v1950
    %v2175 = vsub.f32 %v868, %v1951
    %v2176 = vsub.f32 %v869, %v1952
    %v2177 = vsub.f32 %v870, %v1953
    %v2178 = vsub.f32 %v871, %v1954
    %v2179 = vsub.f32 %v872, %v1955
    %v2180 = vsub.f32 %v873, %v1956
    %v2181 = vsub.f32 %v874, %v1957
    %v2182 = vsub.f32 %v875, %v1958
    %v2183 = vsub.f32 %v876, %v1959
    %v2184 = vsub.f32 %v877, %v1960
    %v2185 = vsub.f32 %v878, %v1961
    %v2186 = vsub.f32 %v879, %v1962
    %v2187 = vsub.f32 %v880, %v1963
    %v2188 = vsub.f32 %v881, %v1964
    %v2189 = vsub.f32 %v882, %v1965
    %v2190 = vsub.f32 %v883, %v1966
    %v2191 = vsub.f32 %v884, %v1967
    %v2192 = vsub.f32 %v885, %v1968
    %v2193 = vsub.f32 %v886, %v1969
    %v2194 = vsub.f32 %v887, %v1970
    %v2195 = vsub.f32 %v888, %v1971
    %v2196 = vsub.f32 %v889, %v1972
    %v2197 = vsub.f32 %v890, %v1973
    %v2198 = vsub.f32 %v891, %v1974
    %v2199 = vsub.f32 %v892, %v1975
    %v2200 = vsub.f32 %v893, %v1976
    %v2201 = vsub.f32 %v894, %v1977
    %v2202 = vsub.f32 %v895, %v1978
    %v2203 = vsub.f32 %v896, %v1979
    %v2204 = vsub.f32 %v897, %v1980
    %v2205 = vsub.f32 %v898, %v1981
    %v2206 = vsub.f32 %v899, %v1982
    %v2207 = vsub.f32 %v900, %v1983
    %v2208 = vsub.f32 %v901, %v1984
    %v2209 = vsub.f32 %v902, %v1985
    %v2210 = vsub.f32 %v903, %v1986
    %v2211 = vsub.f32 %v904, %v1987
    %v2212 = vsub.f32 %v905, %v1988
    %v2213 = vsub.f32 %v906, %v1989
    %v2214 = vsub.f32 %v907, %v1990
    %v2215 = vsub.f32 %v908, %v1991
    %v2216 = vsub.f32 %v909, %v1992
    %v2217 = vsub.f32 %v910, %v1993
    %v2218 = vsub.f32 %v911, %v1994
    %v2219 = vsub.f32 %v912, %v1995
    %v2220 = vsub.f32 %v913, %v1996
    %v2221 = vsub.f32 %v914, %v1997
    %v2222 = vsub.f32 %v915, %v1998
    %v2223 = vsub.f32 %v916, %v1999
    %v2224 = vsub.f32 %v917, %v2000
    %v2225 = vsub.f32 %v918, %v2001
    %v2226 = vsub.f32 %v919, %v2002
    %v2227 = vsub.f32 %v920, %v2003
    %v2228 = vsub.f32 %v921, %v2004
    %v2229 = vsub.f32 %v922, %v2005
    %v2230 = vsub.f32 %v923, %v2006
    %v2231 = vsub.f32 %v924, %v2007
    %v2232 = vsub.f32 %v925, %v2008
    %v2233 = vsub.f32 %v926, %v2009
    %v2234 = vsub.f32 %v927, %v2010
    %v2235 = vsub.f32 %v928, %v2011
    %v2236 = vsub.f32 %v929, %v2012
    %v2237 = vsub.f32 %v930, %v2013
    %v2238 = vsub.f32 %v931, %v2014
    %v2239 = vsub.f32 %v932, %v2015
    %v2240 = vsub.f32 %v933, %v2016
    %v2241 = vsub.f32 %v934, %v2017
    %v2242 = vsub.f32 %v935, %v2018
    %v2243 = vsub.f32 %v936, %v2019
    %v2244 = vsub.f32 %v937, %v2020
    %v2245 = vsub.f32 %v938, %v2021
    %v2246 = vsub.f32 %v939, %v2022
    %v2247 = vsub.f32 %v940, %v2023
    %v2248 = vsub.f32 %v941, %v2024
    %v2249 = vsub.f32 %v942, %v2025
    %v2250 = vsub.f32 %v943, %v2026
    %v2251 = vsub.f32 %v944, %v2027
    %v2252 = vsub.f32 %v945, %v2028
    %v2253 = vsub.f32 %v946, %v2029
    %v2254 = vsub.f32 %v947, %v2030
    %v2255 = vsub.f32 %v948, %v2031
    %v2256 = vsub.f32 %v949, %v2032
    %v2257 = vsub.f32 %v950, %v2033
    %v2258 = vsub.f32 %v951, %v2034
    %v2259 = vsub.f32 %v952, %v2035
    %v2260 = vsub.f32 %v953, %v2036
    %v2261 = vsub.f32 %v954, %v2037
    %v2262 = vsub.f32 %v955, %v2038
    %v2263 = vsub.f32 %v956, %v2039
    %v2264 = vsub.f32 %v957, %v2040
    %v2265 = vsub.f32 %v958, %v2041
    %v2266 = vsub.f32 %v959, %v2042
    %v2267 = vsub.f32 %v960, %v2043
    %v2268 = vsub.f32 %v961, %v2044
    %v2269 = vsub.f32 %v962, %v2045
    %v2270 = vsub.f32 %v963, %v2046
    %v2271 = vsub.f32 %v964, %v2047
    %v2272 = vsub.f32 %v965, %v2048
    %v2273 = vsub.f32 %v966, %v2049
    %v2274 = vsub.f32 %v967, %v2050
    %v2275 = vsub.f32 %v968, %v2051
    %v2276 = vsub.f32 %v969, %v2052
    %v2277 = vsub.f32 %v970, %v2053
    %v2278 = vsub.f32 %v971, %v2054
    %v2279 = vsub.f32 %v972, %v2055
    %v2280 = vsub.f32 %v973, %v2056
    %v2281 = vsub.f32 %v974, %v2057
    %v2282 = vsub.f32 %v975, %v2058
    %v2283 = vsub.f32 %v976, %v2059
    %v2284 = vsub.f32 %v977, %v2060
    %v2285 = vsub.f32 %v978, %v2061
    %v2286 = vsub.f32 %v979, %v2062
    %v2287 = vsub.f32 %v980, %v2063
    %v2288 = vsub.f32 %v981, %v2064
    %v2289 = vsub.f32 %v982, %v2065
    %v2290 = vsub.f32 %v983, %v2066
    %v2291 = vsub.f32 %v984, %v2067
    %v2292 = vsub.f32 %v985, %v2068
    %v2293 = vand.u32 2147483647, %v2069
    %v2294 = vand.u32 2147483647, %v2070
    %v2295 = vand.u32 2147483647, %v2071
    %v2296 = vand.u32 2147483647, %v2072
    %v2297 = vand.u32 2147483647, %v2073
    %v2298 = vand.u32 2147483647, %v2074
    %v2299 = vand.u32 2147483647, %v2075
    %v2300 = vand.u32 2147483647, %v2076
    %v2301 = vand.u32 2147483647, %v2077
    %v2302 = vand.u32 2147483647, %v2078
    %v2303 = vand.u32 2147483647, %v2079
    %v2304 = vand.u32 2147483647, %v2080
    %v2305 = vand.u32 2147483647, %v2081
    %v2306 = vand.u32 2147483647, %v2082
    %v2307 = vand.u32 2147483647, %v2083
    %v2308 = vand.u32 2147483647, %v2084
    %v2309 = vand.u32 2147483647, %v2085
    %v2310 = vand.u32 2147483647, %v2086
    %v2311 = vand.u32 2147483647, %v2087
    %v2312 = vand.u32 2147483647, %v2088
    %v2313 = vand.u32 2147483647, %v2089
    %v2314 = vand.u32 2147483647, %v2090
    %v2315 = vand.u32 2147483647, %v2091
    %v2316 = vand.u32 2147483647, %v2092
    %v2317 = vand.u32 2147483647, %v2093
    %v2318 = vand.u32 2147483647, %v2094
    %v2319 = vand.u32 2147483647, %v2095
    %v2320 = vand.u32 2147483647, %v2096
    %v2321 = vand.u32 2147483647, %v2097
    %v2322 = vand.u32 2147483647, %v2098
    %v2323 = vand.u32 2147483647, %v2099
    %v2324 = vand.u32 2147483647, %v2100
    %v2325 = vand.u32 2147483647, %v2101
    %v2326 = vand.u32 2147483647, %v2102
    %v2327 = vand.u32 2147483647, %v2103
    %v2328 = vand.u32 2147483647, %v2104
    %v2329 = vand.u32 2147483647, %v2105
    %v2330 = vand.u32 2147483647, %v2106
    %v2331 = vand.u32 2147483647, %v2107
    %v2332 = vand.u32 2147483647, %v2108
    %v2333 = vand.u32 2147483647, %v2109
    %v2334 = vand.u32 2147483647, %v2110
    %v2335 = vand.u32 2147483647, %v2111
    %v2336 = vand.u32 2147483647, %v2112
    %v2337 = vand.u32 2147483647, %v2113
    %v2338 = vand.u32 2147483647, %v2114
    %v2339 = vand.u32 2147483647, %v2115
    %v2340 = vand.u32 2147483647, %v2116
    %v2341 = vand.u32 2147483647, %v2117
    %v2342 = vand.u32 2147483647, %v2118
    %v2343 = vand.u32 2147483647, %v2119
    %v2344 = vand.u32 2147483647, %v2120
    %v2345 = vand.u32 2147483647, %v2121
    %v2346 = vand.u32 2147483647, %v2122
    %v2347 = vand.u32 2147483647, %v2123
    %v2348 = vand.u32 2147483647, %v2124
    %v2349 = vand.u32 2147483647, %v2125
    %v2350 = vand.u32 2147483647, %v2126
    %v2351 = vand.u32 2147483647, %v2127
    %v2352 = vand.u32 2147483647, %v2128
    %v2353 = vand.u32 2147483647, %v2129
    %v2354 = vand.u32 2147483647, %v2130
    %v2355 = vand.u32 2147483647, %v2131
    %v2356 = vand.u32 2147483647, %v2132
    %v2357 = vand.u32 2147483647, %v2133
    %v2358 = vand.u32 2147483647, %v2134
    %v2359 = vand.u32 2147483647, %v2135
    %v2360 = vand.u32 2147483647, %v2136
    %v2361 = vand.u32 2147483647, %v2137
    %v2362 = vand.u32 2147483647, %v2138
    %v2363 = vand.u32 2147483647, %v2139
    %v2364 = vand.u32 2147483647, %v2140
    %v2365 = vand.u32 2147483647, %v2141
    %v2366 = vand.u32 2147483647, %v2142
    %v2367 = vand.u32 2147483647, %v2143
    %v2368 = vand.u32 2147483647, %v2144
    %v2369 = vand.u32 2147483647, %v2145
    %v2370 = vand.u32 2147483647, %v2146
    %v2371 = vand.u32 2147483647, %v2147
    %v2372 = vand.u32 2147483647, %v2148
    %v2373 = vand.u32 2147483647, %v2149
    %v2374 = vand.u32 2147483647, %v2150
    %v2375 = vand.u32 2147483647, %v2151
    %v2376 = vand.u32 2147483647, %v2152
    %v2377 = vand.u32 2147483647, %v2153
    %v2378 = vand.u32 2147483647, %v2154
    %v2379 = vand.u32 2147483647, %v2155
    %v2380 = vand.u32 2147483647, %v2156
    %v2381 = vand.u32 2147483647, %v2157
    %v2382 = vand.u32 2147483647, %v2158
    %v2383 = vand.u32 2147483647, %v2159
    %v2384 = vand.u32 2147483647, %v2160
    %v2385 = vand.u32 2147483647, %v2161
    %v2386 = vand.u32 2147483647, %v2162
    %v2387 = vand.u32 2147483647, %v2163
    %v2388 = vand.u32 2147483647, %v2164
    %v2389 = vand.u32 2147483647, %v2165
    %v2390 = vand.u32 2147483647, %v2166
    %v2391 = vand.u32 2147483647, %v2167
    %v2392 = vand.u32 2147483647, %v2168
    %v2393 = vand.u32 2147483647, %v2169
    %v2394 = vand.u32 2147483647, %v2170
    %v2395 = vand.u32 2147483647, %v2171
    %v2396 = vand.u32 2147483647, %v2172
    %v2397 = vand.u32 2147483647, %v2173
    %v2398 = vand.u32 2147483647, %v2174
    %v2399 = vand.u32 2147483647, %v2175
    %v2400 = vand.u32 2147483647, %v2176
    %v2401 = vand.u32 2147483647, %v2177
    %v2402 = vand.u32 2147483647, %v2178
    %v2403 = vand.u32 2147483647, %v2179
    %v2404 = vand.u32 2147483647, %v2180
    %v2405 = vand.u32 2147483647, %v2181
    %v2406 = vand.u32 2147483647, %v2182
    %v2407 = vand.u32 2147483647, %v2183
    %v2408 = vand.u32 2147483647, %v2184
    %v2409 = vand.u32 2147483647, %v2185
    %v2410 = vand.u32 2147483647, %v2186
    %v2411 = vand.u32 2147483647, %v2187
    %v2412 = vand.u32 2147483647, %v2188
    %v2413 = vand.u32 2147483647, %v2189
    %v2414 = vand.u32 2147483647, %v2190
    %v2415 = vand.u32 2147483647, %v2191
    %v2416 = vand.u32 2147483647, %v2192
    %v2417 = vand.u32 2147483647, %v2193
    %v2418 = vand.u32 2147483647, %v2194
    %v2419 = vand.u32 2147483647, %v2195
    %v2420 = vand.u32 2147483647, %v2196
    %v2421 = vand.u32 2147483647, %v2197
    %v2422 = vand.u32 2147483647, %v2198
    %v2423 = vand.u32 2147483647, %v2199
    %v2424 = vand.u32 2147483647, %v2200
    %v2425 = vand.u32 2147483647, %v2201
    %v2426 = vand.u32 2147483647, %v2202
    %v2427 = vand.u32 2147483647, %v2203
    %v2428 = vand.u32 2147483647, %v2204
    %v2429 = vand.u32 2147483647, %v2205
    %v2430 = vand.u32 2147483647, %v2206
    %v2431 = vand.u32 2147483647, %v2207
    %v2432 = vand.u32 2147483647, %v2208
    %v2433 = vand.u32 2147483647, %v2209
    %v2434 = vand.u32 2147483647, %v2210
    %v2435 = vand.u32 2147483647, %v2211
    %v2436 = vand.u32 2147483647, %v2212
    %v2437 = vand.u32 2147483647, %v2213
    %v2438 = vand.u32 2147483647, %v2214
    %v2439 = vand.u32 2147483647, %v2215
    %v2440 = vand.u32 2147483647, %v2216
    %v2441 = vand.u32 2147483647, %v2217
    %v2442 = vand.u32 2147483647, %v2218
    %v2443 = vand.u32 2147483647, %v2219
    %v2444 = vand.u32 2147483647, %v2220
    %v2445 = vand.u32 2147483647, %v2221
    %v2446 = vand.u32 2147483647, %v2222
    %v2447 = vand.u32 2147483647, %v2223
    %v2448 = vand.u32 2147483647, %v2224
    %v2449 = vand.u32 2147483647, %v2225
    %v2450 = vand.u32 2147483647, %v2226
    %v2451 = vand.u32 2147483647, %v2227
    %v2452 = vand.u32 2147483647, %v2228
    %v2453 = vand.u32 2147483647, %v2229
    %v2454 = vand.u32 2147483647, %v2230
    %v2455 = vand.u32 2147483647, %v2231
    %v2456 = vand.u32 2147483647, %v2232
    %v2457 = vand.u32 2147483647, %v2233
    %v2458 = vand.u32 2147483647, %v2234
    %v2459 = vand.u32 2147483647, %v2235
    %v2460 = vand.u32 2147483647, %v2236
    %v2461 = vand.u32 2147483647, %v2237
    %v2462 = vand.u32 2147483647, %v2238
    %v2463 = vand.u32 2147483647, %v2239
    %v2464 = vand.u32 2147483647, %v2240
    %v2465 = vand.u32 2147483647, %v2241
    %v2466 = vand.u32 2147483647, %v2242
    %v2467 = vand.u32 2147483647, %v2243
    %v2468 = vand.u32 2147483647, %v2244
    %v2469 = vand.u32 2147483647, %v2245
    %v2470 = vand.u32 2147483647, %v2246
    %v2471 = vand.u32 2147483647, %v2247
    %v2472 = vand.u32 2147483647, %v2248
    %v2473 = vand.u32 2147483647, %v2249
    %v2474 = vand.u32 2147483647, %v2250
    %v2475 = vand.u32 2147483647, %v2251
    %v2476 = vand.u32 2147483647, %v2252
    %v2477 = vand.u32 2147483647, %v2253
    %v2478 = vand.u32 2147483647, %v2254
    %v2479 = vand.u32 2147483647, %v2255
    %v2480 = vand.u32 2147483647, %v2256
    %v2481 = vand.u32 2147483647, %v2257
    %v2482 = vand.u32 2147483647, %v2258
    %v2483 = vand.u32 2147483647, %v2259
    %v2484 = vand.u32 2147483647, %v2260
    %v2485 = vand.u32 2147483647, %v2261
    %v2486 = vand.u32 2147483647, %v2262
    %v2487 = vand.u32 2147483647, %v2263
    %v2488 = vand.u32 2147483647, %v2264
    %v2489 = vand.u32 2147483647, %v2265
    %v2490 = vand.u32 2147483647, %v2266
    %v2491 = vand.u32 2147483647, %v2267
    %v2492 = vand.u32 2147483647, %v2268
    %v2493 = vand.u32 2147483647, %v2269
    %v2494 = vand.u32 2147483647, %v2270
    %v2495 = vand.u32 2147483647, %v2271
    %v2496 = vand.u32 2147483647, %v2272
    %v2497 = vand.u32 2147483647, %v2273
    %v2498 = vand.u32 2147483647, %v2274
    %v2499 = vand.u32 2147483647, %v2275
    %v2500 = vand.u32 2147483647, %v2276
    %v2501 = vand.u32 2147483647, %v2277
    %v2502 = vand.u32 2147483647, %v2278
    %v2503 = vand.u32 2147483647, %v2279
    %v2504 = vand.u32 2147483647, %v2280
    %v2505 = vand.u32 2147483647, %v2281
    %v2506 = vand.u32 2147483647, %v2282
    %v2507 = vand.u32 2147483647, %v2283
    %v2508 = vand.u32 2147483647, %v2284
    %v2509 = vand.u32 2147483647, %v2285
    %v2510 = vand.u32 2147483647, %v2286
    %v2511 = vand.u32 2147483647, %v2287
    %v2512 = vand.u32 2147483647, %v2288
    %v2513 = vand.u32 2147483647, %v2289
    %v2514 = vand.u32 2147483647, %v2290
    %v2515 = vand.u32 2147483647, %v2291
    %v2516 = vand.u32 2147483647, %v2292
    %v2517 = vlaneseq
    %v2518 = vshrl.u32 %v2517, 7
    %v2519 = vadd.s32 %v2518, 8
    %v2520 = vadd.s32 %v2518, 16
    %v2521 = vadd.s32 %v2518, 24
    %v2522 = vadd.s32 %v2518, 32
    %v2523 = vadd.s32 %v2518, 40
    %v2524 = vadd.s32 %v2518, 48
    %v2525 = vlaneseq
    %v2526 = vand.u32 %v2525, 127
    %s2527 = smul.u32 0, 2
    %v2528 = vstv %s2527
    %v2529 = vadd.s32 %v2526, %v2528
    %v2530 = vmul.u32 %v2529, 50
    %v2531 = vadd.s32 %v2530, %v2518
    %v2532 = vadd.s32 %v2530, %v2519
    %v2533 = vadd.s32 %v2530, %v2520
    %v2534 = vadd.s32 %v2530, %v2521
    %v2535 = vadd.s32 %v2530, %v2522
    %v2536 = vadd.s32 %v2530, %v2523
    %v2537 = vadd.s32 %v2530, %v2524
    %v2538 = vmul.u32 %v2531, 32
    %v2539 = vmul.u32 %v2532, 32
    %v2540 = vmul.u32 %v2533, 32
    %v2541 = vmul.u32 %v2534, 32
    %v2542 = vmul.u32 %v2535, 32
    %v2543 = vmul.u32 %v2536, 32
    %v2544 = vmul.u32 %v2537, 32
    %v2545 = vadd.s32 %v2538, 1
    %v2546 = vadd.s32 %v2539, 1
    %v2547 = vadd.s32 %v2540, 1
    %v2548 = vadd.s32 %v2541, 1
    %v2549 = vadd.s32 %v2542, 1
    %v2550 = vadd.s32 %v2543, 1
    %v2551 = vadd.s32 %v2544, 1
    %v2552 = vadd.s32 %v2538, 2
    %v2553 = vadd.s32 %v2539, 2
    %v2554 = vadd.s32 %v2540, 2
    %v2555 = vadd.s32 %v2541, 2
    %v2556 = vadd.s32 %v2542, 2
    %v2557 = vadd.s32 %v2543, 2
    %v2558 = vadd.s32 %v2544, 2
    %v2559 = vadd.s32 %v2538, 3
    %v2560 = vadd.s32 %v2539, 3
    %v2561 = vadd.s32 %v2540, 3
    %v2562 = vadd.s32 %v2541, 3
    %v2563 = vadd.s32 %v2542, 3
    %v2564 = vadd.s32 %v2543, 3
    %v2565 = vadd.s32 %v2544, 3
    %v2566 = vadd.s32 %v2538, 4
    %v2567 = vadd.s32 %v2539, 4
    %v2568 = vadd.s32 %v2540, 4
    %v2569 = vadd.s32 %v2541, 4
    %v2570 = vadd.s32 %v2542, 4
    %v2571 = vadd.s32 %v2543, 4
    %v2572 = vadd.s32 %v2544, 4
    %v2573 = vadd.s32 %v2538, 5
    %v2574 = vadd.s32 %v2539, 5
    %v2575 = vadd.s32 %v2540, 5
    %v2576 = vadd.s32 %v2541, 5
    %v2577 = vadd.s32 %v2542, 5
    %v2578 = vadd.s32 %v2543, 5
    %v2579 = vadd.s32 %v2544, 5
    %v2580 = vadd.s32 %v2538, 6
    %v2581 = vadd.s32 %v2539, 6
    %v2582 = vadd.s32 %v2540, 6
    %v2583 = vadd.s32 %v2541, 6
    %v2584 = vadd.s32 %v2542, 6
    %v2585 = vadd.s32 %v2543, 6
    %v2586 = vadd.s32 %v2544, 6
    %v2587 = vadd.s32 %v2538, 7
    %v2588 = vadd.s32 %v2539, 7
    %v2589 = vadd.s32 %v2540, 7
    %v2590 = vadd.s32 %v2541, 7
    %v2591 = vadd.s32 %v2542, 7
    %v2592 = vadd.s32 %v2543, 7
    %v2593 = vadd.s32 %v2544, 7
    %v2594 = vadd.s32 %v2538, 8
    %v2595 = vadd.s32 %v2539, 8
    %v2596 = vadd.s32 %v2540, 8
    %v2597 = vadd.s32 %v2541, 8
    %v2598 = vadd.s32 %v2542, 8
    %v2599 = vadd.s32 %v2543, 8
    %v2600 = vadd.s32 %v2544, 8
    %v2601 = vadd.s32 %v2538, 9
    %v2602 = vadd.s32 %v2539, 9
    %v2603 = vadd.s32 %v2540, 9
    %v2604 = vadd.s32 %v2541, 9
    %v2605 = vadd.s32 %v2542, 9
    %v2606 = vadd.s32 %v2543, 9
    %v2607 = vadd.s32 %v2544, 9
    %v2608 = vadd.s32 %v2538, 10
    %v2609 = vadd.s32 %v2539, 10
    %v2610 = vadd.s32 %v2540, 10
    %v2611 = vadd.s32 %v2541, 10
    %v2612 = vadd.s32 %v2542, 10
    %v2613 = vadd.s32 %v2543, 10
    %v2614 = vadd.s32 %v2544, 10
    %v2615 = vadd.s32 %v2538, 11
    %v2616 = vadd.s32 %v2539, 11
    %v2617 = vadd.s32 %v2540, 11
    %v2618 = vadd.s32 %v2541, 11
    %v2619 = vadd.s32 %v2542, 11
    %v2620 = vadd.s32 %v2543, 11
    %v2621 = vadd.s32 %v2544, 11
    %v2622 = vadd.s32 %v2538, 12
    %v2623 = vadd.s32 %v2539, 12
    %v2624 = vadd.s32 %v2540, 12
    %v2625 = vadd.s32 %v2541, 12
    %v2626 = vadd.s32 %v2542, 12
    %v2627 = vadd.s32 %v2543, 12
    %v2628 = vadd.s32 %v2544, 12
    %v2629 = vadd.s32 %v2538, 13
    %v2630 = vadd.s32 %v2539, 13
    %v2631 = vadd.s32 %v2540, 13
    %v2632 = vadd.s32 %v2541, 13
    %v2633 = vadd.s32 %v2542, 13
    %v2634 = vadd.s32 %v2543, 13
    %v2635 = vadd.s32 %v2544, 13
    %v2636 = vadd.s32 %v2538, 14
    %v2637 = vadd.s32 %v2539, 14
    %v2638 = vadd.s32 %v2540, 14
    %v2639 = vadd.s32 %v2541, 14
    %v2640 = vadd.s32 %v2542, 14
    %v2641 = vadd.s32 %v2543, 14
    %v2642 = vadd.s32 %v2544, 14
    %v2643 = vadd.s32 %v2538, 15
    %v2644 = vadd.s32 %v2539, 15
    %v2645 = vadd.s32 %v2540, 15
    %v2646 = vadd.s32 %v2541, 15
    %v2647 = vadd.s32 %v2542, 15
    %v2648 = vadd.s32 %v2543, 15
    %v2649 = vadd.s32 %v2544, 15
    %v2650 = vadd.s32 %v2538, 16
    %v2651 = vadd.s32 %v2539, 16
    %v2652 = vadd.s32 %v2540, 16
    %v2653 = vadd.s32 %v2541, 16
    %v2654 = vadd.s32 %v2542, 16
    %v2655 = vadd.s32 %v2543, 16
    %v2656 = vadd.s32 %v2544, 16
    %v2657 = vadd.s32 %v2538, 17
    %v2658 = vadd.s32 %v2539, 17
    %v2659 = vadd.s32 %v2540, 17
    %v2660 = vadd.s32 %v2541, 17
    %v2661 = vadd.s32 %v2542, 17
    %v2662 = vadd.s32 %v2543, 17
    %v2663 = vadd.s32 %v2544, 17
    %v2664 = vadd.s32 %v2538, 18
    %v2665 = vadd.s32 %v2539, 18
    %v2666 = vadd.s32 %v2540, 18
    %v2667 = vadd.s32 %v2541, 18
    %v2668 = vadd.s32 %v2542, 18
    %v2669 = vadd.s32 %v2543, 18
    %v2670 = vadd.s32 %v2544, 18
    %v2671 = vadd.s32 %v2538, 19
    %v2672 = vadd.s32 %v2539, 19
    %v2673 = vadd.s32 %v2540, 19
    %v2674 = vadd.s32 %v2541, 19
    %v2675 = vadd.s32 %v2542, 19
    %v2676 = vadd.s32 %v2543, 19
    %v2677 = vadd.s32 %v2544, 19
    %v2678 = vadd.s32 %v2538, 20
    %v2679 = vadd.s32 %v2539, 20
    %v2680 = vadd.s32 %v2540, 20
    %v2681 = vadd.s32 %v2541, 20
    %v2682 = vadd.s32 %v2542, 20
    %v2683 = vadd.s32 %v2543, 20
    %v2684 = vadd.s32 %v2544, 20
    %v2685 = vadd.s32 %v2538, 21
    %v2686 = vadd.s32 %v2539, 21
    %v2687 = vadd.s32 %v2540, 21
    %v2688 = vadd.s32 %v2541, 21
    %v2689 = vadd.s32 %v2542, 21
    %v2690 = vadd.s32 %v2543, 21
    %v2691 = vadd.s32 %v2544, 21
    %v2692 = vadd.s32 %v2538, 22
    %v2693 = vadd.s32 %v2539, 22
    %v2694 = vadd.s32 %v2540, 22
    %v2695 = vadd.s32 %v2541, 22
    %v2696 = vadd.s32 %v2542, 22
    %v2697 = vadd.s32 %v2543, 22
    %v2698 = vadd.s32 %v2544, 22
    %v2699 = vadd.s32 %v2538, 23
    %v2700 = vadd.s32 %v2539, 23
    %v2701 = vadd.s32 %v2540, 23
    %v2702 = vadd.s32 %v2541, 23
    %v2703 = vadd.s32 %v2542, 23
    %v2704 = vadd.s32 %v2543, 23
    %v2705 = vadd.s32 %v2544, 23
    %v2706 = vadd.s32 %v2538, 24
    %v2707 = vadd.s32 %v2539, 24
    %v2708 = vadd.s32 %v2540, 24
    %v2709 = vadd.s32 %v2541, 24
    %v2710 = vadd.s32 %v2542, 24
    %v2711 = vadd.s32 %v2543, 24
    %v2712 = vadd.s32 %v2544, 24
    %v2713 = vadd.s32 %v2538, 25
    %v2714 = vadd.s32 %v2539, 25
    %v2715 = vadd.s32 %v2540, 25
    %v2716 = vadd.s32 %v2541, 25
    %v2717 = vadd.s32 %v2542, 25
    %v2718 = vadd.s32 %v2543, 25
    %v2719 = vadd.s32 %v2544, 25
    %v2720 = vadd.s32 %v2538, 26
    %v2721 = vadd.s32 %v2539, 26
    %v2722 = vadd.s32 %v2540, 26
    %v2723 = vadd.s32 %v2541, 26
    %v2724 = vadd.s32 %v2542, 26
    %v2725 = vadd.s32 %v2543, 26
    %v2726 = vadd.s32 %v2544, 26
    %v2727 = vadd.s32 %v2538, 27
    %v2728 = vadd.s32 %v2539, 27
    %v2729 = vadd.s32 %v2540, 27
    %v2730 = vadd.s32 %v2541, 27
    %v2731 = vadd.s32 %v2542, 27
    %v2732 = vadd.s32 %v2543, 27
    %v2733 = vadd.s32 %v2544, 27
    %v2734 = vadd.s32 %v2538, 28
    %v2735 = vadd.s32 %v2539, 28
    %v2736 = vadd.s32 %v2540, 28
    %v2737 = vadd.s32 %v2541, 28
    %v2738 = vadd.s32 %v2542, 28
    %v2739 = vadd.s32 %v2543, 28
    %v2740 = vadd.s32 %v2544, 28
    %v2741 = vadd.s32 %v2538, 29
    %v2742 = vadd.s32 %v2539, 29
    %v2743 = vadd.s32 %v2540, 29
    %v2744 = vadd.s32 %v2541, 29
    %v2745 = vadd.s32 %v2542, 29
    %v2746 = vadd.s32 %v2543, 29
    %v2747 = vadd.s32 %v2544, 29
    %v2748 = vadd.s32 %v2538, 30
    %v2749 = vadd.s32 %v2539, 30
    %v2750 = vadd.s32 %v2540, 30
    %v2751 = vadd.s32 %v2541, 30
    %v2752 = vadd.s32 %v2542, 30
    %v2753 = vadd.s32 %v2543, 30
    %v2754 = vadd.s32 %v2544, 30
    %v2755 = vadd.s32 %v2538, 31
    %v2756 = vadd.s32 %v2539, 31
    %v2757 = vadd.s32 %v2540, 31
    %v2758 = vadd.s32 %v2541, 31
    %v2759 = vadd.s32 %v2542, 31
    %v2760 = vadd.s32 %v2543, 31
    %v2761 = vadd.s32 %v2544, 31
    %s2762 = sld [smem:[#allocation3]]
    %v2763 = vstv %s2762
    %v2764 = vxor.u32 %v2538, %v2763
    %v2765 = vxor.u32 %v2539, %v2763
    %v2766 = vxor.u32 %v2540, %v2763
    %v2767 = vxor.u32 %v2541, %v2763
    %v2768 = vxor.u32 %v2542, %v2763
    %v2769 = vxor.u32 %v2543, %v2763
    %v2770 = vxor.u32 %v2544, %v2763
    %v2771 = vxor.u32 %v2545, %v2763
    %v2772 = vxor.u32 %v2546, %v2763
    %v2773 = vxor.u32 %v2547, %v2763
    %v2774 = vxor.u32 %v2548, %v2763
    %v2775 = vxor.u32 %v2549, %v2763
    %v2776 = vxor.u32 %v2550, %v2763
    %v2777 = vxor.u32 %v2551, %v2763
    %v2778 = vxor.u32 %v2552, %v2763
    %v2779 = vxor.u32 %v2553, %v2763
    %v2780 = vxor.u32 %v2554, %v2763
    %v2781 = vxor.u32 %v2555, %v2763
    %v2782 = vxor.u32 %v2556, %v2763
    %v2783 = vxor.u32 %v2557, %v2763
    %v2784 = vxor.u32 %v2558, %v2763
    %v2785 = vxor.u32 %v2559, %v2763
    %v2786 = vxor.u32 %v2560, %v2763
    %v2787 = vxor.u32 %v2561, %v2763
    %v2788 = vxor.u32 %v2562, %v2763
    %v2789 = vxor.u32 %v2563, %v2763
    %v2790 = vxor.u32 %v2564, %v2763
    %v2791 = vxor.u32 %v2565, %v2763
    %v2792 = vxor.u32 %v2566, %v2763
    %v2793 = vxor.u32 %v2567, %v2763
    %v2794 = vxor.u32 %v2568, %v2763
    %v2795 = vxor.u32 %v2569, %v2763
    %v2796 = vxor.u32 %v2570, %v2763
    %v2797 = vxor.u32 %v2571, %v2763
    %v2798 = vxor.u32 %v2572, %v2763
    %v2799 = vxor.u32 %v2573, %v2763
    %v2800 = vxor.u32 %v2574, %v2763
    %v2801 = vxor.u32 %v2575, %v2763
    %v2802 = vxor.u32 %v2576, %v2763
    %v2803 = vxor.u32 %v2577, %v2763
    %v2804 = vxor.u32 %v2578, %v2763
    %v2805 = vxor.u32 %v2579, %v2763
    %v2806 = vxor.u32 %v2580, %v2763
    %v2807 = vxor.u32 %v2581, %v2763
    %v2808 = vxor.u32 %v2582, %v2763
    %v2809 = vxor.u32 %v2583, %v2763
    %v2810 = vxor.u32 %v2584, %v2763
    %v2811 = vxor.u32 %v2585, %v2763
    %v2812 = vxor.u32 %v2586, %v2763
    %v2813 = vxor.u32 %v2587, %v2763
    %v2814 = vxor.u32 %v2588, %v2763
    %v2815 = vxor.u32 %v2589, %v2763
    %v2816 = vxor.u32 %v2590, %v2763
    %v2817 = vxor.u32 %v2591, %v2763
    %v2818 = vxor.u32 %v2592, %v2763
    %v2819 = vxor.u32 %v2593, %v2763
    %v2820 = vxor.u32 %v2594, %v2763
    %v2821 = vxor.u32 %v2595, %v2763
    %v2822 = vxor.u32 %v2596, %v2763
    %v2823 = vxor.u32 %v2597, %v2763
    %v2824 = vxor.u32 %v2598, %v2763
    %v2825 = vxor.u32 %v2599, %v2763
    %v2826 = vxor.u32 %v2600, %v2763
    %v2827 = vxor.u32 %v2601, %v2763
    %v2828 = vxor.u32 %v2602, %v2763
    %v2829 = vxor.u32 %v2603, %v2763
    %v2830 = vxor.u32 %v2604, %v2763
    %v2831 = vxor.u32 %v2605, %v2763
    %v2832 = vxor.u32 %v2606, %v2763
    %v2833 = vxor.u32 %v2607, %v2763
    %v2834 = vxor.u32 %v2608, %v2763
    %v2835 = vxor.u32 %v2609, %v2763
    %v2836 = vxor.u32 %v2610, %v2763
    %v2837 = vxor.u32 %v2611, %v2763
    %v2838 = vxor.u32 %v2612, %v2763
    %v2839 = vxor.u32 %v2613, %v2763
    %v2840 = vxor.u32 %v2614, %v2763
    %v2841 = vxor.u32 %v2615, %v2763
    %v2842 = vxor.u32 %v2616, %v2763
    %v2843 = vxor.u32 %v2617, %v2763
    %v2844 = vxor.u32 %v2618, %v2763
    %v2845 = vxor.u32 %v2619, %v2763
    %v2846 = vxor.u32 %v2620, %v2763
    %v2847 = vxor.u32 %v2621, %v2763
    %v2848 = vxor.u32 %v2622, %v2763
    %v2849 = vxor.u32 %v2623, %v2763
    %v2850 = vxor.u32 %v2624, %v2763
    %v2851 = vxor.u32 %v2625, %v2763
    %v2852 = vxor.u32 %v2626, %v2763
    %v2853 = vxor.u32 %v2627, %v2763
    %v2854 = vxor.u32 %v2628, %v2763
    %v2855 = vxor.u32 %v2629, %v2763
    %v2856 = vxor.u32 %v2630, %v2763
    %v2857 = vxor.u32 %v2631, %v2763
    %v2858 = vxor.u32 %v2632, %v2763
    %v2859 = vxor.u32 %v2633, %v2763
    %v2860 = vxor.u32 %v2634, %v2763
    %v2861 = vxor.u32 %v2635, %v2763
    %v2862 = vxor.u32 %v2636, %v2763
    %v2863 = vxor.u32 %v2637, %v2763
    %v2864 = vxor.u32 %v2638, %v2763
    %v2865 = vxor.u32 %v2639, %v2763
    %v2866 = vxor.u32 %v2640, %v2763
    %v2867 = vxor.u32 %v2641, %v2763
    %v2868 = vxor.u32 %v2642, %v2763
    %v2869 = vxor.u32 %v2643, %v2763
    %v2870 = vxor.u32 %v2644, %v2763
    %v2871 = vxor.u32 %v2645, %v2763
    %v2872 = vxor.u32 %v2646, %v2763
    %v2873 = vxor.u32 %v2647, %v2763
    %v2874 = vxor.u32 %v2648, %v2763
    %v2875 = vxor.u32 %v2649, %v2763
    %v2876 = vxor.u32 %v2650, %v2763
    %v2877 = vxor.u32 %v2651, %v2763
    %v2878 = vxor.u32 %v2652, %v2763
    %v2879 = vxor.u32 %v2653, %v2763
    %v2880 = vxor.u32 %v2654, %v2763
    %v2881 = vxor.u32 %v2655, %v2763
    %v2882 = vxor.u32 %v2656, %v2763
    %v2883 = vxor.u32 %v2657, %v2763
    %v2884 = vxor.u32 %v2658, %v2763
    %v2885 = vxor.u32 %v2659, %v2763
    %v2886 = vxor.u32 %v2660, %v2763
    %v2887 = vxor.u32 %v2661, %v2763
    %v2888 = vxor.u32 %v2662, %v2763
    %v2889 = vxor.u32 %v2663, %v2763
    %v2890 = vxor.u32 %v2664, %v2763
    %v2891 = vxor.u32 %v2665, %v2763
    %v2892 = vxor.u32 %v2666, %v2763
    %v2893 = vxor.u32 %v2667, %v2763
    %v2894 = vxor.u32 %v2668, %v2763
    %v2895 = vxor.u32 %v2669, %v2763
    %v2896 = vxor.u32 %v2670, %v2763
    %v2897 = vxor.u32 %v2671, %v2763
    %v2898 = vxor.u32 %v2672, %v2763
    %v2899 = vxor.u32 %v2673, %v2763
    %v2900 = vxor.u32 %v2674, %v2763
    %v2901 = vxor.u32 %v2675, %v2763
    %v2902 = vxor.u32 %v2676, %v2763
    %v2903 = vxor.u32 %v2677, %v2763
    %v2904 = vxor.u32 %v2678, %v2763
    %v2905 = vxor.u32 %v2679, %v2763
    %v2906 = vxor.u32 %v2680, %v2763
    %v2907 = vxor.u32 %v2681, %v2763
    %v2908 = vxor.u32 %v2682, %v2763
    %v2909 = vxor.u32 %v2683, %v2763
    %v2910 = vxor.u32 %v2684, %v2763
    %v2911 = vxor.u32 %v2685, %v2763
    %v2912 = vxor.u32 %v2686, %v2763
    %v2913 = vxor.u32 %v2687, %v2763
    %v2914 = vxor.u32 %v2688, %v2763
    %v2915 = vxor.u32 %v2689, %v2763
    %v2916 = vxor.u32 %v2690, %v2763
    %v2917 = vxor.u32 %v2691, %v2763
    %v2918 = vxor.u32 %v2692, %v2763
    %v2919 = vxor.u32 %v2693, %v2763
    %v2920 = vxor.u32 %v2694, %v2763
    %v2921 = vxor.u32 %v2695, %v2763
    %v2922 = vxor.u32 %v2696, %v2763
    %v2923 = vxor.u32 %v2697, %v2763
    %v2924 = vxor.u32 %v2698, %v2763
    %v2925 = vxor.u32 %v2699, %v2763
    %v2926 = vxor.u32 %v2700, %v2763
    %v2927 = vxor.u32 %v2701, %v2763
    %v2928 = vxor.u32 %v2702, %v2763
    %v2929 = vxor.u32 %v2703, %v2763
    %v2930 = vxor.u32 %v2704, %v2763
    %v2931 = vxor.u32 %v2705, %v2763
    %v2932 = vxor.u32 %v2706, %v2763
    %v2933 = vxor.u32 %v2707, %v2763
    %v2934 = vxor.u32 %v2708, %v2763
    %v2935 = vxor.u32 %v2709, %v2763
    %v2936 = vxor.u32 %v2710, %v2763
    %v2937 = vxor.u32 %v2711, %v2763
    %v2938 = vxor.u32 %v2712, %v2763
    %v2939 = vxor.u32 %v2713, %v2763
    %v2940 = vxor.u32 %v2714, %v2763
    %v2941 = vxor.u32 %v2715, %v2763
    %v2942 = vxor.u32 %v2716, %v2763
    %v2943 = vxor.u32 %v2717, %v2763
    %v2944 = vxor.u32 %v2718, %v2763
    %v2945 = vxor.u32 %v2719, %v2763
    %v2946 = vxor.u32 %v2720, %v2763
    %v2947 = vxor.u32 %v2721, %v2763
    %v2948 = vxor.u32 %v2722, %v2763
    %v2949 = vxor.u32 %v2723, %v2763
    %v2950 = vxor.u32 %v2724, %v2763
    %v2951 = vxor.u32 %v2725, %v2763
    %v2952 = vxor.u32 %v2726, %v2763
    %v2953 = vxor.u32 %v2727, %v2763
    %v2954 = vxor.u32 %v2728, %v2763
    %v2955 = vxor.u32 %v2729, %v2763
    %v2956 = vxor.u32 %v2730, %v2763
    %v2957 = vxor.u32 %v2731, %v2763
    %v2958 = vxor.u32 %v2732, %v2763
    %v2959 = vxor.u32 %v2733, %v2763
    %v2960 = vxor.u32 %v2734, %v2763
    %v2961 = vxor.u32 %v2735, %v2763
    %v2962 = vxor.u32 %v2736, %v2763
    %v2963 = vxor.u32 %v2737, %v2763
    %v2964 = vxor.u32 %v2738, %v2763
    %v2965 = vxor.u32 %v2739, %v2763
    %v2966 = vxor.u32 %v2740, %v2763
    %v2967 = vxor.u32 %v2741, %v2763
    %v2968 = vxor.u32 %v2742, %v2763
    %v2969 = vxor.u32 %v2743, %v2763
    %v2970 = vxor.u32 %v2744, %v2763
    %v2971 = vxor.u32 %v2745, %v2763
    %v2972 = vxor.u32 %v2746, %v2763
    %v2973 = vxor.u32 %v2747, %v2763
    %v2974 = vxor.u32 %v2748, %v2763
    %v2975 = vxor.u32 %v2749, %v2763
    %v2976 = vxor.u32 %v2750, %v2763
    %v2977 = vxor.u32 %v2751, %v2763
    %v2978 = vxor.u32 %v2752, %v2763
    %v2979 = vxor.u32 %v2753, %v2763
    %v2980 = vxor.u32 %v2754, %v2763
    %v2981 = vxor.u32 %v2755, %v2763
    %v2982 = vxor.u32 %v2756, %v2763
    %v2983 = vxor.u32 %v2757, %v2763
    %v2984 = vxor.u32 %v2758, %v2763
    %v2985 = vxor.u32 %v2759, %v2763
    %v2986 = vxor.u32 %v2760, %v2763
    %v2987 = vxor.u32 %v2761, %v2763
    %v2988 = vmul.u32 %v2764, 2654435761
    %v2989 = vmul.u32 %v2765, 2654435761
    %v2990 = vmul.u32 %v2766, 2654435761
    %v2991 = vmul.u32 %v2767, 2654435761
    %v2992 = vmul.u32 %v2768, 2654435761
    %v2993 = vmul.u32 %v2769, 2654435761
    %v2994 = vmul.u32 %v2770, 2654435761
    %v2995 = vmul.u32 %v2771, 2654435761
    %v2996 = vmul.u32 %v2772, 2654435761
    %v2997 = vmul.u32 %v2773, 2654435761
    %v2998 = vmul.u32 %v2774, 2654435761
    %v2999 = vmul.u32 %v2775, 2654435761
    %v3000 = vmul.u32 %v2776, 2654435761
    %v3001 = vmul.u32 %v2777, 2654435761
    %v3002 = vmul.u32 %v2778, 2654435761
    %v3003 = vmul.u32 %v2779, 2654435761
    %v3004 = vmul.u32 %v2780, 2654435761
    %v3005 = vmul.u32 %v2781, 2654435761
    %v3006 = vmul.u32 %v2782, 2654435761
    %v3007 = vmul.u32 %v2783, 2654435761
    %v3008 = vmul.u32 %v2784, 2654435761
    %v3009 = vmul.u32 %v2785, 2654435761
    %v3010 = vmul.u32 %v2786, 2654435761
    %v3011 = vmul.u32 %v2787, 2654435761
    %v3012 = vmul.u32 %v2788, 2654435761
    %v3013 = vmul.u32 %v2789, 2654435761
    %v3014 = vmul.u32 %v2790, 2654435761
    %v3015 = vmul.u32 %v2791, 2654435761
    %v3016 = vmul.u32 %v2792, 2654435761
    %v3017 = vmul.u32 %v2793, 2654435761
    %v3018 = vmul.u32 %v2794, 2654435761
    %v3019 = vmul.u32 %v2795, 2654435761
    %v3020 = vmul.u32 %v2796, 2654435761
    %v3021 = vmul.u32 %v2797, 2654435761
    %v3022 = vmul.u32 %v2798, 2654435761
    %v3023 = vmul.u32 %v2799, 2654435761
    %v3024 = vmul.u32 %v2800, 2654435761
    %v3025 = vmul.u32 %v2801, 2654435761
    %v3026 = vmul.u32 %v2802, 2654435761
    %v3027 = vmul.u32 %v2803, 2654435761
    %v3028 = vmul.u32 %v2804, 2654435761
    %v3029 = vmul.u32 %v2805, 2654435761
    %v3030 = vmul.u32 %v2806, 2654435761
    %v3031 = vmul.u32 %v2807, 2654435761
    %v3032 = vmul.u32 %v2808, 2654435761
    %v3033 = vmul.u32 %v2809, 2654435761
    %v3034 = vmul.u32 %v2810, 2654435761
    %v3035 = vmul.u32 %v2811, 2654435761
    %v3036 = vmul.u32 %v2812, 2654435761
    %v3037 = vmul.u32 %v2813, 2654435761
    %v3038 = vmul.u32 %v2814, 2654435761
    %v3039 = vmul.u32 %v2815, 2654435761
    %v3040 = vmul.u32 %v2816, 2654435761
    %v3041 = vmul.u32 %v2817, 2654435761
    %v3042 = vmul.u32 %v2818, 2654435761
    %v3043 = vmul.u32 %v2819, 2654435761
    %v3044 = vmul.u32 %v2820, 2654435761
    %v3045 = vmul.u32 %v2821, 2654435761
    %v3046 = vmul.u32 %v2822, 2654435761
    %v3047 = vmul.u32 %v2823, 2654435761
    %v3048 = vmul.u32 %v2824, 2654435761
    %v3049 = vmul.u32 %v2825, 2654435761
    %v3050 = vmul.u32 %v2826, 2654435761
    %v3051 = vmul.u32 %v2827, 2654435761
    %v3052 = vmul.u32 %v2828, 2654435761
    %v3053 = vmul.u32 %v2829, 2654435761
    %v3054 = vmul.u32 %v2830, 2654435761
    %v3055 = vmul.u32 %v2831, 2654435761
    %v3056 = vmul.u32 %v2832, 2654435761
    %v3057 = vmul.u32 %v2833, 2654435761
    %v3058 = vmul.u32 %v2834, 2654435761
    %v3059 = vmul.u32 %v2835, 2654435761
    %v3060 = vmul.u32 %v2836, 2654435761
    %v3061 = vmul.u32 %v2837, 2654435761
    %v3062 = vmul.u32 %v2838, 2654435761
    %v3063 = vmul.u32 %v2839, 2654435761
    %v3064 = vmul.u32 %v2840, 2654435761
    %v3065 = vmul.u32 %v2841, 2654435761
    %v3066 = vmul.u32 %v2842, 2654435761
    %v3067 = vmul.u32 %v2843, 2654435761
    %v3068 = vmul.u32 %v2844, 2654435761
    %v3069 = vmul.u32 %v2845, 2654435761
    %v3070 = vmul.u32 %v2846, 2654435761
    %v3071 = vmul.u32 %v2847, 2654435761
    %v3072 = vmul.u32 %v2848, 2654435761
    %v3073 = vmul.u32 %v2849, 2654435761
    %v3074 = vmul.u32 %v2850, 2654435761
    %v3075 = vmul.u32 %v2851, 2654435761
    %v3076 = vmul.u32 %v2852, 2654435761
    %v3077 = vmul.u32 %v2853, 2654435761
    %v3078 = vmul.u32 %v2854, 2654435761
    %v3079 = vmul.u32 %v2855, 2654435761
    %v3080 = vmul.u32 %v2856, 2654435761
    %v3081 = vmul.u32 %v2857, 2654435761
    %v3082 = vmul.u32 %v2858, 2654435761
    %v3083 = vmul.u32 %v2859, 2654435761
    %v3084 = vmul.u32 %v2860, 2654435761
    %v3085 = vmul.u32 %v2861, 2654435761
    %v3086 = vmul.u32 %v2862, 2654435761
    %v3087 = vmul.u32 %v2863, 2654435761
    %v3088 = vmul.u32 %v2864, 2654435761
    %v3089 = vmul.u32 %v2865, 2654435761
    %v3090 = vmul.u32 %v2866, 2654435761
    %v3091 = vmul.u32 %v2867, 2654435761
    %v3092 = vmul.u32 %v2868, 2654435761
    %v3093 = vmul.u32 %v2869, 2654435761
    %v3094 = vmul.u32 %v2870, 2654435761
    %v3095 = vmul.u32 %v2871, 2654435761
    %v3096 = vmul.u32 %v2872, 2654435761
    %v3097 = vmul.u32 %v2873, 2654435761
    %v3098 = vmul.u32 %v2874, 2654435761
    %v3099 = vmul.u32 %v2875, 2654435761
    %v3100 = vmul.u32 %v2876, 2654435761
    %v3101 = vmul.u32 %v2877, 2654435761
    %v3102 = vmul.u32 %v2878, 2654435761
    %v3103 = vmul.u32 %v2879, 2654435761
    %v3104 = vmul.u32 %v2880, 2654435761
    %v3105 = vmul.u32 %v2881, 2654435761
    %v3106 = vmul.u32 %v2882, 2654435761
    %v3107 = vmul.u32 %v2883, 2654435761
    %v3108 = vmul.u32 %v2884, 2654435761
    %v3109 = vmul.u32 %v2885, 2654435761
    %v3110 = vmul.u32 %v2886, 2654435761
    %v3111 = vmul.u32 %v2887, 2654435761
    %v3112 = vmul.u32 %v2888, 2654435761
    %v3113 = vmul.u32 %v2889, 2654435761
    %v3114 = vmul.u32 %v2890, 2654435761
    %v3115 = vmul.u32 %v2891, 2654435761
    %v3116 = vmul.u32 %v2892, 2654435761
    %v3117 = vmul.u32 %v2893, 2654435761
    %v3118 = vmul.u32 %v2894, 2654435761
    %v3119 = vmul.u32 %v2895, 2654435761
    %v3120 = vmul.u32 %v2896, 2654435761
    %v3121 = vmul.u32 %v2897, 2654435761
    %v3122 = vmul.u32 %v2898, 2654435761
    %v3123 = vmul.u32 %v2899, 2654435761
    %v3124 = vmul.u32 %v2900, 2654435761
    %v3125 = vmul.u32 %v2901, 2654435761
    %v3126 = vmul.u32 %v2902, 2654435761
    %v3127 = vmul.u32 %v2903, 2654435761
    %v3128 = vmul.u32 %v2904, 2654435761
    %v3129 = vmul.u32 %v2905, 2654435761
    %v3130 = vmul.u32 %v2906, 2654435761
    %v3131 = vmul.u32 %v2907, 2654435761
    %v3132 = vmul.u32 %v2908, 2654435761
    %v3133 = vmul.u32 %v2909, 2654435761
    %v3134 = vmul.u32 %v2910, 2654435761
    %v3135 = vmul.u32 %v2911, 2654435761
    %v3136 = vmul.u32 %v2912, 2654435761
    %v3137 = vmul.u32 %v2913, 2654435761
    %v3138 = vmul.u32 %v2914, 2654435761
    %v3139 = vmul.u32 %v2915, 2654435761
    %v3140 = vmul.u32 %v2916, 2654435761
    %v3141 = vmul.u32 %v2917, 2654435761
    %v3142 = vmul.u32 %v2918, 2654435761
    %v3143 = vmul.u32 %v2919, 2654435761
    %v3144 = vmul.u32 %v2920, 2654435761
    %v3145 = vmul.u32 %v2921, 2654435761
    %v3146 = vmul.u32 %v2922, 2654435761
    %v3147 = vmul.u32 %v2923, 2654435761
    %v3148 = vmul.u32 %v2924, 2654435761
    %v3149 = vmul.u32 %v2925, 2654435761
    %v3150 = vmul.u32 %v2926, 2654435761
    %v3151 = vmul.u32 %v2927, 2654435761
    %v3152 = vmul.u32 %v2928, 2654435761
    %v3153 = vmul.u32 %v2929, 2654435761
    %v3154 = vmul.u32 %v2930, 2654435761
    %v3155 = vmul.u32 %v2931, 2654435761
    %v3156 = vmul.u32 %v2932, 2654435761
    %v3157 = vmul.u32 %v2933, 2654435761
    %v3158 = vmul.u32 %v2934, 2654435761
    %v3159 = vmul.u32 %v2935, 2654435761
    %v3160 = vmul.u32 %v2936, 2654435761
    %v3161 = vmul.u32 %v2937, 2654435761
    %v3162 = vmul.u32 %v2938, 2654435761
    %v3163 = vmul.u32 %v2939, 2654435761
    %v3164 = vmul.u32 %v2940, 2654435761
    %v3165 = vmul.u32 %v2941, 2654435761
    %v3166 = vmul.u32 %v2942, 2654435761
    %v3167 = vmul.u32 %v2943, 2654435761
    %v3168 = vmul.u32 %v2944, 2654435761
    %v3169 = vmul.u32 %v2945, 2654435761
    %v3170 = vmul.u32 %v2946, 2654435761
    %v3171 = vmul.u32 %v2947, 2654435761
    %v3172 = vmul.u32 %v2948, 2654435761
    %v3173 = vmul.u32 %v2949, 2654435761
    %v3174 = vmul.u32 %v2950, 2654435761
    %v3175 = vmul.u32 %v2951, 2654435761
    %v3176 = vmul.u32 %v2952, 2654435761
    %v3177 = vmul.u32 %v2953, 2654435761
    %v3178 = vmul.u32 %v2954, 2654435761
    %v3179 = vmul.u32 %v2955, 2654435761
    %v3180 = vmul.u32 %v2956, 2654435761
    %v3181 = vmul.u32 %v2957, 2654435761
    %v3182 = vmul.u32 %v2958, 2654435761
    %v3183 = vmul.u32 %v2959, 2654435761
    %v3184 = vmul.u32 %v2960, 2654435761
    %v3185 = vmul.u32 %v2961, 2654435761
    %v3186 = vmul.u32 %v2962, 2654435761
    %v3187 = vmul.u32 %v2963, 2654435761
    %v3188 = vmul.u32 %v2964, 2654435761
    %v3189 = vmul.u32 %v2965, 2654435761
    %v3190 = vmul.u32 %v2966, 2654435761
    %v3191 = vmul.u32 %v2967, 2654435761
    %v3192 = vmul.u32 %v2968, 2654435761
    %v3193 = vmul.u32 %v2969, 2654435761
    %v3194 = vmul.u32 %v2970, 2654435761
    %v3195 = vmul.u32 %v2971, 2654435761
    %v3196 = vmul.u32 %v2972, 2654435761
    %v3197 = vmul.u32 %v2973, 2654435761
    %v3198 = vmul.u32 %v2974, 2654435761
    %v3199 = vmul.u32 %v2975, 2654435761
    %v3200 = vmul.u32 %v2976, 2654435761
    %v3201 = vmul.u32 %v2977, 2654435761
    %v3202 = vmul.u32 %v2978, 2654435761
    %v3203 = vmul.u32 %v2979, 2654435761
    %v3204 = vmul.u32 %v2980, 2654435761
    %v3205 = vmul.u32 %v2981, 2654435761
    %v3206 = vmul.u32 %v2982, 2654435761
    %v3207 = vmul.u32 %v2983, 2654435761
    %v3208 = vmul.u32 %v2984, 2654435761
    %v3209 = vmul.u32 %v2985, 2654435761
    %v3210 = vmul.u32 %v2986, 2654435761
    %v3211 = vmul.u32 %v2987, 2654435761
    %v3212 = vand.u32 %v2988, 2147483647
    %v3213 = vand.u32 %v2989, 2147483647
    %v3214 = vand.u32 %v2990, 2147483647
    %v3215 = vand.u32 %v2991, 2147483647
    %v3216 = vand.u32 %v2992, 2147483647
    %v3217 = vand.u32 %v2993, 2147483647
    %v3218 = vand.u32 %v2994, 2147483647
    %v3219 = vand.u32 %v2995, 2147483647
    %v3220 = vand.u32 %v2996, 2147483647
    %v3221 = vand.u32 %v2997, 2147483647
    %v3222 = vand.u32 %v2998, 2147483647
    %v3223 = vand.u32 %v2999, 2147483647
    %v3224 = vand.u32 %v3000, 2147483647
    %v3225 = vand.u32 %v3001, 2147483647
    %v3226 = vand.u32 %v3002, 2147483647
    %v3227 = vand.u32 %v3003, 2147483647
    %v3228 = vand.u32 %v3004, 2147483647
    %v3229 = vand.u32 %v3005, 2147483647
    %v3230 = vand.u32 %v3006, 2147483647
    %v3231 = vand.u32 %v3007, 2147483647
    %v3232 = vand.u32 %v3008, 2147483647
    %v3233 = vand.u32 %v3009, 2147483647
    %v3234 = vand.u32 %v3010, 2147483647
    %v3235 = vand.u32 %v3011, 2147483647
    %v3236 = vand.u32 %v3012, 2147483647
    %v3237 = vand.u32 %v3013, 2147483647
    %v3238 = vand.u32 %v3014, 2147483647
    %v3239 = vand.u32 %v3015, 2147483647
    %v3240 = vand.u32 %v3016, 2147483647
    %v3241 = vand.u32 %v3017, 2147483647
    %v3242 = vand.u32 %v3018, 2147483647
    %v3243 = vand.u32 %v3019, 2147483647
    %v3244 = vand.u32 %v3020, 2147483647
    %v3245 = vand.u32 %v3021, 2147483647
    %v3246 = vand.u32 %v3022, 2147483647
    %v3247 = vand.u32 %v3023, 2147483647
    %v3248 = vand.u32 %v3024, 2147483647
    %v3249 = vand.u32 %v3025, 2147483647
    %v3250 = vand.u32 %v3026, 2147483647
    %v3251 = vand.u32 %v3027, 2147483647
    %v3252 = vand.u32 %v3028, 2147483647
    %v3253 = vand.u32 %v3029, 2147483647
    %v3254 = vand.u32 %v3030, 2147483647
    %v3255 = vand.u32 %v3031, 2147483647
    %v3256 = vand.u32 %v3032, 2147483647
    %v3257 = vand.u32 %v3033, 2147483647
    %v3258 = vand.u32 %v3034, 2147483647
    %v3259 = vand.u32 %v3035, 2147483647
    %v3260 = vand.u32 %v3036, 2147483647
    %v3261 = vand.u32 %v3037, 2147483647
    %v3262 = vand.u32 %v3038, 2147483647
    %v3263 = vand.u32 %v3039, 2147483647
    %v3264 = vand.u32 %v3040, 2147483647
    %v3265 = vand.u32 %v3041, 2147483647
    %v3266 = vand.u32 %v3042, 2147483647
    %v3267 = vand.u32 %v3043, 2147483647
    %v3268 = vand.u32 %v3044, 2147483647
    %v3269 = vand.u32 %v3045, 2147483647
    %v3270 = vand.u32 %v3046, 2147483647
    %v3271 = vand.u32 %v3047, 2147483647
    %v3272 = vand.u32 %v3048, 2147483647
    %v3273 = vand.u32 %v3049, 2147483647
    %v3274 = vand.u32 %v3050, 2147483647
    %v3275 = vand.u32 %v3051, 2147483647
    %v3276 = vand.u32 %v3052, 2147483647
    %v3277 = vand.u32 %v3053, 2147483647
    %v3278 = vand.u32 %v3054, 2147483647
    %v3279 = vand.u32 %v3055, 2147483647
    %v3280 = vand.u32 %v3056, 2147483647
    %v3281 = vand.u32 %v3057, 2147483647
    %v3282 = vand.u32 %v3058, 2147483647
    %v3283 = vand.u32 %v3059, 2147483647
    %v3284 = vand.u32 %v3060, 2147483647
    %v3285 = vand.u32 %v3061, 2147483647
    %v3286 = vand.u32 %v3062, 2147483647
    %v3287 = vand.u32 %v3063, 2147483647
    %v3288 = vand.u32 %v3064, 2147483647
    %v3289 = vand.u32 %v3065, 2147483647
    %v3290 = vand.u32 %v3066, 2147483647
    %v3291 = vand.u32 %v3067, 2147483647
    %v3292 = vand.u32 %v3068, 2147483647
    %v3293 = vand.u32 %v3069, 2147483647
    %v3294 = vand.u32 %v3070, 2147483647
    %v3295 = vand.u32 %v3071, 2147483647
    %v3296 = vand.u32 %v3072, 2147483647
    %v3297 = vand.u32 %v3073, 2147483647
    %v3298 = vand.u32 %v3074, 2147483647
    %v3299 = vand.u32 %v3075, 2147483647
    %v3300 = vand.u32 %v3076, 2147483647
    %v3301 = vand.u32 %v3077, 2147483647
    %v3302 = vand.u32 %v3078, 2147483647
    %v3303 = vand.u32 %v3079, 2147483647
    %v3304 = vand.u32 %v3080, 2147483647
    %v3305 = vand.u32 %v3081, 2147483647
    %v3306 = vand.u32 %v3082, 2147483647
    %v3307 = vand.u32 %v3083, 2147483647
    %v3308 = vand.u32 %v3084, 2147483647
    %v3309 = vand.u32 %v3085, 2147483647
    %v3310 = vand.u32 %v3086, 2147483647
    %v3311 = vand.u32 %v3087, 2147483647
    %v3312 = vand.u32 %v3088, 2147483647
    %v3313 = vand.u32 %v3089, 2147483647
    %v3314 = vand.u32 %v3090, 2147483647
    %v3315 = vand.u32 %v3091, 2147483647
    %v3316 = vand.u32 %v3092, 2147483647
    %v3317 = vand.u32 %v3093, 2147483647
    %v3318 = vand.u32 %v3094, 2147483647
    %v3319 = vand.u32 %v3095, 2147483647
    %v3320 = vand.u32 %v3096, 2147483647
    %v3321 = vand.u32 %v3097, 2147483647
    %v3322 = vand.u32 %v3098, 2147483647
    %v3323 = vand.u32 %v3099, 2147483647
    %v3324 = vand.u32 %v3100, 2147483647
    %v3325 = vand.u32 %v3101, 2147483647
    %v3326 = vand.u32 %v3102, 2147483647
    %v3327 = vand.u32 %v3103, 2147483647
    %v3328 = vand.u32 %v3104, 2147483647
    %v3329 = vand.u32 %v3105, 2147483647
    %v3330 = vand.u32 %v3106, 2147483647
    %v3331 = vand.u32 %v3107, 2147483647
    %v3332 = vand.u32 %v3108, 2147483647
    %v3333 = vand.u32 %v3109, 2147483647
    %v3334 = vand.u32 %v3110, 2147483647
    %v3335 = vand.u32 %v3111, 2147483647
    %v3336 = vand.u32 %v3112, 2147483647
    %v3337 = vand.u32 %v3113, 2147483647
    %v3338 = vand.u32 %v3114, 2147483647
    %v3339 = vand.u32 %v3115, 2147483647
    %v3340 = vand.u32 %v3116, 2147483647
    %v3341 = vand.u32 %v3117, 2147483647
    %v3342 = vand.u32 %v3118, 2147483647
    %v3343 = vand.u32 %v3119, 2147483647
    %v3344 = vand.u32 %v3120, 2147483647
    %v3345 = vand.u32 %v3121, 2147483647
    %v3346 = vand.u32 %v3122, 2147483647
    %v3347 = vand.u32 %v3123, 2147483647
    %v3348 = vand.u32 %v3124, 2147483647
    %v3349 = vand.u32 %v3125, 2147483647
    %v3350 = vand.u32 %v3126, 2147483647
    %v3351 = vand.u32 %v3127, 2147483647
    %v3352 = vand.u32 %v3128, 2147483647
    %v3353 = vand.u32 %v3129, 2147483647
    %v3354 = vand.u32 %v3130, 2147483647
    %v3355 = vand.u32 %v3131, 2147483647
    %v3356 = vand.u32 %v3132, 2147483647
    %v3357 = vand.u32 %v3133, 2147483647
    %v3358 = vand.u32 %v3134, 2147483647
    %v3359 = vand.u32 %v3135, 2147483647
    %v3360 = vand.u32 %v3136, 2147483647
    %v3361 = vand.u32 %v3137, 2147483647
    %v3362 = vand.u32 %v3138, 2147483647
    %v3363 = vand.u32 %v3139, 2147483647
    %v3364 = vand.u32 %v3140, 2147483647
    %v3365 = vand.u32 %v3141, 2147483647
    %v3366 = vand.u32 %v3142, 2147483647
    %v3367 = vand.u32 %v3143, 2147483647
    %v3368 = vand.u32 %v3144, 2147483647
    %v3369 = vand.u32 %v3145, 2147483647
    %v3370 = vand.u32 %v3146, 2147483647
    %v3371 = vand.u32 %v3147, 2147483647
    %v3372 = vand.u32 %v3148, 2147483647
    %v3373 = vand.u32 %v3149, 2147483647
    %v3374 = vand.u32 %v3150, 2147483647
    %v3375 = vand.u32 %v3151, 2147483647
    %v3376 = vand.u32 %v3152, 2147483647
    %v3377 = vand.u32 %v3153, 2147483647
    %v3378 = vand.u32 %v3154, 2147483647
    %v3379 = vand.u32 %v3155, 2147483647
    %v3380 = vand.u32 %v3156, 2147483647
    %v3381 = vand.u32 %v3157, 2147483647
    %v3382 = vand.u32 %v3158, 2147483647
    %v3383 = vand.u32 %v3159, 2147483647
    %v3384 = vand.u32 %v3160, 2147483647
    %v3385 = vand.u32 %v3161, 2147483647
    %v3386 = vand.u32 %v3162, 2147483647
    %v3387 = vand.u32 %v3163, 2147483647
    %v3388 = vand.u32 %v3164, 2147483647
    %v3389 = vand.u32 %v3165, 2147483647
    %v3390 = vand.u32 %v3166, 2147483647
    %v3391 = vand.u32 %v3167, 2147483647
    %v3392 = vand.u32 %v3168, 2147483647
    %v3393 = vand.u32 %v3169, 2147483647
    %v3394 = vand.u32 %v3170, 2147483647
    %v3395 = vand.u32 %v3171, 2147483647
    %v3396 = vand.u32 %v3172, 2147483647
    %v3397 = vand.u32 %v3173, 2147483647
    %v3398 = vand.u32 %v3174, 2147483647
    %v3399 = vand.u32 %v3175, 2147483647
    %v3400 = vand.u32 %v3176, 2147483647
    %v3401 = vand.u32 %v3177, 2147483647
    %v3402 = vand.u32 %v3178, 2147483647
    %v3403 = vand.u32 %v3179, 2147483647
    %v3404 = vand.u32 %v3180, 2147483647
    %v3405 = vand.u32 %v3181, 2147483647
    %v3406 = vand.u32 %v3182, 2147483647
    %v3407 = vand.u32 %v3183, 2147483647
    %v3408 = vand.u32 %v3184, 2147483647
    %v3409 = vand.u32 %v3185, 2147483647
    %v3410 = vand.u32 %v3186, 2147483647
    %v3411 = vand.u32 %v3187, 2147483647
    %v3412 = vand.u32 %v3188, 2147483647
    %v3413 = vand.u32 %v3189, 2147483647
    %v3414 = vand.u32 %v3190, 2147483647
    %v3415 = vand.u32 %v3191, 2147483647
    %v3416 = vand.u32 %v3192, 2147483647
    %v3417 = vand.u32 %v3193, 2147483647
    %v3418 = vand.u32 %v3194, 2147483647
    %v3419 = vand.u32 %v3195, 2147483647
    %v3420 = vand.u32 %v3196, 2147483647
    %v3421 = vand.u32 %v3197, 2147483647
    %v3422 = vand.u32 %v3198, 2147483647
    %v3423 = vand.u32 %v3199, 2147483647
    %v3424 = vand.u32 %v3200, 2147483647
    %v3425 = vand.u32 %v3201, 2147483647
    %v3426 = vand.u32 %v3202, 2147483647
    %v3427 = vand.u32 %v3203, 2147483647
    %v3428 = vand.u32 %v3204, 2147483647
    %v3429 = vand.u32 %v3205, 2147483647
    %v3430 = vand.u32 %v3206, 2147483647
    %v3431 = vand.u32 %v3207, 2147483647
    %v3432 = vand.u32 %v3208, 2147483647
    %v3433 = vand.u32 %v3209, 2147483647
    %v3434 = vand.u32 %v3210, 2147483647
    %v3435 = vand.u32 %v3211, 2147483647
    %v3436 = vshra.s32 %v3212, 16
    %v3437 = vshra.s32 %v3213, 16
    %v3438 = vshra.s32 %v3214, 16
    %v3439 = vshra.s32 %v3215, 16
    %v3440 = vshra.s32 %v3216, 16
    %v3441 = vshra.s32 %v3217, 16
    %v3442 = vshra.s32 %v3218, 16
    %v3443 = vshra.s32 %v3219, 16
    %v3444 = vshra.s32 %v3220, 16
    %v3445 = vshra.s32 %v3221, 16
    %v3446 = vshra.s32 %v3222, 16
    %v3447 = vshra.s32 %v3223, 16
    %v3448 = vshra.s32 %v3224, 16
    %v3449 = vshra.s32 %v3225, 16
    %v3450 = vshra.s32 %v3226, 16
    %v3451 = vshra.s32 %v3227, 16
    %v3452 = vshra.s32 %v3228, 16
    %v3453 = vshra.s32 %v3229, 16
    %v3454 = vshra.s32 %v3230, 16
    %v3455 = vshra.s32 %v3231, 16
    %v3456 = vshra.s32 %v3232, 16
    %v3457 = vshra.s32 %v3233, 16
    %v3458 = vshra.s32 %v3234, 16
    %v3459 = vshra.s32 %v3235, 16
    %v3460 = vshra.s32 %v3236, 16
    %v3461 = vshra.s32 %v3237, 16
    %v3462 = vshra.s32 %v3238, 16
    %v3463 = vshra.s32 %v3239, 16
    %v3464 = vshra.s32 %v3240, 16
    %v3465 = vshra.s32 %v3241, 16
    %v3466 = vshra.s32 %v3242, 16
    %v3467 = vshra.s32 %v3243, 16
    %v3468 = vshra.s32 %v3244, 16
    %v3469 = vshra.s32 %v3245, 16
    %v3470 = vshra.s32 %v3246, 16
    %v3471 = vshra.s32 %v3247, 16
    %v3472 = vshra.s32 %v3248, 16
    %v3473 = vshra.s32 %v3249, 16
    %v3474 = vshra.s32 %v3250, 16
    %v3475 = vshra.s32 %v3251, 16
    %v3476 = vshra.s32 %v3252, 16
    %v3477 = vshra.s32 %v3253, 16
    %v3478 = vshra.s32 %v3254, 16
    %v3479 = vshra.s32 %v3255, 16
    %v3480 = vshra.s32 %v3256, 16
    %v3481 = vshra.s32 %v3257, 16
    %v3482 = vshra.s32 %v3258, 16
    %v3483 = vshra.s32 %v3259, 16
    %v3484 = vshra.s32 %v3260, 16
    %v3485 = vshra.s32 %v3261, 16
    %v3486 = vshra.s32 %v3262, 16
    %v3487 = vshra.s32 %v3263, 16
    %v3488 = vshra.s32 %v3264, 16
    %v3489 = vshra.s32 %v3265, 16
    %v3490 = vshra.s32 %v3266, 16
    %v3491 = vshra.s32 %v3267, 16
    %v3492 = vshra.s32 %v3268, 16
    %v3493 = vshra.s32 %v3269, 16
    %v3494 = vshra.s32 %v3270, 16
    %v3495 = vshra.s32 %v3271, 16
    %v3496 = vshra.s32 %v3272, 16
    %v3497 = vshra.s32 %v3273, 16
    %v3498 = vshra.s32 %v3274, 16
    %v3499 = vshra.s32 %v3275, 16
    %v3500 = vshra.s32 %v3276, 16
    %v3501 = vshra.s32 %v3277, 16
    %v3502 = vshra.s32 %v3278, 16
    %v3503 = vshra.s32 %v3279, 16
    %v3504 = vshra.s32 %v3280, 16
    %v3505 = vshra.s32 %v3281, 16
    %v3506 = vshra.s32 %v3282, 16
    %v3507 = vshra.s32 %v3283, 16
    %v3508 = vshra.s32 %v3284, 16
    %v3509 = vshra.s32 %v3285, 16
    %v3510 = vshra.s32 %v3286, 16
    %v3511 = vshra.s32 %v3287, 16
    %v3512 = vshra.s32 %v3288, 16
    %v3513 = vshra.s32 %v3289, 16
    %v3514 = vshra.s32 %v3290, 16
    %v3515 = vshra.s32 %v3291, 16
    %v3516 = vshra.s32 %v3292, 16
    %v3517 = vshra.s32 %v3293, 16
    %v3518 = vshra.s32 %v3294, 16
    %v3519 = vshra.s32 %v3295, 16
    %v3520 = vshra.s32 %v3296, 16
    %v3521 = vshra.s32 %v3297, 16
    %v3522 = vshra.s32 %v3298, 16
    %v3523 = vshra.s32 %v3299, 16
    %v3524 = vshra.s32 %v3300, 16
    %v3525 = vshra.s32 %v3301, 16
    %v3526 = vshra.s32 %v3302, 16
    %v3527 = vshra.s32 %v3303, 16
    %v3528 = vshra.s32 %v3304, 16
    %v3529 = vshra.s32 %v3305, 16
    %v3530 = vshra.s32 %v3306, 16
    %v3531 = vshra.s32 %v3307, 16
    %v3532 = vshra.s32 %v3308, 16
    %v3533 = vshra.s32 %v3309, 16
    %v3534 = vshra.s32 %v3310, 16
    %v3535 = vshra.s32 %v3311, 16
    %v3536 = vshra.s32 %v3312, 16
    %v3537 = vshra.s32 %v3313, 16
    %v3538 = vshra.s32 %v3314, 16
    %v3539 = vshra.s32 %v3315, 16
    %v3540 = vshra.s32 %v3316, 16
    %v3541 = vshra.s32 %v3317, 16
    %v3542 = vshra.s32 %v3318, 16
    %v3543 = vshra.s32 %v3319, 16
    %v3544 = vshra.s32 %v3320, 16
    %v3545 = vshra.s32 %v3321, 16
    %v3546 = vshra.s32 %v3322, 16
    %v3547 = vshra.s32 %v3323, 16
    %v3548 = vshra.s32 %v3324, 16
    %v3549 = vshra.s32 %v3325, 16
    %v3550 = vshra.s32 %v3326, 16
    %v3551 = vshra.s32 %v3327, 16
    %v3552 = vshra.s32 %v3328, 16
    %v3553 = vshra.s32 %v3329, 16
    %v3554 = vshra.s32 %v3330, 16
    %v3555 = vshra.s32 %v3331, 16
    %v3556 = vshra.s32 %v3332, 16
    %v3557 = vshra.s32 %v3333, 16
    %v3558 = vshra.s32 %v3334, 16
    %v3559 = vshra.s32 %v3335, 16
    %v3560 = vshra.s32 %v3336, 16
    %v3561 = vshra.s32 %v3337, 16
    %v3562 = vshra.s32 %v3338, 16
    %v3563 = vshra.s32 %v3339, 16
    %v3564 = vshra.s32 %v3340, 16
    %v3565 = vshra.s32 %v3341, 16
    %v3566 = vshra.s32 %v3342, 16
    %v3567 = vshra.s32 %v3343, 16
    %v3568 = vshra.s32 %v3344, 16
    %v3569 = vshra.s32 %v3345, 16
    %v3570 = vshra.s32 %v3346, 16
    %v3571 = vshra.s32 %v3347, 16
    %v3572 = vshra.s32 %v3348, 16
    %v3573 = vshra.s32 %v3349, 16
    %v3574 = vshra.s32 %v3350, 16
    %v3575 = vshra.s32 %v3351, 16
    %v3576 = vshra.s32 %v3352, 16
    %v3577 = vshra.s32 %v3353, 16
    %v3578 = vshra.s32 %v3354, 16
    %v3579 = vshra.s32 %v3355, 16
    %v3580 = vshra.s32 %v3356, 16
    %v3581 = vshra.s32 %v3357, 16
    %v3582 = vshra.s32 %v3358, 16
    %v3583 = vshra.s32 %v3359, 16
    %v3584 = vshra.s32 %v3360, 16
    %v3585 = vshra.s32 %v3361, 16
    %v3586 = vshra.s32 %v3362, 16
    %v3587 = vshra.s32 %v3363, 16
    %v3588 = vshra.s32 %v3364, 16
    %v3589 = vshra.s32 %v3365, 16
    %v3590 = vshra.s32 %v3366, 16
    %v3591 = vshra.s32 %v3367, 16
    %v3592 = vshra.s32 %v3368, 16
    %v3593 = vshra.s32 %v3369, 16
    %v3594 = vshra.s32 %v3370, 16
    %v3595 = vshra.s32 %v3371, 16
    %v3596 = vshra.s32 %v3372, 16
    %v3597 = vshra.s32 %v3373, 16
    %v3598 = vshra.s32 %v3374, 16
    %v3599 = vshra.s32 %v3375, 16
    %v3600 = vshra.s32 %v3376, 16
    %v3601 = vshra.s32 %v3377, 16
    %v3602 = vshra.s32 %v3378, 16
    %v3603 = vshra.s32 %v3379, 16
    %v3604 = vshra.s32 %v3380, 16
    %v3605 = vshra.s32 %v3381, 16
    %v3606 = vshra.s32 %v3382, 16
    %v3607 = vshra.s32 %v3383, 16
    %v3608 = vshra.s32 %v3384, 16
    %v3609 = vshra.s32 %v3385, 16
    %v3610 = vshra.s32 %v3386, 16
    %v3611 = vshra.s32 %v3387, 16
    %v3612 = vshra.s32 %v3388, 16
    %v3613 = vshra.s32 %v3389, 16
    %v3614 = vshra.s32 %v3390, 16
    %v3615 = vshra.s32 %v3391, 16
    %v3616 = vshra.s32 %v3392, 16
    %v3617 = vshra.s32 %v3393, 16
    %v3618 = vshra.s32 %v3394, 16
    %v3619 = vshra.s32 %v3395, 16
    %v3620 = vshra.s32 %v3396, 16
    %v3621 = vshra.s32 %v3397, 16
    %v3622 = vshra.s32 %v3398, 16
    %v3623 = vshra.s32 %v3399, 16
    %v3624 = vshra.s32 %v3400, 16
    %v3625 = vshra.s32 %v3401, 16
    %v3626 = vshra.s32 %v3402, 16
    %v3627 = vshra.s32 %v3403, 16
    %v3628 = vshra.s32 %v3404, 16
    %v3629 = vshra.s32 %v3405, 16
    %v3630 = vshra.s32 %v3406, 16
    %v3631 = vshra.s32 %v3407, 16
    %v3632 = vshra.s32 %v3408, 16
    %v3633 = vshra.s32 %v3409, 16
    %v3634 = vshra.s32 %v3410, 16
    %v3635 = vshra.s32 %v3411, 16
    %v3636 = vshra.s32 %v3412, 16
    %v3637 = vshra.s32 %v3413, 16
    %v3638 = vshra.s32 %v3414, 16
    %v3639 = vshra.s32 %v3415, 16
    %v3640 = vshra.s32 %v3416, 16
    %v3641 = vshra.s32 %v3417, 16
    %v3642 = vshra.s32 %v3418, 16
    %v3643 = vshra.s32 %v3419, 16
    %v3644 = vshra.s32 %v3420, 16
    %v3645 = vshra.s32 %v3421, 16
    %v3646 = vshra.s32 %v3422, 16
    %v3647 = vshra.s32 %v3423, 16
    %v3648 = vshra.s32 %v3424, 16
    %v3649 = vshra.s32 %v3425, 16
    %v3650 = vshra.s32 %v3426, 16
    %v3651 = vshra.s32 %v3427, 16
    %v3652 = vshra.s32 %v3428, 16
    %v3653 = vshra.s32 %v3429, 16
    %v3654 = vshra.s32 %v3430, 16
    %v3655 = vshra.s32 %v3431, 16
    %v3656 = vshra.s32 %v3432, 16
    %v3657 = vshra.s32 %v3433, 16
    %v3658 = vshra.s32 %v3434, 16
    %v3659 = vshra.s32 %v3435, 16
    %v3660 = vxor.u32 %v2988, %v3436
    %v3661 = vxor.u32 %v2989, %v3437
    %v3662 = vxor.u32 %v2990, %v3438
    %v3663 = vxor.u32 %v2991, %v3439
    %v3664 = vxor.u32 %v2992, %v3440
    %v3665 = vxor.u32 %v2993, %v3441
    %v3666 = vxor.u32 %v2994, %v3442
    %v3667 = vxor.u32 %v2995, %v3443
    %v3668 = vxor.u32 %v2996, %v3444
    %v3669 = vxor.u32 %v2997, %v3445
    %v3670 = vxor.u32 %v2998, %v3446
    %v3671 = vxor.u32 %v2999, %v3447
    %v3672 = vxor.u32 %v3000, %v3448
    %v3673 = vxor.u32 %v3001, %v3449
    %v3674 = vxor.u32 %v3002, %v3450
    %v3675 = vxor.u32 %v3003, %v3451
    %v3676 = vxor.u32 %v3004, %v3452
    %v3677 = vxor.u32 %v3005, %v3453
    %v3678 = vxor.u32 %v3006, %v3454
    %v3679 = vxor.u32 %v3007, %v3455
    %v3680 = vxor.u32 %v3008, %v3456
    %v3681 = vxor.u32 %v3009, %v3457
    %v3682 = vxor.u32 %v3010, %v3458
    %v3683 = vxor.u32 %v3011, %v3459
    %v3684 = vxor.u32 %v3012, %v3460
    %v3685 = vxor.u32 %v3013, %v3461
    %v3686 = vxor.u32 %v3014, %v3462
    %v3687 = vxor.u32 %v3015, %v3463
    %v3688 = vxor.u32 %v3016, %v3464
    %v3689 = vxor.u32 %v3017, %v3465
    %v3690 = vxor.u32 %v3018, %v3466
    %v3691 = vxor.u32 %v3019, %v3467
    %v3692 = vxor.u32 %v3020, %v3468
    %v3693 = vxor.u32 %v3021, %v3469
    %v3694 = vxor.u32 %v3022, %v3470
    %v3695 = vxor.u32 %v3023, %v3471
    %v3696 = vxor.u32 %v3024, %v3472
    %v3697 = vxor.u32 %v3025, %v3473
    %v3698 = vxor.u32 %v3026, %v3474
    %v3699 = vxor.u32 %v3027, %v3475
    %v3700 = vxor.u32 %v3028, %v3476
    %v3701 = vxor.u32 %v3029, %v3477
    %v3702 = vxor.u32 %v3030, %v3478
    %v3703 = vxor.u32 %v3031, %v3479
    %v3704 = vxor.u32 %v3032, %v3480
    %v3705 = vxor.u32 %v3033, %v3481
    %v3706 = vxor.u32 %v3034, %v3482
    %v3707 = vxor.u32 %v3035, %v3483
    %v3708 = vxor.u32 %v3036, %v3484
    %v3709 = vxor.u32 %v3037, %v3485
    %v3710 = vxor.u32 %v3038, %v3486
    %v3711 = vxor.u32 %v3039, %v3487
    %v3712 = vxor.u32 %v3040, %v3488
    %v3713 = vxor.u32 %v3041, %v3489
    %v3714 = vxor.u32 %v3042, %v3490
    %v3715 = vxor.u32 %v3043, %v3491
    %v3716 = vxor.u32 %v3044, %v3492
    %v3717 = vxor.u32 %v3045, %v3493
    %v3718 = vxor.u32 %v3046, %v3494
    %v3719 = vxor.u32 %v3047, %v3495
    %v3720 = vxor.u32 %v3048, %v3496
    %v3721 = vxor.u32 %v3049, %v3497
    %v3722 = vxor.u32 %v3050, %v3498
    %v3723 = vxor.u32 %v3051, %v3499
    %v3724 = vxor.u32 %v3052, %v3500
    %v3725 = vxor.u32 %v3053, %v3501
    %v3726 = vxor.u32 %v3054, %v3502
    %v3727 = vxor.u32 %v3055, %v3503
    %v3728 = vxor.u32 %v3056, %v3504
    %v3729 = vxor.u32 %v3057, %v3505
    %v3730 = vxor.u32 %v3058, %v3506
    %v3731 = vxor.u32 %v3059, %v3507
    %v3732 = vxor.u32 %v3060, %v3508
    %v3733 = vxor.u32 %v3061, %v3509
    %v3734 = vxor.u32 %v3062, %v3510
    %v3735 = vxor.u32 %v3063, %v3511
    %v3736 = vxor.u32 %v3064, %v3512
    %v3737 = vxor.u32 %v3065, %v3513
    %v3738 = vxor.u32 %v3066, %v3514
    %v3739 = vxor.u32 %v3067, %v3515
    %v3740 = vxor.u32 %v3068, %v3516
    %v3741 = vxor.u32 %v3069, %v3517
    %v3742 = vxor.u32 %v3070, %v3518
    %v3743 = vxor.u32 %v3071, %v3519
    %v3744 = vxor.u32 %v3072, %v3520
    %v3745 = vxor.u32 %v3073, %v3521
    %v3746 = vxor.u32 %v3074, %v3522
    %v3747 = vxor.u32 %v3075, %v3523
    %v3748 = vxor.u32 %v3076, %v3524
    %v3749 = vxor.u32 %v3077, %v3525
    %v3750 = vxor.u32 %v3078, %v3526
    %v3751 = vxor.u32 %v3079, %v3527
    %v3752 = vxor.u32 %v3080, %v3528
    %v3753 = vxor.u32 %v3081, %v3529
    %v3754 = vxor.u32 %v3082, %v3530
    %v3755 = vxor.u32 %v3083, %v3531
    %v3756 = vxor.u32 %v3084, %v3532
    %v3757 = vxor.u32 %v3085, %v3533
    %v3758 = vxor.u32 %v3086, %v3534
    %v3759 = vxor.u32 %v3087, %v3535
    %v3760 = vxor.u32 %v3088, %v3536
    %v3761 = vxor.u32 %v3089, %v3537
    %v3762 = vxor.u32 %v3090, %v3538
    %v3763 = vxor.u32 %v3091, %v3539
    %v3764 = vxor.u32 %v3092, %v3540
    %v3765 = vxor.u32 %v3093, %v3541
    %v3766 = vxor.u32 %v3094, %v3542
    %v3767 = vxor.u32 %v3095, %v3543
    %v3768 = vxor.u32 %v3096, %v3544
    %v3769 = vxor.u32 %v3097, %v3545
    %v3770 = vxor.u32 %v3098, %v3546
    %v3771 = vxor.u32 %v3099, %v3547
    %v3772 = vxor.u32 %v3100, %v3548
    %v3773 = vxor.u32 %v3101, %v3549
    %v3774 = vxor.u32 %v3102, %v3550
    %v3775 = vxor.u32 %v3103, %v3551
    %v3776 = vxor.u32 %v3104, %v3552
    %v3777 = vxor.u32 %v3105, %v3553
    %v3778 = vxor.u32 %v3106, %v3554
    %v3779 = vxor.u32 %v3107, %v3555
    %v3780 = vxor.u32 %v3108, %v3556
    %v3781 = vxor.u32 %v3109, %v3557
    %v3782 = vxor.u32 %v3110, %v3558
    %v3783 = vxor.u32 %v3111, %v3559
    %v3784 = vxor.u32 %v3112, %v3560
    %v3785 = vxor.u32 %v3113, %v3561
    %v3786 = vxor.u32 %v3114, %v3562
    %v3787 = vxor.u32 %v3115, %v3563
    %v3788 = vxor.u32 %v3116, %v3564
    %v3789 = vxor.u32 %v3117, %v3565
    %v3790 = vxor.u32 %v3118, %v3566
    %v3791 = vxor.u32 %v3119, %v3567
    %v3792 = vxor.u32 %v3120, %v3568
    %v3793 = vxor.u32 %v3121, %v3569
    %v3794 = vxor.u32 %v3122, %v3570
    %v3795 = vxor.u32 %v3123, %v3571
    %v3796 = vxor.u32 %v3124, %v3572
    %v3797 = vxor.u32 %v3125, %v3573
    %v3798 = vxor.u32 %v3126, %v3574
    %v3799 = vxor.u32 %v3127, %v3575
    %v3800 = vxor.u32 %v3128, %v3576
    %v3801 = vxor.u32 %v3129, %v3577
    %v3802 = vxor.u32 %v3130, %v3578
    %v3803 = vxor.u32 %v3131, %v3579
    %v3804 = vxor.u32 %v3132, %v3580
    %v3805 = vxor.u32 %v3133, %v3581
    %v3806 = vxor.u32 %v3134, %v3582
    %v3807 = vxor.u32 %v3135, %v3583
    %v3808 = vxor.u32 %v3136, %v3584
    %v3809 = vxor.u32 %v3137, %v3585
    %v3810 = vxor.u32 %v3138, %v3586
    %v3811 = vxor.u32 %v3139, %v3587
    %v3812 = vxor.u32 %v3140, %v3588
    %v3813 = vxor.u32 %v3141, %v3589
    %v3814 = vxor.u32 %v3142, %v3590
    %v3815 = vxor.u32 %v3143, %v3591
    %v3816 = vxor.u32 %v3144, %v3592
    %v3817 = vxor.u32 %v3145, %v3593
    %v3818 = vxor.u32 %v3146, %v3594
    %v3819 = vxor.u32 %v3147, %v3595
    %v3820 = vxor.u32 %v3148, %v3596
    %v3821 = vxor.u32 %v3149, %v3597
    %v3822 = vxor.u32 %v3150, %v3598
    %v3823 = vxor.u32 %v3151, %v3599
    %v3824 = vxor.u32 %v3152, %v3600
    %v3825 = vxor.u32 %v3153, %v3601
    %v3826 = vxor.u32 %v3154, %v3602
    %v3827 = vxor.u32 %v3155, %v3603
    %v3828 = vxor.u32 %v3156, %v3604
    %v3829 = vxor.u32 %v3157, %v3605
    %v3830 = vxor.u32 %v3158, %v3606
    %v3831 = vxor.u32 %v3159, %v3607
    %v3832 = vxor.u32 %v3160, %v3608
    %v3833 = vxor.u32 %v3161, %v3609
    %v3834 = vxor.u32 %v3162, %v3610
    %v3835 = vxor.u32 %v3163, %v3611
    %v3836 = vxor.u32 %v3164, %v3612
    %v3837 = vxor.u32 %v3165, %v3613
    %v3838 = vxor.u32 %v3166, %v3614
    %v3839 = vxor.u32 %v3167, %v3615
    %v3840 = vxor.u32 %v3168, %v3616
    %v3841 = vxor.u32 %v3169, %v3617
    %v3842 = vxor.u32 %v3170, %v3618
    %v3843 = vxor.u32 %v3171, %v3619
    %v3844 = vxor.u32 %v3172, %v3620
    %v3845 = vxor.u32 %v3173, %v3621
    %v3846 = vxor.u32 %v3174, %v3622
    %v3847 = vxor.u32 %v3175, %v3623
    %v3848 = vxor.u32 %v3176, %v3624
    %v3849 = vxor.u32 %v3177, %v3625
    %v3850 = vxor.u32 %v3178, %v3626
    %v3851 = vxor.u32 %v3179, %v3627
    %v3852 = vxor.u32 %v3180, %v3628
    %v3853 = vxor.u32 %v3181, %v3629
    %v3854 = vxor.u32 %v3182, %v3630
    %v3855 = vxor.u32 %v3183, %v3631
    %v3856 = vxor.u32 %v3184, %v3632
    %v3857 = vxor.u32 %v3185, %v3633
    %v3858 = vxor.u32 %v3186, %v3634
    %v3859 = vxor.u32 %v3187, %v3635
    %v3860 = vxor.u32 %v3188, %v3636
    %v3861 = vxor.u32 %v3189, %v3637
    %v3862 = vxor.u32 %v3190, %v3638
    %v3863 = vxor.u32 %v3191, %v3639
    %v3864 = vxor.u32 %v3192, %v3640
    %v3865 = vxor.u32 %v3193, %v3641
    %v3866 = vxor.u32 %v3194, %v3642
    %v3867 = vxor.u32 %v3195, %v3643
    %v3868 = vxor.u32 %v3196, %v3644
    %v3869 = vxor.u32 %v3197, %v3645
    %v3870 = vxor.u32 %v3198, %v3646
    %v3871 = vxor.u32 %v3199, %v3647
    %v3872 = vxor.u32 %v3200, %v3648
    %v3873 = vxor.u32 %v3201, %v3649
    %v3874 = vxor.u32 %v3202, %v3650
    %v3875 = vxor.u32 %v3203, %v3651
    %v3876 = vxor.u32 %v3204, %v3652
    %v3877 = vxor.u32 %v3205, %v3653
    %v3878 = vxor.u32 %v3206, %v3654
    %v3879 = vxor.u32 %v3207, %v3655
    %v3880 = vxor.u32 %v3208, %v3656
    %v3881 = vxor.u32 %v3209, %v3657
    %v3882 = vxor.u32 %v3210, %v3658
    %v3883 = vxor.u32 %v3211, %v3659
    %v3884 = vmul.u32 %v3660, 2246822507
    %v3885 = vmul.u32 %v3661, 2246822507
    %v3886 = vmul.u32 %v3662, 2246822507
    %v3887 = vmul.u32 %v3663, 2246822507
    %v3888 = vmul.u32 %v3664, 2246822507
    %v3889 = vmul.u32 %v3665, 2246822507
    %v3890 = vmul.u32 %v3666, 2246822507
    %v3891 = vmul.u32 %v3667, 2246822507
    %v3892 = vmul.u32 %v3668, 2246822507
    %v3893 = vmul.u32 %v3669, 2246822507
    %v3894 = vmul.u32 %v3670, 2246822507
    %v3895 = vmul.u32 %v3671, 2246822507
    %v3896 = vmul.u32 %v3672, 2246822507
    %v3897 = vmul.u32 %v3673, 2246822507
    %v3898 = vmul.u32 %v3674, 2246822507
    %v3899 = vmul.u32 %v3675, 2246822507
    %v3900 = vmul.u32 %v3676, 2246822507
    %v3901 = vmul.u32 %v3677, 2246822507
    %v3902 = vmul.u32 %v3678, 2246822507
    %v3903 = vmul.u32 %v3679, 2246822507
    %v3904 = vmul.u32 %v3680, 2246822507
    %v3905 = vmul.u32 %v3681, 2246822507
    %v3906 = vmul.u32 %v3682, 2246822507
    %v3907 = vmul.u32 %v3683, 2246822507
    %v3908 = vmul.u32 %v3684, 2246822507
    %v3909 = vmul.u32 %v3685, 2246822507
    %v3910 = vmul.u32 %v3686, 2246822507
    %v3911 = vmul.u32 %v3687, 2246822507
    %v3912 = vmul.u32 %v3688, 2246822507
    %v3913 = vmul.u32 %v3689, 2246822507
    %v3914 = vmul.u32 %v3690, 2246822507
    %v3915 = vmul.u32 %v3691, 2246822507
    %v3916 = vmul.u32 %v3692, 2246822507
    %v3917 = vmul.u32 %v3693, 2246822507
    %v3918 = vmul.u32 %v3694, 2246822507
    %v3919 = vmul.u32 %v3695, 2246822507
    %v3920 = vmul.u32 %v3696, 2246822507
    %v3921 = vmul.u32 %v3697, 2246822507
    %v3922 = vmul.u32 %v3698, 2246822507
    %v3923 = vmul.u32 %v3699, 2246822507
    %v3924 = vmul.u32 %v3700, 2246822507
    %v3925 = vmul.u32 %v3701, 2246822507
    %v3926 = vmul.u32 %v3702, 2246822507
    %v3927 = vmul.u32 %v3703, 2246822507
    %v3928 = vmul.u32 %v3704, 2246822507
    %v3929 = vmul.u32 %v3705, 2246822507
    %v3930 = vmul.u32 %v3706, 2246822507
    %v3931 = vmul.u32 %v3707, 2246822507
    %v3932 = vmul.u32 %v3708, 2246822507
    %v3933 = vmul.u32 %v3709, 2246822507
    %v3934 = vmul.u32 %v3710, 2246822507
    %v3935 = vmul.u32 %v3711, 2246822507
    %v3936 = vmul.u32 %v3712, 2246822507
    %v3937 = vmul.u32 %v3713, 2246822507
    %v3938 = vmul.u32 %v3714, 2246822507
    %v3939 = vmul.u32 %v3715, 2246822507
    %v3940 = vmul.u32 %v3716, 2246822507
    %v3941 = vmul.u32 %v3717, 2246822507
    %v3942 = vmul.u32 %v3718, 2246822507
    %v3943 = vmul.u32 %v3719, 2246822507
    %v3944 = vmul.u32 %v3720, 2246822507
    %v3945 = vmul.u32 %v3721, 2246822507
    %v3946 = vmul.u32 %v3722, 2246822507
    %v3947 = vmul.u32 %v3723, 2246822507
    %v3948 = vmul.u32 %v3724, 2246822507
    %v3949 = vmul.u32 %v3725, 2246822507
    %v3950 = vmul.u32 %v3726, 2246822507
    %v3951 = vmul.u32 %v3727, 2246822507
    %v3952 = vmul.u32 %v3728, 2246822507
    %v3953 = vmul.u32 %v3729, 2246822507
    %v3954 = vmul.u32 %v3730, 2246822507
    %v3955 = vmul.u32 %v3731, 2246822507
    %v3956 = vmul.u32 %v3732, 2246822507
    %v3957 = vmul.u32 %v3733, 2246822507
    %v3958 = vmul.u32 %v3734, 2246822507
    %v3959 = vmul.u32 %v3735, 2246822507
    %v3960 = vmul.u32 %v3736, 2246822507
    %v3961 = vmul.u32 %v3737, 2246822507
    %v3962 = vmul.u32 %v3738, 2246822507
    %v3963 = vmul.u32 %v3739, 2246822507
    %v3964 = vmul.u32 %v3740, 2246822507
    %v3965 = vmul.u32 %v3741, 2246822507
    %v3966 = vmul.u32 %v3742, 2246822507
    %v3967 = vmul.u32 %v3743, 2246822507
    %v3968 = vmul.u32 %v3744, 2246822507
    %v3969 = vmul.u32 %v3745, 2246822507
    %v3970 = vmul.u32 %v3746, 2246822507
    %v3971 = vmul.u32 %v3747, 2246822507
    %v3972 = vmul.u32 %v3748, 2246822507
    %v3973 = vmul.u32 %v3749, 2246822507
    %v3974 = vmul.u32 %v3750, 2246822507
    %v3975 = vmul.u32 %v3751, 2246822507
    %v3976 = vmul.u32 %v3752, 2246822507
    %v3977 = vmul.u32 %v3753, 2246822507
    %v3978 = vmul.u32 %v3754, 2246822507
    %v3979 = vmul.u32 %v3755, 2246822507
    %v3980 = vmul.u32 %v3756, 2246822507
    %v3981 = vmul.u32 %v3757, 2246822507
    %v3982 = vmul.u32 %v3758, 2246822507
    %v3983 = vmul.u32 %v3759, 2246822507
    %v3984 = vmul.u32 %v3760, 2246822507
    %v3985 = vmul.u32 %v3761, 2246822507
    %v3986 = vmul.u32 %v3762, 2246822507
    %v3987 = vmul.u32 %v3763, 2246822507
    %v3988 = vmul.u32 %v3764, 2246822507
    %v3989 = vmul.u32 %v3765, 2246822507
    %v3990 = vmul.u32 %v3766, 2246822507
    %v3991 = vmul.u32 %v3767, 2246822507
    %v3992 = vmul.u32 %v3768, 2246822507
    %v3993 = vmul.u32 %v3769, 2246822507
    %v3994 = vmul.u32 %v3770, 2246822507
    %v3995 = vmul.u32 %v3771, 2246822507
    %v3996 = vmul.u32 %v3772, 2246822507
    %v3997 = vmul.u32 %v3773, 2246822507
    %v3998 = vmul.u32 %v3774, 2246822507
    %v3999 = vmul.u32 %v3775, 2246822507
    %v4000 = vmul.u32 %v3776, 2246822507
    %v4001 = vmul.u32 %v3777, 2246822507
    %v4002 = vmul.u32 %v3778, 2246822507
    %v4003 = vmul.u32 %v3779, 2246822507
    %v4004 = vmul.u32 %v3780, 2246822507
    %v4005 = vmul.u32 %v3781, 2246822507
    %v4006 = vmul.u32 %v3782, 2246822507
    %v4007 = vmul.u32 %v3783, 2246822507
    %v4008 = vmul.u32 %v3784, 2246822507
    %v4009 = vmul.u32 %v3785, 2246822507
    %v4010 = vmul.u32 %v3786, 2246822507
    %v4011 = vmul.u32 %v3787, 2246822507
    %v4012 = vmul.u32 %v3788, 2246822507
    %v4013 = vmul.u32 %v3789, 2246822507
    %v4014 = vmul.u32 %v3790, 2246822507
    %v4015 = vmul.u32 %v3791, 2246822507
    %v4016 = vmul.u32 %v3792, 2246822507
    %v4017 = vmul.u32 %v3793, 2246822507
    %v4018 = vmul.u32 %v3794, 2246822507
    %v4019 = vmul.u32 %v3795, 2246822507
    %v4020 = vmul.u32 %v3796, 2246822507
    %v4021 = vmul.u32 %v3797, 2246822507
    %v4022 = vmul.u32 %v3798, 2246822507
    %v4023 = vmul.u32 %v3799, 2246822507
    %v4024 = vmul.u32 %v3800, 2246822507
    %v4025 = vmul.u32 %v3801, 2246822507
    %v4026 = vmul.u32 %v3802, 2246822507
    %v4027 = vmul.u32 %v3803, 2246822507
    %v4028 = vmul.u32 %v3804, 2246822507
    %v4029 = vmul.u32 %v3805, 2246822507
    %v4030 = vmul.u32 %v3806, 2246822507
    %v4031 = vmul.u32 %v3807, 2246822507
    %v4032 = vmul.u32 %v3808, 2246822507
    %v4033 = vmul.u32 %v3809, 2246822507
    %v4034 = vmul.u32 %v3810, 2246822507
    %v4035 = vmul.u32 %v3811, 2246822507
    %v4036 = vmul.u32 %v3812, 2246822507
    %v4037 = vmul.u32 %v3813, 2246822507
    %v4038 = vmul.u32 %v3814, 2246822507
    %v4039 = vmul.u32 %v3815, 2246822507
    %v4040 = vmul.u32 %v3816, 2246822507
    %v4041 = vmul.u32 %v3817, 2246822507
    %v4042 = vmul.u32 %v3818, 2246822507
    %v4043 = vmul.u32 %v3819, 2246822507
    %v4044 = vmul.u32 %v3820, 2246822507
    %v4045 = vmul.u32 %v3821, 2246822507
    %v4046 = vmul.u32 %v3822, 2246822507
    %v4047 = vmul.u32 %v3823, 2246822507
    %v4048 = vmul.u32 %v3824, 2246822507
    %v4049 = vmul.u32 %v3825, 2246822507
    %v4050 = vmul.u32 %v3826, 2246822507
    %v4051 = vmul.u32 %v3827, 2246822507
    %v4052 = vmul.u32 %v3828, 2246822507
    %v4053 = vmul.u32 %v3829, 2246822507
    %v4054 = vmul.u32 %v3830, 2246822507
    %v4055 = vmul.u32 %v3831, 2246822507
    %v4056 = vmul.u32 %v3832, 2246822507
    %v4057 = vmul.u32 %v3833, 2246822507
    %v4058 = vmul.u32 %v3834, 2246822507
    %v4059 = vmul.u32 %v3835, 2246822507
    %v4060 = vmul.u32 %v3836, 2246822507
    %v4061 = vmul.u32 %v3837, 2246822507
    %v4062 = vmul.u32 %v3838, 2246822507
    %v4063 = vmul.u32 %v3839, 2246822507
    %v4064 = vmul.u32 %v3840, 2246822507
    %v4065 = vmul.u32 %v3841, 2246822507
    %v4066 = vmul.u32 %v3842, 2246822507
    %v4067 = vmul.u32 %v3843, 2246822507
    %v4068 = vmul.u32 %v3844, 2246822507
    %v4069 = vmul.u32 %v3845, 2246822507
    %v4070 = vmul.u32 %v3846, 2246822507
    %v4071 = vmul.u32 %v3847, 2246822507
    %v4072 = vmul.u32 %v3848, 2246822507
    %v4073 = vmul.u32 %v3849, 2246822507
    %v4074 = vmul.u32 %v3850, 2246822507
    %v4075 = vmul.u32 %v3851, 2246822507
    %v4076 = vmul.u32 %v3852, 2246822507
    %v4077 = vmul.u32 %v3853, 2246822507
    %v4078 = vmul.u32 %v3854, 2246822507
    %v4079 = vmul.u32 %v3855, 2246822507
    %v4080 = vmul.u32 %v3856, 2246822507
    %v4081 = vmul.u32 %v3857, 2246822507
    %v4082 = vmul.u32 %v3858, 2246822507
    %v4083 = vmul.u32 %v3859, 2246822507
    %v4084 = vmul.u32 %v3860, 2246822507
    %v4085 = vmul.u32 %v3861, 2246822507
    %v4086 = vmul.u32 %v3862, 2246822507
    %v4087 = vmul.u32 %v3863, 2246822507
    %v4088 = vmul.u32 %v3864, 2246822507
    %v4089 = vmul.u32 %v3865, 2246822507
    %v4090 = vmul.u32 %v3866, 2246822507
    %v4091 = vmul.u32 %v3867, 2246822507
    %v4092 = vmul.u32 %v3868, 2246822507
    %v4093 = vmul.u32 %v3869, 2246822507
    %v4094 = vmul.u32 %v3870, 2246822507
    %v4095 = vmul.u32 %v3871, 2246822507
    %v4096 = vmul.u32 %v3872, 2246822507
    %v4097 = vmul.u32 %v3873, 2246822507
    %v4098 = vmul.u32 %v3874, 2246822507
    %v4099 = vmul.u32 %v3875, 2246822507
    %v4100 = vmul.u32 %v3876, 2246822507
    %v4101 = vmul.u32 %v3877, 2246822507
    %v4102 = vmul.u32 %v3878, 2246822507
    %v4103 = vmul.u32 %v3879, 2246822507
    %v4104 = vmul.u32 %v3880, 2246822507
    %v4105 = vmul.u32 %v3881, 2246822507
    %v4106 = vmul.u32 %v3882, 2246822507
    %v4107 = vmul.u32 %v3883, 2246822507
    %v4108 = vand.u32 %v3884, 2147483647
    %v4109 = vand.u32 %v3885, 2147483647
    %v4110 = vand.u32 %v3886, 2147483647
    %v4111 = vand.u32 %v3887, 2147483647
    %v4112 = vand.u32 %v3888, 2147483647
    %v4113 = vand.u32 %v3889, 2147483647
    %v4114 = vand.u32 %v3890, 2147483647
    %v4115 = vand.u32 %v3891, 2147483647
    %v4116 = vand.u32 %v3892, 2147483647
    %v4117 = vand.u32 %v3893, 2147483647
    %v4118 = vand.u32 %v3894, 2147483647
    %v4119 = vand.u32 %v3895, 2147483647
    %v4120 = vand.u32 %v3896, 2147483647
    %v4121 = vand.u32 %v3897, 2147483647
    %v4122 = vand.u32 %v3898, 2147483647
    %v4123 = vand.u32 %v3899, 2147483647
    %v4124 = vand.u32 %v3900, 2147483647
    %v4125 = vand.u32 %v3901, 2147483647
    %v4126 = vand.u32 %v3902, 2147483647
    %v4127 = vand.u32 %v3903, 2147483647
    %v4128 = vand.u32 %v3904, 2147483647
    %v4129 = vand.u32 %v3905, 2147483647
    %v4130 = vand.u32 %v3906, 2147483647
    %v4131 = vand.u32 %v3907, 2147483647
    %v4132 = vand.u32 %v3908, 2147483647
    %v4133 = vand.u32 %v3909, 2147483647
    %v4134 = vand.u32 %v3910, 2147483647
    %v4135 = vand.u32 %v3911, 2147483647
    %v4136 = vand.u32 %v3912, 2147483647
    %v4137 = vand.u32 %v3913, 2147483647
    %v4138 = vand.u32 %v3914, 2147483647
    %v4139 = vand.u32 %v3915, 2147483647
    %v4140 = vand.u32 %v3916, 2147483647
    %v4141 = vand.u32 %v3917, 2147483647
    %v4142 = vand.u32 %v3918, 2147483647
    %v4143 = vand.u32 %v3919, 2147483647
    %v4144 = vand.u32 %v3920, 2147483647
    %v4145 = vand.u32 %v3921, 2147483647
    %v4146 = vand.u32 %v3922, 2147483647
    %v4147 = vand.u32 %v3923, 2147483647
    %v4148 = vand.u32 %v3924, 2147483647
    %v4149 = vand.u32 %v3925, 2147483647
    %v4150 = vand.u32 %v3926, 2147483647
    %v4151 = vand.u32 %v3927, 2147483647
    %v4152 = vand.u32 %v3928, 2147483647
    %v4153 = vand.u32 %v3929, 2147483647
    %v4154 = vand.u32 %v3930, 2147483647
    %v4155 = vand.u32 %v3931, 2147483647
    %v4156 = vand.u32 %v3932, 2147483647
    %v4157 = vand.u32 %v3933, 2147483647
    %v4158 = vand.u32 %v3934, 2147483647
    %v4159 = vand.u32 %v3935, 2147483647
    %v4160 = vand.u32 %v3936, 2147483647
    %v4161 = vand.u32 %v3937, 2147483647
    %v4162 = vand.u32 %v3938, 2147483647
    %v4163 = vand.u32 %v3939, 2147483647
    %v4164 = vand.u32 %v3940, 2147483647
    %v4165 = vand.u32 %v3941, 2147483647
    %v4166 = vand.u32 %v3942, 2147483647
    %v4167 = vand.u32 %v3943, 2147483647
    %v4168 = vand.u32 %v3944, 2147483647
    %v4169 = vand.u32 %v3945, 2147483647
    %v4170 = vand.u32 %v3946, 2147483647
    %v4171 = vand.u32 %v3947, 2147483647
    %v4172 = vand.u32 %v3948, 2147483647
    %v4173 = vand.u32 %v3949, 2147483647
    %v4174 = vand.u32 %v3950, 2147483647
    %v4175 = vand.u32 %v3951, 2147483647
    %v4176 = vand.u32 %v3952, 2147483647
    %v4177 = vand.u32 %v3953, 2147483647
    %v4178 = vand.u32 %v3954, 2147483647
    %v4179 = vand.u32 %v3955, 2147483647
    %v4180 = vand.u32 %v3956, 2147483647
    %v4181 = vand.u32 %v3957, 2147483647
    %v4182 = vand.u32 %v3958, 2147483647
    %v4183 = vand.u32 %v3959, 2147483647
    %v4184 = vand.u32 %v3960, 2147483647
    %v4185 = vand.u32 %v3961, 2147483647
    %v4186 = vand.u32 %v3962, 2147483647
    %v4187 = vand.u32 %v3963, 2147483647
    %v4188 = vand.u32 %v3964, 2147483647
    %v4189 = vand.u32 %v3965, 2147483647
    %v4190 = vand.u32 %v3966, 2147483647
    %v4191 = vand.u32 %v3967, 2147483647
    %v4192 = vand.u32 %v3968, 2147483647
    %v4193 = vand.u32 %v3969, 2147483647
    %v4194 = vand.u32 %v3970, 2147483647
    %v4195 = vand.u32 %v3971, 2147483647
    %v4196 = vand.u32 %v3972, 2147483647
    %v4197 = vand.u32 %v3973, 2147483647
    %v4198 = vand.u32 %v3974, 2147483647
    %v4199 = vand.u32 %v3975, 2147483647
    %v4200 = vand.u32 %v3976, 2147483647
    %v4201 = vand.u32 %v3977, 2147483647
    %v4202 = vand.u32 %v3978, 2147483647
    %v4203 = vand.u32 %v3979, 2147483647
    %v4204 = vand.u32 %v3980, 2147483647
    %v4205 = vand.u32 %v3981, 2147483647
    %v4206 = vand.u32 %v3982, 2147483647
    %v4207 = vand.u32 %v3983, 2147483647
    %v4208 = vand.u32 %v3984, 2147483647
    %v4209 = vand.u32 %v3985, 2147483647
    %v4210 = vand.u32 %v3986, 2147483647
    %v4211 = vand.u32 %v3987, 2147483647
    %v4212 = vand.u32 %v3988, 2147483647
    %v4213 = vand.u32 %v3989, 2147483647
    %v4214 = vand.u32 %v3990, 2147483647
    %v4215 = vand.u32 %v3991, 2147483647
    %v4216 = vand.u32 %v3992, 2147483647
    %v4217 = vand.u32 %v3993, 2147483647
    %v4218 = vand.u32 %v3994, 2147483647
    %v4219 = vand.u32 %v3995, 2147483647
    %v4220 = vand.u32 %v3996, 2147483647
    %v4221 = vand.u32 %v3997, 2147483647
    %v4222 = vand.u32 %v3998, 2147483647
    %v4223 = vand.u32 %v3999, 2147483647
    %v4224 = vand.u32 %v4000, 2147483647
    %v4225 = vand.u32 %v4001, 2147483647
    %v4226 = vand.u32 %v4002, 2147483647
    %v4227 = vand.u32 %v4003, 2147483647
    %v4228 = vand.u32 %v4004, 2147483647
    %v4229 = vand.u32 %v4005, 2147483647
    %v4230 = vand.u32 %v4006, 2147483647
    %v4231 = vand.u32 %v4007, 2147483647
    %v4232 = vand.u32 %v4008, 2147483647
    %v4233 = vand.u32 %v4009, 2147483647
    %v4234 = vand.u32 %v4010, 2147483647
    %v4235 = vand.u32 %v4011, 2147483647
    %v4236 = vand.u32 %v4012, 2147483647
    %v4237 = vand.u32 %v4013, 2147483647
    %v4238 = vand.u32 %v4014, 2147483647
    %v4239 = vand.u32 %v4015, 2147483647
    %v4240 = vand.u32 %v4016, 2147483647
    %v4241 = vand.u32 %v4017, 2147483647
    %v4242 = vand.u32 %v4018, 2147483647
    %v4243 = vand.u32 %v4019, 2147483647
    %v4244 = vand.u32 %v4020, 2147483647
    %v4245 = vand.u32 %v4021, 2147483647
    %v4246 = vand.u32 %v4022, 2147483647
    %v4247 = vand.u32 %v4023, 2147483647
    %v4248 = vand.u32 %v4024, 2147483647
    %v4249 = vand.u32 %v4025, 2147483647
    %v4250 = vand.u32 %v4026, 2147483647
    %v4251 = vand.u32 %v4027, 2147483647
    %v4252 = vand.u32 %v4028, 2147483647
    %v4253 = vand.u32 %v4029, 2147483647
    %v4254 = vand.u32 %v4030, 2147483647
    %v4255 = vand.u32 %v4031, 2147483647
    %v4256 = vand.u32 %v4032, 2147483647
    %v4257 = vand.u32 %v4033, 2147483647
    %v4258 = vand.u32 %v4034, 2147483647
    %v4259 = vand.u32 %v4035, 2147483647
    %v4260 = vand.u32 %v4036, 2147483647
    %v4261 = vand.u32 %v4037, 2147483647
    %v4262 = vand.u32 %v4038, 2147483647
    %v4263 = vand.u32 %v4039, 2147483647
    %v4264 = vand.u32 %v4040, 2147483647
    %v4265 = vand.u32 %v4041, 2147483647
    %v4266 = vand.u32 %v4042, 2147483647
    %v4267 = vand.u32 %v4043, 2147483647
    %v4268 = vand.u32 %v4044, 2147483647
    %v4269 = vand.u32 %v4045, 2147483647
    %v4270 = vand.u32 %v4046, 2147483647
    %v4271 = vand.u32 %v4047, 2147483647
    %v4272 = vand.u32 %v4048, 2147483647
    %v4273 = vand.u32 %v4049, 2147483647
    %v4274 = vand.u32 %v4050, 2147483647
    %v4275 = vand.u32 %v4051, 2147483647
    %v4276 = vand.u32 %v4052, 2147483647
    %v4277 = vand.u32 %v4053, 2147483647
    %v4278 = vand.u32 %v4054, 2147483647
    %v4279 = vand.u32 %v4055, 2147483647
    %v4280 = vand.u32 %v4056, 2147483647
    %v4281 = vand.u32 %v4057, 2147483647
    %v4282 = vand.u32 %v4058, 2147483647
    %v4283 = vand.u32 %v4059, 2147483647
    %v4284 = vand.u32 %v4060, 2147483647
    %v4285 = vand.u32 %v4061, 2147483647
    %v4286 = vand.u32 %v4062, 2147483647
    %v4287 = vand.u32 %v4063, 2147483647
    %v4288 = vand.u32 %v4064, 2147483647
    %v4289 = vand.u32 %v4065, 2147483647
    %v4290 = vand.u32 %v4066, 2147483647
    %v4291 = vand.u32 %v4067, 2147483647
    %v4292 = vand.u32 %v4068, 2147483647
    %v4293 = vand.u32 %v4069, 2147483647
    %v4294 = vand.u32 %v4070, 2147483647
    %v4295 = vand.u32 %v4071, 2147483647
    %v4296 = vand.u32 %v4072, 2147483647
    %v4297 = vand.u32 %v4073, 2147483647
    %v4298 = vand.u32 %v4074, 2147483647
    %v4299 = vand.u32 %v4075, 2147483647
    %v4300 = vand.u32 %v4076, 2147483647
    %v4301 = vand.u32 %v4077, 2147483647
    %v4302 = vand.u32 %v4078, 2147483647
    %v4303 = vand.u32 %v4079, 2147483647
    %v4304 = vand.u32 %v4080, 2147483647
    %v4305 = vand.u32 %v4081, 2147483647
    %v4306 = vand.u32 %v4082, 2147483647
    %v4307 = vand.u32 %v4083, 2147483647
    %v4308 = vand.u32 %v4084, 2147483647
    %v4309 = vand.u32 %v4085, 2147483647
    %v4310 = vand.u32 %v4086, 2147483647
    %v4311 = vand.u32 %v4087, 2147483647
    %v4312 = vand.u32 %v4088, 2147483647
    %v4313 = vand.u32 %v4089, 2147483647
    %v4314 = vand.u32 %v4090, 2147483647
    %v4315 = vand.u32 %v4091, 2147483647
    %v4316 = vand.u32 %v4092, 2147483647
    %v4317 = vand.u32 %v4093, 2147483647
    %v4318 = vand.u32 %v4094, 2147483647
    %v4319 = vand.u32 %v4095, 2147483647
    %v4320 = vand.u32 %v4096, 2147483647
    %v4321 = vand.u32 %v4097, 2147483647
    %v4322 = vand.u32 %v4098, 2147483647
    %v4323 = vand.u32 %v4099, 2147483647
    %v4324 = vand.u32 %v4100, 2147483647
    %v4325 = vand.u32 %v4101, 2147483647
    %v4326 = vand.u32 %v4102, 2147483647
    %v4327 = vand.u32 %v4103, 2147483647
    %v4328 = vand.u32 %v4104, 2147483647
    %v4329 = vand.u32 %v4105, 2147483647
    %v4330 = vand.u32 %v4106, 2147483647
    %v4331 = vand.u32 %v4107, 2147483647
    %v4332 = vshra.s32 %v4108, 13
    %v4333 = vshra.s32 %v4109, 13
    %v4334 = vshra.s32 %v4110, 13
    %v4335 = vshra.s32 %v4111, 13
    %v4336 = vshra.s32 %v4112, 13
    %v4337 = vshra.s32 %v4113, 13
    %v4338 = vshra.s32 %v4114, 13
    %v4339 = vshra.s32 %v4115, 13
    %v4340 = vshra.s32 %v4116, 13
    %v4341 = vshra.s32 %v4117, 13
    %v4342 = vshra.s32 %v4118, 13
    %v4343 = vshra.s32 %v4119, 13
    %v4344 = vshra.s32 %v4120, 13
    %v4345 = vshra.s32 %v4121, 13
    %v4346 = vshra.s32 %v4122, 13
    %v4347 = vshra.s32 %v4123, 13
    %v4348 = vshra.s32 %v4124, 13
    %v4349 = vshra.s32 %v4125, 13
    %v4350 = vshra.s32 %v4126, 13
    %v4351 = vshra.s32 %v4127, 13
    %v4352 = vshra.s32 %v4128, 13
    %v4353 = vshra.s32 %v4129, 13
    %v4354 = vshra.s32 %v4130, 13
    %v4355 = vshra.s32 %v4131, 13
    %v4356 = vshra.s32 %v4132, 13
    %v4357 = vshra.s32 %v4133, 13
    %v4358 = vshra.s32 %v4134, 13
    %v4359 = vshra.s32 %v4135, 13
    %v4360 = vshra.s32 %v4136, 13
    %v4361 = vshra.s32 %v4137, 13
    %v4362 = vshra.s32 %v4138, 13
    %v4363 = vshra.s32 %v4139, 13
    %v4364 = vshra.s32 %v4140, 13
    %v4365 = vshra.s32 %v4141, 13
    %v4366 = vshra.s32 %v4142, 13
    %v4367 = vshra.s32 %v4143, 13
    %v4368 = vshra.s32 %v4144, 13
    %v4369 = vshra.s32 %v4145, 13
    %v4370 = vshra.s32 %v4146, 13
    %v4371 = vshra.s32 %v4147, 13
    %v4372 = vshra.s32 %v4148, 13
    %v4373 = vshra.s32 %v4149, 13
    %v4374 = vshra.s32 %v4150, 13
    %v4375 = vshra.s32 %v4151, 13
    %v4376 = vshra.s32 %v4152, 13
    %v4377 = vshra.s32 %v4153, 13
    %v4378 = vshra.s32 %v4154, 13
    %v4379 = vshra.s32 %v4155, 13
    %v4380 = vshra.s32 %v4156, 13
    %v4381 = vshra.s32 %v4157, 13
    %v4382 = vshra.s32 %v4158, 13
    %v4383 = vshra.s32 %v4159, 13
    %v4384 = vshra.s32 %v4160, 13
    %v4385 = vshra.s32 %v4161, 13
    %v4386 = vshra.s32 %v4162, 13
    %v4387 = vshra.s32 %v4163, 13
    %v4388 = vshra.s32 %v4164, 13
    %v4389 = vshra.s32 %v4165, 13
    %v4390 = vshra.s32 %v4166, 13
    %v4391 = vshra.s32 %v4167, 13
    %v4392 = vshra.s32 %v4168, 13
    %v4393 = vshra.s32 %v4169, 13
    %v4394 = vshra.s32 %v4170, 13
    %v4395 = vshra.s32 %v4171, 13
    %v4396 = vshra.s32 %v4172, 13
    %v4397 = vshra.s32 %v4173, 13
    %v4398 = vshra.s32 %v4174, 13
    %v4399 = vshra.s32 %v4175, 13
    %v4400 = vshra.s32 %v4176, 13
    %v4401 = vshra.s32 %v4177, 13
    %v4402 = vshra.s32 %v4178, 13
    %v4403 = vshra.s32 %v4179, 13
    %v4404 = vshra.s32 %v4180, 13
    %v4405 = vshra.s32 %v4181, 13
    %v4406 = vshra.s32 %v4182, 13
    %v4407 = vshra.s32 %v4183, 13
    %v4408 = vshra.s32 %v4184, 13
    %v4409 = vshra.s32 %v4185, 13
    %v4410 = vshra.s32 %v4186, 13
    %v4411 = vshra.s32 %v4187, 13
    %v4412 = vshra.s32 %v4188, 13
    %v4413 = vshra.s32 %v4189, 13
    %v4414 = vshra.s32 %v4190, 13
    %v4415 = vshra.s32 %v4191, 13
    %v4416 = vshra.s32 %v4192, 13
    %v4417 = vshra.s32 %v4193, 13
    %v4418 = vshra.s32 %v4194, 13
    %v4419 = vshra.s32 %v4195, 13
    %v4420 = vshra.s32 %v4196, 13
    %v4421 = vshra.s32 %v4197, 13
    %v4422 = vshra.s32 %v4198, 13
    %v4423 = vshra.s32 %v4199, 13
    %v4424 = vshra.s32 %v4200, 13
    %v4425 = vshra.s32 %v4201, 13
    %v4426 = vshra.s32 %v4202, 13
    %v4427 = vshra.s32 %v4203, 13
    %v4428 = vshra.s32 %v4204, 13
    %v4429 = vshra.s32 %v4205, 13
    %v4430 = vshra.s32 %v4206, 13
    %v4431 = vshra.s32 %v4207, 13
    %v4432 = vshra.s32 %v4208, 13
    %v4433 = vshra.s32 %v4209, 13
    %v4434 = vshra.s32 %v4210, 13
    %v4435 = vshra.s32 %v4211, 13
    %v4436 = vshra.s32 %v4212, 13
    %v4437 = vshra.s32 %v4213, 13
    %v4438 = vshra.s32 %v4214, 13
    %v4439 = vshra.s32 %v4215, 13
    %v4440 = vshra.s32 %v4216, 13
    %v4441 = vshra.s32 %v4217, 13
    %v4442 = vshra.s32 %v4218, 13
    %v4443 = vshra.s32 %v4219, 13
    %v4444 = vshra.s32 %v4220, 13
    %v4445 = vshra.s32 %v4221, 13
    %v4446 = vshra.s32 %v4222, 13
    %v4447 = vshra.s32 %v4223, 13
    %v4448 = vshra.s32 %v4224, 13
    %v4449 = vshra.s32 %v4225, 13
    %v4450 = vshra.s32 %v4226, 13
    %v4451 = vshra.s32 %v4227, 13
    %v4452 = vshra.s32 %v4228, 13
    %v4453 = vshra.s32 %v4229, 13
    %v4454 = vshra.s32 %v4230, 13
    %v4455 = vshra.s32 %v4231, 13
    %v4456 = vshra.s32 %v4232, 13
    %v4457 = vshra.s32 %v4233, 13
    %v4458 = vshra.s32 %v4234, 13
    %v4459 = vshra.s32 %v4235, 13
    %v4460 = vshra.s32 %v4236, 13
    %v4461 = vshra.s32 %v4237, 13
    %v4462 = vshra.s32 %v4238, 13
    %v4463 = vshra.s32 %v4239, 13
    %v4464 = vshra.s32 %v4240, 13
    %v4465 = vshra.s32 %v4241, 13
    %v4466 = vshra.s32 %v4242, 13
    %v4467 = vshra.s32 %v4243, 13
    %v4468 = vshra.s32 %v4244, 13
    %v4469 = vshra.s32 %v4245, 13
    %v4470 = vshra.s32 %v4246, 13
    %v4471 = vshra.s32 %v4247, 13
    %v4472 = vshra.s32 %v4248, 13
    %v4473 = vshra.s32 %v4249, 13
    %v4474 = vshra.s32 %v4250, 13
    %v4475 = vshra.s32 %v4251, 13
    %v4476 = vshra.s32 %v4252, 13
    %v4477 = vshra.s32 %v4253, 13
    %v4478 = vshra.s32 %v4254, 13
    %v4479 = vshra.s32 %v4255, 13
    %v4480 = vshra.s32 %v4256, 13
    %v4481 = vshra.s32 %v4257, 13
    %v4482 = vshra.s32 %v4258, 13
    %v4483 = vshra.s32 %v4259, 13
    %v4484 = vshra.s32 %v4260, 13
    %v4485 = vshra.s32 %v4261, 13
    %v4486 = vshra.s32 %v4262, 13
    %v4487 = vshra.s32 %v4263, 13
    %v4488 = vshra.s32 %v4264, 13
    %v4489 = vshra.s32 %v4265, 13
    %v4490 = vshra.s32 %v4266, 13
    %v4491 = vshra.s32 %v4267, 13
    %v4492 = vshra.s32 %v4268, 13
    %v4493 = vshra.s32 %v4269, 13
    %v4494 = vshra.s32 %v4270, 13
    %v4495 = vshra.s32 %v4271, 13
    %v4496 = vshra.s32 %v4272, 13
    %v4497 = vshra.s32 %v4273, 13
    %v4498 = vshra.s32 %v4274, 13
    %v4499 = vshra.s32 %v4275, 13
    %v4500 = vshra.s32 %v4276, 13
    %v4501 = vshra.s32 %v4277, 13
    %v4502 = vshra.s32 %v4278, 13
    %v4503 = vshra.s32 %v4279, 13
    %v4504 = vshra.s32 %v4280, 13
    %v4505 = vshra.s32 %v4281, 13
    %v4506 = vshra.s32 %v4282, 13
    %v4507 = vshra.s32 %v4283, 13
    %v4508 = vshra.s32 %v4284, 13
    %v4509 = vshra.s32 %v4285, 13
    %v4510 = vshra.s32 %v4286, 13
    %v4511 = vshra.s32 %v4287, 13
    %v4512 = vshra.s32 %v4288, 13
    %v4513 = vshra.s32 %v4289, 13
    %v4514 = vshra.s32 %v4290, 13
    %v4515 = vshra.s32 %v4291, 13
    %v4516 = vshra.s32 %v4292, 13
    %v4517 = vshra.s32 %v4293, 13
    %v4518 = vshra.s32 %v4294, 13
    %v4519 = vshra.s32 %v4295, 13
    %v4520 = vshra.s32 %v4296, 13
    %v4521 = vshra.s32 %v4297, 13
    %v4522 = vshra.s32 %v4298, 13
    %v4523 = vshra.s32 %v4299, 13
    %v4524 = vshra.s32 %v4300, 13
    %v4525 = vshra.s32 %v4301, 13
    %v4526 = vshra.s32 %v4302, 13
    %v4527 = vshra.s32 %v4303, 13
    %v4528 = vshra.s32 %v4304, 13
    %v4529 = vshra.s32 %v4305, 13
    %v4530 = vshra.s32 %v4306, 13
    %v4531 = vshra.s32 %v4307, 13
    %v4532 = vshra.s32 %v4308, 13
    %v4533 = vshra.s32 %v4309, 13
    %v4534 = vshra.s32 %v4310, 13
    %v4535 = vshra.s32 %v4311, 13
    %v4536 = vshra.s32 %v4312, 13
    %v4537 = vshra.s32 %v4313, 13
    %v4538 = vshra.s32 %v4314, 13
    %v4539 = vshra.s32 %v4315, 13
    %v4540 = vshra.s32 %v4316, 13
    %v4541 = vshra.s32 %v4317, 13
    %v4542 = vshra.s32 %v4318, 13
    %v4543 = vshra.s32 %v4319, 13
    %v4544 = vshra.s32 %v4320, 13
    %v4545 = vshra.s32 %v4321, 13
    %v4546 = vshra.s32 %v4322, 13
    %v4547 = vshra.s32 %v4323, 13
    %v4548 = vshra.s32 %v4324, 13
    %v4549 = vshra.s32 %v4325, 13
    %v4550 = vshra.s32 %v4326, 13
    %v4551 = vshra.s32 %v4327, 13
    %v4552 = vshra.s32 %v4328, 13
    %v4553 = vshra.s32 %v4329, 13
    %v4554 = vshra.s32 %v4330, 13
    %v4555 = vshra.s32 %v4331, 13
    %v4556 = vxor.u32 %v3884, %v4332
    %v4557 = vxor.u32 %v3885, %v4333
    %v4558 = vxor.u32 %v3886, %v4334
    %v4559 = vxor.u32 %v3887, %v4335
    %v4560 = vxor.u32 %v3888, %v4336
    %v4561 = vxor.u32 %v3889, %v4337
    %v4562 = vxor.u32 %v3890, %v4338
    %v4563 = vxor.u32 %v3891, %v4339
    %v4564 = vxor.u32 %v3892, %v4340
    %v4565 = vxor.u32 %v3893, %v4341
    %v4566 = vxor.u32 %v3894, %v4342
    %v4567 = vxor.u32 %v3895, %v4343
    %v4568 = vxor.u32 %v3896, %v4344
    %v4569 = vxor.u32 %v3897, %v4345
    %v4570 = vxor.u32 %v3898, %v4346
    %v4571 = vxor.u32 %v3899, %v4347
    %v4572 = vxor.u32 %v3900, %v4348
    %v4573 = vxor.u32 %v3901, %v4349
    %v4574 = vxor.u32 %v3902, %v4350
    %v4575 = vxor.u32 %v3903, %v4351
    %v4576 = vxor.u32 %v3904, %v4352
    %v4577 = vxor.u32 %v3905, %v4353
    %v4578 = vxor.u32 %v3906, %v4354
    %v4579 = vxor.u32 %v3907, %v4355
    %v4580 = vxor.u32 %v3908, %v4356
    %v4581 = vxor.u32 %v3909, %v4357
    %v4582 = vxor.u32 %v3910, %v4358
    %v4583 = vxor.u32 %v3911, %v4359
    %v4584 = vxor.u32 %v3912, %v4360
    %v4585 = vxor.u32 %v3913, %v4361
    %v4586 = vxor.u32 %v3914, %v4362
    %v4587 = vxor.u32 %v3915, %v4363
    %v4588 = vxor.u32 %v3916, %v4364
    %v4589 = vxor.u32 %v3917, %v4365
    %v4590 = vxor.u32 %v3918, %v4366
    %v4591 = vxor.u32 %v3919, %v4367
    %v4592 = vxor.u32 %v3920, %v4368
    %v4593 = vxor.u32 %v3921, %v4369
    %v4594 = vxor.u32 %v3922, %v4370
    %v4595 = vxor.u32 %v3923, %v4371
    %v4596 = vxor.u32 %v3924, %v4372
    %v4597 = vxor.u32 %v3925, %v4373
    %v4598 = vxor.u32 %v3926, %v4374
    %v4599 = vxor.u32 %v3927, %v4375
    %v4600 = vxor.u32 %v3928, %v4376
    %v4601 = vxor.u32 %v3929, %v4377
    %v4602 = vxor.u32 %v3930, %v4378
    %v4603 = vxor.u32 %v3931, %v4379
    %v4604 = vxor.u32 %v3932, %v4380
    %v4605 = vxor.u32 %v3933, %v4381
    %v4606 = vxor.u32 %v3934, %v4382
    %v4607 = vxor.u32 %v3935, %v4383
    %v4608 = vxor.u32 %v3936, %v4384
    %v4609 = vxor.u32 %v3937, %v4385
    %v4610 = vxor.u32 %v3938, %v4386
    %v4611 = vxor.u32 %v3939, %v4387
    %v4612 = vxor.u32 %v3940, %v4388
    %v4613 = vxor.u32 %v3941, %v4389
    %v4614 = vxor.u32 %v3942, %v4390
    %v4615 = vxor.u32 %v3943, %v4391
    %v4616 = vxor.u32 %v3944, %v4392
    %v4617 = vxor.u32 %v3945, %v4393
    %v4618 = vxor.u32 %v3946, %v4394
    %v4619 = vxor.u32 %v3947, %v4395
    %v4620 = vxor.u32 %v3948, %v4396
    %v4621 = vxor.u32 %v3949, %v4397
    %v4622 = vxor.u32 %v3950, %v4398
    %v4623 = vxor.u32 %v3951, %v4399
    %v4624 = vxor.u32 %v3952, %v4400
    %v4625 = vxor.u32 %v3953, %v4401
    %v4626 = vxor.u32 %v3954, %v4402
    %v4627 = vxor.u32 %v3955, %v4403
    %v4628 = vxor.u32 %v3956, %v4404
    %v4629 = vxor.u32 %v3957, %v4405
    %v4630 = vxor.u32 %v3958, %v4406
    %v4631 = vxor.u32 %v3959, %v4407
    %v4632 = vxor.u32 %v3960, %v4408
    %v4633 = vxor.u32 %v3961, %v4409
    %v4634 = vxor.u32 %v3962, %v4410
    %v4635 = vxor.u32 %v3963, %v4411
    %v4636 = vxor.u32 %v3964, %v4412
    %v4637 = vxor.u32 %v3965, %v4413
    %v4638 = vxor.u32 %v3966, %v4414
    %v4639 = vxor.u32 %v3967, %v4415
    %v4640 = vxor.u32 %v3968, %v4416
    %v4641 = vxor.u32 %v3969, %v4417
    %v4642 = vxor.u32 %v3970, %v4418
    %v4643 = vxor.u32 %v3971, %v4419
    %v4644 = vxor.u32 %v3972, %v4420
    %v4645 = vxor.u32 %v3973, %v4421
    %v4646 = vxor.u32 %v3974, %v4422
    %v4647 = vxor.u32 %v3975, %v4423
    %v4648 = vxor.u32 %v3976, %v4424
    %v4649 = vxor.u32 %v3977, %v4425
    %v4650 = vxor.u32 %v3978, %v4426
    %v4651 = vxor.u32 %v3979, %v4427
    %v4652 = vxor.u32 %v3980, %v4428
    %v4653 = vxor.u32 %v3981, %v4429
    %v4654 = vxor.u32 %v3982, %v4430
    %v4655 = vxor.u32 %v3983, %v4431
    %v4656 = vxor.u32 %v3984, %v4432
    %v4657 = vxor.u32 %v3985, %v4433
    %v4658 = vxor.u32 %v3986, %v4434
    %v4659 = vxor.u32 %v3987, %v4435
    %v4660 = vxor.u32 %v3988, %v4436
    %v4661 = vxor.u32 %v3989, %v4437
    %v4662 = vxor.u32 %v3990, %v4438
    %v4663 = vxor.u32 %v3991, %v4439
    %v4664 = vxor.u32 %v3992, %v4440
    %v4665 = vxor.u32 %v3993, %v4441
    %v4666 = vxor.u32 %v3994, %v4442
    %v4667 = vxor.u32 %v3995, %v4443
    %v4668 = vxor.u32 %v3996, %v4444
    %v4669 = vxor.u32 %v3997, %v4445
    %v4670 = vxor.u32 %v3998, %v4446
    %v4671 = vxor.u32 %v3999, %v4447
    %v4672 = vxor.u32 %v4000, %v4448
    %v4673 = vxor.u32 %v4001, %v4449
    %v4674 = vxor.u32 %v4002, %v4450
    %v4675 = vxor.u32 %v4003, %v4451
    %v4676 = vxor.u32 %v4004, %v4452
    %v4677 = vxor.u32 %v4005, %v4453
    %v4678 = vxor.u32 %v4006, %v4454
    %v4679 = vxor.u32 %v4007, %v4455
    %v4680 = vxor.u32 %v4008, %v4456
    %v4681 = vxor.u32 %v4009, %v4457
    %v4682 = vxor.u32 %v4010, %v4458
    %v4683 = vxor.u32 %v4011, %v4459
    %v4684 = vxor.u32 %v4012, %v4460
    %v4685 = vxor.u32 %v4013, %v4461
    %v4686 = vxor.u32 %v4014, %v4462
    %v4687 = vxor.u32 %v4015, %v4463
    %v4688 = vxor.u32 %v4016, %v4464
    %v4689 = vxor.u32 %v4017, %v4465
    %v4690 = vxor.u32 %v4018, %v4466
    %v4691 = vxor.u32 %v4019, %v4467
    %v4692 = vxor.u32 %v4020, %v4468
    %v4693 = vxor.u32 %v4021, %v4469
    %v4694 = vxor.u32 %v4022, %v4470
    %v4695 = vxor.u32 %v4023, %v4471
    %v4696 = vxor.u32 %v4024, %v4472
    %v4697 = vxor.u32 %v4025, %v4473
    %v4698 = vxor.u32 %v4026, %v4474
    %v4699 = vxor.u32 %v4027, %v4475
    %v4700 = vxor.u32 %v4028, %v4476
    %v4701 = vxor.u32 %v4029, %v4477
    %v4702 = vxor.u32 %v4030, %v4478
    %v4703 = vxor.u32 %v4031, %v4479
    %v4704 = vxor.u32 %v4032, %v4480
    %v4705 = vxor.u32 %v4033, %v4481
    %v4706 = vxor.u32 %v4034, %v4482
    %v4707 = vxor.u32 %v4035, %v4483
    %v4708 = vxor.u32 %v4036, %v4484
    %v4709 = vxor.u32 %v4037, %v4485
    %v4710 = vxor.u32 %v4038, %v4486
    %v4711 = vxor.u32 %v4039, %v4487
    %v4712 = vxor.u32 %v4040, %v4488
    %v4713 = vxor.u32 %v4041, %v4489
    %v4714 = vxor.u32 %v4042, %v4490
    %v4715 = vxor.u32 %v4043, %v4491
    %v4716 = vxor.u32 %v4044, %v4492
    %v4717 = vxor.u32 %v4045, %v4493
    %v4718 = vxor.u32 %v4046, %v4494
    %v4719 = vxor.u32 %v4047, %v4495
    %v4720 = vxor.u32 %v4048, %v4496
    %v4721 = vxor.u32 %v4049, %v4497
    %v4722 = vxor.u32 %v4050, %v4498
    %v4723 = vxor.u32 %v4051, %v4499
    %v4724 = vxor.u32 %v4052, %v4500
    %v4725 = vxor.u32 %v4053, %v4501
    %v4726 = vxor.u32 %v4054, %v4502
    %v4727 = vxor.u32 %v4055, %v4503
    %v4728 = vxor.u32 %v4056, %v4504
    %v4729 = vxor.u32 %v4057, %v4505
    %v4730 = vxor.u32 %v4058, %v4506
    %v4731 = vxor.u32 %v4059, %v4507
    %v4732 = vxor.u32 %v4060, %v4508
    %v4733 = vxor.u32 %v4061, %v4509
    %v4734 = vxor.u32 %v4062, %v4510
    %v4735 = vxor.u32 %v4063, %v4511
    %v4736 = vxor.u32 %v4064, %v4512
    %v4737 = vxor.u32 %v4065, %v4513
    %v4738 = vxor.u32 %v4066, %v4514
    %v4739 = vxor.u32 %v4067, %v4515
    %v4740 = vxor.u32 %v4068, %v4516
    %v4741 = vxor.u32 %v4069, %v4517
    %v4742 = vxor.u32 %v4070, %v4518
    %v4743 = vxor.u32 %v4071, %v4519
    %v4744 = vxor.u32 %v4072, %v4520
    %v4745 = vxor.u32 %v4073, %v4521
    %v4746 = vxor.u32 %v4074, %v4522
    %v4747 = vxor.u32 %v4075, %v4523
    %v4748 = vxor.u32 %v4076, %v4524
    %v4749 = vxor.u32 %v4077, %v4525
    %v4750 = vxor.u32 %v4078, %v4526
    %v4751 = vxor.u32 %v4079, %v4527
    %v4752 = vxor.u32 %v4080, %v4528
    %v4753 = vxor.u32 %v4081, %v4529
    %v4754 = vxor.u32 %v4082, %v4530
    %v4755 = vxor.u32 %v4083, %v4531
    %v4756 = vxor.u32 %v4084, %v4532
    %v4757 = vxor.u32 %v4085, %v4533
    %v4758 = vxor.u32 %v4086, %v4534
    %v4759 = vxor.u32 %v4087, %v4535
    %v4760 = vxor.u32 %v4088, %v4536
    %v4761 = vxor.u32 %v4089, %v4537
    %v4762 = vxor.u32 %v4090, %v4538
    %v4763 = vxor.u32 %v4091, %v4539
    %v4764 = vxor.u32 %v4092, %v4540
    %v4765 = vxor.u32 %v4093, %v4541
    %v4766 = vxor.u32 %v4094, %v4542
    %v4767 = vxor.u32 %v4095, %v4543
    %v4768 = vxor.u32 %v4096, %v4544
    %v4769 = vxor.u32 %v4097, %v4545
    %v4770 = vxor.u32 %v4098, %v4546
    %v4771 = vxor.u32 %v4099, %v4547
    %v4772 = vxor.u32 %v4100, %v4548
    %v4773 = vxor.u32 %v4101, %v4549
    %v4774 = vxor.u32 %v4102, %v4550
    %v4775 = vxor.u32 %v4103, %v4551
    %v4776 = vxor.u32 %v4104, %v4552
    %v4777 = vxor.u32 %v4105, %v4553
    %v4778 = vxor.u32 %v4106, %v4554
    %v4779 = vxor.u32 %v4107, %v4555
    %v4780 = vmul.u32 %v4556, 3266489909
    %v4781 = vmul.u32 %v4557, 3266489909
    %v4782 = vmul.u32 %v4558, 3266489909
    %v4783 = vmul.u32 %v4559, 3266489909
    %v4784 = vmul.u32 %v4560, 3266489909
    %v4785 = vmul.u32 %v4561, 3266489909
    %v4786 = vmul.u32 %v4562, 3266489909
    %v4787 = vmul.u32 %v4563, 3266489909
    %v4788 = vmul.u32 %v4564, 3266489909
    %v4789 = vmul.u32 %v4565, 3266489909
    %v4790 = vmul.u32 %v4566, 3266489909
    %v4791 = vmul.u32 %v4567, 3266489909
    %v4792 = vmul.u32 %v4568, 3266489909
    %v4793 = vmul.u32 %v4569, 3266489909
    %v4794 = vmul.u32 %v4570, 3266489909
    %v4795 = vmul.u32 %v4571, 3266489909
    %v4796 = vmul.u32 %v4572, 3266489909
    %v4797 = vmul.u32 %v4573, 3266489909
    %v4798 = vmul.u32 %v4574, 3266489909
    %v4799 = vmul.u32 %v4575, 3266489909
    %v4800 = vmul.u32 %v4576, 3266489909
    %v4801 = vmul.u32 %v4577, 3266489909
    %v4802 = vmul.u32 %v4578, 3266489909
    %v4803 = vmul.u32 %v4579, 3266489909
    %v4804 = vmul.u32 %v4580, 3266489909
    %v4805 = vmul.u32 %v4581, 3266489909
    %v4806 = vmul.u32 %v4582, 3266489909
    %v4807 = vmul.u32 %v4583, 3266489909
    %v4808 = vmul.u32 %v4584, 3266489909
    %v4809 = vmul.u32 %v4585, 3266489909
    %v4810 = vmul.u32 %v4586, 3266489909
    %v4811 = vmul.u32 %v4587, 3266489909
    %v4812 = vmul.u32 %v4588, 3266489909
    %v4813 = vmul.u32 %v4589, 3266489909
    %v4814 = vmul.u32 %v4590, 3266489909
    %v4815 = vmul.u32 %v4591, 3266489909
    %v4816 = vmul.u32 %v4592, 3266489909
    %v4817 = vmul.u32 %v4593, 3266489909
    %v4818 = vmul.u32 %v4594, 3266489909
    %v4819 = vmul.u32 %v4595, 3266489909
    %v4820 = vmul.u32 %v4596, 3266489909
    %v4821 = vmul.u32 %v4597, 3266489909
    %v4822 = vmul.u32 %v4598, 3266489909
    %v4823 = vmul.u32 %v4599, 3266489909
    %v4824 = vmul.u32 %v4600, 3266489909
    %v4825 = vmul.u32 %v4601, 3266489909
    %v4826 = vmul.u32 %v4602, 3266489909
    %v4827 = vmul.u32 %v4603, 3266489909
    %v4828 = vmul.u32 %v4604, 3266489909
    %v4829 = vmul.u32 %v4605, 3266489909
    %v4830 = vmul.u32 %v4606, 3266489909
    %v4831 = vmul.u32 %v4607, 3266489909
    %v4832 = vmul.u32 %v4608, 3266489909
    %v4833 = vmul.u32 %v4609, 3266489909
    %v4834 = vmul.u32 %v4610, 3266489909
    %v4835 = vmul.u32 %v4611, 3266489909
    %v4836 = vmul.u32 %v4612, 3266489909
    %v4837 = vmul.u32 %v4613, 3266489909
    %v4838 = vmul.u32 %v4614, 3266489909
    %v4839 = vmul.u32 %v4615, 3266489909
    %v4840 = vmul.u32 %v4616, 3266489909
    %v4841 = vmul.u32 %v4617, 3266489909
    %v4842 = vmul.u32 %v4618, 3266489909
    %v4843 = vmul.u32 %v4619, 3266489909
    %v4844 = vmul.u32 %v4620, 3266489909
    %v4845 = vmul.u32 %v4621, 3266489909
    %v4846 = vmul.u32 %v4622, 3266489909
    %v4847 = vmul.u32 %v4623, 3266489909
    %v4848 = vmul.u32 %v4624, 3266489909
    %v4849 = vmul.u32 %v4625, 3266489909
    %v4850 = vmul.u32 %v4626, 3266489909
    %v4851 = vmul.u32 %v4627, 3266489909
    %v4852 = vmul.u32 %v4628, 3266489909
    %v4853 = vmul.u32 %v4629, 3266489909
    %v4854 = vmul.u32 %v4630, 3266489909
    %v4855 = vmul.u32 %v4631, 3266489909
    %v4856 = vmul.u32 %v4632, 3266489909
    %v4857 = vmul.u32 %v4633, 3266489909
    %v4858 = vmul.u32 %v4634, 3266489909
    %v4859 = vmul.u32 %v4635, 3266489909
    %v4860 = vmul.u32 %v4636, 3266489909
    %v4861 = vmul.u32 %v4637, 3266489909
    %v4862 = vmul.u32 %v4638, 3266489909
    %v4863 = vmul.u32 %v4639, 3266489909
    %v4864 = vmul.u32 %v4640, 3266489909
    %v4865 = vmul.u32 %v4641, 3266489909
    %v4866 = vmul.u32 %v4642, 3266489909
    %v4867 = vmul.u32 %v4643, 3266489909
    %v4868 = vmul.u32 %v4644, 3266489909
    %v4869 = vmul.u32 %v4645, 3266489909
    %v4870 = vmul.u32 %v4646, 3266489909
    %v4871 = vmul.u32 %v4647, 3266489909
    %v4872 = vmul.u32 %v4648, 3266489909
    %v4873 = vmul.u32 %v4649, 3266489909
    %v4874 = vmul.u32 %v4650, 3266489909
    %v4875 = vmul.u32 %v4651, 3266489909
    %v4876 = vmul.u32 %v4652, 3266489909
    %v4877 = vmul.u32 %v4653, 3266489909
    %v4878 = vmul.u32 %v4654, 3266489909
    %v4879 = vmul.u32 %v4655, 3266489909
    %v4880 = vmul.u32 %v4656, 3266489909
    %v4881 = vmul.u32 %v4657, 3266489909
    %v4882 = vmul.u32 %v4658, 3266489909
    %v4883 = vmul.u32 %v4659, 3266489909
    %v4884 = vmul.u32 %v4660, 3266489909
    %v4885 = vmul.u32 %v4661, 3266489909
    %v4886 = vmul.u32 %v4662, 3266489909
    %v4887 = vmul.u32 %v4663, 3266489909
    %v4888 = vmul.u32 %v4664, 3266489909
    %v4889 = vmul.u32 %v4665, 3266489909
    %v4890 = vmul.u32 %v4666, 3266489909
    %v4891 = vmul.u32 %v4667, 3266489909
    %v4892 = vmul.u32 %v4668, 3266489909
    %v4893 = vmul.u32 %v4669, 3266489909
    %v4894 = vmul.u32 %v4670, 3266489909
    %v4895 = vmul.u32 %v4671, 3266489909
    %v4896 = vmul.u32 %v4672, 3266489909
    %v4897 = vmul.u32 %v4673, 3266489909
    %v4898 = vmul.u32 %v4674, 3266489909
    %v4899 = vmul.u32 %v4675, 3266489909
    %v4900 = vmul.u32 %v4676, 3266489909
    %v4901 = vmul.u32 %v4677, 3266489909
    %v4902 = vmul.u32 %v4678, 3266489909
    %v4903 = vmul.u32 %v4679, 3266489909
    %v4904 = vmul.u32 %v4680, 3266489909
    %v4905 = vmul.u32 %v4681, 3266489909
    %v4906 = vmul.u32 %v4682, 3266489909
    %v4907 = vmul.u32 %v4683, 3266489909
    %v4908 = vmul.u32 %v4684, 3266489909
    %v4909 = vmul.u32 %v4685, 3266489909
    %v4910 = vmul.u32 %v4686, 3266489909
    %v4911 = vmul.u32 %v4687, 3266489909
    %v4912 = vmul.u32 %v4688, 3266489909
    %v4913 = vmul.u32 %v4689, 3266489909
    %v4914 = vmul.u32 %v4690, 3266489909
    %v4915 = vmul.u32 %v4691, 3266489909
    %v4916 = vmul.u32 %v4692, 3266489909
    %v4917 = vmul.u32 %v4693, 3266489909
    %v4918 = vmul.u32 %v4694, 3266489909
    %v4919 = vmul.u32 %v4695, 3266489909
    %v4920 = vmul.u32 %v4696, 3266489909
    %v4921 = vmul.u32 %v4697, 3266489909
    %v4922 = vmul.u32 %v4698, 3266489909
    %v4923 = vmul.u32 %v4699, 3266489909
    %v4924 = vmul.u32 %v4700, 3266489909
    %v4925 = vmul.u32 %v4701, 3266489909
    %v4926 = vmul.u32 %v4702, 3266489909
    %v4927 = vmul.u32 %v4703, 3266489909
    %v4928 = vmul.u32 %v4704, 3266489909
    %v4929 = vmul.u32 %v4705, 3266489909
    %v4930 = vmul.u32 %v4706, 3266489909
    %v4931 = vmul.u32 %v4707, 3266489909
    %v4932 = vmul.u32 %v4708, 3266489909
    %v4933 = vmul.u32 %v4709, 3266489909
    %v4934 = vmul.u32 %v4710, 3266489909
    %v4935 = vmul.u32 %v4711, 3266489909
    %v4936 = vmul.u32 %v4712, 3266489909
    %v4937 = vmul.u32 %v4713, 3266489909
    %v4938 = vmul.u32 %v4714, 3266489909
    %v4939 = vmul.u32 %v4715, 3266489909
    %v4940 = vmul.u32 %v4716, 3266489909
    %v4941 = vmul.u32 %v4717, 3266489909
    %v4942 = vmul.u32 %v4718, 3266489909
    %v4943 = vmul.u32 %v4719, 3266489909
    %v4944 = vmul.u32 %v4720, 3266489909
    %v4945 = vmul.u32 %v4721, 3266489909
    %v4946 = vmul.u32 %v4722, 3266489909
    %v4947 = vmul.u32 %v4723, 3266489909
    %v4948 = vmul.u32 %v4724, 3266489909
    %v4949 = vmul.u32 %v4725, 3266489909
    %v4950 = vmul.u32 %v4726, 3266489909
    %v4951 = vmul.u32 %v4727, 3266489909
    %v4952 = vmul.u32 %v4728, 3266489909
    %v4953 = vmul.u32 %v4729, 3266489909
    %v4954 = vmul.u32 %v4730, 3266489909
    %v4955 = vmul.u32 %v4731, 3266489909
    %v4956 = vmul.u32 %v4732, 3266489909
    %v4957 = vmul.u32 %v4733, 3266489909
    %v4958 = vmul.u32 %v4734, 3266489909
    %v4959 = vmul.u32 %v4735, 3266489909
    %v4960 = vmul.u32 %v4736, 3266489909
    %v4961 = vmul.u32 %v4737, 3266489909
    %v4962 = vmul.u32 %v4738, 3266489909
    %v4963 = vmul.u32 %v4739, 3266489909
    %v4964 = vmul.u32 %v4740, 3266489909
    %v4965 = vmul.u32 %v4741, 3266489909
    %v4966 = vmul.u32 %v4742, 3266489909
    %v4967 = vmul.u32 %v4743, 3266489909
    %v4968 = vmul.u32 %v4744, 3266489909
    %v4969 = vmul.u32 %v4745, 3266489909
    %v4970 = vmul.u32 %v4746, 3266489909
    %v4971 = vmul.u32 %v4747, 3266489909
    %v4972 = vmul.u32 %v4748, 3266489909
    %v4973 = vmul.u32 %v4749, 3266489909
    %v4974 = vmul.u32 %v4750, 3266489909
    %v4975 = vmul.u32 %v4751, 3266489909
    %v4976 = vmul.u32 %v4752, 3266489909
    %v4977 = vmul.u32 %v4753, 3266489909
    %v4978 = vmul.u32 %v4754, 3266489909
    %v4979 = vmul.u32 %v4755, 3266489909
    %v4980 = vmul.u32 %v4756, 3266489909
    %v4981 = vmul.u32 %v4757, 3266489909
    %v4982 = vmul.u32 %v4758, 3266489909
    %v4983 = vmul.u32 %v4759, 3266489909
    %v4984 = vmul.u32 %v4760, 3266489909
    %v4985 = vmul.u32 %v4761, 3266489909
    %v4986 = vmul.u32 %v4762, 3266489909
    %v4987 = vmul.u32 %v4763, 3266489909
    %v4988 = vmul.u32 %v4764, 3266489909
    %v4989 = vmul.u32 %v4765, 3266489909
    %v4990 = vmul.u32 %v4766, 3266489909
    %v4991 = vmul.u32 %v4767, 3266489909
    %v4992 = vmul.u32 %v4768, 3266489909
    %v4993 = vmul.u32 %v4769, 3266489909
    %v4994 = vmul.u32 %v4770, 3266489909
    %v4995 = vmul.u32 %v4771, 3266489909
    %v4996 = vmul.u32 %v4772, 3266489909
    %v4997 = vmul.u32 %v4773, 3266489909
    %v4998 = vmul.u32 %v4774, 3266489909
    %v4999 = vmul.u32 %v4775, 3266489909
    %v5000 = vmul.u32 %v4776, 3266489909
    %v5001 = vmul.u32 %v4777, 3266489909
    %v5002 = vmul.u32 %v4778, 3266489909
    %v5003 = vmul.u32 %v4779, 3266489909
    %v5004 = vand.u32 %v4780, 2147483647
    %v5005 = vand.u32 %v4781, 2147483647
    %v5006 = vand.u32 %v4782, 2147483647
    %v5007 = vand.u32 %v4783, 2147483647
    %v5008 = vand.u32 %v4784, 2147483647
    %v5009 = vand.u32 %v4785, 2147483647
    %v5010 = vand.u32 %v4786, 2147483647
    %v5011 = vand.u32 %v4787, 2147483647
    %v5012 = vand.u32 %v4788, 2147483647
    %v5013 = vand.u32 %v4789, 2147483647
    %v5014 = vand.u32 %v4790, 2147483647
    %v5015 = vand.u32 %v4791, 2147483647
    %v5016 = vand.u32 %v4792, 2147483647
    %v5017 = vand.u32 %v4793, 2147483647
    %v5018 = vand.u32 %v4794, 2147483647
    %v5019 = vand.u32 %v4795, 2147483647
    %v5020 = vand.u32 %v4796, 2147483647
    %v5021 = vand.u32 %v4797, 2147483647
    %v5022 = vand.u32 %v4798, 2147483647
    %v5023 = vand.u32 %v4799, 2147483647
    %v5024 = vand.u32 %v4800, 2147483647
    %v5025 = vand.u32 %v4801, 2147483647
    %v5026 = vand.u32 %v4802, 2147483647
    %v5027 = vand.u32 %v4803, 2147483647
    %v5028 = vand.u32 %v4804, 2147483647
    %v5029 = vand.u32 %v4805, 2147483647
    %v5030 = vand.u32 %v4806, 2147483647
    %v5031 = vand.u32 %v4807, 2147483647
    %v5032 = vand.u32 %v4808, 2147483647
    %v5033 = vand.u32 %v4809, 2147483647
    %v5034 = vand.u32 %v4810, 2147483647
    %v5035 = vand.u32 %v4811, 2147483647
    %v5036 = vand.u32 %v4812, 2147483647
    %v5037 = vand.u32 %v4813, 2147483647
    %v5038 = vand.u32 %v4814, 2147483647
    %v5039 = vand.u32 %v4815, 2147483647
    %v5040 = vand.u32 %v4816, 2147483647
    %v5041 = vand.u32 %v4817, 2147483647
    %v5042 = vand.u32 %v4818, 2147483647
    %v5043 = vand.u32 %v4819, 2147483647
    %v5044 = vand.u32 %v4820, 2147483647
    %v5045 = vand.u32 %v4821, 2147483647
    %v5046 = vand.u32 %v4822, 2147483647
    %v5047 = vand.u32 %v4823, 2147483647
    %v5048 = vand.u32 %v4824, 2147483647
    %v5049 = vand.u32 %v4825, 2147483647
    %v5050 = vand.u32 %v4826, 2147483647
    %v5051 = vand.u32 %v4827, 2147483647
    %v5052 = vand.u32 %v4828, 2147483647
    %v5053 = vand.u32 %v4829, 2147483647
    %v5054 = vand.u32 %v4830, 2147483647
    %v5055 = vand.u32 %v4831, 2147483647
    %v5056 = vand.u32 %v4832, 2147483647
    %v5057 = vand.u32 %v4833, 2147483647
    %v5058 = vand.u32 %v4834, 2147483647
    %v5059 = vand.u32 %v4835, 2147483647
    %v5060 = vand.u32 %v4836, 2147483647
    %v5061 = vand.u32 %v4837, 2147483647
    %v5062 = vand.u32 %v4838, 2147483647
    %v5063 = vand.u32 %v4839, 2147483647
    %v5064 = vand.u32 %v4840, 2147483647
    %v5065 = vand.u32 %v4841, 2147483647
    %v5066 = vand.u32 %v4842, 2147483647
    %v5067 = vand.u32 %v4843, 2147483647
    %v5068 = vand.u32 %v4844, 2147483647
    %v5069 = vand.u32 %v4845, 2147483647
    %v5070 = vand.u32 %v4846, 2147483647
    %v5071 = vand.u32 %v4847, 2147483647
    %v5072 = vand.u32 %v4848, 2147483647
    %v5073 = vand.u32 %v4849, 2147483647
    %v5074 = vand.u32 %v4850, 2147483647
    %v5075 = vand.u32 %v4851, 2147483647
    %v5076 = vand.u32 %v4852, 2147483647
    %v5077 = vand.u32 %v4853, 2147483647
    %v5078 = vand.u32 %v4854, 2147483647
    %v5079 = vand.u32 %v4855, 2147483647
    %v5080 = vand.u32 %v4856, 2147483647
    %v5081 = vand.u32 %v4857, 2147483647
    %v5082 = vand.u32 %v4858, 2147483647
    %v5083 = vand.u32 %v4859, 2147483647
    %v5084 = vand.u32 %v4860, 2147483647
    %v5085 = vand.u32 %v4861, 2147483647
    %v5086 = vand.u32 %v4862, 2147483647
    %v5087 = vand.u32 %v4863, 2147483647
    %v5088 = vand.u32 %v4864, 2147483647
    %v5089 = vand.u32 %v4865, 2147483647
    %v5090 = vand.u32 %v4866, 2147483647
    %v5091 = vand.u32 %v4867, 2147483647
    %v5092 = vand.u32 %v4868, 2147483647
    %v5093 = vand.u32 %v4869, 2147483647
    %v5094 = vand.u32 %v4870, 2147483647
    %v5095 = vand.u32 %v4871, 2147483647
    %v5096 = vand.u32 %v4872, 2147483647
    %v5097 = vand.u32 %v4873, 2147483647
    %v5098 = vand.u32 %v4874, 2147483647
    %v5099 = vand.u32 %v4875, 2147483647
    %v5100 = vand.u32 %v4876, 2147483647
    %v5101 = vand.u32 %v4877, 2147483647
    %v5102 = vand.u32 %v4878, 2147483647
    %v5103 = vand.u32 %v4879, 2147483647
    %v5104 = vand.u32 %v4880, 2147483647
    %v5105 = vand.u32 %v4881, 2147483647
    %v5106 = vand.u32 %v4882, 2147483647
    %v5107 = vand.u32 %v4883, 2147483647
    %v5108 = vand.u32 %v4884, 2147483647
    %v5109 = vand.u32 %v4885, 2147483647
    %v5110 = vand.u32 %v4886, 2147483647
    %v5111 = vand.u32 %v4887, 2147483647
    %v5112 = vand.u32 %v4888, 2147483647
    %v5113 = vand.u32 %v4889, 2147483647
    %v5114 = vand.u32 %v4890, 2147483647
    %v5115 = vand.u32 %v4891, 2147483647
    %v5116 = vand.u32 %v4892, 2147483647
    %v5117 = vand.u32 %v4893, 2147483647
    %v5118 = vand.u32 %v4894, 2147483647
    %v5119 = vand.u32 %v4895, 2147483647
    %v5120 = vand.u32 %v4896, 2147483647
    %v5121 = vand.u32 %v4897, 2147483647
    %v5122 = vand.u32 %v4898, 2147483647
    %v5123 = vand.u32 %v4899, 2147483647
    %v5124 = vand.u32 %v4900, 2147483647
    %v5125 = vand.u32 %v4901, 2147483647
    %v5126 = vand.u32 %v4902, 2147483647
    %v5127 = vand.u32 %v4903, 2147483647
    %v5128 = vand.u32 %v4904, 2147483647
    %v5129 = vand.u32 %v4905, 2147483647
    %v5130 = vand.u32 %v4906, 2147483647
    %v5131 = vand.u32 %v4907, 2147483647
    %v5132 = vand.u32 %v4908, 2147483647
    %v5133 = vand.u32 %v4909, 2147483647
    %v5134 = vand.u32 %v4910, 2147483647
    %v5135 = vand.u32 %v4911, 2147483647
    %v5136 = vand.u32 %v4912, 2147483647
    %v5137 = vand.u32 %v4913, 2147483647
    %v5138 = vand.u32 %v4914, 2147483647
    %v5139 = vand.u32 %v4915, 2147483647
    %v5140 = vand.u32 %v4916, 2147483647
    %v5141 = vand.u32 %v4917, 2147483647
    %v5142 = vand.u32 %v4918, 2147483647
    %v5143 = vand.u32 %v4919, 2147483647
    %v5144 = vand.u32 %v4920, 2147483647
    %v5145 = vand.u32 %v4921, 2147483647
    %v5146 = vand.u32 %v4922, 2147483647
    %v5147 = vand.u32 %v4923, 2147483647
    %v5148 = vand.u32 %v4924, 2147483647
    %v5149 = vand.u32 %v4925, 2147483647
    %v5150 = vand.u32 %v4926, 2147483647
    %v5151 = vand.u32 %v4927, 2147483647
    %v5152 = vand.u32 %v4928, 2147483647
    %v5153 = vand.u32 %v4929, 2147483647
    %v5154 = vand.u32 %v4930, 2147483647
    %v5155 = vand.u32 %v4931, 2147483647
    %v5156 = vand.u32 %v4932, 2147483647
    %v5157 = vand.u32 %v4933, 2147483647
    %v5158 = vand.u32 %v4934, 2147483647
    %v5159 = vand.u32 %v4935, 2147483647
    %v5160 = vand.u32 %v4936, 2147483647
    %v5161 = vand.u32 %v4937, 2147483647
    %v5162 = vand.u32 %v4938, 2147483647
    %v5163 = vand.u32 %v4939, 2147483647
    %v5164 = vand.u32 %v4940, 2147483647
    %v5165 = vand.u32 %v4941, 2147483647
    %v5166 = vand.u32 %v4942, 2147483647
    %v5167 = vand.u32 %v4943, 2147483647
    %v5168 = vand.u32 %v4944, 2147483647
    %v5169 = vand.u32 %v4945, 2147483647
    %v5170 = vand.u32 %v4946, 2147483647
    %v5171 = vand.u32 %v4947, 2147483647
    %v5172 = vand.u32 %v4948, 2147483647
    %v5173 = vand.u32 %v4949, 2147483647
    %v5174 = vand.u32 %v4950, 2147483647
    %v5175 = vand.u32 %v4951, 2147483647
    %v5176 = vand.u32 %v4952, 2147483647
    %v5177 = vand.u32 %v4953, 2147483647
    %v5178 = vand.u32 %v4954, 2147483647
    %v5179 = vand.u32 %v4955, 2147483647
    %v5180 = vand.u32 %v4956, 2147483647
    %v5181 = vand.u32 %v4957, 2147483647
    %v5182 = vand.u32 %v4958, 2147483647
    %v5183 = vand.u32 %v4959, 2147483647
    %v5184 = vand.u32 %v4960, 2147483647
    %v5185 = vand.u32 %v4961, 2147483647
    %v5186 = vand.u32 %v4962, 2147483647
    %v5187 = vand.u32 %v4963, 2147483647
    %v5188 = vand.u32 %v4964, 2147483647
    %v5189 = vand.u32 %v4965, 2147483647
    %v5190 = vand.u32 %v4966, 2147483647
    %v5191 = vand.u32 %v4967, 2147483647
    %v5192 = vand.u32 %v4968, 2147483647
    %v5193 = vand.u32 %v4969, 2147483647
    %v5194 = vand.u32 %v4970, 2147483647
    %v5195 = vand.u32 %v4971, 2147483647
    %v5196 = vand.u32 %v4972, 2147483647
    %v5197 = vand.u32 %v4973, 2147483647
    %v5198 = vand.u32 %v4974, 2147483647
    %v5199 = vand.u32 %v4975, 2147483647
    %v5200 = vand.u32 %v4976, 2147483647
    %v5201 = vand.u32 %v4977, 2147483647
    %v5202 = vand.u32 %v4978, 2147483647
    %v5203 = vand.u32 %v4979, 2147483647
    %v5204 = vand.u32 %v4980, 2147483647
    %v5205 = vand.u32 %v4981, 2147483647
    %v5206 = vand.u32 %v4982, 2147483647
    %v5207 = vand.u32 %v4983, 2147483647
    %v5208 = vand.u32 %v4984, 2147483647
    %v5209 = vand.u32 %v4985, 2147483647
    %v5210 = vand.u32 %v4986, 2147483647
    %v5211 = vand.u32 %v4987, 2147483647
    %v5212 = vand.u32 %v4988, 2147483647
    %v5213 = vand.u32 %v4989, 2147483647
    %v5214 = vand.u32 %v4990, 2147483647
    %v5215 = vand.u32 %v4991, 2147483647
    %v5216 = vand.u32 %v4992, 2147483647
    %v5217 = vand.u32 %v4993, 2147483647
    %v5218 = vand.u32 %v4994, 2147483647
    %v5219 = vand.u32 %v4995, 2147483647
    %v5220 = vand.u32 %v4996, 2147483647
    %v5221 = vand.u32 %v4997, 2147483647
    %v5222 = vand.u32 %v4998, 2147483647
    %v5223 = vand.u32 %v4999, 2147483647
    %v5224 = vand.u32 %v5000, 2147483647
    %v5225 = vand.u32 %v5001, 2147483647
    %v5226 = vand.u32 %v5002, 2147483647
    %v5227 = vand.u32 %v5003, 2147483647
    %v5228 = vshra.s32 %v5004, 16
    %v5229 = vshra.s32 %v5005, 16
    %v5230 = vshra.s32 %v5006, 16
    %v5231 = vshra.s32 %v5007, 16
    %v5232 = vshra.s32 %v5008, 16
    %v5233 = vshra.s32 %v5009, 16
    %v5234 = vshra.s32 %v5010, 16
    %v5235 = vshra.s32 %v5011, 16
    %v5236 = vshra.s32 %v5012, 16
    %v5237 = vshra.s32 %v5013, 16
    %v5238 = vshra.s32 %v5014, 16
    %v5239 = vshra.s32 %v5015, 16
    %v5240 = vshra.s32 %v5016, 16
    %v5241 = vshra.s32 %v5017, 16
    %v5242 = vshra.s32 %v5018, 16
    %v5243 = vshra.s32 %v5019, 16
    %v5244 = vshra.s32 %v5020, 16
    %v5245 = vshra.s32 %v5021, 16
    %v5246 = vshra.s32 %v5022, 16
    %v5247 = vshra.s32 %v5023, 16
    %v5248 = vshra.s32 %v5024, 16
    %v5249 = vshra.s32 %v5025, 16
    %v5250 = vshra.s32 %v5026, 16
    %v5251 = vshra.s32 %v5027, 16
    %v5252 = vshra.s32 %v5028, 16
    %v5253 = vshra.s32 %v5029, 16
    %v5254 = vshra.s32 %v5030, 16
    %v5255 = vshra.s32 %v5031, 16
    %v5256 = vshra.s32 %v5032, 16
    %v5257 = vshra.s32 %v5033, 16
    %v5258 = vshra.s32 %v5034, 16
    %v5259 = vshra.s32 %v5035, 16
    %v5260 = vshra.s32 %v5036, 16
    %v5261 = vshra.s32 %v5037, 16
    %v5262 = vshra.s32 %v5038, 16
    %v5263 = vshra.s32 %v5039, 16
    %v5264 = vshra.s32 %v5040, 16
    %v5265 = vshra.s32 %v5041, 16
    %v5266 = vshra.s32 %v5042, 16
    %v5267 = vshra.s32 %v5043, 16
    %v5268 = vshra.s32 %v5044, 16
    %v5269 = vshra.s32 %v5045, 16
    %v5270 = vshra.s32 %v5046, 16
    %v5271 = vshra.s32 %v5047, 16
    %v5272 = vshra.s32 %v5048, 16
    %v5273 = vshra.s32 %v5049, 16
    %v5274 = vshra.s32 %v5050, 16
    %v5275 = vshra.s32 %v5051, 16
    %v5276 = vshra.s32 %v5052, 16
    %v5277 = vshra.s32 %v5053, 16
    %v5278 = vshra.s32 %v5054, 16
    %v5279 = vshra.s32 %v5055, 16
    %v5280 = vshra.s32 %v5056, 16
    %v5281 = vshra.s32 %v5057, 16
    %v5282 = vshra.s32 %v5058, 16
    %v5283 = vshra.s32 %v5059, 16
    %v5284 = vshra.s32 %v5060, 16
    %v5285 = vshra.s32 %v5061, 16
    %v5286 = vshra.s32 %v5062, 16
    %v5287 = vshra.s32 %v5063, 16
    %v5288 = vshra.s32 %v5064, 16
    %v5289 = vshra.s32 %v5065, 16
    %v5290 = vshra.s32 %v5066, 16
    %v5291 = vshra.s32 %v5067, 16
    %v5292 = vshra.s32 %v5068, 16
    %v5293 = vshra.s32 %v5069, 16
    %v5294 = vshra.s32 %v5070, 16
    %v5295 = vshra.s32 %v5071, 16
    %v5296 = vshra.s32 %v5072, 16
    %v5297 = vshra.s32 %v5073, 16
    %v5298 = vshra.s32 %v5074, 16
    %v5299 = vshra.s32 %v5075, 16
    %v5300 = vshra.s32 %v5076, 16
    %v5301 = vshra.s32 %v5077, 16
    %v5302 = vshra.s32 %v5078, 16
    %v5303 = vshra.s32 %v5079, 16
    %v5304 = vshra.s32 %v5080, 16
    %v5305 = vshra.s32 %v5081, 16
    %v5306 = vshra.s32 %v5082, 16
    %v5307 = vshra.s32 %v5083, 16
    %v5308 = vshra.s32 %v5084, 16
    %v5309 = vshra.s32 %v5085, 16
    %v5310 = vshra.s32 %v5086, 16
    %v5311 = vshra.s32 %v5087, 16
    %v5312 = vshra.s32 %v5088, 16
    %v5313 = vshra.s32 %v5089, 16
    %v5314 = vshra.s32 %v5090, 16
    %v5315 = vshra.s32 %v5091, 16
    %v5316 = vshra.s32 %v5092, 16
    %v5317 = vshra.s32 %v5093, 16
    %v5318 = vshra.s32 %v5094, 16
    %v5319 = vshra.s32 %v5095, 16
    %v5320 = vshra.s32 %v5096, 16
    %v5321 = vshra.s32 %v5097, 16
    %v5322 = vshra.s32 %v5098, 16
    %v5323 = vshra.s32 %v5099, 16
    %v5324 = vshra.s32 %v5100, 16
    %v5325 = vshra.s32 %v5101, 16
    %v5326 = vshra.s32 %v5102, 16
    %v5327 = vshra.s32 %v5103, 16
    %v5328 = vshra.s32 %v5104, 16
    %v5329 = vshra.s32 %v5105, 16
    %v5330 = vshra.s32 %v5106, 16
    %v5331 = vshra.s32 %v5107, 16
    %v5332 = vshra.s32 %v5108, 16
    %v5333 = vshra.s32 %v5109, 16
    %v5334 = vshra.s32 %v5110, 16
    %v5335 = vshra.s32 %v5111, 16
    %v5336 = vshra.s32 %v5112, 16
    %v5337 = vshra.s32 %v5113, 16
    %v5338 = vshra.s32 %v5114, 16
    %v5339 = vshra.s32 %v5115, 16
    %v5340 = vshra.s32 %v5116, 16
    %v5341 = vshra.s32 %v5117, 16
    %v5342 = vshra.s32 %v5118, 16
    %v5343 = vshra.s32 %v5119, 16
    %v5344 = vshra.s32 %v5120, 16
    %v5345 = vshra.s32 %v5121, 16
    %v5346 = vshra.s32 %v5122, 16
    %v5347 = vshra.s32 %v5123, 16
    %v5348 = vshra.s32 %v5124, 16
    %v5349 = vshra.s32 %v5125, 16
    %v5350 = vshra.s32 %v5126, 16
    %v5351 = vshra.s32 %v5127, 16
    %v5352 = vshra.s32 %v5128, 16
    %v5353 = vshra.s32 %v5129, 16
    %v5354 = vshra.s32 %v5130, 16
    %v5355 = vshra.s32 %v5131, 16
    %v5356 = vshra.s32 %v5132, 16
    %v5357 = vshra.s32 %v5133, 16
    %v5358 = vshra.s32 %v5134, 16
    %v5359 = vshra.s32 %v5135, 16
    %v5360 = vshra.s32 %v5136, 16
    %v5361 = vshra.s32 %v5137, 16
    %v5362 = vshra.s32 %v5138, 16
    %v5363 = vshra.s32 %v5139, 16
    %v5364 = vshra.s32 %v5140, 16
    %v5365 = vshra.s32 %v5141, 16
    %v5366 = vshra.s32 %v5142, 16
    %v5367 = vshra.s32 %v5143, 16
    %v5368 = vshra.s32 %v5144, 16
    %v5369 = vshra.s32 %v5145, 16
    %v5370 = vshra.s32 %v5146, 16
    %v5371 = vshra.s32 %v5147, 16
    %v5372 = vshra.s32 %v5148, 16
    %v5373 = vshra.s32 %v5149, 16
    %v5374 = vshra.s32 %v5150, 16
    %v5375 = vshra.s32 %v5151, 16
    %v5376 = vshra.s32 %v5152, 16
    %v5377 = vshra.s32 %v5153, 16
    %v5378 = vshra.s32 %v5154, 16
    %v5379 = vshra.s32 %v5155, 16
    %v5380 = vshra.s32 %v5156, 16
    %v5381 = vshra.s32 %v5157, 16
    %v5382 = vshra.s32 %v5158, 16
    %v5383 = vshra.s32 %v5159, 16
    %v5384 = vshra.s32 %v5160, 16
    %v5385 = vshra.s32 %v5161, 16
    %v5386 = vshra.s32 %v5162, 16
    %v5387 = vshra.s32 %v5163, 16
    %v5388 = vshra.s32 %v5164, 16
    %v5389 = vshra.s32 %v5165, 16
    %v5390 = vshra.s32 %v5166, 16
    %v5391 = vshra.s32 %v5167, 16
    %v5392 = vshra.s32 %v5168, 16
    %v5393 = vshra.s32 %v5169, 16
    %v5394 = vshra.s32 %v5170, 16
    %v5395 = vshra.s32 %v5171, 16
    %v5396 = vshra.s32 %v5172, 16
    %v5397 = vshra.s32 %v5173, 16
    %v5398 = vshra.s32 %v5174, 16
    %v5399 = vshra.s32 %v5175, 16
    %v5400 = vshra.s32 %v5176, 16
    %v5401 = vshra.s32 %v5177, 16
    %v5402 = vshra.s32 %v5178, 16
    %v5403 = vshra.s32 %v5179, 16
    %v5404 = vshra.s32 %v5180, 16
    %v5405 = vshra.s32 %v5181, 16
    %v5406 = vshra.s32 %v5182, 16
    %v5407 = vshra.s32 %v5183, 16
    %v5408 = vshra.s32 %v5184, 16
    %v5409 = vshra.s32 %v5185, 16
    %v5410 = vshra.s32 %v5186, 16
    %v5411 = vshra.s32 %v5187, 16
    %v5412 = vshra.s32 %v5188, 16
    %v5413 = vshra.s32 %v5189, 16
    %v5414 = vshra.s32 %v5190, 16
    %v5415 = vshra.s32 %v5191, 16
    %v5416 = vshra.s32 %v5192, 16
    %v5417 = vshra.s32 %v5193, 16
    %v5418 = vshra.s32 %v5194, 16
    %v5419 = vshra.s32 %v5195, 16
    %v5420 = vshra.s32 %v5196, 16
    %v5421 = vshra.s32 %v5197, 16
    %v5422 = vshra.s32 %v5198, 16
    %v5423 = vshra.s32 %v5199, 16
    %v5424 = vshra.s32 %v5200, 16
    %v5425 = vshra.s32 %v5201, 16
    %v5426 = vshra.s32 %v5202, 16
    %v5427 = vshra.s32 %v5203, 16
    %v5428 = vshra.s32 %v5204, 16
    %v5429 = vshra.s32 %v5205, 16
    %v5430 = vshra.s32 %v5206, 16
    %v5431 = vshra.s32 %v5207, 16
    %v5432 = vshra.s32 %v5208, 16
    %v5433 = vshra.s32 %v5209, 16
    %v5434 = vshra.s32 %v5210, 16
    %v5435 = vshra.s32 %v5211, 16
    %v5436 = vshra.s32 %v5212, 16
    %v5437 = vshra.s32 %v5213, 16
    %v5438 = vshra.s32 %v5214, 16
    %v5439 = vshra.s32 %v5215, 16
    %v5440 = vshra.s32 %v5216, 16
    %v5441 = vshra.s32 %v5217, 16
    %v5442 = vshra.s32 %v5218, 16
    %v5443 = vshra.s32 %v5219, 16
    %v5444 = vshra.s32 %v5220, 16
    %v5445 = vshra.s32 %v5221, 16
    %v5446 = vshra.s32 %v5222, 16
    %v5447 = vshra.s32 %v5223, 16
    %v5448 = vshra.s32 %v5224, 16
    %v5449 = vshra.s32 %v5225, 16
    %v5450 = vshra.s32 %v5226, 16
    %v5451 = vshra.s32 %v5227, 16
    %v5452 = vxor.u32 %v4780, %v5228
    %v5453 = vxor.u32 %v4781, %v5229
    %v5454 = vxor.u32 %v4782, %v5230
    %v5455 = vxor.u32 %v4783, %v5231
    %v5456 = vxor.u32 %v4784, %v5232
    %v5457 = vxor.u32 %v4785, %v5233
    %v5458 = vxor.u32 %v4786, %v5234
    %v5459 = vxor.u32 %v4787, %v5235
    %v5460 = vxor.u32 %v4788, %v5236
    %v5461 = vxor.u32 %v4789, %v5237
    %v5462 = vxor.u32 %v4790, %v5238
    %v5463 = vxor.u32 %v4791, %v5239
    %v5464 = vxor.u32 %v4792, %v5240
    %v5465 = vxor.u32 %v4793, %v5241
    %v5466 = vxor.u32 %v4794, %v5242
    %v5467 = vxor.u32 %v4795, %v5243
    %v5468 = vxor.u32 %v4796, %v5244
    %v5469 = vxor.u32 %v4797, %v5245
    %v5470 = vxor.u32 %v4798, %v5246
    %v5471 = vxor.u32 %v4799, %v5247
    %v5472 = vxor.u32 %v4800, %v5248
    %v5473 = vxor.u32 %v4801, %v5249
    %v5474 = vxor.u32 %v4802, %v5250
    %v5475 = vxor.u32 %v4803, %v5251
    %v5476 = vxor.u32 %v4804, %v5252
    %v5477 = vxor.u32 %v4805, %v5253
    %v5478 = vxor.u32 %v4806, %v5254
    %v5479 = vxor.u32 %v4807, %v5255
    %v5480 = vxor.u32 %v4808, %v5256
    %v5481 = vxor.u32 %v4809, %v5257
    %v5482 = vxor.u32 %v4810, %v5258
    %v5483 = vxor.u32 %v4811, %v5259
    %v5484 = vxor.u32 %v4812, %v5260
    %v5485 = vxor.u32 %v4813, %v5261
    %v5486 = vxor.u32 %v4814, %v5262
    %v5487 = vxor.u32 %v4815, %v5263
    %v5488 = vxor.u32 %v4816, %v5264
    %v5489 = vxor.u32 %v4817, %v5265
    %v5490 = vxor.u32 %v4818, %v5266
    %v5491 = vxor.u32 %v4819, %v5267
    %v5492 = vxor.u32 %v4820, %v5268
    %v5493 = vxor.u32 %v4821, %v5269
    %v5494 = vxor.u32 %v4822, %v5270
    %v5495 = vxor.u32 %v4823, %v5271
    %v5496 = vxor.u32 %v4824, %v5272
    %v5497 = vxor.u32 %v4825, %v5273
    %v5498 = vxor.u32 %v4826, %v5274
    %v5499 = vxor.u32 %v4827, %v5275
    %v5500 = vxor.u32 %v4828, %v5276
    %v5501 = vxor.u32 %v4829, %v5277
    %v5502 = vxor.u32 %v4830, %v5278
    %v5503 = vxor.u32 %v4831, %v5279
    %v5504 = vxor.u32 %v4832, %v5280
    %v5505 = vxor.u32 %v4833, %v5281
    %v5506 = vxor.u32 %v4834, %v5282
    %v5507 = vxor.u32 %v4835, %v5283
    %v5508 = vxor.u32 %v4836, %v5284
    %v5509 = vxor.u32 %v4837, %v5285
    %v5510 = vxor.u32 %v4838, %v5286
    %v5511 = vxor.u32 %v4839, %v5287
    %v5512 = vxor.u32 %v4840, %v5288
    %v5513 = vxor.u32 %v4841, %v5289
    %v5514 = vxor.u32 %v4842, %v5290
    %v5515 = vxor.u32 %v4843, %v5291
    %v5516 = vxor.u32 %v4844, %v5292
    %v5517 = vxor.u32 %v4845, %v5293
    %v5518 = vxor.u32 %v4846, %v5294
    %v5519 = vxor.u32 %v4847, %v5295
    %v5520 = vxor.u32 %v4848, %v5296
    %v5521 = vxor.u32 %v4849, %v5297
    %v5522 = vxor.u32 %v4850, %v5298
    %v5523 = vxor.u32 %v4851, %v5299
    %v5524 = vxor.u32 %v4852, %v5300
    %v5525 = vxor.u32 %v4853, %v5301
    %v5526 = vxor.u32 %v4854, %v5302
    %v5527 = vxor.u32 %v4855, %v5303
    %v5528 = vxor.u32 %v4856, %v5304
    %v5529 = vxor.u32 %v4857, %v5305
    %v5530 = vxor.u32 %v4858, %v5306
    %v5531 = vxor.u32 %v4859, %v5307
    %v5532 = vxor.u32 %v4860, %v5308
    %v5533 = vxor.u32 %v4861, %v5309
    %v5534 = vxor.u32 %v4862, %v5310
    %v5535 = vxor.u32 %v4863, %v5311
    %v5536 = vxor.u32 %v4864, %v5312
    %v5537 = vxor.u32 %v4865, %v5313
    %v5538 = vxor.u32 %v4866, %v5314
    %v5539 = vxor.u32 %v4867, %v5315
    %v5540 = vxor.u32 %v4868, %v5316
    %v5541 = vxor.u32 %v4869, %v5317
    %v5542 = vxor.u32 %v4870, %v5318
    %v5543 = vxor.u32 %v4871, %v5319
    %v5544 = vxor.u32 %v4872, %v5320
    %v5545 = vxor.u32 %v4873, %v5321
    %v5546 = vxor.u32 %v4874, %v5322
    %v5547 = vxor.u32 %v4875, %v5323
    %v5548 = vxor.u32 %v4876, %v5324
    %v5549 = vxor.u32 %v4877, %v5325
    %v5550 = vxor.u32 %v4878, %v5326
    %v5551 = vxor.u32 %v4879, %v5327
    %v5552 = vxor.u32 %v4880, %v5328
    %v5553 = vxor.u32 %v4881, %v5329
    %v5554 = vxor.u32 %v4882, %v5330
    %v5555 = vxor.u32 %v4883, %v5331
    %v5556 = vxor.u32 %v4884, %v5332
    %v5557 = vxor.u32 %v4885, %v5333
    %v5558 = vxor.u32 %v4886, %v5334
    %v5559 = vxor.u32 %v4887, %v5335
    %v5560 = vxor.u32 %v4888, %v5336
    %v5561 = vxor.u32 %v4889, %v5337
    %v5562 = vxor.u32 %v4890, %v5338
    %v5563 = vxor.u32 %v4891, %v5339
    %v5564 = vxor.u32 %v4892, %v5340
    %v5565 = vxor.u32 %v4893, %v5341
    %v5566 = vxor.u32 %v4894, %v5342
    %v5567 = vxor.u32 %v4895, %v5343
    %v5568 = vxor.u32 %v4896, %v5344
    %v5569 = vxor.u32 %v4897, %v5345
    %v5570 = vxor.u32 %v4898, %v5346
    %v5571 = vxor.u32 %v4899, %v5347
    %v5572 = vxor.u32 %v4900, %v5348
    %v5573 = vxor.u32 %v4901, %v5349
    %v5574 = vxor.u32 %v4902, %v5350
    %v5575 = vxor.u32 %v4903, %v5351
    %v5576 = vxor.u32 %v4904, %v5352
    %v5577 = vxor.u32 %v4905, %v5353
    %v5578 = vxor.u32 %v4906, %v5354
    %v5579 = vxor.u32 %v4907, %v5355
    %v5580 = vxor.u32 %v4908, %v5356
    %v5581 = vxor.u32 %v4909, %v5357
    %v5582 = vxor.u32 %v4910, %v5358
    %v5583 = vxor.u32 %v4911, %v5359
    %v5584 = vxor.u32 %v4912, %v5360
    %v5585 = vxor.u32 %v4913, %v5361
    %v5586 = vxor.u32 %v4914, %v5362
    %v5587 = vxor.u32 %v4915, %v5363
    %v5588 = vxor.u32 %v4916, %v5364
    %v5589 = vxor.u32 %v4917, %v5365
    %v5590 = vxor.u32 %v4918, %v5366
    %v5591 = vxor.u32 %v4919, %v5367
    %v5592 = vxor.u32 %v4920, %v5368
    %v5593 = vxor.u32 %v4921, %v5369
    %v5594 = vxor.u32 %v4922, %v5370
    %v5595 = vxor.u32 %v4923, %v5371
    %v5596 = vxor.u32 %v4924, %v5372
    %v5597 = vxor.u32 %v4925, %v5373
    %v5598 = vxor.u32 %v4926, %v5374
    %v5599 = vxor.u32 %v4927, %v5375
    %v5600 = vxor.u32 %v4928, %v5376
    %v5601 = vxor.u32 %v4929, %v5377
    %v5602 = vxor.u32 %v4930, %v5378
    %v5603 = vxor.u32 %v4931, %v5379
    %v5604 = vxor.u32 %v4932, %v5380
    %v5605 = vxor.u32 %v4933, %v5381
    %v5606 = vxor.u32 %v4934, %v5382
    %v5607 = vxor.u32 %v4935, %v5383
    %v5608 = vxor.u32 %v4936, %v5384
    %v5609 = vxor.u32 %v4937, %v5385
    %v5610 = vxor.u32 %v4938, %v5386
    %v5611 = vxor.u32 %v4939, %v5387
    %v5612 = vxor.u32 %v4940, %v5388
    %v5613 = vxor.u32 %v4941, %v5389
    %v5614 = vxor.u32 %v4942, %v5390
    %v5615 = vxor.u32 %v4943, %v5391
    %v5616 = vxor.u32 %v4944, %v5392
    %v5617 = vxor.u32 %v4945, %v5393
    %v5618 = vxor.u32 %v4946, %v5394
    %v5619 = vxor.u32 %v4947, %v5395
    %v5620 = vxor.u32 %v4948, %v5396
    %v5621 = vxor.u32 %v4949, %v5397
    %v5622 = vxor.u32 %v4950, %v5398
    %v5623 = vxor.u32 %v4951, %v5399
    %v5624 = vxor.u32 %v4952, %v5400
    %v5625 = vxor.u32 %v4953, %v5401
    %v5626 = vxor.u32 %v4954, %v5402
    %v5627 = vxor.u32 %v4955, %v5403
    %v5628 = vxor.u32 %v4956, %v5404
    %v5629 = vxor.u32 %v4957, %v5405
    %v5630 = vxor.u32 %v4958, %v5406
    %v5631 = vxor.u32 %v4959, %v5407
    %v5632 = vxor.u32 %v4960, %v5408
    %v5633 = vxor.u32 %v4961, %v5409
    %v5634 = vxor.u32 %v4962, %v5410
    %v5635 = vxor.u32 %v4963, %v5411
    %v5636 = vxor.u32 %v4964, %v5412
    %v5637 = vxor.u32 %v4965, %v5413
    %v5638 = vxor.u32 %v4966, %v5414
    %v5639 = vxor.u32 %v4967, %v5415
    %v5640 = vxor.u32 %v4968, %v5416
    %v5641 = vxor.u32 %v4969, %v5417
    %v5642 = vxor.u32 %v4970, %v5418
    %v5643 = vxor.u32 %v4971, %v5419
    %v5644 = vxor.u32 %v4972, %v5420
    %v5645 = vxor.u32 %v4973, %v5421
    %v5646 = vxor.u32 %v4974, %v5422
    %v5647 = vxor.u32 %v4975, %v5423
    %v5648 = vxor.u32 %v4976, %v5424
    %v5649 = vxor.u32 %v4977, %v5425
    %v5650 = vxor.u32 %v4978, %v5426
    %v5651 = vxor.u32 %v4979, %v5427
    %v5652 = vxor.u32 %v4980, %v5428
    %v5653 = vxor.u32 %v4981, %v5429
    %v5654 = vxor.u32 %v4982, %v5430
    %v5655 = vxor.u32 %v4983, %v5431
    %v5656 = vxor.u32 %v4984, %v5432
    %v5657 = vxor.u32 %v4985, %v5433
    %v5658 = vxor.u32 %v4986, %v5434
    %v5659 = vxor.u32 %v4987, %v5435
    %v5660 = vxor.u32 %v4988, %v5436
    %v5661 = vxor.u32 %v4989, %v5437
    %v5662 = vxor.u32 %v4990, %v5438
    %v5663 = vxor.u32 %v4991, %v5439
    %v5664 = vxor.u32 %v4992, %v5440
    %v5665 = vxor.u32 %v4993, %v5441
    %v5666 = vxor.u32 %v4994, %v5442
    %v5667 = vxor.u32 %v4995, %v5443
    %v5668 = vxor.u32 %v4996, %v5444
    %v5669 = vxor.u32 %v4997, %v5445
    %v5670 = vxor.u32 %v4998, %v5446
    %v5671 = vxor.u32 %v4999, %v5447
    %v5672 = vxor.u32 %v5000, %v5448
    %v5673 = vxor.u32 %v5001, %v5449
    %v5674 = vxor.u32 %v5002, %v5450
    %v5675 = vxor.u32 %v5003, %v5451
    %v5676 = vand.u32 %v5452, 8388607
    %v5677 = vand.u32 %v5453, 8388607
    %v5678 = vand.u32 %v5454, 8388607
    %v5679 = vand.u32 %v5455, 8388607
    %v5680 = vand.u32 %v5456, 8388607
    %v5681 = vand.u32 %v5457, 8388607
    %v5682 = vand.u32 %v5458, 8388607
    %v5683 = vand.u32 %v5459, 8388607
    %v5684 = vand.u32 %v5460, 8388607
    %v5685 = vand.u32 %v5461, 8388607
    %v5686 = vand.u32 %v5462, 8388607
    %v5687 = vand.u32 %v5463, 8388607
    %v5688 = vand.u32 %v5464, 8388607
    %v5689 = vand.u32 %v5465, 8388607
    %v5690 = vand.u32 %v5466, 8388607
    %v5691 = vand.u32 %v5467, 8388607
    %v5692 = vand.u32 %v5468, 8388607
    %v5693 = vand.u32 %v5469, 8388607
    %v5694 = vand.u32 %v5470, 8388607
    %v5695 = vand.u32 %v5471, 8388607
    %v5696 = vand.u32 %v5472, 8388607
    %v5697 = vand.u32 %v5473, 8388607
    %v5698 = vand.u32 %v5474, 8388607
    %v5699 = vand.u32 %v5475, 8388607
    %v5700 = vand.u32 %v5476, 8388607
    %v5701 = vand.u32 %v5477, 8388607
    %v5702 = vand.u32 %v5478, 8388607
    %v5703 = vand.u32 %v5479, 8388607
    %v5704 = vand.u32 %v5480, 8388607
    %v5705 = vand.u32 %v5481, 8388607
    %v5706 = vand.u32 %v5482, 8388607
    %v5707 = vand.u32 %v5483, 8388607
    %v5708 = vand.u32 %v5484, 8388607
    %v5709 = vand.u32 %v5485, 8388607
    %v5710 = vand.u32 %v5486, 8388607
    %v5711 = vand.u32 %v5487, 8388607
    %v5712 = vand.u32 %v5488, 8388607
    %v5713 = vand.u32 %v5489, 8388607
    %v5714 = vand.u32 %v5490, 8388607
    %v5715 = vand.u32 %v5491, 8388607
    %v5716 = vand.u32 %v5492, 8388607
    %v5717 = vand.u32 %v5493, 8388607
    %v5718 = vand.u32 %v5494, 8388607
    %v5719 = vand.u32 %v5495, 8388607
    %v5720 = vand.u32 %v5496, 8388607
    %v5721 = vand.u32 %v5497, 8388607
    %v5722 = vand.u32 %v5498, 8388607
    %v5723 = vand.u32 %v5499, 8388607
    %v5724 = vand.u32 %v5500, 8388607
    %v5725 = vand.u32 %v5501, 8388607
    %v5726 = vand.u32 %v5502, 8388607
    %v5727 = vand.u32 %v5503, 8388607
    %v5728 = vand.u32 %v5504, 8388607
    %v5729 = vand.u32 %v5505, 8388607
    %v5730 = vand.u32 %v5506, 8388607
    %v5731 = vand.u32 %v5507, 8388607
    %v5732 = vand.u32 %v5508, 8388607
    %v5733 = vand.u32 %v5509, 8388607
    %v5734 = vand.u32 %v5510, 8388607
    %v5735 = vand.u32 %v5511, 8388607
    %v5736 = vand.u32 %v5512, 8388607
    %v5737 = vand.u32 %v5513, 8388607
    %v5738 = vand.u32 %v5514, 8388607
    %v5739 = vand.u32 %v5515, 8388607
    %v5740 = vand.u32 %v5516, 8388607
    %v5741 = vand.u32 %v5517, 8388607
    %v5742 = vand.u32 %v5518, 8388607
    %v5743 = vand.u32 %v5519, 8388607
    %v5744 = vand.u32 %v5520, 8388607
    %v5745 = vand.u32 %v5521, 8388607
    %v5746 = vand.u32 %v5522, 8388607
    %v5747 = vand.u32 %v5523, 8388607
    %v5748 = vand.u32 %v5524, 8388607
    %v5749 = vand.u32 %v5525, 8388607
    %v5750 = vand.u32 %v5526, 8388607
    %v5751 = vand.u32 %v5527, 8388607
    %v5752 = vand.u32 %v5528, 8388607
    %v5753 = vand.u32 %v5529, 8388607
    %v5754 = vand.u32 %v5530, 8388607
    %v5755 = vand.u32 %v5531, 8388607
    %v5756 = vand.u32 %v5532, 8388607
    %v5757 = vand.u32 %v5533, 8388607
    %v5758 = vand.u32 %v5534, 8388607
    %v5759 = vand.u32 %v5535, 8388607
    %v5760 = vand.u32 %v5536, 8388607
    %v5761 = vand.u32 %v5537, 8388607
    %v5762 = vand.u32 %v5538, 8388607
    %v5763 = vand.u32 %v5539, 8388607
    %v5764 = vand.u32 %v5540, 8388607
    %v5765 = vand.u32 %v5541, 8388607
    %v5766 = vand.u32 %v5542, 8388607
    %v5767 = vand.u32 %v5543, 8388607
    %v5768 = vand.u32 %v5544, 8388607
    %v5769 = vand.u32 %v5545, 8388607
    %v5770 = vand.u32 %v5546, 8388607
    %v5771 = vand.u32 %v5547, 8388607
    %v5772 = vand.u32 %v5548, 8388607
    %v5773 = vand.u32 %v5549, 8388607
    %v5774 = vand.u32 %v5550, 8388607
    %v5775 = vand.u32 %v5551, 8388607
    %v5776 = vand.u32 %v5552, 8388607
    %v5777 = vand.u32 %v5553, 8388607
    %v5778 = vand.u32 %v5554, 8388607
    %v5779 = vand.u32 %v5555, 8388607
    %v5780 = vand.u32 %v5556, 8388607
    %v5781 = vand.u32 %v5557, 8388607
    %v5782 = vand.u32 %v5558, 8388607
    %v5783 = vand.u32 %v5559, 8388607
    %v5784 = vand.u32 %v5560, 8388607
    %v5785 = vand.u32 %v5561, 8388607
    %v5786 = vand.u32 %v5562, 8388607
    %v5787 = vand.u32 %v5563, 8388607
    %v5788 = vand.u32 %v5564, 8388607
    %v5789 = vand.u32 %v5565, 8388607
    %v5790 = vand.u32 %v5566, 8388607
    %v5791 = vand.u32 %v5567, 8388607
    %v5792 = vand.u32 %v5568, 8388607
    %v5793 = vand.u32 %v5569, 8388607
    %v5794 = vand.u32 %v5570, 8388607
    %v5795 = vand.u32 %v5571, 8388607
    %v5796 = vand.u32 %v5572, 8388607
    %v5797 = vand.u32 %v5573, 8388607
    %v5798 = vand.u32 %v5574, 8388607
    %v5799 = vand.u32 %v5575, 8388607
    %v5800 = vand.u32 %v5576, 8388607
    %v5801 = vand.u32 %v5577, 8388607
    %v5802 = vand.u32 %v5578, 8388607
    %v5803 = vand.u32 %v5579, 8388607
    %v5804 = vand.u32 %v5580, 8388607
    %v5805 = vand.u32 %v5581, 8388607
    %v5806 = vand.u32 %v5582, 8388607
    %v5807 = vand.u32 %v5583, 8388607
    %v5808 = vand.u32 %v5584, 8388607
    %v5809 = vand.u32 %v5585, 8388607
    %v5810 = vand.u32 %v5586, 8388607
    %v5811 = vand.u32 %v5587, 8388607
    %v5812 = vand.u32 %v5588, 8388607
    %v5813 = vand.u32 %v5589, 8388607
    %v5814 = vand.u32 %v5590, 8388607
    %v5815 = vand.u32 %v5591, 8388607
    %v5816 = vand.u32 %v5592, 8388607
    %v5817 = vand.u32 %v5593, 8388607
    %v5818 = vand.u32 %v5594, 8388607
    %v5819 = vand.u32 %v5595, 8388607
    %v5820 = vand.u32 %v5596, 8388607
    %v5821 = vand.u32 %v5597, 8388607
    %v5822 = vand.u32 %v5598, 8388607
    %v5823 = vand.u32 %v5599, 8388607
    %v5824 = vand.u32 %v5600, 8388607
    %v5825 = vand.u32 %v5601, 8388607
    %v5826 = vand.u32 %v5602, 8388607
    %v5827 = vand.u32 %v5603, 8388607
    %v5828 = vand.u32 %v5604, 8388607
    %v5829 = vand.u32 %v5605, 8388607
    %v5830 = vand.u32 %v5606, 8388607
    %v5831 = vand.u32 %v5607, 8388607
    %v5832 = vand.u32 %v5608, 8388607
    %v5833 = vand.u32 %v5609, 8388607
    %v5834 = vand.u32 %v5610, 8388607
    %v5835 = vand.u32 %v5611, 8388607
    %v5836 = vand.u32 %v5612, 8388607
    %v5837 = vand.u32 %v5613, 8388607
    %v5838 = vand.u32 %v5614, 8388607
    %v5839 = vand.u32 %v5615, 8388607
    %v5840 = vand.u32 %v5616, 8388607
    %v5841 = vand.u32 %v5617, 8388607
    %v5842 = vand.u32 %v5618, 8388607
    %v5843 = vand.u32 %v5619, 8388607
    %v5844 = vand.u32 %v5620, 8388607
    %v5845 = vand.u32 %v5621, 8388607
    %v5846 = vand.u32 %v5622, 8388607
    %v5847 = vand.u32 %v5623, 8388607
    %v5848 = vand.u32 %v5624, 8388607
    %v5849 = vand.u32 %v5625, 8388607
    %v5850 = vand.u32 %v5626, 8388607
    %v5851 = vand.u32 %v5627, 8388607
    %v5852 = vand.u32 %v5628, 8388607
    %v5853 = vand.u32 %v5629, 8388607
    %v5854 = vand.u32 %v5630, 8388607
    %v5855 = vand.u32 %v5631, 8388607
    %v5856 = vand.u32 %v5632, 8388607
    %v5857 = vand.u32 %v5633, 8388607
    %v5858 = vand.u32 %v5634, 8388607
    %v5859 = vand.u32 %v5635, 8388607
    %v5860 = vand.u32 %v5636, 8388607
    %v5861 = vand.u32 %v5637, 8388607
    %v5862 = vand.u32 %v5638, 8388607
    %v5863 = vand.u32 %v5639, 8388607
    %v5864 = vand.u32 %v5640, 8388607
    %v5865 = vand.u32 %v5641, 8388607
    %v5866 = vand.u32 %v5642, 8388607
    %v5867 = vand.u32 %v5643, 8388607
    %v5868 = vand.u32 %v5644, 8388607
    %v5869 = vand.u32 %v5645, 8388607
    %v5870 = vand.u32 %v5646, 8388607
    %v5871 = vand.u32 %v5647, 8388607
    %v5872 = vand.u32 %v5648, 8388607
    %v5873 = vand.u32 %v5649, 8388607
    %v5874 = vand.u32 %v5650, 8388607
    %v5875 = vand.u32 %v5651, 8388607
    %v5876 = vand.u32 %v5652, 8388607
    %v5877 = vand.u32 %v5653, 8388607
    %v5878 = vand.u32 %v5654, 8388607
    %v5879 = vand.u32 %v5655, 8388607
    %v5880 = vand.u32 %v5656, 8388607
    %v5881 = vand.u32 %v5657, 8388607
    %v5882 = vand.u32 %v5658, 8388607
    %v5883 = vand.u32 %v5659, 8388607
    %v5884 = vand.u32 %v5660, 8388607
    %v5885 = vand.u32 %v5661, 8388607
    %v5886 = vand.u32 %v5662, 8388607
    %v5887 = vand.u32 %v5663, 8388607
    %v5888 = vand.u32 %v5664, 8388607
    %v5889 = vand.u32 %v5665, 8388607
    %v5890 = vand.u32 %v5666, 8388607
    %v5891 = vand.u32 %v5667, 8388607
    %v5892 = vand.u32 %v5668, 8388607
    %v5893 = vand.u32 %v5669, 8388607
    %v5894 = vand.u32 %v5670, 8388607
    %v5895 = vand.u32 %v5671, 8388607
    %v5896 = vand.u32 %v5672, 8388607
    %v5897 = vand.u32 %v5673, 8388607
    %v5898 = vand.u32 %v5674, 8388607
    %v5899 = vand.u32 %v5675, 8388607
    %vm5900 = vcmp.ge.s32.totalorder %v5676, 3355443
    %vm5901 = vcmp.ge.s32.totalorder %v5677, 3355443
    %vm5902 = vcmp.ge.s32.totalorder %v5678, 3355443
    %vm5903 = vcmp.ge.s32.totalorder %v5679, 3355443
    %vm5904 = vcmp.ge.s32.totalorder %v5680, 3355443
    %vm5905 = vcmp.ge.s32.totalorder %v5681, 3355443
    %vm5906 = vcmp.ge.s32.totalorder %v5682, 3355443
    %vm5907 = vcmp.ge.s32.totalorder %v5683, 3355443
    %vm5908 = vcmp.ge.s32.totalorder %v5684, 3355443
    %vm5909 = vcmp.ge.s32.totalorder %v5685, 3355443
    %vm5910 = vcmp.ge.s32.totalorder %v5686, 3355443
    %vm5911 = vcmp.ge.s32.totalorder %v5687, 3355443
    %vm5912 = vcmp.ge.s32.totalorder %v5688, 3355443
    %vm5913 = vcmp.ge.s32.totalorder %v5689, 3355443
    %vm5914 = vcmp.ge.s32.totalorder %v5690, 3355443
    %vm5915 = vcmp.ge.s32.totalorder %v5691, 3355443
    %vm5916 = vcmp.ge.s32.totalorder %v5692, 3355443
    %vm5917 = vcmp.ge.s32.totalorder %v5693, 3355443
    %vm5918 = vcmp.ge.s32.totalorder %v5694, 3355443
    %vm5919 = vcmp.ge.s32.totalorder %v5695, 3355443
    %vm5920 = vcmp.ge.s32.totalorder %v5696, 3355443
    %vm5921 = vcmp.ge.s32.totalorder %v5697, 3355443
    %vm5922 = vcmp.ge.s32.totalorder %v5698, 3355443
    %vm5923 = vcmp.ge.s32.totalorder %v5699, 3355443
    %vm5924 = vcmp.ge.s32.totalorder %v5700, 3355443
    %vm5925 = vcmp.ge.s32.totalorder %v5701, 3355443
    %vm5926 = vcmp.ge.s32.totalorder %v5702, 3355443
    %vm5927 = vcmp.ge.s32.totalorder %v5703, 3355443
    %vm5928 = vcmp.ge.s32.totalorder %v5704, 3355443
    %vm5929 = vcmp.ge.s32.totalorder %v5705, 3355443
    %vm5930 = vcmp.ge.s32.totalorder %v5706, 3355443
    %vm5931 = vcmp.ge.s32.totalorder %v5707, 3355443
    %vm5932 = vcmp.ge.s32.totalorder %v5708, 3355443
    %vm5933 = vcmp.ge.s32.totalorder %v5709, 3355443
    %vm5934 = vcmp.ge.s32.totalorder %v5710, 3355443
    %vm5935 = vcmp.ge.s32.totalorder %v5711, 3355443
    %vm5936 = vcmp.ge.s32.totalorder %v5712, 3355443
    %vm5937 = vcmp.ge.s32.totalorder %v5713, 3355443
    %vm5938 = vcmp.ge.s32.totalorder %v5714, 3355443
    %vm5939 = vcmp.ge.s32.totalorder %v5715, 3355443
    %vm5940 = vcmp.ge.s32.totalorder %v5716, 3355443
    %vm5941 = vcmp.ge.s32.totalorder %v5717, 3355443
    %vm5942 = vcmp.ge.s32.totalorder %v5718, 3355443
    %vm5943 = vcmp.ge.s32.totalorder %v5719, 3355443
    %vm5944 = vcmp.ge.s32.totalorder %v5720, 3355443
    %vm5945 = vcmp.ge.s32.totalorder %v5721, 3355443
    %vm5946 = vcmp.ge.s32.totalorder %v5722, 3355443
    %vm5947 = vcmp.ge.s32.totalorder %v5723, 3355443
    %vm5948 = vcmp.ge.s32.totalorder %v5724, 3355443
    %vm5949 = vcmp.ge.s32.totalorder %v5725, 3355443
    %vm5950 = vcmp.ge.s32.totalorder %v5726, 3355443
    %vm5951 = vcmp.ge.s32.totalorder %v5727, 3355443
    %vm5952 = vcmp.ge.s32.totalorder %v5728, 3355443
    %vm5953 = vcmp.ge.s32.totalorder %v5729, 3355443
    %vm5954 = vcmp.ge.s32.totalorder %v5730, 3355443
    %vm5955 = vcmp.ge.s32.totalorder %v5731, 3355443
    %vm5956 = vcmp.ge.s32.totalorder %v5732, 3355443
    %vm5957 = vcmp.ge.s32.totalorder %v5733, 3355443
    %vm5958 = vcmp.ge.s32.totalorder %v5734, 3355443
    %vm5959 = vcmp.ge.s32.totalorder %v5735, 3355443
    %vm5960 = vcmp.ge.s32.totalorder %v5736, 3355443
    %vm5961 = vcmp.ge.s32.totalorder %v5737, 3355443
    %vm5962 = vcmp.ge.s32.totalorder %v5738, 3355443
    %vm5963 = vcmp.ge.s32.totalorder %v5739, 3355443
    %vm5964 = vcmp.ge.s32.totalorder %v5740, 3355443
    %vm5965 = vcmp.ge.s32.totalorder %v5741, 3355443
    %vm5966 = vcmp.ge.s32.totalorder %v5742, 3355443
    %vm5967 = vcmp.ge.s32.totalorder %v5743, 3355443
    %vm5968 = vcmp.ge.s32.totalorder %v5744, 3355443
    %vm5969 = vcmp.ge.s32.totalorder %v5745, 3355443
    %vm5970 = vcmp.ge.s32.totalorder %v5746, 3355443
    %vm5971 = vcmp.ge.s32.totalorder %v5747, 3355443
    %vm5972 = vcmp.ge.s32.totalorder %v5748, 3355443
    %vm5973 = vcmp.ge.s32.totalorder %v5749, 3355443
    %vm5974 = vcmp.ge.s32.totalorder %v5750, 3355443
    %vm5975 = vcmp.ge.s32.totalorder %v5751, 3355443
    %vm5976 = vcmp.ge.s32.totalorder %v5752, 3355443
    %vm5977 = vcmp.ge.s32.totalorder %v5753, 3355443
    %vm5978 = vcmp.ge.s32.totalorder %v5754, 3355443
    %vm5979 = vcmp.ge.s32.totalorder %v5755, 3355443
    %vm5980 = vcmp.ge.s32.totalorder %v5756, 3355443
    %vm5981 = vcmp.ge.s32.totalorder %v5757, 3355443
    %vm5982 = vcmp.ge.s32.totalorder %v5758, 3355443
    %vm5983 = vcmp.ge.s32.totalorder %v5759, 3355443
    %vm5984 = vcmp.ge.s32.totalorder %v5760, 3355443
    %vm5985 = vcmp.ge.s32.totalorder %v5761, 3355443
    %vm5986 = vcmp.ge.s32.totalorder %v5762, 3355443
    %vm5987 = vcmp.ge.s32.totalorder %v5763, 3355443
    %vm5988 = vcmp.ge.s32.totalorder %v5764, 3355443
    %vm5989 = vcmp.ge.s32.totalorder %v5765, 3355443
    %vm5990 = vcmp.ge.s32.totalorder %v5766, 3355443
    %vm5991 = vcmp.ge.s32.totalorder %v5767, 3355443
    %vm5992 = vcmp.ge.s32.totalorder %v5768, 3355443
    %vm5993 = vcmp.ge.s32.totalorder %v5769, 3355443
    %vm5994 = vcmp.ge.s32.totalorder %v5770, 3355443
    %vm5995 = vcmp.ge.s32.totalorder %v5771, 3355443
    %vm5996 = vcmp.ge.s32.totalorder %v5772, 3355443
    %vm5997 = vcmp.ge.s32.totalorder %v5773, 3355443
    %vm5998 = vcmp.ge.s32.totalorder %v5774, 3355443
    %vm5999 = vcmp.ge.s32.totalorder %v5775, 3355443
    %vm6000 = vcmp.ge.s32.totalorder %v5776, 3355443
    %vm6001 = vcmp.ge.s32.totalorder %v5777, 3355443
    %vm6002 = vcmp.ge.s32.totalorder %v5778, 3355443
    %vm6003 = vcmp.ge.s32.totalorder %v5779, 3355443
    %vm6004 = vcmp.ge.s32.totalorder %v5780, 3355443
    %vm6005 = vcmp.ge.s32.totalorder %v5781, 3355443
    %vm6006 = vcmp.ge.s32.totalorder %v5782, 3355443
    %vm6007 = vcmp.ge.s32.totalorder %v5783, 3355443
    %vm6008 = vcmp.ge.s32.totalorder %v5784, 3355443
    %vm6009 = vcmp.ge.s32.totalorder %v5785, 3355443
    %vm6010 = vcmp.ge.s32.totalorder %v5786, 3355443
    %vm6011 = vcmp.ge.s32.totalorder %v5787, 3355443
    %vm6012 = vcmp.ge.s32.totalorder %v5788, 3355443
    %vm6013 = vcmp.ge.s32.totalorder %v5789, 3355443
    %vm6014 = vcmp.ge.s32.totalorder %v5790, 3355443
    %vm6015 = vcmp.ge.s32.totalorder %v5791, 3355443
    %vm6016 = vcmp.ge.s32.totalorder %v5792, 3355443
    %vm6017 = vcmp.ge.s32.totalorder %v5793, 3355443
    %vm6018 = vcmp.ge.s32.totalorder %v5794, 3355443
    %vm6019 = vcmp.ge.s32.totalorder %v5795, 3355443
    %vm6020 = vcmp.ge.s32.totalorder %v5796, 3355443
    %vm6021 = vcmp.ge.s32.totalorder %v5797, 3355443
    %vm6022 = vcmp.ge.s32.totalorder %v5798, 3355443
    %vm6023 = vcmp.ge.s32.totalorder %v5799, 3355443
    %vm6024 = vcmp.ge.s32.totalorder %v5800, 3355443
    %vm6025 = vcmp.ge.s32.totalorder %v5801, 3355443
    %vm6026 = vcmp.ge.s32.totalorder %v5802, 3355443
    %vm6027 = vcmp.ge.s32.totalorder %v5803, 3355443
    %vm6028 = vcmp.ge.s32.totalorder %v5804, 3355443
    %vm6029 = vcmp.ge.s32.totalorder %v5805, 3355443
    %vm6030 = vcmp.ge.s32.totalorder %v5806, 3355443
    %vm6031 = vcmp.ge.s32.totalorder %v5807, 3355443
    %vm6032 = vcmp.ge.s32.totalorder %v5808, 3355443
    %vm6033 = vcmp.ge.s32.totalorder %v5809, 3355443
    %vm6034 = vcmp.ge.s32.totalorder %v5810, 3355443
    %vm6035 = vcmp.ge.s32.totalorder %v5811, 3355443
    %vm6036 = vcmp.ge.s32.totalorder %v5812, 3355443
    %vm6037 = vcmp.ge.s32.totalorder %v5813, 3355443
    %vm6038 = vcmp.ge.s32.totalorder %v5814, 3355443
    %vm6039 = vcmp.ge.s32.totalorder %v5815, 3355443
    %vm6040 = vcmp.ge.s32.totalorder %v5816, 3355443
    %vm6041 = vcmp.ge.s32.totalorder %v5817, 3355443
    %vm6042 = vcmp.ge.s32.totalorder %v5818, 3355443
    %vm6043 = vcmp.ge.s32.totalorder %v5819, 3355443
    %vm6044 = vcmp.ge.s32.totalorder %v5820, 3355443
    %vm6045 = vcmp.ge.s32.totalorder %v5821, 3355443
    %vm6046 = vcmp.ge.s32.totalorder %v5822, 3355443
    %vm6047 = vcmp.ge.s32.totalorder %v5823, 3355443
    %vm6048 = vcmp.ge.s32.totalorder %v5824, 3355443
    %vm6049 = vcmp.ge.s32.totalorder %v5825, 3355443
    %vm6050 = vcmp.ge.s32.totalorder %v5826, 3355443
    %vm6051 = vcmp.ge.s32.totalorder %v5827, 3355443
    %vm6052 = vcmp.ge.s32.totalorder %v5828, 3355443
    %vm6053 = vcmp.ge.s32.totalorder %v5829, 3355443
    %vm6054 = vcmp.ge.s32.totalorder %v5830, 3355443
    %vm6055 = vcmp.ge.s32.totalorder %v5831, 3355443
    %vm6056 = vcmp.ge.s32.totalorder %v5832, 3355443
    %vm6057 = vcmp.ge.s32.totalorder %v5833, 3355443
    %vm6058 = vcmp.ge.s32.totalorder %v5834, 3355443
    %vm6059 = vcmp.ge.s32.totalorder %v5835, 3355443
    %vm6060 = vcmp.ge.s32.totalorder %v5836, 3355443
    %vm6061 = vcmp.ge.s32.totalorder %v5837, 3355443
    %vm6062 = vcmp.ge.s32.totalorder %v5838, 3355443
    %vm6063 = vcmp.ge.s32.totalorder %v5839, 3355443
    %vm6064 = vcmp.ge.s32.totalorder %v5840, 3355443
    %vm6065 = vcmp.ge.s32.totalorder %v5841, 3355443
    %vm6066 = vcmp.ge.s32.totalorder %v5842, 3355443
    %vm6067 = vcmp.ge.s32.totalorder %v5843, 3355443
    %vm6068 = vcmp.ge.s32.totalorder %v5844, 3355443
    %vm6069 = vcmp.ge.s32.totalorder %v5845, 3355443
    %vm6070 = vcmp.ge.s32.totalorder %v5846, 3355443
    %vm6071 = vcmp.ge.s32.totalorder %v5847, 3355443
    %vm6072 = vcmp.ge.s32.totalorder %v5848, 3355443
    %vm6073 = vcmp.ge.s32.totalorder %v5849, 3355443
    %vm6074 = vcmp.ge.s32.totalorder %v5850, 3355443
    %vm6075 = vcmp.ge.s32.totalorder %v5851, 3355443
    %vm6076 = vcmp.ge.s32.totalorder %v5852, 3355443
    %vm6077 = vcmp.ge.s32.totalorder %v5853, 3355443
    %vm6078 = vcmp.ge.s32.totalorder %v5854, 3355443
    %vm6079 = vcmp.ge.s32.totalorder %v5855, 3355443
    %vm6080 = vcmp.ge.s32.totalorder %v5856, 3355443
    %vm6081 = vcmp.ge.s32.totalorder %v5857, 3355443
    %vm6082 = vcmp.ge.s32.totalorder %v5858, 3355443
    %vm6083 = vcmp.ge.s32.totalorder %v5859, 3355443
    %vm6084 = vcmp.ge.s32.totalorder %v5860, 3355443
    %vm6085 = vcmp.ge.s32.totalorder %v5861, 3355443
    %vm6086 = vcmp.ge.s32.totalorder %v5862, 3355443
    %vm6087 = vcmp.ge.s32.totalorder %v5863, 3355443
    %vm6088 = vcmp.ge.s32.totalorder %v5864, 3355443
    %vm6089 = vcmp.ge.s32.totalorder %v5865, 3355443
    %vm6090 = vcmp.ge.s32.totalorder %v5866, 3355443
    %vm6091 = vcmp.ge.s32.totalorder %v5867, 3355443
    %vm6092 = vcmp.ge.s32.totalorder %v5868, 3355443
    %vm6093 = vcmp.ge.s32.totalorder %v5869, 3355443
    %vm6094 = vcmp.ge.s32.totalorder %v5870, 3355443
    %vm6095 = vcmp.ge.s32.totalorder %v5871, 3355443
    %vm6096 = vcmp.ge.s32.totalorder %v5872, 3355443
    %vm6097 = vcmp.ge.s32.totalorder %v5873, 3355443
    %vm6098 = vcmp.ge.s32.totalorder %v5874, 3355443
    %vm6099 = vcmp.ge.s32.totalorder %v5875, 3355443
    %vm6100 = vcmp.ge.s32.totalorder %v5876, 3355443
    %vm6101 = vcmp.ge.s32.totalorder %v5877, 3355443
    %vm6102 = vcmp.ge.s32.totalorder %v5878, 3355443
    %vm6103 = vcmp.ge.s32.totalorder %v5879, 3355443
    %vm6104 = vcmp.ge.s32.totalorder %v5880, 3355443
    %vm6105 = vcmp.ge.s32.totalorder %v5881, 3355443
    %vm6106 = vcmp.ge.s32.totalorder %v5882, 3355443
    %vm6107 = vcmp.ge.s32.totalorder %v5883, 3355443
    %vm6108 = vcmp.ge.s32.totalorder %v5884, 3355443
    %vm6109 = vcmp.ge.s32.totalorder %v5885, 3355443
    %vm6110 = vcmp.ge.s32.totalorder %v5886, 3355443
    %vm6111 = vcmp.ge.s32.totalorder %v5887, 3355443
    %vm6112 = vcmp.ge.s32.totalorder %v5888, 3355443
    %vm6113 = vcmp.ge.s32.totalorder %v5889, 3355443
    %vm6114 = vcmp.ge.s32.totalorder %v5890, 3355443
    %vm6115 = vcmp.ge.s32.totalorder %v5891, 3355443
    %vm6116 = vcmp.ge.s32.totalorder %v5892, 3355443
    %vm6117 = vcmp.ge.s32.totalorder %v5893, 3355443
    %vm6118 = vcmp.ge.s32.totalorder %v5894, 3355443
    %vm6119 = vcmp.ge.s32.totalorder %v5895, 3355443
    %vm6120 = vcmp.ge.s32.totalorder %v5896, 3355443
    %vm6121 = vcmp.ge.s32.totalorder %v5897, 3355443
    %vm6122 = vcmp.ge.s32.totalorder %v5898, 3355443
    %vm6123 = vcmp.ge.s32.totalorder %v5899, 3355443
    %v6124 = vsel %vm5900, %v2293, 0.0
    %v6125 = vsel %vm5901, %v2294, 0.0
    %v6126 = vsel %vm5902, %v2295, 0.0
    %v6127 = vsel %vm5903, %v2296, 0.0
    %v6128 = vsel %vm5904, %v2297, 0.0
    %v6129 = vsel %vm5905, %v2298, 0.0
    %v6130 = vsel %vm5906, %v2299, 0.0
    %v6131 = vsel %vm5907, %v2300, 0.0
    %v6132 = vsel %vm5908, %v2301, 0.0
    %v6133 = vsel %vm5909, %v2302, 0.0
    %v6134 = vsel %vm5910, %v2303, 0.0
    %v6135 = vsel %vm5911, %v2304, 0.0
    %v6136 = vsel %vm5912, %v2305, 0.0
    %v6137 = vsel %vm5913, %v2306, 0.0
    %v6138 = vsel %vm5914, %v2307, 0.0
    %v6139 = vsel %vm5915, %v2308, 0.0
    %v6140 = vsel %vm5916, %v2309, 0.0
    %v6141 = vsel %vm5917, %v2310, 0.0
    %v6142 = vsel %vm5918, %v2311, 0.0
    %v6143 = vsel %vm5919, %v2312, 0.0
    %v6144 = vsel %vm5920, %v2313, 0.0
    %v6145 = vsel %vm5921, %v2314, 0.0
    %v6146 = vsel %vm5922, %v2315, 0.0
    %v6147 = vsel %vm5923, %v2316, 0.0
    %v6148 = vsel %vm5924, %v2317, 0.0
    %v6149 = vsel %vm5925, %v2318, 0.0
    %v6150 = vsel %vm5926, %v2319, 0.0
    %v6151 = vsel %vm5927, %v2320, 0.0
    %v6152 = vsel %vm5928, %v2321, 0.0
    %v6153 = vsel %vm5929, %v2322, 0.0
    %v6154 = vsel %vm5930, %v2323, 0.0
    %v6155 = vsel %vm5931, %v2324, 0.0
    %v6156 = vsel %vm5932, %v2325, 0.0
    %v6157 = vsel %vm5933, %v2326, 0.0
    %v6158 = vsel %vm5934, %v2327, 0.0
    %v6159 = vsel %vm5935, %v2328, 0.0
    %v6160 = vsel %vm5936, %v2329, 0.0
    %v6161 = vsel %vm5937, %v2330, 0.0
    %v6162 = vsel %vm5938, %v2331, 0.0
    %v6163 = vsel %vm5939, %v2332, 0.0
    %v6164 = vsel %vm5940, %v2333, 0.0
    %v6165 = vsel %vm5941, %v2334, 0.0
    %v6166 = vsel %vm5942, %v2335, 0.0
    %v6167 = vsel %vm5943, %v2336, 0.0
    %v6168 = vsel %vm5944, %v2337, 0.0
    %v6169 = vsel %vm5945, %v2338, 0.0
    %v6170 = vsel %vm5946, %v2339, 0.0
    %v6171 = vsel %vm5947, %v2340, 0.0
    %v6172 = vsel %vm5948, %v2341, 0.0
    %v6173 = vsel %vm5949, %v2342, 0.0
    %v6174 = vsel %vm5950, %v2343, 0.0
    %v6175 = vsel %vm5951, %v2344, 0.0
    %v6176 = vsel %vm5952, %v2345, 0.0
    %v6177 = vsel %vm5953, %v2346, 0.0
    %v6178 = vsel %vm5954, %v2347, 0.0
    %v6179 = vsel %vm5955, %v2348, 0.0
    %v6180 = vsel %vm5956, %v2349, 0.0
    %v6181 = vsel %vm5957, %v2350, 0.0
    %v6182 = vsel %vm5958, %v2351, 0.0
    %v6183 = vsel %vm5959, %v2352, 0.0
    %v6184 = vsel %vm5960, %v2353, 0.0
    %v6185 = vsel %vm5961, %v2354, 0.0
    %v6186 = vsel %vm5962, %v2355, 0.0
    %v6187 = vsel %vm5963, %v2356, 0.0
    %v6188 = vsel %vm5964, %v2357, 0.0
    %v6189 = vsel %vm5965, %v2358, 0.0
    %v6190 = vsel %vm5966, %v2359, 0.0
    %v6191 = vsel %vm5967, %v2360, 0.0
    %v6192 = vsel %vm5968, %v2361, 0.0
    %v6193 = vsel %vm5969, %v2362, 0.0
    %v6194 = vsel %vm5970, %v2363, 0.0
    %v6195 = vsel %vm5971, %v2364, 0.0
    %v6196 = vsel %vm5972, %v2365, 0.0
    %v6197 = vsel %vm5973, %v2366, 0.0
    %v6198 = vsel %vm5974, %v2367, 0.0
    %v6199 = vsel %vm5975, %v2368, 0.0
    %v6200 = vsel %vm5976, %v2369, 0.0
    %v6201 = vsel %vm5977, %v2370, 0.0
    %v6202 = vsel %vm5978, %v2371, 0.0
    %v6203 = vsel %vm5979, %v2372, 0.0
    %v6204 = vsel %vm5980, %v2373, 0.0
    %v6205 = vsel %vm5981, %v2374, 0.0
    %v6206 = vsel %vm5982, %v2375, 0.0
    %v6207 = vsel %vm5983, %v2376, 0.0
    %v6208 = vsel %vm5984, %v2377, 0.0
    %v6209 = vsel %vm5985, %v2378, 0.0
    %v6210 = vsel %vm5986, %v2379, 0.0
    %v6211 = vsel %vm5987, %v2380, 0.0
    %v6212 = vsel %vm5988, %v2381, 0.0
    %v6213 = vsel %vm5989, %v2382, 0.0
    %v6214 = vsel %vm5990, %v2383, 0.0
    %v6215 = vsel %vm5991, %v2384, 0.0
    %v6216 = vsel %vm5992, %v2385, 0.0
    %v6217 = vsel %vm5993, %v2386, 0.0
    %v6218 = vsel %vm5994, %v2387, 0.0
    %v6219 = vsel %vm5995, %v2388, 0.0
    %v6220 = vsel %vm5996, %v2389, 0.0
    %v6221 = vsel %vm5997, %v2390, 0.0
    %v6222 = vsel %vm5998, %v2391, 0.0
    %v6223 = vsel %vm5999, %v2392, 0.0
    %v6224 = vsel %vm6000, %v2393, 0.0
    %v6225 = vsel %vm6001, %v2394, 0.0
    %v6226 = vsel %vm6002, %v2395, 0.0
    %v6227 = vsel %vm6003, %v2396, 0.0
    %v6228 = vsel %vm6004, %v2397, 0.0
    %v6229 = vsel %vm6005, %v2398, 0.0
    %v6230 = vsel %vm6006, %v2399, 0.0
    %v6231 = vsel %vm6007, %v2400, 0.0
    %v6232 = vsel %vm6008, %v2401, 0.0
    %v6233 = vsel %vm6009, %v2402, 0.0
    %v6234 = vsel %vm6010, %v2403, 0.0
    %v6235 = vsel %vm6011, %v2404, 0.0
    %v6236 = vsel %vm6012, %v2405, 0.0
    %v6237 = vsel %vm6013, %v2406, 0.0
    %v6238 = vsel %vm6014, %v2407, 0.0
    %v6239 = vsel %vm6015, %v2408, 0.0
    %v6240 = vsel %vm6016, %v2409, 0.0
    %v6241 = vsel %vm6017, %v2410, 0.0
    %v6242 = vsel %vm6018, %v2411, 0.0
    %v6243 = vsel %vm6019, %v2412, 0.0
    %v6244 = vsel %vm6020, %v2413, 0.0
    %v6245 = vsel %vm6021, %v2414, 0.0
    %v6246 = vsel %vm6022, %v2415, 0.0
    %v6247 = vsel %vm6023, %v2416, 0.0
    %v6248 = vsel %vm6024, %v2417, 0.0
    %v6249 = vsel %vm6025, %v2418, 0.0
    %v6250 = vsel %vm6026, %v2419, 0.0
    %v6251 = vsel %vm6027, %v2420, 0.0
    %v6252 = vsel %vm6028, %v2421, 0.0
    %v6253 = vsel %vm6029, %v2422, 0.0
    %v6254 = vsel %vm6030, %v2423, 0.0
    %v6255 = vsel %vm6031, %v2424, 0.0
    %v6256 = vsel %vm6032, %v2425, 0.0
    %v6257 = vsel %vm6033, %v2426, 0.0
    %v6258 = vsel %vm6034, %v2427, 0.0
    %v6259 = vsel %vm6035, %v2428, 0.0
    %v6260 = vsel %vm6036, %v2429, 0.0
    %v6261 = vsel %vm6037, %v2430, 0.0
    %v6262 = vsel %vm6038, %v2431, 0.0
    %v6263 = vsel %vm6039, %v2432, 0.0
    %v6264 = vsel %vm6040, %v2433, 0.0
    %v6265 = vsel %vm6041, %v2434, 0.0
    %v6266 = vsel %vm6042, %v2435, 0.0
    %v6267 = vsel %vm6043, %v2436, 0.0
    %v6268 = vsel %vm6044, %v2437, 0.0
    %v6269 = vsel %vm6045, %v2438, 0.0
    %v6270 = vsel %vm6046, %v2439, 0.0
    %v6271 = vsel %vm6047, %v2440, 0.0
    %v6272 = vsel %vm6048, %v2441, 0.0
    %v6273 = vsel %vm6049, %v2442, 0.0
    %v6274 = vsel %vm6050, %v2443, 0.0
    %v6275 = vsel %vm6051, %v2444, 0.0
    %v6276 = vsel %vm6052, %v2445, 0.0
    %v6277 = vsel %vm6053, %v2446, 0.0
    %v6278 = vsel %vm6054, %v2447, 0.0
    %v6279 = vsel %vm6055, %v2448, 0.0
    %v6280 = vsel %vm6056, %v2449, 0.0
    %v6281 = vsel %vm6057, %v2450, 0.0
    %v6282 = vsel %vm6058, %v2451, 0.0
    %v6283 = vsel %vm6059, %v2452, 0.0
    %v6284 = vsel %vm6060, %v2453, 0.0
    %v6285 = vsel %vm6061, %v2454, 0.0
    %v6286 = vsel %vm6062, %v2455, 0.0
    %v6287 = vsel %vm6063, %v2456, 0.0
    %v6288 = vsel %vm6064, %v2457, 0.0
    %v6289 = vsel %vm6065, %v2458, 0.0
    %v6290 = vsel %vm6066, %v2459, 0.0
    %v6291 = vsel %vm6067, %v2460, 0.0
    %v6292 = vsel %vm6068, %v2461, 0.0
    %v6293 = vsel %vm6069, %v2462, 0.0
    %v6294 = vsel %vm6070, %v2463, 0.0
    %v6295 = vsel %vm6071, %v2464, 0.0
    %v6296 = vsel %vm6072, %v2465, 0.0
    %v6297 = vsel %vm6073, %v2466, 0.0
    %v6298 = vsel %vm6074, %v2467, 0.0
    %v6299 = vsel %vm6075, %v2468, 0.0
    %v6300 = vsel %vm6076, %v2469, 0.0
    %v6301 = vsel %vm6077, %v2470, 0.0
    %v6302 = vsel %vm6078, %v2471, 0.0
    %v6303 = vsel %vm6079, %v2472, 0.0
    %v6304 = vsel %vm6080, %v2473, 0.0
    %v6305 = vsel %vm6081, %v2474, 0.0
    %v6306 = vsel %vm6082, %v2475, 0.0
    %v6307 = vsel %vm6083, %v2476, 0.0
    %v6308 = vsel %vm6084, %v2477, 0.0
    %v6309 = vsel %vm6085, %v2478, 0.0
    %v6310 = vsel %vm6086, %v2479, 0.0
    %v6311 = vsel %vm6087, %v2480, 0.0
    %v6312 = vsel %vm6088, %v2481, 0.0
    %v6313 = vsel %vm6089, %v2482, 0.0
    %v6314 = vsel %vm6090, %v2483, 0.0
    %v6315 = vsel %vm6091, %v2484, 0.0
    %v6316 = vsel %vm6092, %v2485, 0.0
    %v6317 = vsel %vm6093, %v2486, 0.0
    %v6318 = vsel %vm6094, %v2487, 0.0
    %v6319 = vsel %vm6095, %v2488, 0.0
    %v6320 = vsel %vm6096, %v2489, 0.0
    %v6321 = vsel %vm6097, %v2490, 0.0
    %v6322 = vsel %vm6098, %v2491, 0.0
    %v6323 = vsel %vm6099, %v2492, 0.0
    %v6324 = vsel %vm6100, %v2493, 0.0
    %v6325 = vsel %vm6101, %v2494, 0.0
    %v6326 = vsel %vm6102, %v2495, 0.0
    %v6327 = vsel %vm6103, %v2496, 0.0
    %v6328 = vsel %vm6104, %v2497, 0.0
    %v6329 = vsel %vm6105, %v2498, 0.0
    %v6330 = vsel %vm6106, %v2499, 0.0
    %v6331 = vsel %vm6107, %v2500, 0.0
    %v6332 = vsel %vm6108, %v2501, 0.0
    %v6333 = vsel %vm6109, %v2502, 0.0
    %v6334 = vsel %vm6110, %v2503, 0.0
    %v6335 = vsel %vm6111, %v2504, 0.0
    %v6336 = vsel %vm6112, %v2505, 0.0
    %v6337 = vsel %vm6113, %v2506, 0.0
    %v6338 = vsel %vm6114, %v2507, 0.0
    %v6339 = vsel %vm6115, %v2508, 0.0
    %v6340 = vsel %vm6116, %v2509, 0.0
    %v6341 = vsel %vm6117, %v2510, 0.0
    %v6342 = vsel %vm6118, %v2511, 0.0
    %v6343 = vsel %vm6119, %v2512, 0.0
    %v6344 = vsel %vm6120, %v2513, 0.0
    %v6345 = vsel %vm6121, %v2514, 0.0
    %v6346 = vsel %vm6122, %v2515, 0.0
    %v6347 = vsel %vm6123, %v2516, 0.0
    %v6348 = vsel %vm1402, %v6124, 0.0
    %v6349 = vsel %vm1402, %v6131, 0.0
    %v6350 = vadd.f32 %v6348, %v6349
    %v6351 = vsel %vm1402, %v6138, 0.0
    %v6352 = vadd.f32 %v6350, %v6351
    %v6353 = vsel %vm1402, %v6145, 0.0
    %v6354 = vadd.f32 %v6352, %v6353
    %v6355 = vsel %vm1402, %v6152, 0.0
    %v6356 = vadd.f32 %v6354, %v6355
    %v6357 = vsel %vm1402, %v6159, 0.0
    %v6358 = vadd.f32 %v6356, %v6357
    %v6359 = vsel %vm1402, %v6166, 0.0
    %v6360 = vadd.f32 %v6358, %v6359
    %v6361 = vsel %vm1402, %v6173, 0.0
    %v6362 = vadd.f32 %v6360, %v6361
    %v6363 = vsel %vm1402, %v6180, 0.0
    %v6364 = vadd.f32 %v6362, %v6363
    %v6365 = vsel %vm1402, %v6187, 0.0
    %v6366 = vadd.f32 %v6364, %v6365
    %v6367 = vsel %vm1402, %v6194, 0.0
    %v6368 = vadd.f32 %v6366, %v6367
    %v6369 = vsel %vm1402, %v6201, 0.0
    %v6370 = vadd.f32 %v6368, %v6369
    %v6371 = vsel %vm1402, %v6208, 0.0
    %v6372 = vadd.f32 %v6370, %v6371
    %v6373 = vsel %vm1402, %v6215, 0.0
    %v6374 = vadd.f32 %v6372, %v6373
    %v6375 = vsel %vm1402, %v6222, 0.0
    %v6376 = vadd.f32 %v6374, %v6375
    %v6377 = vsel %vm1402, %v6229, 0.0
    %v6378 = vadd.f32 %v6376, %v6377
    %v6379 = vsel %vm1402, %v6236, 0.0
    %v6380 = vadd.f32 %v6378, %v6379
    %v6381 = vsel %vm1402, %v6243, 0.0
    %v6382 = vadd.f32 %v6380, %v6381
    %v6383 = vsel %vm1402, %v6250, 0.0
    %v6384 = vadd.f32 %v6382, %v6383
    %v6385 = vsel %vm1402, %v6257, 0.0
    %v6386 = vadd.f32 %v6384, %v6385
    %v6387 = vsel %vm1402, %v6264, 0.0
    %v6388 = vadd.f32 %v6386, %v6387
    %v6389 = vsel %vm1402, %v6271, 0.0
    %v6390 = vadd.f32 %v6388, %v6389
    %v6391 = vsel %vm1402, %v6278, 0.0
    %v6392 = vadd.f32 %v6390, %v6391
    %v6393 = vsel %vm1402, %v6285, 0.0
    %v6394 = vadd.f32 %v6392, %v6393
    %v6395 = vsel %vm1402, %v6292, 0.0
    %v6396 = vadd.f32 %v6394, %v6395
    %v6397 = vsel %vm1402, %v6299, 0.0
    %v6398 = vadd.f32 %v6396, %v6397
    %v6399 = vsel %vm1402, %v6306, 0.0
    %v6400 = vadd.f32 %v6398, %v6399
    %v6401 = vsel %vm1402, %v6313, 0.0
    %v6402 = vadd.f32 %v6400, %v6401
    %v6403 = vsel %vm1402, %v6320, 0.0
    %v6404 = vadd.f32 %v6402, %v6403
    %v6405 = vsel %vm1402, %v6327, 0.0
    %v6406 = vadd.f32 %v6404, %v6405
    %v6407 = vsel %vm1402, %v6334, 0.0
    %v6408 = vadd.f32 %v6406, %v6407
    %v6409 = vsel %vm1402, %v6341, 0.0
    %v6410 = vadd.f32 %v6408, %v6409
    %v6411 = vsel %vm1402, %v6125, 0.0
    %v6412 = vsel %vm1402, %v6132, 0.0
    %v6413 = vadd.f32 %v6411, %v6412
    %v6414 = vsel %vm1402, %v6139, 0.0
    %v6415 = vadd.f32 %v6413, %v6414
    %v6416 = vsel %vm1402, %v6146, 0.0
    %v6417 = vadd.f32 %v6415, %v6416
    %v6418 = vsel %vm1402, %v6153, 0.0
    %v6419 = vadd.f32 %v6417, %v6418
    %v6420 = vsel %vm1402, %v6160, 0.0
    %v6421 = vadd.f32 %v6419, %v6420
    %v6422 = vsel %vm1402, %v6167, 0.0
    %v6423 = vadd.f32 %v6421, %v6422
    %v6424 = vsel %vm1402, %v6174, 0.0
    %v6425 = vadd.f32 %v6423, %v6424
    %v6426 = vsel %vm1402, %v6181, 0.0
    %v6427 = vadd.f32 %v6425, %v6426
    %v6428 = vsel %vm1402, %v6188, 0.0
    %v6429 = vadd.f32 %v6427, %v6428
    %v6430 = vsel %vm1402, %v6195, 0.0
    %v6431 = vadd.f32 %v6429, %v6430
    %v6432 = vsel %vm1402, %v6202, 0.0
    %v6433 = vadd.f32 %v6431, %v6432
    %v6434 = vsel %vm1402, %v6209, 0.0
    %v6435 = vadd.f32 %v6433, %v6434
    %v6436 = vsel %vm1402, %v6216, 0.0
    %v6437 = vadd.f32 %v6435, %v6436
    %v6438 = vsel %vm1402, %v6223, 0.0
    %v6439 = vadd.f32 %v6437, %v6438
    %v6440 = vsel %vm1402, %v6230, 0.0
    %v6441 = vadd.f32 %v6439, %v6440
    %v6442 = vsel %vm1402, %v6237, 0.0
    %v6443 = vadd.f32 %v6441, %v6442
    %v6444 = vsel %vm1402, %v6244, 0.0
    %v6445 = vadd.f32 %v6443, %v6444
    %v6446 = vsel %vm1402, %v6251, 0.0
    %v6447 = vadd.f32 %v6445, %v6446
    %v6448 = vsel %vm1402, %v6258, 0.0
    %v6449 = vadd.f32 %v6447, %v6448
    %v6450 = vsel %vm1402, %v6265, 0.0
    %v6451 = vadd.f32 %v6449, %v6450
    %v6452 = vsel %vm1402, %v6272, 0.0
    %v6453 = vadd.f32 %v6451, %v6452
    %v6454 = vsel %vm1402, %v6279, 0.0
    %v6455 = vadd.f32 %v6453, %v6454
    %v6456 = vsel %vm1402, %v6286, 0.0
    %v6457 = vadd.f32 %v6455, %v6456
    %v6458 = vsel %vm1402, %v6293, 0.0
    %v6459 = vadd.f32 %v6457, %v6458
    %v6460 = vsel %vm1402, %v6300, 0.0
    %v6461 = vadd.f32 %v6459, %v6460
    %v6462 = vsel %vm1402, %v6307, 0.0
    %v6463 = vadd.f32 %v6461, %v6462
    %v6464 = vsel %vm1402, %v6314, 0.0
    %v6465 = vadd.f32 %v6463, %v6464
    %v6466 = vsel %vm1402, %v6321, 0.0
    %v6467 = vadd.f32 %v6465, %v6466
    %v6468 = vsel %vm1402, %v6328, 0.0
    %v6469 = vadd.f32 %v6467, %v6468
    %v6470 = vsel %vm1402, %v6335, 0.0
    %v6471 = vadd.f32 %v6469, %v6470
    %v6472 = vsel %vm1402, %v6342, 0.0
    %v6473 = vadd.f32 %v6471, %v6472
    %v6474 = vsel %vm1402, %v6126, 0.0
    %v6475 = vsel %vm1402, %v6133, 0.0
    %v6476 = vadd.f32 %v6474, %v6475
    %v6477 = vsel %vm1402, %v6140, 0.0
    %v6478 = vadd.f32 %v6476, %v6477
    %v6479 = vsel %vm1402, %v6147, 0.0
    %v6480 = vadd.f32 %v6478, %v6479
    %v6481 = vsel %vm1402, %v6154, 0.0
    %v6482 = vadd.f32 %v6480, %v6481
    %v6483 = vsel %vm1402, %v6161, 0.0
    %v6484 = vadd.f32 %v6482, %v6483
    %v6485 = vsel %vm1402, %v6168, 0.0
    %v6486 = vadd.f32 %v6484, %v6485
    %v6487 = vsel %vm1402, %v6175, 0.0
    %v6488 = vadd.f32 %v6486, %v6487
    %v6489 = vsel %vm1402, %v6182, 0.0
    %v6490 = vadd.f32 %v6488, %v6489
    %v6491 = vsel %vm1402, %v6189, 0.0
    %v6492 = vadd.f32 %v6490, %v6491
    %v6493 = vsel %vm1402, %v6196, 0.0
    %v6494 = vadd.f32 %v6492, %v6493
    %v6495 = vsel %vm1402, %v6203, 0.0
    %v6496 = vadd.f32 %v6494, %v6495
    %v6497 = vsel %vm1402, %v6210, 0.0
    %v6498 = vadd.f32 %v6496, %v6497
    %v6499 = vsel %vm1402, %v6217, 0.0
    %v6500 = vadd.f32 %v6498, %v6499
    %v6501 = vsel %vm1402, %v6224, 0.0
    %v6502 = vadd.f32 %v6500, %v6501
    %v6503 = vsel %vm1402, %v6231, 0.0
    %v6504 = vadd.f32 %v6502, %v6503
    %v6505 = vsel %vm1402, %v6238, 0.0
    %v6506 = vadd.f32 %v6504, %v6505
    %v6507 = vsel %vm1402, %v6245, 0.0
    %v6508 = vadd.f32 %v6506, %v6507
    %v6509 = vsel %vm1402, %v6252, 0.0
    %v6510 = vadd.f32 %v6508, %v6509
    %v6511 = vsel %vm1402, %v6259, 0.0
    %v6512 = vadd.f32 %v6510, %v6511
    %v6513 = vsel %vm1402, %v6266, 0.0
    %v6514 = vadd.f32 %v6512, %v6513
    %v6515 = vsel %vm1402, %v6273, 0.0
    %v6516 = vadd.f32 %v6514, %v6515
    %v6517 = vsel %vm1402, %v6280, 0.0
    %v6518 = vadd.f32 %v6516, %v6517
    %v6519 = vsel %vm1402, %v6287, 0.0
    %v6520 = vadd.f32 %v6518, %v6519
    %v6521 = vsel %vm1402, %v6294, 0.0
    %v6522 = vadd.f32 %v6520, %v6521
    %v6523 = vsel %vm1402, %v6301, 0.0
    %v6524 = vadd.f32 %v6522, %v6523
    %v6525 = vsel %vm1402, %v6308, 0.0
    %v6526 = vadd.f32 %v6524, %v6525
    %v6527 = vsel %vm1402, %v6315, 0.0
    %v6528 = vadd.f32 %v6526, %v6527
    %v6529 = vsel %vm1402, %v6322, 0.0
    %v6530 = vadd.f32 %v6528, %v6529
    %v6531 = vsel %vm1402, %v6329, 0.0
    %v6532 = vadd.f32 %v6530, %v6531
    %v6533 = vsel %vm1402, %v6336, 0.0
    %v6534 = vadd.f32 %v6532, %v6533
    %v6535 = vsel %vm1402, %v6343, 0.0
    %v6536 = vadd.f32 %v6534, %v6535
    %v6537 = vsel %vm1402, %v6127, 0.0
    %v6538 = vsel %vm1402, %v6134, 0.0
    %v6539 = vadd.f32 %v6537, %v6538
    %v6540 = vsel %vm1402, %v6141, 0.0
    %v6541 = vadd.f32 %v6539, %v6540
    %v6542 = vsel %vm1402, %v6148, 0.0
    %v6543 = vadd.f32 %v6541, %v6542
    %v6544 = vsel %vm1402, %v6155, 0.0
    %v6545 = vadd.f32 %v6543, %v6544
    %v6546 = vsel %vm1402, %v6162, 0.0
    %v6547 = vadd.f32 %v6545, %v6546
    %v6548 = vsel %vm1402, %v6169, 0.0
    %v6549 = vadd.f32 %v6547, %v6548
    %v6550 = vsel %vm1402, %v6176, 0.0
    %v6551 = vadd.f32 %v6549, %v6550
    %v6552 = vsel %vm1402, %v6183, 0.0
    %v6553 = vadd.f32 %v6551, %v6552
    %v6554 = vsel %vm1402, %v6190, 0.0
    %v6555 = vadd.f32 %v6553, %v6554
    %v6556 = vsel %vm1402, %v6197, 0.0
    %v6557 = vadd.f32 %v6555, %v6556
    %v6558 = vsel %vm1402, %v6204, 0.0
    %v6559 = vadd.f32 %v6557, %v6558
    %v6560 = vsel %vm1402, %v6211, 0.0
    %v6561 = vadd.f32 %v6559, %v6560
    %v6562 = vsel %vm1402, %v6218, 0.0
    %v6563 = vadd.f32 %v6561, %v6562
    %v6564 = vsel %vm1402, %v6225, 0.0
    %v6565 = vadd.f32 %v6563, %v6564
    %v6566 = vsel %vm1402, %v6232, 0.0
    %v6567 = vadd.f32 %v6565, %v6566
    %v6568 = vsel %vm1402, %v6239, 0.0
    %v6569 = vadd.f32 %v6567, %v6568
    %v6570 = vsel %vm1402, %v6246, 0.0
    %v6571 = vadd.f32 %v6569, %v6570
    %v6572 = vsel %vm1402, %v6253, 0.0
    %v6573 = vadd.f32 %v6571, %v6572
    %v6574 = vsel %vm1402, %v6260, 0.0
    %v6575 = vadd.f32 %v6573, %v6574
    %v6576 = vsel %vm1402, %v6267, 0.0
    %v6577 = vadd.f32 %v6575, %v6576
    %v6578 = vsel %vm1402, %v6274, 0.0
    %v6579 = vadd.f32 %v6577, %v6578
    %v6580 = vsel %vm1402, %v6281, 0.0
    %v6581 = vadd.f32 %v6579, %v6580
    %v6582 = vsel %vm1402, %v6288, 0.0
    %v6583 = vadd.f32 %v6581, %v6582
    %v6584 = vsel %vm1402, %v6295, 0.0
    %v6585 = vadd.f32 %v6583, %v6584
    %v6586 = vsel %vm1402, %v6302, 0.0
    %v6587 = vadd.f32 %v6585, %v6586
    %v6588 = vsel %vm1402, %v6309, 0.0
    %v6589 = vadd.f32 %v6587, %v6588
    %v6590 = vsel %vm1402, %v6316, 0.0
    %v6591 = vadd.f32 %v6589, %v6590
    %v6592 = vsel %vm1402, %v6323, 0.0
    %v6593 = vadd.f32 %v6591, %v6592
    %v6594 = vsel %vm1402, %v6330, 0.0
    %v6595 = vadd.f32 %v6593, %v6594
    %v6596 = vsel %vm1402, %v6337, 0.0
    %v6597 = vadd.f32 %v6595, %v6596
    %v6598 = vsel %vm1402, %v6344, 0.0
    %v6599 = vadd.f32 %v6597, %v6598
    %v6600 = vsel %vm1402, %v6128, 0.0
    %v6601 = vsel %vm1402, %v6135, 0.0
    %v6602 = vadd.f32 %v6600, %v6601
    %v6603 = vsel %vm1402, %v6142, 0.0
    %v6604 = vadd.f32 %v6602, %v6603
    %v6605 = vsel %vm1402, %v6149, 0.0
    %v6606 = vadd.f32 %v6604, %v6605
    %v6607 = vsel %vm1402, %v6156, 0.0
    %v6608 = vadd.f32 %v6606, %v6607
    %v6609 = vsel %vm1402, %v6163, 0.0
    %v6610 = vadd.f32 %v6608, %v6609
    %v6611 = vsel %vm1402, %v6170, 0.0
    %v6612 = vadd.f32 %v6610, %v6611
    %v6613 = vsel %vm1402, %v6177, 0.0
    %v6614 = vadd.f32 %v6612, %v6613
    %v6615 = vsel %vm1402, %v6184, 0.0
    %v6616 = vadd.f32 %v6614, %v6615
    %v6617 = vsel %vm1402, %v6191, 0.0
    %v6618 = vadd.f32 %v6616, %v6617
    %v6619 = vsel %vm1402, %v6198, 0.0
    %v6620 = vadd.f32 %v6618, %v6619
    %v6621 = vsel %vm1402, %v6205, 0.0
    %v6622 = vadd.f32 %v6620, %v6621
    %v6623 = vsel %vm1402, %v6212, 0.0
    %v6624 = vadd.f32 %v6622, %v6623
    %v6625 = vsel %vm1402, %v6219, 0.0
    %v6626 = vadd.f32 %v6624, %v6625
    %v6627 = vsel %vm1402, %v6226, 0.0
    %v6628 = vadd.f32 %v6626, %v6627
    %v6629 = vsel %vm1402, %v6233, 0.0
    %v6630 = vadd.f32 %v6628, %v6629
    %v6631 = vsel %vm1402, %v6240, 0.0
    %v6632 = vadd.f32 %v6630, %v6631
    %v6633 = vsel %vm1402, %v6247, 0.0
    %v6634 = vadd.f32 %v6632, %v6633
    %v6635 = vsel %vm1402, %v6254, 0.0
    %v6636 = vadd.f32 %v6634, %v6635
    %v6637 = vsel %vm1402, %v6261, 0.0
    %v6638 = vadd.f32 %v6636, %v6637
    %v6639 = vsel %vm1402, %v6268, 0.0
    %v6640 = vadd.f32 %v6638, %v6639
    %v6641 = vsel %vm1402, %v6275, 0.0
    %v6642 = vadd.f32 %v6640, %v6641
    %v6643 = vsel %vm1402, %v6282, 0.0
    %v6644 = vadd.f32 %v6642, %v6643
    %v6645 = vsel %vm1402, %v6289, 0.0
    %v6646 = vadd.f32 %v6644, %v6645
    %v6647 = vsel %vm1402, %v6296, 0.0
    %v6648 = vadd.f32 %v6646, %v6647
    %v6649 = vsel %vm1402, %v6303, 0.0
    %v6650 = vadd.f32 %v6648, %v6649
    %v6651 = vsel %vm1402, %v6310, 0.0
    %v6652 = vadd.f32 %v6650, %v6651
    %v6653 = vsel %vm1402, %v6317, 0.0
    %v6654 = vadd.f32 %v6652, %v6653
    %v6655 = vsel %vm1402, %v6324, 0.0
    %v6656 = vadd.f32 %v6654, %v6655
    %v6657 = vsel %vm1402, %v6331, 0.0
    %v6658 = vadd.f32 %v6656, %v6657
    %v6659 = vsel %vm1402, %v6338, 0.0
    %v6660 = vadd.f32 %v6658, %v6659
    %v6661 = vsel %vm1402, %v6345, 0.0
    %v6662 = vadd.f32 %v6660, %v6661
    %v6663 = vsel %vm1402, %v6129, 0.0
    %v6664 = vsel %vm1402, %v6136, 0.0
    %v6665 = vadd.f32 %v6663, %v6664
    %v6666 = vsel %vm1402, %v6143, 0.0
    %v6667 = vadd.f32 %v6665, %v6666
    %v6668 = vsel %vm1402, %v6150, 0.0
    %v6669 = vadd.f32 %v6667, %v6668
    %v6670 = vsel %vm1402, %v6157, 0.0
    %v6671 = vadd.f32 %v6669, %v6670
    %v6672 = vsel %vm1402, %v6164, 0.0
    %v6673 = vadd.f32 %v6671, %v6672
    %v6674 = vsel %vm1402, %v6171, 0.0
    %v6675 = vadd.f32 %v6673, %v6674
    %v6676 = vsel %vm1402, %v6178, 0.0
    %v6677 = vadd.f32 %v6675, %v6676
    %v6678 = vsel %vm1402, %v6185, 0.0
    %v6679 = vadd.f32 %v6677, %v6678
    %v6680 = vsel %vm1402, %v6192, 0.0
    %v6681 = vadd.f32 %v6679, %v6680
    %v6682 = vsel %vm1402, %v6199, 0.0
    %v6683 = vadd.f32 %v6681, %v6682
    %v6684 = vsel %vm1402, %v6206, 0.0
    %v6685 = vadd.f32 %v6683, %v6684
    %v6686 = vsel %vm1402, %v6213, 0.0
    %v6687 = vadd.f32 %v6685, %v6686
    %v6688 = vsel %vm1402, %v6220, 0.0
    %v6689 = vadd.f32 %v6687, %v6688
    %v6690 = vsel %vm1402, %v6227, 0.0
    %v6691 = vadd.f32 %v6689, %v6690
    %v6692 = vsel %vm1402, %v6234, 0.0
    %v6693 = vadd.f32 %v6691, %v6692
    %v6694 = vsel %vm1402, %v6241, 0.0
    %v6695 = vadd.f32 %v6693, %v6694
    %v6696 = vsel %vm1402, %v6248, 0.0
    %v6697 = vadd.f32 %v6695, %v6696
    %v6698 = vsel %vm1402, %v6255, 0.0
    %v6699 = vadd.f32 %v6697, %v6698
    %v6700 = vsel %vm1402, %v6262, 0.0
    %v6701 = vadd.f32 %v6699, %v6700
    %v6702 = vsel %vm1402, %v6269, 0.0
    %v6703 = vadd.f32 %v6701, %v6702
    %v6704 = vsel %vm1402, %v6276, 0.0
    %v6705 = vadd.f32 %v6703, %v6704
    %v6706 = vsel %vm1402, %v6283, 0.0
    %v6707 = vadd.f32 %v6705, %v6706
    %v6708 = vsel %vm1402, %v6290, 0.0
    %v6709 = vadd.f32 %v6707, %v6708
    %v6710 = vsel %vm1402, %v6297, 0.0
    %v6711 = vadd.f32 %v6709, %v6710
    %v6712 = vsel %vm1402, %v6304, 0.0
    %v6713 = vadd.f32 %v6711, %v6712
    %v6714 = vsel %vm1402, %v6311, 0.0
    %v6715 = vadd.f32 %v6713, %v6714
    %v6716 = vsel %vm1402, %v6318, 0.0
    %v6717 = vadd.f32 %v6715, %v6716
    %v6718 = vsel %vm1402, %v6325, 0.0
    %v6719 = vadd.f32 %v6717, %v6718
    %v6720 = vsel %vm1402, %v6332, 0.0
    %v6721 = vadd.f32 %v6719, %v6720
    %v6722 = vsel %vm1402, %v6339, 0.0
    %v6723 = vadd.f32 %v6721, %v6722
    %v6724 = vsel %vm1402, %v6346, 0.0
    %v6725 = vadd.f32 %v6723, %v6724
    %v6726 = vsel %vm1781, %v6130, 0.0
    %v6727 = vsel %vm1781, %v6137, 0.0
    %v6728 = vadd.f32 %v6726, %v6727
    %v6729 = vsel %vm1781, %v6144, 0.0
    %v6730 = vadd.f32 %v6728, %v6729
    %v6731 = vsel %vm1781, %v6151, 0.0
    %v6732 = vadd.f32 %v6730, %v6731
    %v6733 = vsel %vm1781, %v6158, 0.0
    %v6734 = vadd.f32 %v6732, %v6733
    %v6735 = vsel %vm1781, %v6165, 0.0
    %v6736 = vadd.f32 %v6734, %v6735
    %v6737 = vsel %vm1781, %v6172, 0.0
    %v6738 = vadd.f32 %v6736, %v6737
    %v6739 = vsel %vm1781, %v6179, 0.0
    %v6740 = vadd.f32 %v6738, %v6739
    %v6741 = vsel %vm1781, %v6186, 0.0
    %v6742 = vadd.f32 %v6740, %v6741
    %v6743 = vsel %vm1781, %v6193, 0.0
    %v6744 = vadd.f32 %v6742, %v6743
    %v6745 = vsel %vm1781, %v6200, 0.0
    %v6746 = vadd.f32 %v6744, %v6745
    %v6747 = vsel %vm1781, %v6207, 0.0
    %v6748 = vadd.f32 %v6746, %v6747
    %v6749 = vsel %vm1781, %v6214, 0.0
    %v6750 = vadd.f32 %v6748, %v6749
    %v6751 = vsel %vm1781, %v6221, 0.0
    %v6752 = vadd.f32 %v6750, %v6751
    %v6753 = vsel %vm1781, %v6228, 0.0
    %v6754 = vadd.f32 %v6752, %v6753
    %v6755 = vsel %vm1781, %v6235, 0.0
    %v6756 = vadd.f32 %v6754, %v6755
    %v6757 = vsel %vm1781, %v6242, 0.0
    %v6758 = vadd.f32 %v6756, %v6757
    %v6759 = vsel %vm1781, %v6249, 0.0
    %v6760 = vadd.f32 %v6758, %v6759
    %v6761 = vsel %vm1781, %v6256, 0.0
    %v6762 = vadd.f32 %v6760, %v6761
    %v6763 = vsel %vm1781, %v6263, 0.0
    %v6764 = vadd.f32 %v6762, %v6763
    %v6765 = vsel %vm1781, %v6270, 0.0
    %v6766 = vadd.f32 %v6764, %v6765
    %v6767 = vsel %vm1781, %v6277, 0.0
    %v6768 = vadd.f32 %v6766, %v6767
    %v6769 = vsel %vm1781, %v6284, 0.0
    %v6770 = vadd.f32 %v6768, %v6769
    %v6771 = vsel %vm1781, %v6291, 0.0
    %v6772 = vadd.f32 %v6770, %v6771
    %v6773 = vsel %vm1781, %v6298, 0.0
    %v6774 = vadd.f32 %v6772, %v6773
    %v6775 = vsel %vm1781, %v6305, 0.0
    %v6776 = vadd.f32 %v6774, %v6775
    %v6777 = vsel %vm1781, %v6312, 0.0
    %v6778 = vadd.f32 %v6776, %v6777
    %v6779 = vsel %vm1781, %v6319, 0.0
    %v6780 = vadd.f32 %v6778, %v6779
    %v6781 = vsel %vm1781, %v6326, 0.0
    %v6782 = vadd.f32 %v6780, %v6781
    %v6783 = vsel %vm1781, %v6333, 0.0
    %v6784 = vadd.f32 %v6782, %v6783
    %v6785 = vsel %vm1781, %v6340, 0.0
    %v6786 = vadd.f32 %v6784, %v6785
    %v6787 = vsel %vm1781, %v6347, 0.0
    %v6788 = vadd.f32 %v6786, %v6787
    %v6789 = vmul.f32 %v6410, 1.6666666
    %v6790 = vmul.f32 %v6473, 1.6666666
    %v6791 = vmul.f32 %v6536, 1.6666666
    %v6792 = vmul.f32 %v6599, 1.6666666
    %v6793 = vmul.f32 %v6662, 1.6666666
    %v6794 = vmul.f32 %v6725, 1.6666666
    %v6795 = vmul.f32 %v6788, 1.6666666
    %6796 = vst.msk [vmem:[#allocation10] sm:$0xff] %vm1402, %v6789
    %6797 = vst.msk [vmem:[#allocation10 + $0x8] sm:$0xff] %vm1402, %v6790
    %6798 = vst.msk [vmem:[#allocation10 + $0x10] sm:$0xff] %vm1402, %v6791
    %6799 = vst.msk [vmem:[#allocation10 + $0x18] sm:$0xff] %vm1402, %v6792
    %6800 = vst.msk [vmem:[#allocation10 + $0x20] sm:$0xff] %vm1402, %v6793
    %6801 = vst.msk [vmem:[#allocation10 + $0x28] sm:$0xff] %vm1402, %v6794
    %6802 = vst.msk [vmem:[#allocation10 + $0x30] sm:$0x3] %vm1781, %v6795
    // Predicated region
    $region26: #{tpu_custom_call.1} parent=1 // pred_check
      _
    $region27: #{tpu_custom_call.1} parent=1 // pred_check_branch
      %6804 = sbr.rel (0) target = $region29
    $region28: #{tpu_custom_call.1} parent=1 // pred_region
      %s6806 = ssub.s32 896, 896
      %6807 = vsyncadd [#allocation6], %s6806
      %s6808 = sshll.u32 [#allocation10], 4
      %s6809 = int_to_ptr.vmem [resolvable:$true] %s6808
      %6814 = dma.vmem_to_hbm [thread:$0]  %s6809, 896, %s4, [#allocation6], 128, 128, 8
    $region29: #{tpu_custom_call.1} parent=1 // pred_fallthru
      _
    // Predicated region
    $region30: #{tpu_custom_call.1} parent=1 // pred_check
      _
    $region31: #{tpu_custom_call.1} parent=1 // pred_check_branch
      %6816 = sbr.rel (0) target = $region33
    $region32: #{tpu_custom_call.1} parent=1 // pred_region
      %6817 = dma.done [#allocation6], 896
    $region33: #{tpu_custom_call.1} parent=1 // pred_fallthru
      _
    %6818 = vsyncpa [#allocation5], 1
    %6819 = vsyncpa [#allocation8], 1
    %6820 = vsyncpa [#allocation6], 1

</llo_original>
